<compile_context>
chip_gen: v7x
topology: tpu7x:2x2x1
jax: 0.10.0
libtpu: 0.0.40
codegen_flags: <defaults>
</compile_context>

<pallas_src>
import functools

import jax
import jax.numpy as jnp
from jax import lax
from jax.experimental import pallas as pl
from jax.experimental.pallas import tpu as pltpu

_EPS = 1e-5
_LANE = 128


def _round_up(x, m):
    return (x + m - 1) // m * m


# --------------------------------------------------------------------------- #
# Pallas kernels
# --------------------------------------------------------------------------- #
def _stats_kernel(x_ref, s_ref, ss_ref):
    """Per-channel sum / sum-of-squares of one NHWC image (per-step partials)."""
    c = x_ref.shape[-1]
    x = x_ref[...].reshape(-1, c)                            # (H*W, C) f32
    s_ref[...] = jnp.sum(x, axis=0, keepdims=True).reshape(1, 1, c)
    ss_ref[...] = jnp.sum(x * x, axis=0, keepdims=True).reshape(1, 1, c)


def _fused_conv(xp_ref, w_ref, b_ref, sc_ref, sh_ref, z_ref, *, k, pad, h, w,
                c_in, c_out):
    """relu(x*scale+shift) -> kxk conv via on-chip im2col -> + bias.

    xp_ref : (1, H+2p, W+2p, c_in)  spatially zero-padded input image
    w_ref  : (k*k, c_in, c_out)     weights, [kh, kw]-major
    b_ref  : (1, c_out)             bias
    sc_ref, sh_ref : (1, 1, c_in)   folded BatchNorm scale / shift
    z_ref  : (H+2p, W+2p, c_in)     VMEM scratch for the normalized activation
    Returns the (H*W, c_out) f32 accumulator (bias already added).
    """
    hp, wp = h + 2 * pad, w + 2 * pad
    xb = xp_ref[0].astype(jnp.float32)
    z = jnp.maximum(xb * sc_ref[...] + sh_ref[...], 0.0)
    # Conv zero-padding happens AFTER bn+relu in the module, so the halo ring
    # (which would otherwise hold relu(shift) != 0) is masked back to zero.
    rows = lax.broadcasted_iota(jnp.int32, (hp, wp, c_in), 0)
    cols = lax.broadcasted_iota(jnp.int32, (hp, wp, c_in), 1)
    keep = ((rows >= pad) & (rows < pad + h) &
            (cols >= pad) & (cols < pad + w))
    z_ref[...] = jnp.where(keep, z, 0.0).astype(z_ref.dtype)

    # On-chip im2col: k*k shifted in-VMEM views, accumulated f32 matmuls.
    acc = jnp.zeros((h * w, c_out), jnp.float32)
    for kh in range(k):
        for kw in range(k):
            win = z_ref[kh:kh + h, kw:kw + w, :].reshape(h * w, c_in)
            acc = acc + jnp.dot(win, w_ref[kh * k + kw],
                                preferred_element_type=jnp.float32)
    return acc + b_ref[...]


def _conv1_kernel(xp_ref, w_ref, b_ref, sc_ref, sh_ref,
                  y_ref, s_ref, ss_ref, z_ref,
                  *, k, pad, h, w, c_in, c_out):
    acc = _fused_conv(xp_ref, w_ref, b_ref, sc_ref, sh_ref, z_ref,
                      k=k, pad=pad, h=h, w=w, c_in=c_in, c_out=c_out)
    # Fused per-channel statistics of THIS conv's output (what norm2 needs),
    # emitted as per-image partials so the grid axis stays fully parallel.
    s_ref[...] = jnp.sum(acc, axis=0, keepdims=True).reshape(1, 1, c_out)
    ss_ref[...] = jnp.sum(acc * acc, axis=0, keepdims=True).reshape(1, 1, c_out)
    y_ref[...] = acc.reshape(1, h, w, c_out).astype(y_ref.dtype)


def _conv2_kernel(yp_ref, w_ref, b_ref, sc_ref, sh_ref, res_ref,
                  o_ref, z_ref, *, k, pad, h, w, c_in, c_out):
    acc = _fused_conv(yp_ref, w_ref, b_ref, sc_ref, sh_ref, z_ref,
                      k=k, pad=pad, h=h, w=w, c_in=c_in, c_out=c_out)
    acc = acc + res_ref[0].astype(jnp.float32).reshape(h * w, c_out)  # residual
    o_ref[...] = acc.reshape(1, h, w, c_out).astype(o_ref.dtype)


# --------------------------------------------------------------------------- #
# Pallas wrappers
# --------------------------------------------------------------------------- #
def _channel_stats(x_nhwc):
    """Per-channel sum / sumsq of x, one image per grid step, reduced in glue."""
    n, h, w, c = x_nhwc.shape
    out_spec = pl.BlockSpec((1, 1, c), lambda i: (i, 0, 0))
    s, ss = pl.pallas_call(
        _stats_kernel,
        grid=(n,),
        in_specs=[pl.BlockSpec((1, h, w, c), lambda i: (i, 0, 0, 0))],
        out_specs=(out_spec, out_spec),
        out_shape=(jax.ShapeDtypeStruct((n, 1, c), jnp.float32),
                   jax.ShapeDtypeStruct((n, 1, c), jnp.float32)),
        compiler_params=pltpu.CompilerParams(
            dimension_semantics=("parallel",)),
    )(x_nhwc)
    return jnp.sum(s, axis=(0, 1)), jnp.sum(ss, axis=(0, 1))


def _conv1(x_pad, wt, b, scale, shift, *, k, pad, h, w_sp, compute_dtype):
    """Fused bn1-apply + relu + conv1 + output statistics."""
    n = x_pad.shape[0]
    cout, cin = wt.shape[0], wt.shape[1]
    cp = _round_up(cout, _LANE)                      # lane-dense intermediate
    hp, wp = h + 2 * pad, w_sp + 2 * pad

    w2 = jnp.transpose(wt, (2, 3, 1, 0)).reshape(k * k, cin, cout)
    w2 = jnp.pad(w2, ((0, 0), (0, 0), (0, cp - cout))).astype(compute_dtype)
    b2 = jnp.pad(b, (0, cp - cout)).reshape(1, cp).astype(jnp.float32)
    sc = scale.reshape(1, 1, cin).astype(jnp.float32)
    sh = shift.reshape(1, 1, cin).astype(jnp.float32)

    kernel = functools.partial(_conv1_kernel, k=k, pad=pad, h=h, w=w_sp,
                               c_in=cin, c_out=cp)
    stat_spec = pl.BlockSpec((1, 1, cp), lambda i: (i, 0, 0))
    return pl.pallas_call(
        kernel,
        grid=(n,),
        in_specs=[
            pl.BlockSpec((1, hp, wp, cin), lambda i: (i, 0, 0, 0)),
            pl.BlockSpec((k * k, cin, cp), lambda i: (0, 0, 0)),
            pl.BlockSpec((1, cp), lambda i: (0, 0)),
            pl.BlockSpec((1, 1, cin), lambda i: (0, 0, 0)),
            pl.BlockSpec((1, 1, cin), lambda i: (0, 0, 0)),
        ],
        out_specs=(
            pl.BlockSpec((1, h, w_sp, cp), lambda i: (i, 0, 0, 0)),
            stat_spec, stat_spec,
        ),
        out_shape=(
            jax.ShapeDtypeStruct((n, h, w_sp, cp), compute_dtype),
            jax.ShapeDtypeStruct((n, 1, cp), jnp.float32),
            jax.ShapeDtypeStruct((n, 1, cp), jnp.float32),
        ),
        scratch_shapes=[pltpu.VMEM((hp, wp, cin), compute_dtype)],
        compiler_params=pltpu.CompilerParams(
            dimension_semantics=("parallel",)),
    )(x_pad, w2, b2, sc, sh)


def _conv2(y_pad, wt, b, scale, shift, x_res, *, k, pad, h, w_sp, compute_dtype):
    """Fused bn2-apply + relu + conv2 + residual add."""
    n, hp, wp, cpi = y_pad.shape
    cout, cin = wt.shape[0], wt.shape[1]

    w2 = jnp.transpose(wt, (2, 3, 1, 0)).reshape(k * k, cin, cout)
    w2 = jnp.pad(w2, ((0, 0), (0, cpi - cin), (0, 0))).astype(compute_dtype)
    b2 = b.reshape(1, cout).astype(jnp.float32)
    # Zero-padded channels of conv1's output stay exactly zero through bn+relu.
    sc = jnp.pad(scale, (0, cpi - cin)).reshape(1, 1, cpi).astype(jnp.float32)
    sh = jnp.pad(shift, (0, cpi - cin)).reshape(1, 1, cpi).astype(jnp.float32)

    kernel = functools.partial(_conv2_kernel, k=k, pad=pad, h=h, w=w_sp,
                               c_in=cpi, c_out=cout)
    return pl.pallas_call(
        kernel,
        grid=(n,),
        in_specs=[
            pl.BlockSpec((1, hp, wp, cpi), lambda i: (i, 0, 0, 0)),
            pl.BlockSpec((k * k, cpi, cout), lambda i: (0, 0, 0)),
            pl.BlockSpec((1, cout), lambda i: (0, 0)),
            pl.BlockSpec((1, 1, cpi), lambda i: (0, 0, 0)),
            pl.BlockSpec((1, 1, cpi), lambda i: (0, 0, 0)),
            pl.BlockSpec((1, h, w_sp, cout), lambda i: (i, 0, 0, 0)),
        ],
        out_specs=pl.BlockSpec((1, h, w_sp, cout), lambda i: (i, 0, 0, 0)),
        out_shape=jax.ShapeDtypeStruct((n, h, w_sp, cout), jnp.float32),
        scratch_shapes=[pltpu.VMEM((hp, wp, cpi), compute_dtype)],
        compiler_params=pltpu.CompilerParams(
            dimension_semantics=("parallel",)),
    )(y_pad, w2, b2, sc, sh, x_res)


# --------------------------------------------------------------------------- #
# Glue (XLA) helpers
# --------------------------------------------------------------------------- #
def _bn_scale_shift(s, ss, m, gamma, beta):
    """Fold train-mode BatchNorm into per-channel y = x*scale + shift.
    Note: single-pass E[x^2]-E[x]^2 variance (clamped >= 0)."""
    mean = s / m
    var = jnp.maximum(ss / m - mean * mean, 0.0)
    scale = gamma * lax.rsqrt(var + _EPS)
    shift = beta - mean * scale
    return scale, shift


# --------------------------------------------------------------------------- #
# ResBlock2d forward
# --------------------------------------------------------------------------- #
def res_block_2d(x_nchw, params, *, kernel_size, padding,
                 compute_dtype=jnp.bfloat16):
    k, p = kernel_size, padding
    assert k == 2 * p + 1, "ResBlock2d conv must preserve spatial resolution"
    n, c, h, w = x_nchw.shape
    m = n * h * w

    x_nhwc = jnp.transpose(x_nchw, (0, 2, 3, 1))                    # NHWC
    x_pad = jnp.pad(x_nhwc, ((0, 0), (p, p), (p, p), (0, 0)))

    # ---- norm1 batch statistics (single Pallas read pass over x) ----
    s1, ss1 = _channel_stats(x_nhwc)
    scale1, shift1 = _bn_scale_shift(s1, ss1, m,
                                     params["norm1_gamma"], params["norm1_beta"])

    # ---- conv1 fused with bn1-apply + relu + on-chip im2col + output stats ----
    y1, s2p, ss2p = _conv1(x_pad, params["conv1_w"], params["conv1_b"],
                           scale1, shift1, k=k, pad=p, h=h, w_sp=w,
                           compute_dtype=compute_dtype)
    s2 = jnp.sum(s2p, axis=(0, 1))[:c]
    ss2 = jnp.sum(ss2p, axis=(0, 1))[:c]
    scale2, shift2 = _bn_scale_shift(s2, ss2, m,
                                     params["norm2_gamma"], params["norm2_beta"])

    # ---- conv2 fused with bn2-apply + relu + on-chip im2col + residual add ----
    y1_pad = jnp.pad(y1, ((0, 0), (p, p), (p, p), (0, 0)))
    out_nhwc = _conv2(y1_pad, params["conv2_w"], params["conv2_b"],
                      scale2, shift2, x_nhwc, k=k, pad=p, h=h, w_sp=w,
                      compute_dtype=compute_dtype)
    return jnp.transpose(out_nhwc, (0, 3, 1, 2))                     # NCHW


def init_res_block_params(key, in_features, kernel_size):
    c, k = in_features, kernel_size
    fan_in = c * k * k
    bound = 1.0 / (fan_in ** 0.5)
    ks = jax.random.split(key, 8)
    return {
        "conv1_w": jax.random.uniform(ks[0], (c, c, k, k), jnp.float32, -bound, bound),
        "conv1_b": jax.random.uniform(ks[1], (c,), jnp.float32, -bound, bound),
        "conv2_w": jax.random.uniform(ks[2], (c, c, k, k), jnp.float32, -bound, bound),
        "conv2_b": jax.random.uniform(ks[3], (c,), jnp.float32, -bound, bound),
        "norm1_gamma": 1.0 + 0.1 * jax.random.normal(ks[4], (c,), jnp.float32),
        "norm1_beta": 0.1 * jax.random.normal(ks[5], (c,), jnp.float32),
        "norm2_gamma": 1.0 + 0.1 * jax.random.normal(ks[6], (c,), jnp.float32),
        "norm2_beta": 0.1 * jax.random.normal(ks[7], (c,), jnp.float32),
    }


# --------------------------------------------------------------------------- #
# Pure-JAX reference
# --------------------------------------------------------------------------- #
def _ref_bn_train(x, gamma, beta):
    mean = jnp.mean(x, axis=(0, 2, 3), keepdims=True)
    var = jnp.mean(jnp.square(x - mean), axis=(0, 2, 3), keepdims=True)
    xh = (x - mean) / jnp.sqrt(var + _EPS)
    return xh * gamma.reshape(1, -1, 1, 1) + beta.reshape(1, -1, 1, 1)


def _ref_conv(x, w, b, padding):
    y = lax.conv_general_dilated(
        x, w, window_strides=(1, 1), padding=[(padding, padding)] * 2,
        dimension_numbers=("NCHW", "OIHW", "NCHW"),
        precision=lax.Precision.HIGHEST)
    return y + b.reshape(1, -1, 1, 1)


def _ref_res_block(x, params, padding):
    out = _ref_bn_train(x, params["norm1_gamma"], params["norm1_beta"])
    out = jnp.maximum(out, 0.0)
    out = _ref_conv(out, params["conv1_w"], params["conv1_b"], padding)
    out = _ref_bn_train(out, params["norm2_gamma"], params["norm2_beta"])
    out = jnp.maximum(out, 0.0)
    out = _ref_conv(out, params["conv2_w"], params["conv2_b"], padding)
    return out + x


if __name__ == "__main__":
    key = jax.random.PRNGKey(0)
    kx, kp = jax.random.split(key)

    in_features, kernel_size, padding = 32, 3, 1
    x = jax.random.normal(kx, (2, in_features, 16, 16), jnp.float32)   # NCHW
    params = init_res_block_params(kp, in_features, kernel_size)

    fwd = jax.jit(functools.partial(res_block_2d, kernel_size=kernel_size,
                                    padding=padding,
                                    compute_dtype=jnp.bfloat16))
    out = fwd(x, params)
    jax.block_until_ready(out)

    ref = _ref_res_block(x, params, padding)
    assert out.shape == ref.shape, (out.shape, ref.shape)
    max_err = float(jnp.max(jnp.abs(out - ref)))
    # bf16 matmul operands (f32 accumulation) -> loosened tolerance vs the
    # HIGHEST-precision f32 reference; pass compute_dtype=jnp.float32 for 5e-3.
    assert jnp.allclose(out, ref, atol=5e-2, rtol=5e-2), max_err

    print("KERNEL_OK")
</pallas_src>

<mosaic_0001>
module attributes {stable_mosaic.version = 11 : i64} {
  func.func @_stats_kernel(%arg0: i32, %arg1: memref<1x16x16x32xf32, #tpu.memory_space<vmem>>, %arg2: memref<1x1x32xf32, #tpu.memory_space<vmem>>, %arg3: memref<1x1x32xf32, #tpu.memory_space<vmem>>) attributes {dimension_semantics = [#tpu.dimension_semantics<parallel>], iteration_bounds = array<i64: 2>, scalar_prefetch = 0 : i64, scratch_operands = 0 : i64, tpu.core_type = #tpu.core_type<tc>, window_params = [{transform_indices = @transform_0, window_bounds = array<i64: 1, 16, 16, 32>}, {transform_indices = @transform_1, window_bounds = array<i64: 1, 1, 32>}, {transform_indices = @transform_2, window_bounds = array<i64: 1, 1, 32>}]} {
    %c0 = arith.constant 0 : index
    %c0_0 = arith.constant 0 : index
    %c0_1 = arith.constant 0 : index
    %c0_2 = arith.constant 0 : index
    %0 = vector.load %arg1[%c0, %c0_0, %c0_1, %c0_2] : memref<1x16x16x32xf32, #tpu.memory_space<vmem>>, vector<1x16x16x32xf32>
    %1 = vector.shape_cast %0 : vector<1x16x16x32xf32> to vector<256x32xf32>
    %cst = arith.constant dense<0.000000e+00> : vector<32xf32>
    %2 = vector.multi_reduction <add>, %1, %cst [0] : vector<256x32xf32> to vector<32xf32>
    %3 = vector.shape_cast %2 : vector<32xf32> to vector<1x32xf32>
    %4 = vector.shape_cast %3 : vector<1x32xf32> to vector<1x1x32xf32>
    %c0_3 = arith.constant 0 : index
    %c0_4 = arith.constant 0 : index
    %c0_5 = arith.constant 0 : index
    %5 = vector.load %arg2[%c0_3, %c0_4, %c0_5] : memref<1x1x32xf32, #tpu.memory_space<vmem>>, vector<1x1x32xf32>
    tpu.vector_store %arg2[%c0_3, %c0_4, %c0_5], %4 {strides = array<i32>} : memref<1x1x32xf32, #tpu.memory_space<vmem>>, vector<1x1x32xf32>,
    %6 = arith.mulf %1, %1 : vector<256x32xf32>
    %cst_6 = arith.constant dense<0.000000e+00> : vector<32xf32>
    %7 = vector.multi_reduction <add>, %6, %cst_6 [0] : vector<256x32xf32> to vector<32xf32>
    %8 = vector.shape_cast %7 : vector<32xf32> to vector<1x32xf32>
    %9 = vector.shape_cast %8 : vector<1x32xf32> to vector<1x1x32xf32>
    %c0_7 = arith.constant 0 : index
    %c0_8 = arith.constant 0 : index
    %c0_9 = arith.constant 0 : index
    %10 = vector.load %arg3[%c0_7, %c0_8, %c0_9] : memref<1x1x32xf32, #tpu.memory_space<vmem>>, vector<1x1x32xf32>
    tpu.vector_store %arg3[%c0_7, %c0_8, %c0_9], %9 {strides = array<i32>} : memref<1x1x32xf32, #tpu.memory_space<vmem>>, vector<1x1x32xf32>,
    return
  }
  func.func @transform_0(%arg0: i32) -> (i32, i32, i32, i32) {
    %c0_i32 = arith.constant 0 : i32
    %c0_i32_0 = arith.constant 0 : i32
    %c0_i32_1 = arith.constant 0 : i32
    %c0_i32_2 = arith.constant 0 : i32
    return %arg0, %c0_i32, %c0_i32_0, %c0_i32_1 : i32, i32, i32, i32
  }
  func.func @transform_1(%arg0: i32) -> (i32, i32, i32) {
    %c0_i32 = arith.constant 0 : i32
    %c0_i32_0 = arith.constant 0 : i32
    %c0_i32_1 = arith.constant 0 : i32
    return %arg0, %c0_i32, %c0_i32_0 : i32, i32, i32
  }
  func.func @transform_2(%arg0: i32) -> (i32, i32, i32) {
    %c0_i32 = arith.constant 0 : i32
    %c0_i32_0 = arith.constant 0 : i32
    %c0_i32_1 = arith.constant 0 : i32
    return %arg0, %c0_i32, %c0_i32_0 : i32, i32, i32
  }
}

module attributes {stable_mosaic.version = 11 : i64} {
  func.func @_conv1_kernel(%arg0: i32, %arg1: memref<1x18x18x32xf32, #tpu.memory_space<vmem>>, %arg2: memref<9x32x128xbf16, #tpu.memory_space<vmem>>, %arg3: memref<1x128xf32, #tpu.memory_space<vmem>>, %arg4: memref<1x1x32xf32, #tpu.memory_space<vmem>>, %arg5: memref<1x1x32xf32, #tpu.memory_space<vmem>>, %arg6: memref<1x16x16x128xbf16, #tpu.memory_space<vmem>>, %arg7: memref<1x1x128xf32, #tpu.memory_space<vmem>>, %arg8: memref<1x1x128xf32, #tpu.memory_space<vmem>>, %arg9: memref<18x18x32xbf16, #tpu.memory_space<vmem>>) attributes {dimension_semantics = [#tpu.dimension_semantics<parallel>], iteration_bounds = array<i64: 2>, scalar_prefetch = 0 : i64, scratch_operands = 1 : i64, tpu.core_type = #tpu.core_type<tc>, window_params = [{transform_indices = @transform_0, window_bounds = array<i64: 1, 18, 18, 32>}, {pipeline_mode = #tpu.pipeline_mode<synchronous>, transform_indices = @transform_1, window_bounds = array<i64: 9, 32, 128>}, {pipeline_mode = #tpu.pipeline_mode<synchronous>, transform_indices = @transform_2, window_bounds = array<i64: 1, 128>}, {pipeline_mode = #tpu.pipeline_mode<synchronous>, transform_indices = @transform_3, window_bounds = array<i64: 1, 1, 32>}, {pipeline_mode = #tpu.pipeline_mode<synchronous>, transform_indices = @transform_4, window_bounds = array<i64: 1, 1, 32>}, {transform_indices = @transform_5, window_bounds = array<i64: 1, 16, 16, 128>}, {transform_indices = @transform_6, window_bounds = array<i64: 1, 1, 128>}, {transform_indices = @transform_7, window_bounds = array<i64: 1, 1, 128>}]} {
    %c0 = arith.constant 0 : index
    %c0_0 = arith.constant 0 : index
    %c0_1 = arith.constant 0 : index
    %c0_2 = arith.constant 0 : index
    %0 = vector.load %arg1[%c0, %c0_0, %c0_1, %c0_2] : memref<1x18x18x32xf32, #tpu.memory_space<vmem>>, vector<1x18x18x32xf32>
    %1 = vector.shape_cast %0 : vector<1x18x18x32xf32> to vector<18x18x32xf32>
    %c0_3 = arith.constant 0 : index
    %c0_4 = arith.constant 0 : index
    %c0_5 = arith.constant 0 : index
    %2 = vector.load %arg4[%c0_3, %c0_4, %c0_5] : memref<1x1x32xf32, #tpu.memory_space<vmem>>, vector<1x1x32xf32>
    %3 = vector.broadcast %2 : vector<1x1x32xf32> to vector<18x18x32xf32>
    %4 = arith.mulf %1, %3 : vector<18x18x32xf32>
    %c0_6 = arith.constant 0 : index
    %c0_7 = arith.constant 0 : index
    %c0_8 = arith.constant 0 : index
    %5 = vector.load %arg5[%c0_6, %c0_7, %c0_8] : memref<1x1x32xf32, #tpu.memory_space<vmem>>, vector<1x1x32xf32>
    %6 = vector.broadcast %5 : vector<1x1x32xf32> to vector<18x18x32xf32>
    %7 = arith.addf %4, %6 : vector<18x18x32xf32>
    %cst = arith.constant 0.000000e+00 : f32
    %8 = vector.broadcast %cst : f32 to vector<18x18x32xf32>
    %9 = arith.maximumf %7, %8 : vector<18x18x32xf32>
    %10 = tpu.iota {dimensions = array<i32: 0>} : vector<18x18x32xi32>
    %11 = tpu.iota {dimensions = array<i32: 1>} : vector<18x18x32xi32>
    %c1_i32 = arith.constant 1 : i32
    %12 = vector.broadcast %c1_i32 : i32 to vector<18x18x32xi32>
    %13 = arith.cmpi sge, %10, %12 : vector<18x18x32xi32>
    %c17_i32 = arith.constant 17 : i32
    %14 = vector.broadcast %c17_i32 : i32 to vector<18x18x32xi32>
    %15 = arith.cmpi slt, %10, %14 : vector<18x18x32xi32>
    %16 = arith.andi %13, %15 : vector<18x18x32xi1>
    %c1_i32_9 = arith.constant 1 : i32
    %17 = vector.broadcast %c1_i32_9 : i32 to vector<18x18x32xi32>
    %18 = arith.cmpi sge, %11, %17 : vector<18x18x32xi32>
    %19 = arith.andi %16, %18 : vector<18x18x32xi1>
    %c17_i32_10 = arith.constant 17 : i32
    %20 = vector.broadcast %c17_i32_10 : i32 to vector<18x18x32xi32>
    %21 = arith.cmpi slt, %11, %20 : vector<18x18x32xi32>
    %22 = arith.andi %19, %21 : vector<18x18x32xi1>
    %cst_11 = arith.constant 0.000000e+00 : f32
    %23 = vector.broadcast %cst_11 : f32 to vector<18x18x32xf32>
    %24 = arith.select %22, %9, %23 : vector<18x18x32xi1>, vector<18x18x32xf32>
    %25 = arith.truncf %24 : vector<18x18x32xf32> to vector<18x18x32xbf16>
    %c0_12 = arith.constant 0 : index
    %c0_13 = arith.constant 0 : index
    %c0_14 = arith.constant 0 : index
    %26 = vector.load %arg9[%c0_12, %c0_13, %c0_14] : memref<18x18x32xbf16, #tpu.memory_space<vmem>>, vector<18x18x32xbf16>
    tpu.vector_store %arg9[%c0_12, %c0_13, %c0_14], %25 {strides = array<i32>} : memref<18x18x32xbf16, #tpu.memory_space<vmem>>, vector<18x18x32xbf16>,
    %cst_15 = arith.constant 0.000000e+00 : f32
    %27 = vector.broadcast %cst_15 : f32 to vector<256x128xf32>
    %c0_16 = arith.constant 0 : index
    %c0_17 = arith.constant 0 : index
    %c0_18 = arith.constant 0 : index
    %28 = vector.load %arg9[%c0_16, %c0_17, %c0_18] : memref<18x18x32xbf16, #tpu.memory_space<vmem>>, vector<16x16x32xbf16>
    %29 = vector.shape_cast %28 : vector<16x16x32xbf16> to vector<256x32xbf16>
    %c0_19 = arith.constant 0 : index
    %c0_20 = arith.constant 0 : index
    %c0_21 = arith.constant 0 : index
    %30 = vector.load %arg2[%c0_19, %c0_20, %c0_21] : memref<9x32x128xbf16, #tpu.memory_space<vmem>>, vector<1x32x128xbf16>
    %31 = vector.shape_cast %30 : vector<1x32x128xbf16> to vector<32x128xbf16>
    %cst_22 = arith.constant dense<0.000000e+00> : vector<256x128xf32>
    %32 = tpu.matmul %29, %31, %cst_22 {dimension_numbers = #tpu.dot_dimension_numbers<[1], [0], [0], [1], [0, 0, 1, 1], [], []>} : vector<256x32xbf16>, vector<32x128xbf16>, vector<256x128xf32> -> vector<256x128xf32>
    %33 = arith.addf %27, %32 : vector<256x128xf32>
    %c0_23 = arith.constant 0 : index
    %c1 = arith.constant 1 : index
    %c0_24 = arith.constant 0 : index
    %34 = vector.load %arg9[%c0_23, %c1, %c0_24] : memref<18x18x32xbf16, #tpu.memory_space<vmem>>, vector<16x16x32xbf16>
    %35 = vector.shape_cast %34 : vector<16x16x32xbf16> to vector<256x32xbf16>
    %c1_25 = arith.constant 1 : index
    %c0_26 = arith.constant 0 : index
    %c0_27 = arith.constant 0 : index
    %36 = vector.load %arg2[%c1_25, %c0_26, %c0_27] : memref<9x32x128xbf16, #tpu.memory_space<vmem>>, vector<1x32x128xbf16>
    %37 = vector.shape_cast %36 : vector<1x32x128xbf16> to vector<32x128xbf16>
    %cst_28 = arith.constant dense<0.000000e+00> : vector<256x128xf32>
    %38 = tpu.matmul %35, %37, %cst_28 {dimension_numbers = #tpu.dot_dimension_numbers<[1], [0], [0], [1], [0, 0, 1, 1], [], []>} : vector<256x32xbf16>, vector<32x128xbf16>, vector<256x128xf32> -> vector<256x128xf32>
    %39 = arith.addf %33, %38 : vector<256x128xf32>
    %c0_29 = arith.constant 0 : index
    %c2 = arith.constant 2 : index
    %c0_30 = arith.constant 0 : index
    %40 = vector.load %arg9[%c0_29, %c2, %c0_30] : memref<18x18x32xbf16, #tpu.memory_space<vmem>>, vector<16x16x32xbf16>
    %41 = vector.shape_cast %40 : vector<16x16x32xbf16> to vector<256x32xbf16>
    %c2_31 = arith.constant 2 : index
    %c0_32 = arith.constant 0 : index
    %c0_33 = arith.constant 0 : index
    %42 = vector.load %arg2[%c2_31, %c0_32, %c0_33] : memref<9x32x128xbf16, #tpu.memory_space<vmem>>, vector<1x32x128xbf16>
    %43 = vector.shape_cast %42 : vector<1x32x128xbf16> to vector<32x128xbf16>
    %cst_34 = arith.constant dense<0.000000e+00> : vector<256x128xf32>
    %44 = tpu.matmul %41, %43, %cst_34 {dimension_numbers = #tpu.dot_dimension_numbers<[1], [0], [0], [1], [0, 0, 1, 1], [], []>} : vector<256x32xbf16>, vector<32x128xbf16>, vector<256x128xf32> -> vector<256x128xf32>
    %45 = arith.addf %39, %44 : vector<256x128xf32>
    %c1_35 = arith.constant 1 : index
    %c0_36 = arith.constant 0 : index
    %c0_37 = arith.constant 0 : index
    %46 = vector.load %arg9[%c1_35, %c0_36, %c0_37] : memref<18x18x32xbf16, #tpu.memory_space<vmem>>, vector<16x16x32xbf16>
    %47 = vector.shape_cast %46 : vector<16x16x32xbf16> to vector<256x32xbf16>
    %c3 = arith.constant 3 : index
    %c0_38 = arith.constant 0 : index
    %c0_39 = arith.constant 0 : index
    %48 = vector.load %arg2[%c3, %c0_38, %c0_39] : memref<9x32x128xbf16, #tpu.memory_space<vmem>>, vector<1x32x128xbf16>
    %49 = vector.shape_cast %48 : vector<1x32x128xbf16> to vector<32x128xbf16>
    %cst_40 = arith.constant dense<0.000000e+00> : vector<256x128xf32>
    %50 = tpu.matmul %47, %49, %cst_40 {dimension_numbers = #tpu.dot_dimension_numbers<[1], [0], [0], [1], [0, 0, 1, 1], [], []>} : vector<256x32xbf16>, vector<32x128xbf16>, vector<256x128xf32> -> vector<256x128xf32>
    %51 = arith.addf %45, %50 : vector<256x128xf32>
    %c1_41 = arith.constant 1 : index
    %c1_42 = arith.constant 1 : index
    %c0_43 = arith.constant 0 : index
    %52 = vector.load %arg9[%c1_41, %c1_42, %c0_43] : memref<18x18x32xbf16, #tpu.memory_space<vmem>>, vector<16x16x32xbf16>
    %53 = vector.shape_cast %52 : vector<16x16x32xbf16> to vector<256x32xbf16>
    %c4 = arith.constant 4 : index
    %c0_44 = arith.constant 0 : index
    %c0_45 = arith.constant 0 : index
    %54 = vector.load %arg2[%c4, %c0_44, %c0_45] : memref<9x32x128xbf16, #tpu.memory_space<vmem>>, vector<1x32x128xbf16>
    %55 = vector.shape_cast %54 : vector<1x32x128xbf16> to vector<32x128xbf16>
    %cst_46 = arith.constant dense<0.000000e+00> : vector<256x128xf32>
    %56 = tpu.matmul %53, %55, %cst_46 {dimension_numbers = #tpu.dot_dimension_numbers<[1], [0], [0], [1], [0, 0, 1, 1], [], []>} : vector<256x32xbf16>, vector<32x128xbf16>, vector<256x128xf32> -> vector<256x128xf32>
    %57 = arith.addf %51, %56 : vector<256x128xf32>
    %c1_47 = arith.constant 1 : index
    %c2_48 = arith.constant 2 : index
    %c0_49 = arith.constant 0 : index
    %58 = vector.load %arg9[%c1_47, %c2_48, %c0_49] : memref<18x18x32xbf16, #tpu.memory_space<vmem>>, vector<16x16x32xbf16>
    %59 = vector.shape_cast %58 : vector<16x16x32xbf16> to vector<256x32xbf16>
    %c5 = arith.constant 5 : index
    %c0_50 = arith.constant 0 : index
    %c0_51 = arith.constant 0 : index
    %60 = vector.load %arg2[%c5, %c0_50, %c0_51] : memref<9x32x128xbf16, #tpu.memory_space<vmem>>, vector<1x32x128xbf16>
    %61 = vector.shape_cast %60 : vector<1x32x128xbf16> to vector<32x128xbf16>
    %cst_52 = arith.constant dense<0.000000e+00> : vector<256x128xf32>
    %62 = tpu.matmul %59, %61, %cst_52 {dimension_numbers = #tpu.dot_dimension_numbers<[1], [0], [0], [1], [0, 0, 1, 1], [], []>} : vector<256x32xbf16>, vector<32x128xbf16>, vector<256x128xf32> -> vector<256x128xf32>
    %63 = arith.addf %57, %62 : vector<256x128xf32>
    %c2_53 = arith.constant 2 : index
    %c0_54 = arith.constant 0 : index
    %c0_55 = arith.constant 0 : index
    %64 = vector.load %arg9[%c2_53, %c0_54, %c0_55] : memref<18x18x32xbf16, #tpu.memory_space<vmem>>, vector<16x16x32xbf16>
    %65 = vector.shape_cast %64 : vector<16x16x32xbf16> to vector<256x32xbf16>
    %c6 = arith.constant 6 : index
    %c0_56 = arith.constant 0 : index
    %c0_57 = arith.constant 0 : index
    %66 = vector.load %arg2[%c6, %c0_56, %c0_57] : memref<9x32x128xbf16, #tpu.memory_space<vmem>>, vector<1x32x128xbf16>
    %67 = vector.shape_cast %66 : vector<1x32x128xbf16> to vector<32x128xbf16>
    %cst_58 = arith.constant dense<0.000000e+00> : vector<256x128xf32>
    %68 = tpu.matmul %65, %67, %cst_58 {dimension_numbers = #tpu.dot_dimension_numbers<[1], [0], [0], [1], [0, 0, 1, 1], [], []>} : vector<256x32xbf16>, vector<32x128xbf16>, vector<256x128xf32> -> vector<256x128xf32>
    %69 = arith.addf %63, %68 : vector<256x128xf32>
    %c2_59 = arith.constant 2 : index
    %c1_60 = arith.constant 1 : index
    %c0_61 = arith.constant 0 : index
    %70 = vector.load %arg9[%c2_59, %c1_60, %c0_61] : memref<18x18x32xbf16, #tpu.memory_space<vmem>>, vector<16x16x32xbf16>
    %71 = vector.shape_cast %70 : vector<16x16x32xbf16> to vector<256x32xbf16>
    %c7 = arith.constant 7 : index
    %c0_62 = arith.constant 0 : index
    %c0_63 = arith.constant 0 : index
    %72 = vector.load %arg2[%c7, %c0_62, %c0_63] : memref<9x32x128xbf16, #tpu.memory_space<vmem>>, vector<1x32x128xbf16>
    %73 = vector.shape_cast %72 : vector<1x32x128xbf16> to vector<32x128xbf16>
    %cst_64 = arith.constant dense<0.000000e+00> : vector<256x128xf32>
    %74 = tpu.matmul %71, %73, %cst_64 {dimension_numbers = #tpu.dot_dimension_numbers<[1], [0], [0], [1], [0, 0, 1, 1], [], []>} : vector<256x32xbf16>, vector<32x128xbf16>, vector<256x128xf32> -> vector<256x128xf32>
    %75 = arith.addf %69, %74 : vector<256x128xf32>
    %c2_65 = arith.constant 2 : index
    %c2_66 = arith.constant 2 : index
    %c0_67 = arith.constant 0 : index
    %76 = vector.load %arg9[%c2_65, %c2_66, %c0_67] : memref<18x18x32xbf16, #tpu.memory_space<vmem>>, vector<16x16x32xbf16>
    %77 = vector.shape_cast %76 : vector<16x16x32xbf16> to vector<256x32xbf16>
    %c8 = arith.constant 8 : index
    %c0_68 = arith.constant 0 : index
    %c0_69 = arith.constant 0 : index
    %78 = vector.load %arg2[%c8, %c0_68, %c0_69] : memref<9x32x128xbf16, #tpu.memory_space<vmem>>, vector<1x32x128xbf16>
    %79 = vector.shape_cast %78 : vector<1x32x128xbf16> to vector<32x128xbf16>
    %cst_70 = arith.constant dense<0.000000e+00> : vector<256x128xf32>
    %80 = tpu.matmul %77, %79, %cst_70 {dimension_numbers = #tpu.dot_dimension_numbers<[1], [0], [0], [1], [0, 0, 1, 1], [], []>} : vector<256x32xbf16>, vector<32x128xbf16>, vector<256x128xf32> -> vector<256x128xf32>
    %81 = arith.addf %75, %80 : vector<256x128xf32>
    %c0_71 = arith.constant 0 : index
    %c0_72 = arith.constant 0 : index
    %82 = vector.load %arg3[%c0_71, %c0_72] : memref<1x128xf32, #tpu.memory_space<vmem>>, vector<1x128xf32>
    %83 = vector.broadcast %82 : vector<1x128xf32> to vector<256x128xf32>
    %84 = arith.addf %81, %83 : vector<256x128xf32>
    %cst_73 = arith.constant dense<0.000000e+00> : vector<128xf32>
    %85 = vector.multi_reduction <add>, %84, %cst_73 [0] : vector<256x128xf32> to vector<128xf32>
    %86 = vector.shape_cast %85 : vector<128xf32> to vector<1x128xf32>
    %87 = vector.shape_cast %86 : vector<1x128xf32> to vector<1x1x128xf32>
    %c0_74 = arith.constant 0 : index
    %c0_75 = arith.constant 0 : index
    %c0_76 = arith.constant 0 : index
    %88 = vector.load %arg7[%c0_74, %c0_75, %c0_76] : memref<1x1x128xf32, #tpu.memory_space<vmem>>, vector<1x1x128xf32>
    tpu.vector_store %arg7[%c0_74, %c0_75, %c0_76], %87 {strides = array<i32>} : memref<1x1x128xf32, #tpu.memory_space<vmem>>, vector<1x1x128xf32>,
    %89 = arith.mulf %84, %84 : vector<256x128xf32>
    %cst_77 = arith.constant dense<0.000000e+00> : vector<128xf32>
    %90 = vector.multi_reduction <add>, %89, %cst_77 [0] : vector<256x128xf32> to vector<128xf32>
    %91 = vector.shape_cast %90 : vector<128xf32> to vector<1x128xf32>
    %92 = vector.shape_cast %91 : vector<1x128xf32> to vector<1x1x128xf32>
    %c0_78 = arith.constant 0 : index
    %c0_79 = arith.constant 0 : index
    %c0_80 = arith.constant 0 : index
    %93 = vector.load %arg8[%c0_78, %c0_79, %c0_80] : memref<1x1x128xf32, #tpu.memory_space<vmem>>, vector<1x1x128xf32>
    tpu.vector_store %arg8[%c0_78, %c0_79, %c0_80], %92 {strides = array<i32>} : memref<1x1x128xf32, #tpu.memory_space<vmem>>, vector<1x1x128xf32>,
    %94 = vector.shape_cast %84 : vector<256x128xf32> to vector<1x16x16x128xf32>
    %95 = arith.truncf %94 : vector<1x16x16x128xf32> to vector<1x16x16x128xbf16>
    %c0_81 = arith.constant 0 : index
    %c0_82 = arith.constant 0 : index
    %c0_83 = arith.constant 0 : index
    %c0_84 = arith.constant 0 : index
    %96 = vector.load %arg6[%c0_81, %c0_82, %c0_83, %c0_84] : memref<1x16x16x128xbf16, #tpu.memory_space<vmem>>, vector<1x16x16x128xbf16>
    tpu.vector_store %arg6[%c0_81, %c0_82, %c0_83, %c0_84], %95 {strides = array<i32>} : memref<1x16x16x128xbf16, #tpu.memory_space<vmem>>, vector<1x16x16x128xbf16>,
    return
  }
  func.func @transform_0(%arg0: i32) -> (i32, i32, i32, i32) {
    %c0_i32 = arith.constant 0 : i32
    %c0_i32_0 = arith.constant 0 : i32
    %c0_i32_1 = arith.constant 0 : i32
    %c0_i32_2 = arith.constant 0 : i32
    return %arg0, %c0_i32, %c0_i32_0, %c0_i32_1 : i32, i32, i32, i32
  }
  func.func @transform_1(%arg0: i32) -> (i32, i32, i32) {
    %c0_i32 = arith.constant 0 : i32
    %c0_i32_0 = arith.constant 0 : i32
    %c0_i32_1 = arith.constant 0 : i32
    %c0_i32_2 = arith.constant 0 : i32
    return %c0_i32, %c0_i32_0, %c0_i32_1 : i32, i32, i32
  }
  func.func @transform_2(%arg0: i32) -> (i32, i32) {
    %c0_i32 = arith.constant 0 : i32
    %c0_i32_0 = arith.constant 0 : i32
    %c0_i32_1 = arith.constant 0 : i32
    return %c0_i32, %c0_i32_0 : i32, i32
  }
  func.func @transform_3(%arg0: i32) -> (i32, i32, i32) {
    %c0_i32 = arith.constant 0 : i32
    %c0_i32_0 = arith.constant 0 : i32
    %c0_i32_1 = arith.constant 0 : i32
    %c0_i32_2 = arith.constant 0 : i32
    return %c0_i32, %c0_i32_0, %c0_i32_1 : i32, i32, i32
  }
  func.func @transform_4(%arg0: i32) -> (i32, i32, i32) {
    %c0_i32 = arith.constant 0 : i32
    %c0_i32_0 = arith.constant 0 : i32
    %c0_i32_1 = arith.constant 0 : i32
    %c0_i32_2 = arith.constant 0 : i32
    return %c0_i32, %c0_i32_0, %c0_i32_1 : i32, i32, i32
  }
  func.func @transform_5(%arg0: i32) -> (i32, i32, i32, i32) {
    %c0_i32 = arith.constant 0 : i32
    %c0_i32_0 = arith.constant 0 : i32
    %c0_i32_1 = arith.constant 0 : i32
    %c0_i32_2 = arith.constant 0 : i32
    return %arg0, %c0_i32, %c0_i32_0, %c0_i32_1 : i32, i32, i32, i32
  }
  func.func @transform_6(%arg0: i32) -> (i32, i32, i32) {
    %c0_i32 = arith.constant 0 : i32
    %c0_i32_0 = arith.constant 0 : i32
    %c0_i32_1 = arith.constant 0 : i32
    return %arg0, %c0_i32, %c0_i32_0 : i32, i32, i32
  }
  func.func @transform_7(%arg0: i32) -> (i32, i32, i32) {
    %c0_i32 = arith.constant 0 : i32
    %c0_i32_0 = arith.constant 0 : i32
    %c0_i32_1 = arith.constant 0 : i32
    return %arg0, %c0_i32, %c0_i32_0 : i32, i32, i32
  }
}

module attributes {stable_mosaic.version = 11 : i64} {
  func.func @_conv2_kernel(%arg0: i32, %arg1: memref<1x18x18x128xbf16, #tpu.memory_space<vmem>>, %arg2: memref<9x128x32xbf16, #tpu.memory_space<vmem>>, %arg3: memref<1x32xf32, #tpu.memory_space<vmem>>, %arg4: memref<1x1x128xf32, #tpu.memory_space<vmem>>, %arg5: memref<1x1x128xf32, #tpu.memory_space<vmem>>, %arg6: memref<1x16x16x32xf32, #tpu.memory_space<vmem>>, %arg7: memref<1x16x16x32xf32, #tpu.memory_space<vmem>>, %arg8: memref<18x18x128xbf16, #tpu.memory_space<vmem>>) attributes {dimension_semantics = [#tpu.dimension_semantics<parallel>], iteration_bounds = array<i64: 2>, scalar_prefetch = 0 : i64, scratch_operands = 1 : i64, tpu.core_type = #tpu.core_type<tc>, window_params = [{transform_indices = @transform_0, window_bounds = array<i64: 1, 18, 18, 128>}, {pipeline_mode = #tpu.pipeline_mode<synchronous>, transform_indices = @transform_1, window_bounds = array<i64: 9, 128, 32>}, {pipeline_mode = #tpu.pipeline_mode<synchronous>, transform_indices = @transform_2, window_bounds = array<i64: 1, 32>}, {pipeline_mode = #tpu.pipeline_mode<synchronous>, transform_indices = @transform_3, window_bounds = array<i64: 1, 1, 128>}, {pipeline_mode = #tpu.pipeline_mode<synchronous>, transform_indices = @transform_4, window_bounds = array<i64: 1, 1, 128>}, {transform_indices = @transform_5, window_bounds = array<i64: 1, 16, 16, 32>}, {transform_indices = @transform_6, window_bounds = array<i64: 1, 16, 16, 32>}]} {
    %c0 = arith.constant 0 : index
    %c0_0 = arith.constant 0 : index
    %c0_1 = arith.constant 0 : index
    %c0_2 = arith.constant 0 : index
    %0 = vector.load %arg1[%c0, %c0_0, %c0_1, %c0_2] : memref<1x18x18x128xbf16, #tpu.memory_space<vmem>>, vector<1x18x18x128xbf16>
    %1 = vector.shape_cast %0 : vector<1x18x18x128xbf16> to vector<18x18x128xbf16>
    %2 = arith.extf %1 : vector<18x18x128xbf16> to vector<18x18x128xf32>
    %c0_3 = arith.constant 0 : index
    %c0_4 = arith.constant 0 : index
    %c0_5 = arith.constant 0 : index
    %3 = vector.load %arg4[%c0_3, %c0_4, %c0_5] : memref<1x1x128xf32, #tpu.memory_space<vmem>>, vector<1x1x128xf32>
    %4 = vector.broadcast %3 : vector<1x1x128xf32> to vector<18x18x128xf32>
    %5 = arith.mulf %2, %4 : vector<18x18x128xf32>
    %c0_6 = arith.constant 0 : index
    %c0_7 = arith.constant 0 : index
    %c0_8 = arith.constant 0 : index
    %6 = vector.load %arg5[%c0_6, %c0_7, %c0_8] : memref<1x1x128xf32, #tpu.memory_space<vmem>>, vector<1x1x128xf32>
    %7 = vector.broadcast %6 : vector<1x1x128xf32> to vector<18x18x128xf32>
    %8 = arith.addf %5, %7 : vector<18x18x128xf32>
    %cst = arith.constant 0.000000e+00 : f32
    %9 = vector.broadcast %cst : f32 to vector<18x18x128xf32>
    %10 = arith.maximumf %8, %9 : vector<18x18x128xf32>
    %11 = tpu.iota {dimensions = array<i32: 0>} : vector<18x18x128xi32>
    %12 = tpu.iota {dimensions = array<i32: 1>} : vector<18x18x128xi32>
    %c1_i32 = arith.constant 1 : i32
    %13 = vector.broadcast %c1_i32 : i32 to vector<18x18x128xi32>
    %14 = arith.cmpi sge, %11, %13 : vector<18x18x128xi32>
    %c17_i32 = arith.constant 17 : i32
    %15 = vector.broadcast %c17_i32 : i32 to vector<18x18x128xi32>
    %16 = arith.cmpi slt, %11, %15 : vector<18x18x128xi32>
    %17 = arith.andi %14, %16 : vector<18x18x128xi1>
    %c1_i32_9 = arith.constant 1 : i32
    %18 = vector.broadcast %c1_i32_9 : i32 to vector<18x18x128xi32>
    %19 = arith.cmpi sge, %12, %18 : vector<18x18x128xi32>
    %20 = arith.andi %17, %19 : vector<18x18x128xi1>
    %c17_i32_10 = arith.constant 17 : i32
    %21 = vector.broadcast %c17_i32_10 : i32 to vector<18x18x128xi32>
    %22 = arith.cmpi slt, %12, %21 : vector<18x18x128xi32>
    %23 = arith.andi %20, %22 : vector<18x18x128xi1>
    %cst_11 = arith.constant 0.000000e+00 : f32
    %24 = vector.broadcast %cst_11 : f32 to vector<18x18x128xf32>
    %25 = arith.select %23, %10, %24 : vector<18x18x128xi1>, vector<18x18x128xf32>
    %26 = arith.truncf %25 : vector<18x18x128xf32> to vector<18x18x128xbf16>
    %c0_12 = arith.constant 0 : index
    %c0_13 = arith.constant 0 : index
    %c0_14 = arith.constant 0 : index
    %27 = vector.load %arg8[%c0_12, %c0_13, %c0_14] : memref<18x18x128xbf16, #tpu.memory_space<vmem>>, vector<18x18x128xbf16>
    tpu.vector_store %arg8[%c0_12, %c0_13, %c0_14], %26 {strides = array<i32>} : memref<18x18x128xbf16, #tpu.memory_space<vmem>>, vector<18x18x128xbf16>,
    %cst_15 = arith.constant 0.000000e+00 : f32
    %28 = vector.broadcast %cst_15 : f32 to vector<256x32xf32>
    %c0_16 = arith.constant 0 : index
    %c0_17 = arith.constant 0 : index
    %c0_18 = arith.constant 0 : index
    %29 = vector.load %arg8[%c0_16, %c0_17, %c0_18] : memref<18x18x128xbf16, #tpu.memory_space<vmem>>, vector<16x16x128xbf16>
    %30 = vector.shape_cast %29 : vector<16x16x128xbf16> to vector<256x128xbf16>
    %c0_19 = arith.constant 0 : index
    %c0_20 = arith.constant 0 : index
    %c0_21 = arith.constant 0 : index
    %31 = vector.load %arg2[%c0_19, %c0_20, %c0_21] : memref<9x128x32xbf16, #tpu.memory_space<vmem>>, vector<1x128x32xbf16>
    %32 = vector.shape_cast %31 : vector<1x128x32xbf16> to vector<128x32xbf16>
    %cst_22 = arith.constant dense<0.000000e+00> : vector<256x32xf32>
    %33 = tpu.matmul %30, %32, %cst_22 {dimension_numbers = #tpu.dot_dimension_numbers<[1], [0], [0], [1], [0, 0, 1, 1], [], []>} : vector<256x128xbf16>, vector<128x32xbf16>, vector<256x32xf32> -> vector<256x32xf32>
    %34 = arith.addf %28, %33 : vector<256x32xf32>
    %c0_23 = arith.constant 0 : index
    %c1 = arith.constant 1 : index
    %c0_24 = arith.constant 0 : index
    %35 = vector.load %arg8[%c0_23, %c1, %c0_24] : memref<18x18x128xbf16, #tpu.memory_space<vmem>>, vector<16x16x128xbf16>
    %36 = vector.shape_cast %35 : vector<16x16x128xbf16> to vector<256x128xbf16>
    %c1_25 = arith.constant 1 : index
    %c0_26 = arith.constant 0 : index
    %c0_27 = arith.constant 0 : index
    %37 = vector.load %arg2[%c1_25, %c0_26, %c0_27] : memref<9x128x32xbf16, #tpu.memory_space<vmem>>, vector<1x128x32xbf16>
    %38 = vector.shape_cast %37 : vector<1x128x32xbf16> to vector<128x32xbf16>
    %cst_28 = arith.constant dense<0.000000e+00> : vector<256x32xf32>
    %39 = tpu.matmul %36, %38, %cst_28 {dimension_numbers = #tpu.dot_dimension_numbers<[1], [0], [0], [1], [0, 0, 1, 1], [], []>} : vector<256x128xbf16>, vector<128x32xbf16>, vector<256x32xf32> -> vector<256x32xf32>
    %40 = arith.addf %34, %39 : vector<256x32xf32>
    %c0_29 = arith.constant 0 : index
    %c2 = arith.constant 2 : index
    %c0_30 = arith.constant 0 : index
    %41 = vector.load %arg8[%c0_29, %c2, %c0_30] : memref<18x18x128xbf16, #tpu.memory_space<vmem>>, vector<16x16x128xbf16>
    %42 = vector.shape_cast %41 : vector<16x16x128xbf16> to vector<256x128xbf16>
    %c2_31 = arith.constant 2 : index
    %c0_32 = arith.constant 0 : index
    %c0_33 = arith.constant 0 : index
    %43 = vector.load %arg2[%c2_31, %c0_32, %c0_33] : memref<9x128x32xbf16, #tpu.memory_space<vmem>>, vector<1x128x32xbf16>
    %44 = vector.shape_cast %43 : vector<1x128x32xbf16> to vector<128x32xbf16>
    %cst_34 = arith.constant dense<0.000000e+00> : vector<256x32xf32>
    %45 = tpu.matmul %42, %44, %cst_34 {dimension_numbers = #tpu.dot_dimension_numbers<[1], [0], [0], [1], [0, 0, 1, 1], [], []>} : vector<256x128xbf16>, vector<128x32xbf16>, vector<256x32xf32> -> vector<256x32xf32>
    %46 = arith.addf %40, %45 : vector<256x32xf32>
    %c1_35 = arith.constant 1 : index
    %c0_36 = arith.constant 0 : index
    %c0_37 = arith.constant 0 : index
    %47 = vector.load %arg8[%c1_35, %c0_36, %c0_37] : memref<18x18x128xbf16, #tpu.memory_space<vmem>>, vector<16x16x128xbf16>
    %48 = vector.shape_cast %47 : vector<16x16x128xbf16> to vector<256x128xbf16>
    %c3 = arith.constant 3 : index
    %c0_38 = arith.constant 0 : index
    %c0_39 = arith.constant 0 : index
    %49 = vector.load %arg2[%c3, %c0_38, %c0_39] : memref<9x128x32xbf16, #tpu.memory_space<vmem>>, vector<1x128x32xbf16>
    %50 = vector.shape_cast %49 : vector<1x128x32xbf16> to vector<128x32xbf16>
    %cst_40 = arith.constant dense<0.000000e+00> : vector<256x32xf32>
    %51 = tpu.matmul %48, %50, %cst_40 {dimension_numbers = #tpu.dot_dimension_numbers<[1], [0], [0], [1], [0, 0, 1, 1], [], []>} : vector<256x128xbf16>, vector<128x32xbf16>, vector<256x32xf32> -> vector<256x32xf32>
    %52 = arith.addf %46, %51 : vector<256x32xf32>
    %c1_41 = arith.constant 1 : index
    %c1_42 = arith.constant 1 : index
    %c0_43 = arith.constant 0 : index
    %53 = vector.load %arg8[%c1_41, %c1_42, %c0_43] : memref<18x18x128xbf16, #tpu.memory_space<vmem>>, vector<16x16x128xbf16>
    %54 = vector.shape_cast %53 : vector<16x16x128xbf16> to vector<256x128xbf16>
    %c4 = arith.constant 4 : index
    %c0_44 = arith.constant 0 : index
    %c0_45 = arith.constant 0 : index
    %55 = vector.load %arg2[%c4, %c0_44, %c0_45] : memref<9x128x32xbf16, #tpu.memory_space<vmem>>, vector<1x128x32xbf16>
    %56 = vector.shape_cast %55 : vector<1x128x32xbf16> to vector<128x32xbf16>
    %cst_46 = arith.constant dense<0.000000e+00> : vector<256x32xf32>
    %57 = tpu.matmul %54, %56, %cst_46 {dimension_numbers = #tpu.dot_dimension_numbers<[1], [0], [0], [1], [0, 0, 1, 1], [], []>} : vector<256x128xbf16>, vector<128x32xbf16>, vector<256x32xf32> -> vector<256x32xf32>
    %58 = arith.addf %52, %57 : vector<256x32xf32>
    %c1_47 = arith.constant 1 : index
    %c2_48 = arith.constant 2 : index
    %c0_49 = arith.constant 0 : index
    %59 = vector.load %arg8[%c1_47, %c2_48, %c0_49] : memref<18x18x128xbf16, #tpu.memory_space<vmem>>, vector<16x16x128xbf16>
    %60 = vector.shape_cast %59 : vector<16x16x128xbf16> to vector<256x128xbf16>
    %c5 = arith.constant 5 : index
    %c0_50 = arith.constant 0 : index
    %c0_51 = arith.constant 0 : index
    %61 = vector.load %arg2[%c5, %c0_50, %c0_51] : memref<9x128x32xbf16, #tpu.memory_space<vmem>>, vector<1x128x32xbf16>
    %62 = vector.shape_cast %61 : vector<1x128x32xbf16> to vector<128x32xbf16>
    %cst_52 = arith.constant dense<0.000000e+00> : vector<256x32xf32>
    %63 = tpu.matmul %60, %62, %cst_52 {dimension_numbers = #tpu.dot_dimension_numbers<[1], [0], [0], [1], [0, 0, 1, 1], [], []>} : vector<256x128xbf16>, vector<128x32xbf16>, vector<256x32xf32> -> vector<256x32xf32>
    %64 = arith.addf %58, %63 : vector<256x32xf32>
    %c2_53 = arith.constant 2 : index
    %c0_54 = arith.constant 0 : index
    %c0_55 = arith.constant 0 : index
    %65 = vector.load %arg8[%c2_53, %c0_54, %c0_55] : memref<18x18x128xbf16, #tpu.memory_space<vmem>>, vector<16x16x128xbf16>
    %66 = vector.shape_cast %65 : vector<16x16x128xbf16> to vector<256x128xbf16>
    %c6 = arith.constant 6 : index
    %c0_56 = arith.constant 0 : index
    %c0_57 = arith.constant 0 : index
    %67 = vector.load %arg2[%c6, %c0_56, %c0_57] : memref<9x128x32xbf16, #tpu.memory_space<vmem>>, vector<1x128x32xbf16>
    %68 = vector.shape_cast %67 : vector<1x128x32xbf16> to vector<128x32xbf16>
    %cst_58 = arith.constant dense<0.000000e+00> : vector<256x32xf32>
    %69 = tpu.matmul %66, %68, %cst_58 {dimension_numbers = #tpu.dot_dimension_numbers<[1], [0], [0], [1], [0, 0, 1, 1], [], []>} : vector<256x128xbf16>, vector<128x32xbf16>, vector<256x32xf32> -> vector<256x32xf32>
    %70 = arith.addf %64, %69 : vector<256x32xf32>
    %c2_59 = arith.constant 2 : index
    %c1_60 = arith.constant 1 : index
    %c0_61 = arith.constant 0 : index
    %71 = vector.load %arg8[%c2_59, %c1_60, %c0_61] : memref<18x18x128xbf16, #tpu.memory_space<vmem>>, vector<16x16x128xbf16>
    %72 = vector.shape_cast %71 : vector<16x16x128xbf16> to vector<256x128xbf16>
    %c7 = arith.constant 7 : index
    %c0_62 = arith.constant 0 : index
    %c0_63 = arith.constant 0 : index
    %73 = vector.load %arg2[%c7, %c0_62, %c0_63] : memref<9x128x32xbf16, #tpu.memory_space<vmem>>, vector<1x128x32xbf16>
    %74 = vector.shape_cast %73 : vector<1x128x32xbf16> to vector<128x32xbf16>
    %cst_64 = arith.constant dense<0.000000e+00> : vector<256x32xf32>
    %75 = tpu.matmul %72, %74, %cst_64 {dimension_numbers = #tpu.dot_dimension_numbers<[1], [0], [0], [1], [0, 0, 1, 1], [], []>} : vector<256x128xbf16>, vector<128x32xbf16>, vector<256x32xf32> -> vector<256x32xf32>
    %76 = arith.addf %70, %75 : vector<256x32xf32>
    %c2_65 = arith.constant 2 : index
    %c2_66 = arith.constant 2 : index
    %c0_67 = arith.constant 0 : index
    %77 = vector.load %arg8[%c2_65, %c2_66, %c0_67] : memref<18x18x128xbf16, #tpu.memory_space<vmem>>, vector<16x16x128xbf16>
    %78 = vector.shape_cast %77 : vector<16x16x128xbf16> to vector<256x128xbf16>
    %c8 = arith.constant 8 : index
    %c0_68 = arith.constant 0 : index
    %c0_69 = arith.constant 0 : index
    %79 = vector.load %arg2[%c8, %c0_68, %c0_69] : memref<9x128x32xbf16, #tpu.memory_space<vmem>>, vector<1x128x32xbf16>
    %80 = vector.shape_cast %79 : vector<1x128x32xbf16> to vector<128x32xbf16>
    %cst_70 = arith.constant dense<0.000000e+00> : vector<256x32xf32>
    %81 = tpu.matmul %78, %80, %cst_70 {dimension_numbers = #tpu.dot_dimension_numbers<[1], [0], [0], [1], [0, 0, 1, 1], [], []>} : vector<256x128xbf16>, vector<128x32xbf16>, vector<256x32xf32> -> vector<256x32xf32>
    %82 = arith.addf %76, %81 : vector<256x32xf32>
    %c0_71 = arith.constant 0 : index
    %c0_72 = arith.constant 0 : index
    %83 = vector.load %arg3[%c0_71, %c0_72] : memref<1x32xf32, #tpu.memory_space<vmem>>, vector<1x32xf32>
    %84 = vector.broadcast %83 : vector<1x32xf32> to vector<256x32xf32>
    %85 = arith.addf %82, %84 : vector<256x32xf32>
    %c0_73 = arith.constant 0 : index
    %c0_74 = arith.constant 0 : index
    %c0_75 = arith.constant 0 : index
    %c0_76 = arith.constant 0 : index
    %86 = vector.load %arg6[%c0_73, %c0_74, %c0_75, %c0_76] : memref<1x16x16x32xf32, #tpu.memory_space<vmem>>, vector<1x16x16x32xf32>
    %87 = vector.shape_cast %86 : vector<1x16x16x32xf32> to vector<16x16x32xf32>
    %88 = vector.shape_cast %87 : vector<16x16x32xf32> to vector<256x32xf32>
    %89 = arith.addf %85, %88 : vector<256x32xf32>
    %90 = vector.shape_cast %89 : vector<256x32xf32> to vector<1x16x16x32xf32>
    %c0_77 = arith.constant 0 : index
    %c0_78 = arith.constant 0 : index
    %c0_79 = arith.constant 0 : index
    %c0_80 = arith.constant 0 : index
    %91 = vector.load %arg7[%c0_77, %c0_78, %c0_79, %c0_80] : memref<1x16x16x32xf32, #tpu.memory_space<vmem>>, vector<1x16x16x32xf32>
    tpu.vector_store %arg7[%c0_77, %c0_78, %c0_79, %c0_80], %90 {strides = array<i32>} : memref<1x16x16x32xf32, #tpu.memory_space<vmem>>, vector<1x16x16x32xf32>,
    return
  }
  func.func @transform_0(%arg0: i32) -> (i32, i32, i32, i32) {
    %c0_i32 = arith.constant 0 : i32
    %c0_i32_0 = arith.constant 0 : i32
    %c0_i32_1 = arith.constant 0 : i32
    %c0_i32_2 = arith.constant 0 : i32
    return %arg0, %c0_i32, %c0_i32_0, %c0_i32_1 : i32, i32, i32, i32
  }
  func.func @transform_1(%arg0: i32) -> (i32, i32, i32) {
    %c0_i32 = arith.constant 0 : i32
    %c0_i32_0 = arith.constant 0 : i32
    %c0_i32_1 = arith.constant 0 : i32
    %c0_i32_2 = arith.constant 0 : i32
    return %c0_i32, %c0_i32_0, %c0_i32_1 : i32, i32, i32
  }
  func.func @transform_2(%arg0: i32) -> (i32, i32) {
    %c0_i32 = arith.constant 0 : i32
    %c0_i32_0 = arith.constant 0 : i32
    %c0_i32_1 = arith.constant 0 : i32
    return %c0_i32, %c0_i32_0 : i32, i32
  }
  func.func @transform_3(%arg0: i32) -> (i32, i32, i32) {
    %c0_i32 = arith.constant 0 : i32
    %c0_i32_0 = arith.constant 0 : i32
    %c0_i32_1 = arith.constant 0 : i32
    %c0_i32_2 = arith.constant 0 : i32
    return %c0_i32, %c0_i32_0, %c0_i32_1 : i32, i32, i32
  }
  func.func @transform_4(%arg0: i32) -> (i32, i32, i32) {
    %c0_i32 = arith.constant 0 : i32
    %c0_i32_0 = arith.constant 0 : i32
    %c0_i32_1 = arith.constant 0 : i32
    %c0_i32_2 = arith.constant 0 : i32
    return %c0_i32, %c0_i32_0, %c0_i32_1 : i32, i32, i32
  }
  func.func @transform_5(%arg0: i32) -> (i32, i32, i32, i32) {
    %c0_i32 = arith.constant 0 : i32
    %c0_i32_0 = arith.constant 0 : i32
    %c0_i32_1 = arith.constant 0 : i32
    %c0_i32_2 = arith.constant 0 : i32
    return %arg0, %c0_i32, %c0_i32_0, %c0_i32_1 : i32, i32, i32, i32
  }
  func.func @transform_6(%arg0: i32) -> (i32, i32, i32, i32) {
    %c0_i32 = arith.constant 0 : i32
    %c0_i32_0 = arith.constant 0 : i32
    %c0_i32_1 = arith.constant 0 : i32
    %c0_i32_2 = arith.constant 0 : i32
    return %arg0, %c0_i32, %c0_i32_0, %c0_i32_1 : i32, i32, i32, i32
  }
}

</mosaic_0001>

<llo_original>
// kernel: res_block_2d.3
$region0: #{res_block_2d.3}
  #allocation0 [shape = 'u32[]', space=smem, size = 0x4, offset = 0x4, fixed_abs, tag = 'smem constant byte address 0x4 - core index']
  #allocation1 [shape = 'u32[144,128]{1,0:T(1,128)}', space=vmem, size = 0x12000, scoped, tag = 'internal scratch']
  %s0 = inlined_call_operand.hbm [shape: f32[2,16,16,32], index: 0, kind: input, shape index: {}]
  %s1 = inlined_call_operand.vmem [shape: f32[2,1,32], index: 1, kind: output, shape index: {0}]
  %s2 = inlined_call_operand.vmem [shape: f32[2,1,32], index: 2, kind: output, shape index: {1}]
  %3 = xla_tuple %s1, %s2
  %s4 = sld [smem:[#allocation0]]
  $region49: #{res_block_2d.3} parent=0
    _
  %s6 = ssub.s32 1, %s4
  %s7 = scalar_select 0, %s6, %s4
  $region1: #{res_block_2d.3} parent=0
    #allocation2 [shape = 'u8[262144]{0}', space=vmem, size = 0x40000, scoped, tag = 'input window, operand 0']
    #allocation3 [shape = 's32[2]{0}', space=sflag, size = 0x8, scoped, tag = 'scoped memory for res_block_2d.3']
    %8 = vsyncpa [#allocation3], 0
    %s9 = scalar_lea.sflag [#allocation3], 1
    %10 = vsyncpa %s9, 0
    loop: start=0, step=1, limit=4
    $region2: #{res_block_2d.3} parent=1 // loop_pre_header
      _
    $region3: #{res_block_2d.3} parent=1 // loop_header
      %s12 = sphi 0, %s16
      %p13 = scmp.ge.s32.totalorder %s12, 4
      %s22 = sphi 0, %s24
      %s25 = sphi 0, %s22
      %s26 = sphi 0, %s25
      %s42 = sphi 0, %s26
      %s48 = sphi 0, %s50
      %s51 = sphi 0, %s48
      %s52 = sphi 0, %s51
      %s68 = sphi 0, %s52
      %s74 = sphi 0, %s76
      %s77 = sphi 0, %s74
      %s78 = sphi 0, %s77
      %s94 = sphi 0, %s78
    $region4: #{res_block_2d.3} parent=1 // loop_header_branch
      %15 = sbr.rel (%p13) target = $region8
    $region5: #{res_block_2d.3} parent=1 // loop_body
      %s17 = ssub.s32 %s12, 1
      %s18 = ssub.s32 %s12, 2
      %s19 = sadd.s32 %s12, 1
      %s20 = ssub.s32 %s12, %s19
      %p21 = scmp.eq.s32.totalorder %s20, 0
      %s23 = sadd.s32 %s22, 1
      %s24 = scalar_select %p21, %s22, %s23
      %p27 = pneg %p21
      %p28 = scmp.eq.s32.totalorder %s12, 1
      %p29 = por %p27, %p28
      %p30 = scmp.ne.s32.totalorder %s22, %s25
      %p31 = scmp.eq.s32.totalorder %s12, 0
      %p32 = por %p30, %p31
      %p33 = scmp.ne.s32.totalorder %s22, %s25
      %p34 = scmp.eq.s32.totalorder %s17, 1
      %p35 = por %p33, %p34
      %p36 = scmp.ne.s32.totalorder %s25, %s26
      %p37 = scmp.eq.s32.totalorder %s17, 0
      %p38 = por %p36, %p37
      %p39 = scmp.ne.s32.totalorder %s25, %s26
      %p40 = scmp.eq.s32.totalorder %s18, 1
      %p41 = por %p39, %p40
      %p43 = scmp.ne.s32.totalorder %s26, %s42
      %p44 = scmp.eq.s32.totalorder %s18, 0
      %p45 = por %p43, %p44
      %s46 = ssub.s32 %s12, %s19
      %p47 = scmp.eq.s32.totalorder %s46, 0
      %s49 = sadd.s32 %s48, 1
      %s50 = scalar_select %p47, %s48, %s49
      %p53 = pneg %p47
      %p54 = scmp.eq.s32.totalorder %s12, 1
      %p55 = por %p53, %p54
      %p56 = scmp.ne.s32.totalorder %s48, %s51
      %p57 = scmp.eq.s32.totalorder %s12, 0
      %p58 = por %p56, %p57
      %p59 = scmp.ne.s32.totalorder %s48, %s51
      %p60 = scmp.eq.s32.totalorder %s17, 1
      %p61 = por %p59, %p60
      %p62 = scmp.ne.s32.totalorder %s51, %s52
      %p63 = scmp.eq.s32.totalorder %s17, 0
      %p64 = por %p62, %p63
      %p65 = scmp.ne.s32.totalorder %s51, %s52
      %p66 = scmp.eq.s32.totalorder %s18, 1
      %p67 = por %p65, %p66
      %p69 = scmp.ne.s32.totalorder %s52, %s68
      %p70 = scmp.eq.s32.totalorder %s18, 0
      %p71 = por %p69, %p70
      %s72 = ssub.s32 %s12, %s19
      %p73 = scmp.eq.s32.totalorder %s72, 0
      %s75 = sadd.s32 %s74, 1
      %s76 = scalar_select %p73, %s74, %s75
      %p79 = pneg %p73
      %p80 = scmp.eq.s32.totalorder %s12, 1
      %p81 = por %p79, %p80
      %p82 = scmp.ne.s32.totalorder %s74, %s77
      %p83 = scmp.eq.s32.totalorder %s12, 0
      %p84 = por %p82, %p83
      %p85 = scmp.ne.s32.totalorder %s74, %s77
      %p86 = scmp.eq.s32.totalorder %s17, 1
      %p87 = por %p85, %p86
      %p88 = scmp.ne.s32.totalorder %s77, %s78
      %p89 = scmp.eq.s32.totalorder %s17, 0
      %p90 = por %p88, %p89
      %p91 = scmp.ne.s32.totalorder %s77, %s78
      %p92 = scmp.eq.s32.totalorder %s18, 1
      %p93 = por %p91, %p92
      %p95 = scmp.ne.s32.totalorder %s78, %s94
      %p96 = scmp.eq.s32.totalorder %s18, 0
      %p97 = por %p95, %p96
      %p98 = scmp.le.s32.totalorder 1, %s12
      %p99 = scmp.lt.s32.totalorder %s12, 3
      %p100 = pnand %p98, %p99
      %p101 = pneg %p100
      // Predicated region
      $region9: #{res_block_2d.3} parent=5 // pred_check
        _
      $region10: #{res_block_2d.3} parent=5 // pred_check_branch
        %103 = sbr.rel (%p100) target = $region12
      $region11: #{res_block_2d.3} parent=5 // pred_region
        %s104 = ssub.s32 %s12, 1
      $region12: #{res_block_2d.3} parent=5 // pred_fallthru
        _
      %p105 = scmp.lt.s32.totalorder %s12, 2
      // Predicated region
      $region13: #{res_block_2d.3} parent=5 // pred_check
        %p106 = pneg %p105
      $region14: #{res_block_2d.3} parent=5 // pred_check_branch
        %108 = sbr.rel (%p106) target = $region16
      $region15: #{res_block_2d.3} parent=5 // pred_region
        // Predicated region
        $region17: #{res_block_2d.3} parent=15 // pred_check
          %p109 = pneg %p32
        $region18: #{res_block_2d.3} parent=15 // pred_check_branch
          %111 = sbr.rel (%p109) target = $region20
        $region19: #{res_block_2d.3} parent=15 // pred_region
          %s112 = sand.u32 %s22, 1
          %s113 = scalar_lea.sflag [#allocation3], %s112
          %s114 = sand.u32 %s22, 1
          %s115 = smul.addr %s114, 256
          %s116 = scalar_lea.vmem [#allocation2], %s115
          %s118 = ssub.s32 4096, 4096
          %119 = vsyncadd %s113, %s118
          %s120 = smul.addr %s12, 32
          %s121 = smul.addr %s120, 128
          %s122 = scalar_lea.hbm %s0, %s121
          %s123 = sshll.u32 %s116, 4
          %s124 = int_to_ptr.vmem [resolvable:$true] %s123
          %129 = dma.hbm_to_vmem [thread:$0]  %s122, 4096, %s124, %s113, 128, 128, 8
        $region20: #{res_block_2d.3} parent=15 // pred_fallthru
          _
      $region16: #{res_block_2d.3} parent=5 // pred_fallthru
        _
      %p130 = scmp.le.s32.totalorder 1, %s12
      %p131 = scmp.lt.s32.totalorder %s12, 3
      %p132 = pnand %p130, %p131
      %p133 = pneg %p132
      // Predicated region
      $region21: #{res_block_2d.3} parent=5 // pred_check
        _
      $region22: #{res_block_2d.3} parent=5 // pred_check_branch
        %135 = sbr.rel (%p132) target = $region24
      $region23: #{res_block_2d.3} parent=5 // pred_region
        %s136 = ssub.s32 %s12, 1
        %s137 = sand.u32 %s25, 1
        %s138 = scalar_lea.sflag [#allocation3], %s137
        %s139 = sand.u32 %s25, 1
        %s140 = smul.addr %s139, 256
        %s141 = scalar_lea.vmem [#allocation2], %s140
        // Predicated region
        $region25: #{res_block_2d.3} parent=23 // pred_check
          %p142 = pneg %p38
        $region26: #{res_block_2d.3} parent=23 // pred_check_branch
          %144 = sbr.rel (%p142) target = $region28
        $region27: #{res_block_2d.3} parent=23 // pred_region
          %145 = dma.done %s138, 4096
        $region28: #{res_block_2d.3} parent=23 // pred_fallthru
          _
        %s146 = sand.u32 %s25, 1
        %s147 = scalar_lea.sflag [#allocation3], %s146
        %s148 = sand.u32 %s25, 1
        %s149 = smul.addr %s148, 256
        %s150 = scalar_lea.vmem [#allocation2], %s149
        %p151 = pneg %p38
        %p152 = pneg %p35
        %p153 = pneg %p64
        %p154 = pneg %p61
        %p155 = scmp.lt.s32.totalorder %s17, 1
        %s156 = scalar_select %p155, %s17, 1
        %s157 = scalar_lea.vmem %s1, %s156
        %p158 = pneg %p90
        %p159 = pneg %p87
        %p160 = scmp.lt.s32.totalorder %s17, 1
        %s161 = scalar_select %p160, %s17, 1
        %s162 = scalar_lea.vmem %s2, %s161
        %p163 = scmp.lt.s32.totalorder %s17, 1
        %s164 = scalar_select %p163, %s17, 1
        %s165 = scalar_lea.vmem %s1, %s164
        %p166 = scmp.lt.s32.totalorder %s17, 1
        %s167 = scalar_select %p166, %s17, 1
        %s168 = scalar_lea.vmem %s2, %s167
        %v169 = vld [vmem:[%s141] sm:$0xff]
        %v170 = vld [vmem:[%s141 + $0x8] sm:$0xff]
        %v171 = vld [vmem:[%s141 + $0x10] sm:$0xff]
        %v172 = vld [vmem:[%s141 + $0x18] sm:$0xff]
        %v173 = vld [vmem:[%s141 + $0x20] sm:$0xff]
        %v174 = vld [vmem:[%s141 + $0x28] sm:$0xff]
        %v175 = vld [vmem:[%s141 + $0x30] sm:$0xff]
        %v176 = vld [vmem:[%s141 + $0x38] sm:$0xff]
        %v177 = vld [vmem:[%s141 + $0x40] sm:$0xff]
        %v178 = vld [vmem:[%s141 + $0x48] sm:$0xff]
        %v179 = vld [vmem:[%s141 + $0x50] sm:$0xff]
        %v180 = vld [vmem:[%s141 + $0x58] sm:$0xff]
        %v181 = vld [vmem:[%s141 + $0x60] sm:$0xff]
        %v182 = vld [vmem:[%s141 + $0x68] sm:$0xff]
        %v183 = vld [vmem:[%s141 + $0x70] sm:$0xff]
        %v184 = vld [vmem:[%s141 + $0x78] sm:$0xff]
        %v185 = vld [vmem:[%s141 + $0x80] sm:$0xff]
        %v186 = vld [vmem:[%s141 + $0x88] sm:$0xff]
        %v187 = vld [vmem:[%s141 + $0x90] sm:$0xff]
        %v188 = vld [vmem:[%s141 + $0x98] sm:$0xff]
        %v189 = vld [vmem:[%s141 + $0xa0] sm:$0xff]
        %v190 = vld [vmem:[%s141 + $0xa8] sm:$0xff]
        %v191 = vld [vmem:[%s141 + $0xb0] sm:$0xff]
        %v192 = vld [vmem:[%s141 + $0xb8] sm:$0xff]
        %v193 = vld [vmem:[%s141 + $0xc0] sm:$0xff]
        %v194 = vld [vmem:[%s141 + $0xc8] sm:$0xff]
        %v195 = vld [vmem:[%s141 + $0xd0] sm:$0xff]
        %v196 = vld [vmem:[%s141 + $0xd8] sm:$0xff]
        %v197 = vld [vmem:[%s141 + $0xe0] sm:$0xff]
        %v198 = vld [vmem:[%s141 + $0xe8] sm:$0xff]
        %v199 = vld [vmem:[%s141 + $0xf0] sm:$0xff]
        %v200 = vld [vmem:[%s141 + $0xf8] sm:$0xff]
        %vm201 = vcmask 261120
        %v202 = vsel %vm201, %v169, 0.0
        %v203 = vsel %vm201, %v170, 0.0
        %v204 = vadd.f32 %v202, %v203
        %v205 = vsel %vm201, %v171, 0.0
        %v206 = vadd.f32 %v204, %v205
        %v207 = vsel %vm201, %v172, 0.0
        %v208 = vadd.f32 %v206, %v207
        %v209 = vsel %vm201, %v173, 0.0
        %v210 = vadd.f32 %v208, %v209
        %v211 = vsel %vm201, %v174, 0.0
        %v212 = vadd.f32 %v210, %v211
        %v213 = vsel %vm201, %v175, 0.0
        %v214 = vadd.f32 %v212, %v213
        %v215 = vsel %vm201, %v176, 0.0
        %v216 = vadd.f32 %v214, %v215
        %v217 = vsel %vm201, %v177, 0.0
        %v218 = vadd.f32 %v216, %v217
        %v219 = vsel %vm201, %v178, 0.0
        %v220 = vadd.f32 %v218, %v219
        %v221 = vsel %vm201, %v179, 0.0
        %v222 = vadd.f32 %v220, %v221
        %v223 = vsel %vm201, %v180, 0.0
        %v224 = vadd.f32 %v222, %v223
        %v225 = vsel %vm201, %v181, 0.0
        %v226 = vadd.f32 %v224, %v225
        %v227 = vsel %vm201, %v182, 0.0
        %v228 = vadd.f32 %v226, %v227
        %v229 = vsel %vm201, %v183, 0.0
        %v230 = vadd.f32 %v228, %v229
        %v231 = vsel %vm201, %v184, 0.0
        %v232 = vadd.f32 %v230, %v231
        %v233 = vsel %vm201, %v185, 0.0
        %v234 = vadd.f32 %v232, %v233
        %v235 = vsel %vm201, %v186, 0.0
        %v236 = vadd.f32 %v234, %v235
        %v237 = vsel %vm201, %v187, 0.0
        %v238 = vadd.f32 %v236, %v237
        %v239 = vsel %vm201, %v188, 0.0
        %v240 = vadd.f32 %v238, %v239
        %v241 = vsel %vm201, %v189, 0.0
        %v242 = vadd.f32 %v240, %v241
        %v243 = vsel %vm201, %v190, 0.0
        %v244 = vadd.f32 %v242, %v243
        %v245 = vsel %vm201, %v191, 0.0
        %v246 = vadd.f32 %v244, %v245
        %v247 = vsel %vm201, %v192, 0.0
        %v248 = vadd.f32 %v246, %v247
        %v249 = vsel %vm201, %v193, 0.0
        %v250 = vadd.f32 %v248, %v249
        %v251 = vsel %vm201, %v194, 0.0
        %v252 = vadd.f32 %v250, %v251
        %v253 = vsel %vm201, %v195, 0.0
        %v254 = vadd.f32 %v252, %v253
        %v255 = vsel %vm201, %v196, 0.0
        %v256 = vadd.f32 %v254, %v255
        %v257 = vsel %vm201, %v197, 0.0
        %v258 = vadd.f32 %v256, %v257
        %v259 = vsel %vm201, %v198, 0.0
        %v260 = vadd.f32 %v258, %v259
        %v261 = vsel %vm201, %v199, 0.0
        %v262 = vadd.f32 %v260, %v261
        %v263 = vsel %vm201, %v200, 0.0
        %v264 = vadd.f32 %v262, %v263
        %v265 = vrot.slane %v264, 4
        %v266 = vadd.f32 %v264, %v265
        %v267 = vrot.slane %v266, 2
        %v268 = vadd.f32 %v266, %v267
        %v269 = vrot.slane %v268, 1
        %v270 = vadd.f32 %v268, %v269
        %vm271 = vcmask 253952
        %272 = vst.msk [vmem:[%s165] sm:$0x1] %vm271, %v270
        %v273 = vmul.f32 %v169, %v169
        %v274 = vmul.f32 %v170, %v170
        %v275 = vmul.f32 %v171, %v171
        %v276 = vmul.f32 %v172, %v172
        %v277 = vmul.f32 %v173, %v173
        %v278 = vmul.f32 %v174, %v174
        %v279 = vmul.f32 %v175, %v175
        %v280 = vmul.f32 %v176, %v176
        %v281 = vmul.f32 %v177, %v177
        %v282 = vmul.f32 %v178, %v178
        %v283 = vmul.f32 %v179, %v179
        %v284 = vmul.f32 %v180, %v180
        %v285 = vmul.f32 %v181, %v181
        %v286 = vmul.f32 %v182, %v182
        %v287 = vmul.f32 %v183, %v183
        %v288 = vmul.f32 %v184, %v184
        %v289 = vmul.f32 %v185, %v185
        %v290 = vmul.f32 %v186, %v186
        %v291 = vmul.f32 %v187, %v187
        %v292 = vmul.f32 %v188, %v188
        %v293 = vmul.f32 %v189, %v189
        %v294 = vmul.f32 %v190, %v190
        %v295 = vmul.f32 %v191, %v191
        %v296 = vmul.f32 %v192, %v192
        %v297 = vmul.f32 %v193, %v193
        %v298 = vmul.f32 %v194, %v194
        %v299 = vmul.f32 %v195, %v195
        %v300 = vmul.f32 %v196, %v196
        %v301 = vmul.f32 %v197, %v197
        %v302 = vmul.f32 %v198, %v198
        %v303 = vmul.f32 %v199, %v199
        %v304 = vmul.f32 %v200, %v200
        %v305 = vsel %vm201, %v273, 0.0
        %v306 = vsel %vm201, %v274, 0.0
        %v307 = vadd.f32 %v305, %v306
        %v308 = vsel %vm201, %v275, 0.0
        %v309 = vadd.f32 %v307, %v308
        %v310 = vsel %vm201, %v276, 0.0
        %v311 = vadd.f32 %v309, %v310
        %v312 = vsel %vm201, %v277, 0.0
        %v313 = vadd.f32 %v311, %v312
        %v314 = vsel %vm201, %v278, 0.0
        %v315 = vadd.f32 %v313, %v314
        %v316 = vsel %vm201, %v279, 0.0
        %v317 = vadd.f32 %v315, %v316
        %v318 = vsel %vm201, %v280, 0.0
        %v319 = vadd.f32 %v317, %v318
        %v320 = vsel %vm201, %v281, 0.0
        %v321 = vadd.f32 %v319, %v320
        %v322 = vsel %vm201, %v282, 0.0
        %v323 = vadd.f32 %v321, %v322
        %v324 = vsel %vm201, %v283, 0.0
        %v325 = vadd.f32 %v323, %v324
        %v326 = vsel %vm201, %v284, 0.0
        %v327 = vadd.f32 %v325, %v326
        %v328 = vsel %vm201, %v285, 0.0
        %v329 = vadd.f32 %v327, %v328
        %v330 = vsel %vm201, %v286, 0.0
        %v331 = vadd.f32 %v329, %v330
        %v332 = vsel %vm201, %v287, 0.0
        %v333 = vadd.f32 %v331, %v332
        %v334 = vsel %vm201, %v288, 0.0
        %v335 = vadd.f32 %v333, %v334
        %v336 = vsel %vm201, %v289, 0.0
        %v337 = vadd.f32 %v335, %v336
        %v338 = vsel %vm201, %v290, 0.0
        %v339 = vadd.f32 %v337, %v338
        %v340 = vsel %vm201, %v291, 0.0
        %v341 = vadd.f32 %v339, %v340
        %v342 = vsel %vm201, %v292, 0.0
        %v343 = vadd.f32 %v341, %v342
        %v344 = vsel %vm201, %v293, 0.0
        %v345 = vadd.f32 %v343, %v344
        %v346 = vsel %vm201, %v294, 0.0
        %v347 = vadd.f32 %v345, %v346
        %v348 = vsel %vm201, %v295, 0.0
        %v349 = vadd.f32 %v347, %v348
        %v350 = vsel %vm201, %v296, 0.0
        %v351 = vadd.f32 %v349, %v350
        %v352 = vsel %vm201, %v297, 0.0
        %v353 = vadd.f32 %v351, %v352
        %v354 = vsel %vm201, %v298, 0.0
        %v355 = vadd.f32 %v353, %v354
        %v356 = vsel %vm201, %v299, 0.0
        %v357 = vadd.f32 %v355, %v356
        %v358 = vsel %vm201, %v300, 0.0
        %v359 = vadd.f32 %v357, %v358
        %v360 = vsel %vm201, %v301, 0.0
        %v361 = vadd.f32 %v359, %v360
        %v362 = vsel %vm201, %v302, 0.0
        %v363 = vadd.f32 %v361, %v362
        %v364 = vsel %vm201, %v303, 0.0
        %v365 = vadd.f32 %v363, %v364
        %v366 = vsel %vm201, %v304, 0.0
        %v367 = vadd.f32 %v365, %v366
        %v368 = vrot.slane %v367, 4
        %v369 = vadd.f32 %v367, %v368
        %v370 = vrot.slane %v369, 2
        %v371 = vadd.f32 %v369, %v370
        %v372 = vrot.slane %v371, 1
        %v373 = vadd.f32 %v371, %v372
        %374 = vst.msk [vmem:[%s168] sm:$0x1] %vm271, %v373
        %p375 = scmp.lt.s32.totalorder %s17, 1
        %s376 = scalar_select %p375, %s17, 1
        %s377 = scalar_lea.vmem %s1, %s376
        %p378 = scmp.lt.s32.totalorder %s17, 1
        %s379 = scalar_select %p378, %s17, 1
        %s380 = scalar_lea.vmem %s2, %s379
        // Predicated region
        $region29: #{res_block_2d.3} parent=23 // pred_check
          %p381 = pneg %p61
        $region30: #{res_block_2d.3} parent=23 // pred_check_branch
          %383 = sbr.rel (%p381) target = $region32
        $region31: #{res_block_2d.3} parent=23 // pred_region
          _
        $region32: #{res_block_2d.3} parent=23 // pred_fallthru
          _
        // Predicated region
        $region33: #{res_block_2d.3} parent=23 // pred_check
          %p384 = pneg %p87
        $region34: #{res_block_2d.3} parent=23 // pred_check_branch
          %386 = sbr.rel (%p384) target = $region36
        $region35: #{res_block_2d.3} parent=23 // pred_region
          _
        $region36: #{res_block_2d.3} parent=23 // pred_fallthru
          _
      $region24: #{res_block_2d.3} parent=5 // pred_fallthru
        _
      %p387 = scmp.le.s32.totalorder 2, %s12
      // Predicated region
      $region37: #{res_block_2d.3} parent=5 // pred_check
        %p388 = pneg %p387
      $region38: #{res_block_2d.3} parent=5 // pred_check_branch
        %390 = sbr.rel (%p388) target = $region40
      $region39: #{res_block_2d.3} parent=5 // pred_region
        %s391 = ssub.s32 %s12, 2
        // Predicated region
        $region41: #{res_block_2d.3} parent=39 // pred_check
          %p392 = pneg %p67
        $region42: #{res_block_2d.3} parent=39 // pred_check_branch
          %394 = sbr.rel (%p392) target = $region44
        $region43: #{res_block_2d.3} parent=39 // pred_region
          %p395 = scmp.lt.s32.totalorder %s18, 1
          %s396 = scalar_select %p395, %s18, 1
          %s397 = scalar_lea.vmem %s1, %s396
        $region44: #{res_block_2d.3} parent=39 // pred_fallthru
          _
        // Predicated region
        $region45: #{res_block_2d.3} parent=39 // pred_check
          %p398 = pneg %p93
        $region46: #{res_block_2d.3} parent=39 // pred_check_branch
          %400 = sbr.rel (%p398) target = $region48
        $region47: #{res_block_2d.3} parent=39 // pred_region
          %p401 = scmp.lt.s32.totalorder %s18, 1
          %s402 = scalar_select %p401, %s18, 1
          %s403 = scalar_lea.vmem %s2, %s402
        $region48: #{res_block_2d.3} parent=39 // pred_fallthru
          _
      $region40: #{res_block_2d.3} parent=5 // pred_fallthru
        _
    $region6: #{res_block_2d.3} parent=1 // loop_footer
      %s16 = sadd.s32 1, %s12
    $region7: #{res_block_2d.3} parent=1 // loop_footer_branch
      %11 = sbr.rel target = $region3
    $region8: #{res_block_2d.3} parent=1 // loop_exit
      _
    %404 = vsyncpa [#allocation3], 1
    %s405 = scalar_lea.sflag [#allocation3], 1
    %406 = vsyncpa %s405, 1

// kernel: res_block_2d.4
$region0: #{res_block_2d.4}
  #allocation0 [shape = 'u32[]', space=smem, size = 0x4, offset = 0x4, fixed_abs, tag = 'smem constant byte address 0x4 - core index']
  #allocation1 [shape = 'u32[144,128]{1,0:T(1,128)}', space=vmem, size = 0x12000, scoped, tag = 'internal scratch']
  #allocation2 [shape = 'bf16[18,18,32]{2,1,0:T(8,128)(2,1)}', space=vmem, size = 0x1b000, scoped, tag = 'scratch operand']
  %s0 = inlined_call_operand.vmem [shape: f32[2,18,18,32], index: 0, kind: input, shape index: {}]
  %s1 = inlined_call_operand.vmem [shape: bf16[9,32,128], index: 1, kind: input, shape index: {}]
  %s2 = inlined_call_operand.vmem [shape: f32[1,128], index: 2, kind: input, shape index: {}]
  %s3 = inlined_call_operand.vmem [shape: f32[1,1,32], index: 3, kind: input, shape index: {}]
  %s4 = inlined_call_operand.vmem [shape: f32[1,1,32], index: 4, kind: input, shape index: {}]
  %s5 = inlined_call_operand.vmem [shape: bf16[2,16,16,128], index: 5, kind: output, shape index: {0}]
  %s6 = inlined_call_operand.vmem [shape: f32[2,1,128], index: 6, kind: output, shape index: {1}]
  %s7 = inlined_call_operand.vmem [shape: f32[2,1,128], index: 7, kind: output, shape index: {2}]
  %8 = xla_tuple %s5, %s6, %s7
  %s9 = sld [smem:[#allocation0]]
  $region69: #{res_block_2d.4} parent=0
    _
  %s11 = ssub.s32 1, %s9
  %s12 = scalar_select 0, %s11, %s9
  loop: start=0, step=1, limit=4
  $region2: #{res_block_2d.4} parent=0 // loop_pre_header
    _
  $region3: #{res_block_2d.4} parent=0 // loop_header
    %s14 = sphi 0, %s18
    %p15 = scmp.ge.s32.totalorder %s14, 4
    %s24 = sphi 0, %s26
    %s27 = sphi 0, %s24
    %s28 = sphi 0, %s27
    %s44 = sphi 0, %s28
    %s48 = sphi 0, %s48
    %s50 = sphi 0, %s48
    %s51 = sphi 0, %s50
    %s65 = sphi 0, %s51
    %s69 = sphi 0, %s69
    %s71 = sphi 0, %s69
    %s72 = sphi 0, %s71
    %s86 = sphi 0, %s72
    %s90 = sphi 0, %s90
    %s92 = sphi 0, %s90
    %s93 = sphi 0, %s92
    %s107 = sphi 0, %s93
    %s111 = sphi 0, %s111
    %s113 = sphi 0, %s111
    %s114 = sphi 0, %s113
    %s128 = sphi 0, %s114
    %s134 = sphi 0, %s136
    %s137 = sphi 0, %s134
    %s138 = sphi 0, %s137
    %s154 = sphi 0, %s138
    %s160 = sphi 0, %s162
    %s163 = sphi 0, %s160
    %s164 = sphi 0, %s163
    %s180 = sphi 0, %s164
    %s186 = sphi 0, %s188
    %s189 = sphi 0, %s186
    %s190 = sphi 0, %s189
    %s206 = sphi 0, %s190
  $region4: #{res_block_2d.4} parent=0 // loop_header_branch
    %17 = sbr.rel (%p15) target = $region8
  $region5: #{res_block_2d.4} parent=0 // loop_body
    %s19 = ssub.s32 %s14, 1
    %s20 = ssub.s32 %s14, 2
    %s21 = sadd.s32 %s14, 1
    %s22 = ssub.s32 %s14, %s21
    %p23 = scmp.eq.s32.totalorder %s22, 0
    %s25 = sadd.s32 %s24, 1
    %s26 = scalar_select %p23, %s24, %s25
    %p29 = pneg %p23
    %p30 = scmp.eq.s32.totalorder %s14, 1
    %p31 = por %p29, %p30
    %p32 = scmp.ne.s32.totalorder %s24, %s27
    %p33 = scmp.eq.s32.totalorder %s14, 0
    %p34 = por %p32, %p33
    %p35 = scmp.ne.s32.totalorder %s24, %s27
    %p36 = scmp.eq.s32.totalorder %s19, 1
    %p37 = por %p35, %p36
    %p38 = scmp.ne.s32.totalorder %s27, %s28
    %p39 = scmp.eq.s32.totalorder %s19, 0
    %p40 = por %p38, %p39
    %p41 = scmp.ne.s32.totalorder %s27, %s28
    %p42 = scmp.eq.s32.totalorder %s20, 1
    %p43 = por %p41, %p42
    %p45 = scmp.ne.s32.totalorder %s28, %s44
    %p46 = scmp.eq.s32.totalorder %s20, 0
    %p47 = por %p45, %p46
    %s49 = sadd.s32 %s48, 1
    %p52 = scmp.eq.s32.totalorder %s14, 1
    %p53 = scmp.ne.s32.totalorder %s48, %s50
    %p54 = scmp.eq.s32.totalorder %s14, 0
    %p55 = por %p53, %p54
    %p56 = scmp.ne.s32.totalorder %s48, %s50
    %p57 = scmp.eq.s32.totalorder %s19, 1
    %p58 = por %p56, %p57
    %p59 = scmp.ne.s32.totalorder %s50, %s51
    %p60 = scmp.eq.s32.totalorder %s19, 0
    %p61 = por %p59, %p60
    %p62 = scmp.ne.s32.totalorder %s50, %s51
    %p63 = scmp.eq.s32.totalorder %s20, 1
    %p64 = por %p62, %p63
    %p66 = scmp.ne.s32.totalorder %s51, %s65
    %p67 = scmp.eq.s32.totalorder %s20, 0
    %p68 = por %p66, %p67
    %s70 = sadd.s32 %s69, 1
    %p73 = scmp.eq.s32.totalorder %s14, 1
    %p74 = scmp.ne.s32.totalorder %s69, %s71
    %p75 = scmp.eq.s32.totalorder %s14, 0
    %p76 = por %p74, %p75
    %p77 = scmp.ne.s32.totalorder %s69, %s71
    %p78 = scmp.eq.s32.totalorder %s19, 1
    %p79 = por %p77, %p78
    %p80 = scmp.ne.s32.totalorder %s71, %s72
    %p81 = scmp.eq.s32.totalorder %s19, 0
    %p82 = por %p80, %p81
    %p83 = scmp.ne.s32.totalorder %s71, %s72
    %p84 = scmp.eq.s32.totalorder %s20, 1
    %p85 = por %p83, %p84
    %p87 = scmp.ne.s32.totalorder %s72, %s86
    %p88 = scmp.eq.s32.totalorder %s20, 0
    %p89 = por %p87, %p88
    %s91 = sadd.s32 %s90, 1
    %p94 = scmp.eq.s32.totalorder %s14, 1
    %p95 = scmp.ne.s32.totalorder %s90, %s92
    %p96 = scmp.eq.s32.totalorder %s14, 0
    %p97 = por %p95, %p96
    %p98 = scmp.ne.s32.totalorder %s90, %s92
    %p99 = scmp.eq.s32.totalorder %s19, 1
    %p100 = por %p98, %p99
    %p101 = scmp.ne.s32.totalorder %s92, %s93
    %p102 = scmp.eq.s32.totalorder %s19, 0
    %p103 = por %p101, %p102
    %p104 = scmp.ne.s32.totalorder %s92, %s93
    %p105 = scmp.eq.s32.totalorder %s20, 1
    %p106 = por %p104, %p105
    %p108 = scmp.ne.s32.totalorder %s93, %s107
    %p109 = scmp.eq.s32.totalorder %s20, 0
    %p110 = por %p108, %p109
    %s112 = sadd.s32 %s111, 1
    %p115 = scmp.eq.s32.totalorder %s14, 1
    %p116 = scmp.ne.s32.totalorder %s111, %s113
    %p117 = scmp.eq.s32.totalorder %s14, 0
    %p118 = por %p116, %p117
    %p119 = scmp.ne.s32.totalorder %s111, %s113
    %p120 = scmp.eq.s32.totalorder %s19, 1
    %p121 = por %p119, %p120
    %p122 = scmp.ne.s32.totalorder %s113, %s114
    %p123 = scmp.eq.s32.totalorder %s19, 0
    %p124 = por %p122, %p123
    %p125 = scmp.ne.s32.totalorder %s113, %s114
    %p126 = scmp.eq.s32.totalorder %s20, 1
    %p127 = por %p125, %p126
    %p129 = scmp.ne.s32.totalorder %s114, %s128
    %p130 = scmp.eq.s32.totalorder %s20, 0
    %p131 = por %p129, %p130
    %s132 = ssub.s32 %s14, %s21
    %p133 = scmp.eq.s32.totalorder %s132, 0
    %s135 = sadd.s32 %s134, 1
    %s136 = scalar_select %p133, %s134, %s135
    %p139 = pneg %p133
    %p140 = scmp.eq.s32.totalorder %s14, 1
    %p141 = por %p139, %p140
    %p142 = scmp.ne.s32.totalorder %s134, %s137
    %p143 = scmp.eq.s32.totalorder %s14, 0
    %p144 = por %p142, %p143
    %p145 = scmp.ne.s32.totalorder %s134, %s137
    %p146 = scmp.eq.s32.totalorder %s19, 1
    %p147 = por %p145, %p146
    %p148 = scmp.ne.s32.totalorder %s137, %s138
    %p149 = scmp.eq.s32.totalorder %s19, 0
    %p150 = por %p148, %p149
    %p151 = scmp.ne.s32.totalorder %s137, %s138
    %p152 = scmp.eq.s32.totalorder %s20, 1
    %p153 = por %p151, %p152
    %p155 = scmp.ne.s32.totalorder %s138, %s154
    %p156 = scmp.eq.s32.totalorder %s20, 0
    %p157 = por %p155, %p156
    %s158 = ssub.s32 %s14, %s21
    %p159 = scmp.eq.s32.totalorder %s158, 0
    %s161 = sadd.s32 %s160, 1
    %s162 = scalar_select %p159, %s160, %s161
    %p165 = pneg %p159
    %p166 = scmp.eq.s32.totalorder %s14, 1
    %p167 = por %p165, %p166
    %p168 = scmp.ne.s32.totalorder %s160, %s163
    %p169 = scmp.eq.s32.totalorder %s14, 0
    %p170 = por %p168, %p169
    %p171 = scmp.ne.s32.totalorder %s160, %s163
    %p172 = scmp.eq.s32.totalorder %s19, 1
    %p173 = por %p171, %p172
    %p174 = scmp.ne.s32.totalorder %s163, %s164
    %p175 = scmp.eq.s32.totalorder %s19, 0
    %p176 = por %p174, %p175
    %p177 = scmp.ne.s32.totalorder %s163, %s164
    %p178 = scmp.eq.s32.totalorder %s20, 1
    %p179 = por %p177, %p178
    %p181 = scmp.ne.s32.totalorder %s164, %s180
    %p182 = scmp.eq.s32.totalorder %s20, 0
    %p183 = por %p181, %p182
    %s184 = ssub.s32 %s14, %s21
    %p185 = scmp.eq.s32.totalorder %s184, 0
    %s187 = sadd.s32 %s186, 1
    %s188 = scalar_select %p185, %s186, %s187
    %p191 = pneg %p185
    %p192 = scmp.eq.s32.totalorder %s14, 1
    %p193 = por %p191, %p192
    %p194 = scmp.ne.s32.totalorder %s186, %s189
    %p195 = scmp.eq.s32.totalorder %s14, 0
    %p196 = por %p194, %p195
    %p197 = scmp.ne.s32.totalorder %s186, %s189
    %p198 = scmp.eq.s32.totalorder %s19, 1
    %p199 = por %p197, %p198
    %p200 = scmp.ne.s32.totalorder %s189, %s190
    %p201 = scmp.eq.s32.totalorder %s19, 0
    %p202 = por %p200, %p201
    %p203 = scmp.ne.s32.totalorder %s189, %s190
    %p204 = scmp.eq.s32.totalorder %s20, 1
    %p205 = por %p203, %p204
    %p207 = scmp.ne.s32.totalorder %s190, %s206
    %p208 = scmp.eq.s32.totalorder %s20, 0
    %p209 = por %p207, %p208
    %p210 = scmp.le.s32.totalorder 1, %s14
    %p211 = scmp.lt.s32.totalorder %s14, 3
    %p212 = pnand %p210, %p211
    %p213 = pneg %p212
    // Predicated region
    $region9: #{res_block_2d.4} parent=5 // pred_check
      _
    $region10: #{res_block_2d.4} parent=5 // pred_check_branch
      %215 = sbr.rel (%p212) target = $region12
    $region11: #{res_block_2d.4} parent=5 // pred_region
      %s216 = ssub.s32 %s14, 1
      // Predicated region
      $region13: #{res_block_2d.4} parent=11 // pred_check
        %p217 = pneg %p61
      $region14: #{res_block_2d.4} parent=11 // pred_check_branch
        %219 = sbr.rel (%p217) target = $region16
      $region15: #{res_block_2d.4} parent=11 // pred_region
        _
      $region16: #{res_block_2d.4} parent=11 // pred_fallthru
        _
      // Predicated region
      $region17: #{res_block_2d.4} parent=11 // pred_check
        %p220 = pneg %p82
      $region18: #{res_block_2d.4} parent=11 // pred_check_branch
        %222 = sbr.rel (%p220) target = $region20
      $region19: #{res_block_2d.4} parent=11 // pred_region
        _
      $region20: #{res_block_2d.4} parent=11 // pred_fallthru
        _
      // Predicated region
      $region21: #{res_block_2d.4} parent=11 // pred_check
        %p223 = pneg %p103
      $region22: #{res_block_2d.4} parent=11 // pred_check_branch
        %225 = sbr.rel (%p223) target = $region24
      $region23: #{res_block_2d.4} parent=11 // pred_region
        _
      $region24: #{res_block_2d.4} parent=11 // pred_fallthru
        _
      // Predicated region
      $region25: #{res_block_2d.4} parent=11 // pred_check
        %p226 = pneg %p124
      $region26: #{res_block_2d.4} parent=11 // pred_check_branch
        %228 = sbr.rel (%p226) target = $region28
      $region27: #{res_block_2d.4} parent=11 // pred_region
        _
      $region28: #{res_block_2d.4} parent=11 // pred_fallthru
        _
    $region12: #{res_block_2d.4} parent=5 // pred_fallthru
      _
    %p229 = scmp.lt.s32.totalorder %s14, 2
    // Predicated region
    $region29: #{res_block_2d.4} parent=5 // pred_check
      %p230 = pneg %p229
    $region30: #{res_block_2d.4} parent=5 // pred_check_branch
      %232 = sbr.rel (%p230) target = $region32
    $region31: #{res_block_2d.4} parent=5 // pred_region
      // Predicated region
      $region33: #{res_block_2d.4} parent=31 // pred_check
        %p233 = pneg %p34
      $region34: #{res_block_2d.4} parent=31 // pred_check_branch
        %235 = sbr.rel (%p233) target = $region36
      $region35: #{res_block_2d.4} parent=31 // pred_region
        %p236 = scmp.lt.s32.totalorder %s14, 1
        %s237 = scalar_select %p236, %s14, 1
        %s238 = smul.addr %s237, 54
        %s239 = smul.addr %s238, 8
        %s240 = scalar_lea.vmem %s0, %s239
      $region36: #{res_block_2d.4} parent=31 // pred_fallthru
        _
    $region32: #{res_block_2d.4} parent=5 // pred_fallthru
      _
    %p241 = scmp.le.s32.totalorder 1, %s14
    %p242 = scmp.lt.s32.totalorder %s14, 3
    %p243 = pnand %p241, %p242
    %p244 = pneg %p243
    // Predicated region
    $region37: #{res_block_2d.4} parent=5 // pred_check
      _
    $region38: #{res_block_2d.4} parent=5 // pred_check_branch
      %246 = sbr.rel (%p243) target = $region40
    $region39: #{res_block_2d.4} parent=5 // pred_region
      %s247 = ssub.s32 %s14, 1
      %p248 = scmp.lt.s32.totalorder %s19, 1
      %s249 = scalar_select %p248, %s19, 1
      %s250 = smul.addr %s249, 54
      %s251 = smul.addr %s250, 8
      %s252 = scalar_lea.vmem %s0, %s251
      %p253 = pneg %p40
      %p254 = pneg %p37
      %p255 = pneg %p61
      %p256 = pneg %p58
      %p257 = pneg %p82
      %p258 = pneg %p79
      %p259 = pneg %p103
      %p260 = pneg %p100
      %p261 = pneg %p124
      %p262 = pneg %p121
      %p263 = pneg %p150
      %p264 = pneg %p147
      %p265 = scmp.lt.s32.totalorder %s19, 1
      %s266 = scalar_select %p265, %s19, 1
      %s267 = smul.addr %s266, 32
      %s268 = smul.addr %s267, 4
      %s269 = scalar_lea.vmem %s5, %s268
      %p270 = pneg %p176
      %p271 = pneg %p173
      %p272 = scmp.lt.s32.totalorder %s19, 1
      %s273 = scalar_select %p272, %s19, 1
      %s274 = scalar_lea.vmem %s6, %s273
      %p275 = pneg %p202
      %p276 = pneg %p199
      %p277 = scmp.lt.s32.totalorder %s19, 1
      %s278 = scalar_select %p277, %s19, 1
      %s279 = scalar_lea.vmem %s7, %s278
      %p280 = scmp.lt.s32.totalorder %s19, 1
      %s281 = scalar_select %p280, %s19, 1
      %s282 = smul.addr %s281, 54
      %s283 = smul.addr %s282, 8
      %s284 = scalar_lea.vmem %s0, %s283
      %p285 = scmp.lt.s32.totalorder %s19, 1
      %s286 = scalar_select %p285, %s19, 1
      %s287 = smul.addr %s286, 32
      %s288 = smul.addr %s287, 4
      %s289 = scalar_lea.vmem %s5, %s288
      %p290 = scmp.lt.s32.totalorder %s19, 1
      %s291 = scalar_select %p290, %s19, 1
      %s292 = scalar_lea.vmem %s6, %s291
      %p293 = scmp.lt.s32.totalorder %s19, 1
      %s294 = scalar_select %p293, %s19, 1
      %s295 = scalar_lea.vmem %s7, %s294
      %v297 = vld [vmem:[%s284] sm:$0xff]
      %v298 = vld [vmem:[%s284 + $0x8] sm:$0xff]
      %v299 = vld [vmem:[%s284 + $0x10] sm:$0x3]
      %v300 = vld [vmem:[%s284 + $0x18] sm:$0xff]
      %v301 = vld [vmem:[%s284 + $0x20] sm:$0xff]
      %v302 = vld [vmem:[%s284 + $0x28] sm:$0x3]
      %v303 = vld [vmem:[%s284 + $0x30] sm:$0xff]
      %v304 = vld [vmem:[%s284 + $0x38] sm:$0xff]
      %v305 = vld [vmem:[%s284 + $0x40] sm:$0x3]
      %v306 = vld [vmem:[%s284 + $0x48] sm:$0xff]
      %v307 = vld [vmem:[%s284 + $0x50] sm:$0xff]
      %v308 = vld [vmem:[%s284 + $0x58] sm:$0x3]
      %v309 = vld [vmem:[%s284 + $0x60] sm:$0xff]
      %v310 = vld [vmem:[%s284 + $0x68] sm:$0xff]
      %v311 = vld [vmem:[%s284 + $0x70] sm:$0x3]
      %v312 = vld [vmem:[%s284 + $0x78] sm:$0xff]
      %v313 = vld [vmem:[%s284 + $0x80] sm:$0xff]
      %v314 = vld [vmem:[%s284 + $0x88] sm:$0x3]
      %v315 = vld [vmem:[%s284 + $0x90] sm:$0xff]
      %v316 = vld [vmem:[%s284 + $0x98] sm:$0xff]
      %v317 = vld [vmem:[%s284 + $0xa0] sm:$0x3]
      %v318 = vld [vmem:[%s284 + $0xa8] sm:$0xff]
      %v319 = vld [vmem:[%s284 + $0xb0] sm:$0xff]
      %v320 = vld [vmem:[%s284 + $0xb8] sm:$0x3]
      %v321 = vld [vmem:[%s284 + $0xc0] sm:$0xff]
      %v322 = vld [vmem:[%s284 + $0xc8] sm:$0xff]
      %v323 = vld [vmem:[%s284 + $0xd0] sm:$0x3]
      %v324 = vld [vmem:[%s284 + $0xd8] sm:$0xff]
      %v325 = vld [vmem:[%s284 + $0xe0] sm:$0xff]
      %v326 = vld [vmem:[%s284 + $0xe8] sm:$0x3]
      %v327 = vld [vmem:[%s284 + $0xf0] sm:$0xff]
      %v328 = vld [vmem:[%s284 + $0xf8] sm:$0xff]
      %v329 = vld [vmem:[%s284 + $0x100] sm:$0x3]
      %v330 = vld [vmem:[%s284 + $0x108] sm:$0xff]
      %v331 = vld [vmem:[%s284 + $0x110] sm:$0xff]
      %v332 = vld [vmem:[%s284 + $0x118] sm:$0x3]
      %v333 = vld [vmem:[%s284 + $0x120] sm:$0xff]
      %v334 = vld [vmem:[%s284 + $0x128] sm:$0xff]
      %v335 = vld [vmem:[%s284 + $0x130] sm:$0x3]
      %v336 = vld [vmem:[%s284 + $0x138] sm:$0xff]
      %v337 = vld [vmem:[%s284 + $0x140] sm:$0xff]
      %v338 = vld [vmem:[%s284 + $0x148] sm:$0x3]
      %v339 = vld [vmem:[%s284 + $0x150] sm:$0xff]
      %v340 = vld [vmem:[%s284 + $0x158] sm:$0xff]
      %v341 = vld [vmem:[%s284 + $0x160] sm:$0x3]
      %v342 = vld [vmem:[%s284 + $0x168] sm:$0xff]
      %v343 = vld [vmem:[%s284 + $0x170] sm:$0xff]
      %v344 = vld [vmem:[%s284 + $0x178] sm:$0x3]
      %v345 = vld [vmem:[%s284 + $0x180] sm:$0xff]
      %v346 = vld [vmem:[%s284 + $0x188] sm:$0xff]
      %v347 = vld [vmem:[%s284 + $0x190] sm:$0x3]
      %v348 = vld [vmem:[%s284 + $0x198] sm:$0xff]
      %v349 = vld [vmem:[%s284 + $0x1a0] sm:$0xff]
      %v350 = vld [vmem:[%s284 + $0x1a8] sm:$0x3]
      %v351 = vld [vmem:[%s3] sm:$0x1]
      %v353 = vlaneseq
      %v354 = vshrl.u32 %v353, 7
      %v355 = vsub.s32 0, %v354
      %v356 = vrot.slane %v351, %v355
      %v358 = vmul.f32 %v297, %v356
      %v359 = vmul.f32 %v298, %v356
      %v360 = vmul.f32 %v299, %v356
      %v361 = vmul.f32 %v300, %v356
      %v362 = vmul.f32 %v301, %v356
      %v363 = vmul.f32 %v302, %v356
      %v364 = vmul.f32 %v303, %v356
      %v365 = vmul.f32 %v304, %v356
      %v366 = vmul.f32 %v305, %v356
      %v367 = vmul.f32 %v306, %v356
      %v368 = vmul.f32 %v307, %v356
      %v369 = vmul.f32 %v308, %v356
      %v370 = vmul.f32 %v309, %v356
      %v371 = vmul.f32 %v310, %v356
      %v372 = vmul.f32 %v311, %v356
      %v373 = vmul.f32 %v312, %v356
      %v374 = vmul.f32 %v313, %v356
      %v375 = vmul.f32 %v314, %v356
      %v376 = vmul.f32 %v315, %v356
      %v377 = vmul.f32 %v316, %v356
      %v378 = vmul.f32 %v317, %v356
      %v379 = vmul.f32 %v318, %v356
      %v380 = vmul.f32 %v319, %v356
      %v381 = vmul.f32 %v320, %v356
      %v382 = vmul.f32 %v321, %v356
      %v383 = vmul.f32 %v322, %v356
      %v384 = vmul.f32 %v323, %v356
      %v385 = vmul.f32 %v324, %v356
      %v386 = vmul.f32 %v325, %v356
      %v387 = vmul.f32 %v326, %v356
      %v388 = vmul.f32 %v327, %v356
      %v389 = vmul.f32 %v328, %v356
      %v390 = vmul.f32 %v329, %v356
      %v391 = vmul.f32 %v330, %v356
      %v392 = vmul.f32 %v331, %v356
      %v393 = vmul.f32 %v332, %v356
      %v394 = vmul.f32 %v333, %v356
      %v395 = vmul.f32 %v334, %v356
      %v396 = vmul.f32 %v335, %v356
      %v397 = vmul.f32 %v336, %v356
      %v398 = vmul.f32 %v337, %v356
      %v399 = vmul.f32 %v338, %v356
      %v400 = vmul.f32 %v339, %v356
      %v401 = vmul.f32 %v340, %v356
      %v402 = vmul.f32 %v341, %v356
      %v403 = vmul.f32 %v342, %v356
      %v404 = vmul.f32 %v343, %v356
      %v405 = vmul.f32 %v344, %v356
      %v406 = vmul.f32 %v345, %v356
      %v407 = vmul.f32 %v346, %v356
      %v408 = vmul.f32 %v347, %v356
      %v409 = vmul.f32 %v348, %v356
      %v410 = vmul.f32 %v349, %v356
      %v411 = vmul.f32 %v350, %v356
      %v412 = vld [vmem:[%s4] sm:$0x1]
      %v414 = vlaneseq
      %v415 = vshrl.u32 %v414, 7
      %v416 = vsub.s32 0, %v415
      %v417 = vrot.slane %v412, %v416
      %v419 = vadd.f32 %v358, %v417
      %v420 = vadd.f32 %v359, %v417
      %v421 = vadd.f32 %v360, %v417
      %v422 = vadd.f32 %v361, %v417
      %v423 = vadd.f32 %v362, %v417
      %v424 = vadd.f32 %v363, %v417
      %v425 = vadd.f32 %v364, %v417
      %v426 = vadd.f32 %v365, %v417
      %v427 = vadd.f32 %v366, %v417
      %v428 = vadd.f32 %v367, %v417
      %v429 = vadd.f32 %v368, %v417
      %v430 = vadd.f32 %v369, %v417
      %v431 = vadd.f32 %v370, %v417
      %v432 = vadd.f32 %v371, %v417
      %v433 = vadd.f32 %v372, %v417
      %v434 = vadd.f32 %v373, %v417
      %v435 = vadd.f32 %v374, %v417
      %v436 = vadd.f32 %v375, %v417
      %v437 = vadd.f32 %v376, %v417
      %v438 = vadd.f32 %v377, %v417
      %v439 = vadd.f32 %v378, %v417
      %v440 = vadd.f32 %v379, %v417
      %v441 = vadd.f32 %v380, %v417
      %v442 = vadd.f32 %v381, %v417
      %v443 = vadd.f32 %v382, %v417
      %v444 = vadd.f32 %v383, %v417
      %v445 = vadd.f32 %v384, %v417
      %v446 = vadd.f32 %v385, %v417
      %v447 = vadd.f32 %v386, %v417
      %v448 = vadd.f32 %v387, %v417
      %v449 = vadd.f32 %v388, %v417
      %v450 = vadd.f32 %v389, %v417
      %v451 = vadd.f32 %v390, %v417
      %v452 = vadd.f32 %v391, %v417
      %v453 = vadd.f32 %v392, %v417
      %v454 = vadd.f32 %v393, %v417
      %v455 = vadd.f32 %v394, %v417
      %v456 = vadd.f32 %v395, %v417
      %v457 = vadd.f32 %v396, %v417
      %v458 = vadd.f32 %v397, %v417
      %v459 = vadd.f32 %v398, %v417
      %v460 = vadd.f32 %v399, %v417
      %v461 = vadd.f32 %v400, %v417
      %v462 = vadd.f32 %v401, %v417
      %v463 = vadd.f32 %v402, %v417
      %v464 = vadd.f32 %v403, %v417
      %v465 = vadd.f32 %v404, %v417
      %v466 = vadd.f32 %v405, %v417
      %v467 = vadd.f32 %v406, %v417
      %v468 = vadd.f32 %v407, %v417
      %v469 = vadd.f32 %v408, %v417
      %v470 = vadd.f32 %v409, %v417
      %v471 = vadd.f32 %v410, %v417
      %v472 = vadd.f32 %v411, %v417
      %v473 = vmax.f32 %v419, 0.0
      %v474 = vmax.f32 %v420, 0.0
      %v475 = vmax.f32 %v421, 0.0
      %v476 = vmax.f32 %v422, 0.0
      %v477 = vmax.f32 %v423, 0.0
      %v478 = vmax.f32 %v424, 0.0
      %v479 = vmax.f32 %v425, 0.0
      %v480 = vmax.f32 %v426, 0.0
      %v481 = vmax.f32 %v427, 0.0
      %v482 = vmax.f32 %v428, 0.0
      %v483 = vmax.f32 %v429, 0.0
      %v484 = vmax.f32 %v430, 0.0
      %v485 = vmax.f32 %v431, 0.0
      %v486 = vmax.f32 %v432, 0.0
      %v487 = vmax.f32 %v433, 0.0
      %v488 = vmax.f32 %v434, 0.0
      %v489 = vmax.f32 %v435, 0.0
      %v490 = vmax.f32 %v436, 0.0
      %v491 = vmax.f32 %v437, 0.0
      %v492 = vmax.f32 %v438, 0.0
      %v493 = vmax.f32 %v439, 0.0
      %v494 = vmax.f32 %v440, 0.0
      %v495 = vmax.f32 %v441, 0.0
      %v496 = vmax.f32 %v442, 0.0
      %v497 = vmax.f32 %v443, 0.0
      %v498 = vmax.f32 %v444, 0.0
      %v499 = vmax.f32 %v445, 0.0
      %v500 = vmax.f32 %v446, 0.0
      %v501 = vmax.f32 %v447, 0.0
      %v502 = vmax.f32 %v448, 0.0
      %v503 = vmax.f32 %v449, 0.0
      %v504 = vmax.f32 %v450, 0.0
      %v505 = vmax.f32 %v451, 0.0
      %v506 = vmax.f32 %v452, 0.0
      %v507 = vmax.f32 %v453, 0.0
      %v508 = vmax.f32 %v454, 0.0
      %v509 = vmax.f32 %v455, 0.0
      %v510 = vmax.f32 %v456, 0.0
      %v511 = vmax.f32 %v457, 0.0
      %v512 = vmax.f32 %v458, 0.0
      %v513 = vmax.f32 %v459, 0.0
      %v514 = vmax.f32 %v460, 0.0
      %v515 = vmax.f32 %v461, 0.0
      %v516 = vmax.f32 %v462, 0.0
      %v517 = vmax.f32 %v463, 0.0
      %v518 = vmax.f32 %v464, 0.0
      %v519 = vmax.f32 %v465, 0.0
      %v520 = vmax.f32 %v466, 0.0
      %v521 = vmax.f32 %v467, 0.0
      %v522 = vmax.f32 %v468, 0.0
      %v523 = vmax.f32 %v469, 0.0
      %v524 = vmax.f32 %v470, 0.0
      %v525 = vmax.f32 %v471, 0.0
      %v526 = vmax.f32 %v472, 0.0
      %v527 = vlaneseq
      %v528 = vshrl.u32 %v527, 7
      %v529 = vadd.s32 %v528, 8
      %v530 = vadd.s32 %v528, 16
      %vm531 = vcmp.ge.s32.totalorder %v528, 1
      %vm532 = vcmp.ge.s32.totalorder %v529, 1
      %vm533 = vcmp.ge.s32.totalorder %v530, 1
      %vm534 = vmand 0, %vm531
      %vm535 = vmand 0, %vm532
      %vm536 = vmand 0, %vm533
      %vm537 = vmand 1, %vm531
      %vm538 = vmand 1, %vm532
      %vm539 = vmand 1, %vm533
      %vm540 = vcmp.lt.s32.totalorder %v528, 17
      %vm541 = vcmp.lt.s32.totalorder %v529, 17
      %vm542 = vcmp.lt.s32.totalorder %v530, 17
      %vm543 = vmand %vm534, %vm540
      %vm544 = vmand %vm535, %vm541
      %vm545 = vmand %vm536, %vm542
      %vm546 = vmand %vm537, %vm540
      %vm547 = vmand %vm538, %vm541
      %vm548 = vmand %vm539, %vm542
      %v549 = vsel %vm543, %v473, 0.0
      %v550 = vsel %vm544, %v474, 0.0
      %v551 = vsel %vm545, %v475, 0.0
      %v552 = vsel %vm546, %v476, 0.0
      %v553 = vsel %vm547, %v477, 0.0
      %v554 = vsel %vm548, %v478, 0.0
      %v555 = vsel %vm546, %v479, 0.0
      %v556 = vsel %vm547, %v480, 0.0
      %v557 = vsel %vm548, %v481, 0.0
      %v558 = vsel %vm546, %v482, 0.0
      %v559 = vsel %vm547, %v483, 0.0
      %v560 = vsel %vm548, %v484, 0.0
      %v561 = vsel %vm546, %v485, 0.0
      %v562 = vsel %vm547, %v486, 0.0
      %v563 = vsel %vm548, %v487, 0.0
      %v564 = vsel %vm546, %v488, 0.0
      %v565 = vsel %vm547, %v489, 0.0
      %v566 = vsel %vm548, %v490, 0.0
      %v567 = vsel %vm546, %v491, 0.0
      %v568 = vsel %vm547, %v492, 0.0
      %v569 = vsel %vm548, %v493, 0.0
      %v570 = vsel %vm546, %v494, 0.0
      %v571 = vsel %vm547, %v495, 0.0
      %v572 = vsel %vm548, %v496, 0.0
      %v573 = vsel %vm546, %v497, 0.0
      %v574 = vsel %vm547, %v498, 0.0
      %v575 = vsel %vm548, %v499, 0.0
      %v576 = vsel %vm546, %v500, 0.0
      %v577 = vsel %vm547, %v501, 0.0
      %v578 = vsel %vm548, %v502, 0.0
      %v579 = vsel %vm546, %v503, 0.0
      %v580 = vsel %vm547, %v504, 0.0
      %v581 = vsel %vm548, %v505, 0.0
      %v582 = vsel %vm546, %v506, 0.0
      %v583 = vsel %vm547, %v507, 0.0
      %v584 = vsel %vm548, %v508, 0.0
      %v585 = vsel %vm546, %v509, 0.0
      %v586 = vsel %vm547, %v510, 0.0
      %v587 = vsel %vm548, %v511, 0.0
      %v588 = vsel %vm546, %v512, 0.0
      %v589 = vsel %vm547, %v513, 0.0
      %v590 = vsel %vm548, %v514, 0.0
      %v591 = vsel %vm546, %v515, 0.0
      %v592 = vsel %vm547, %v516, 0.0
      %v593 = vsel %vm548, %v517, 0.0
      %v594 = vsel %vm546, %v518, 0.0
      %v595 = vsel %vm547, %v519, 0.0
      %v596 = vsel %vm548, %v520, 0.0
      %v597 = vsel %vm546, %v521, 0.0
      %v598 = vsel %vm547, %v522, 0.0
      %v599 = vsel %vm548, %v523, 0.0
      %v600 = vsel %vm543, %v524, 0.0
      %v601 = vsel %vm544, %v525, 0.0
      %v602 = vsel %vm545, %v526, 0.0
      %v603 = vpack.c.bf16 %v550, %v549
      %v604 = vpack.c.bf16 %v551, %v551
      %v605 = vpack.c.bf16 %v553, %v552
      %v606 = vpack.c.bf16 %v554, %v554
      %v607 = vpack.c.bf16 %v556, %v555
      %v608 = vpack.c.bf16 %v557, %v557
      %v609 = vpack.c.bf16 %v559, %v558
      %v610 = vpack.c.bf16 %v560, %v560
      %v611 = vpack.c.bf16 %v562, %v561
      %v612 = vpack.c.bf16 %v563, %v563
      %v613 = vpack.c.bf16 %v565, %v564
      %v614 = vpack.c.bf16 %v566, %v566
      %v615 = vpack.c.bf16 %v568, %v567
      %v616 = vpack.c.bf16 %v569, %v569
      %v617 = vpack.c.bf16 %v571, %v570
      %v618 = vpack.c.bf16 %v572, %v572
      %v619 = vpack.c.bf16 %v574, %v573
      %v620 = vpack.c.bf16 %v575, %v575
      %v621 = vpack.c.bf16 %v577, %v576
      %v622 = vpack.c.bf16 %v578, %v578
      %v623 = vpack.c.bf16 %v580, %v579
      %v624 = vpack.c.bf16 %v581, %v581
      %v625 = vpack.c.bf16 %v583, %v582
      %v626 = vpack.c.bf16 %v584, %v584
      %v627 = vpack.c.bf16 %v586, %v585
      %v628 = vpack.c.bf16 %v587, %v587
      %v629 = vpack.c.bf16 %v589, %v588
      %v630 = vpack.c.bf16 %v590, %v590
      %v631 = vpack.c.bf16 %v592, %v591
      %v632 = vpack.c.bf16 %v593, %v593
      %v633 = vpack.c.bf16 %v595, %v594
      %v634 = vpack.c.bf16 %v596, %v596
      %v635 = vpack.c.bf16 %v598, %v597
      %v636 = vpack.c.bf16 %v599, %v599
      %v637 = vpack.c.bf16 %v601, %v600
      %v638 = vpack.c.bf16 %v602, %v602
      %v675 = vunpack.c.l.b16 %v603
      %v676 = vunpack.c.h.b16 %v603
      %v677 = vunpack.c.l.b16 %v604
      %v678 = vunpack.c.l.b16 %v605
      %v679 = vunpack.c.h.b16 %v605
      %v680 = vunpack.c.l.b16 %v606
      %v681 = vunpack.c.l.b16 %v607
      %v682 = vunpack.c.h.b16 %v607
      %v683 = vunpack.c.l.b16 %v608
      %v684 = vunpack.c.l.b16 %v609
      %v685 = vunpack.c.h.b16 %v609
      %v686 = vunpack.c.l.b16 %v610
      %v687 = vunpack.c.l.b16 %v611
      %v688 = vunpack.c.h.b16 %v611
      %v689 = vunpack.c.l.b16 %v612
      %v690 = vunpack.c.l.b16 %v613
      %v691 = vunpack.c.h.b16 %v613
      %v692 = vunpack.c.l.b16 %v614
      %v693 = vunpack.c.l.b16 %v615
      %v694 = vunpack.c.h.b16 %v615
      %v695 = vunpack.c.l.b16 %v616
      %v696 = vunpack.c.l.b16 %v617
      %v697 = vunpack.c.h.b16 %v617
      %v698 = vunpack.c.l.b16 %v618
      %v699 = vunpack.c.l.b16 %v619
      %v700 = vunpack.c.h.b16 %v619
      %v701 = vunpack.c.l.b16 %v620
      %v702 = vunpack.c.l.b16 %v621
      %v703 = vunpack.c.h.b16 %v621
      %v704 = vunpack.c.l.b16 %v622
      %v705 = vunpack.c.l.b16 %v623
      %v706 = vunpack.c.h.b16 %v623
      %v707 = vunpack.c.l.b16 %v624
      %v708 = vunpack.c.l.b16 %v625
      %v709 = vunpack.c.h.b16 %v625
      %v710 = vunpack.c.l.b16 %v626
      %v711 = vunpack.c.l.b16 %v627
      %v712 = vunpack.c.h.b16 %v627
      %v713 = vunpack.c.l.b16 %v628
      %v714 = vunpack.c.l.b16 %v629
      %v715 = vunpack.c.h.b16 %v629
      %v716 = vunpack.c.l.b16 %v630
      %v717 = vunpack.c.l.b16 %v631
      %v718 = vunpack.c.h.b16 %v631
      %v719 = vunpack.c.l.b16 %v632
      %v720 = vunpack.c.l.b16 %v633
      %v721 = vunpack.c.h.b16 %v633
      %v722 = vunpack.c.l.b16 %v634
      %v723 = vunpack.c.l.b16 %v635
      %v724 = vunpack.c.h.b16 %v635
      %v725 = vunpack.c.l.b16 %v636
      %v726 = vunpack.c.l.b16 %v637
      %v727 = vunpack.c.h.b16 %v637
      %v728 = vunpack.c.l.b16 %v638
      %v729 = vpack.c.b16 %v675, %v675
      %v730 = vpack.c.b16 %v676, %v676
      %v731 = vpack.c.b16 %v677, %v677
      %v732 = vpack.c.b16 %v678, %v678
      %v733 = vpack.c.b16 %v679, %v679
      %v734 = vpack.c.b16 %v680, %v680
      %v735 = vpack.c.b16 %v681, %v681
      %v736 = vpack.c.b16 %v682, %v682
      %v737 = vpack.c.b16 %v683, %v683
      %v738 = vpack.c.b16 %v684, %v684
      %v739 = vpack.c.b16 %v685, %v685
      %v740 = vpack.c.b16 %v686, %v686
      %v741 = vpack.c.b16 %v687, %v687
      %v742 = vpack.c.b16 %v688, %v688
      %v743 = vpack.c.b16 %v689, %v689
      %v744 = vpack.c.b16 %v690, %v690
      %v745 = vpack.c.b16 %v691, %v691
      %v746 = vpack.c.b16 %v692, %v692
      %v747 = vpack.c.b16 %v693, %v693
      %v748 = vpack.c.b16 %v694, %v694
      %v749 = vpack.c.b16 %v695, %v695
      %v750 = vpack.c.b16 %v696, %v696
      %v751 = vpack.c.b16 %v697, %v697
      %v752 = vpack.c.b16 %v698, %v698
      %v753 = vpack.c.b16 %v699, %v699
      %v754 = vpack.c.b16 %v700, %v700
      %v755 = vpack.c.b16 %v701, %v701
      %v756 = vpack.c.b16 %v702, %v702
      %v757 = vpack.c.b16 %v703, %v703
      %v758 = vpack.c.b16 %v704, %v704
      %v759 = vpack.c.b16 %v705, %v705
      %v760 = vpack.c.b16 %v706, %v706
      %v761 = vpack.c.b16 %v707, %v707
      %v762 = vpack.c.b16 %v708, %v708
      %v763 = vpack.c.b16 %v709, %v709
      %v764 = vpack.c.b16 %v710, %v710
      %v765 = vpack.c.b16 %v711, %v711
      %v766 = vpack.c.b16 %v712, %v712
      %v767 = vpack.c.b16 %v713, %v713
      %v768 = vpack.c.b16 %v714, %v714
      %v769 = vpack.c.b16 %v715, %v715
      %v770 = vpack.c.b16 %v716, %v716
      %v771 = vpack.c.b16 %v717, %v717
      %v772 = vpack.c.b16 %v718, %v718
      %v773 = vpack.c.b16 %v719, %v719
      %v774 = vpack.c.b16 %v720, %v720
      %v775 = vpack.c.b16 %v721, %v721
      %v776 = vpack.c.b16 %v722, %v722
      %v777 = vpack.c.b16 %v723, %v723
      %v778 = vpack.c.b16 %v724, %v724
      %v779 = vpack.c.b16 %v725, %v725
      %v780 = vpack.c.b16 %v726, %v726
      %v781 = vpack.c.b16 %v727, %v727
      %v782 = vpack.c.b16 %v728, %v728
      %vm837 = vcmask 257024
      %838 = vst.msk [vmem:[#allocation2] sm:$0xf] %vm837, %v729
      %839 = vst.msk [vmem:[#allocation2 + $0x4] sm:$0xf] %vm837, %v730
      %vm840 = vcmask 253952
      %841 = vst.msk [vmem:[#allocation2 + $0x8] sm:$0x1] %vm840, %v731
      %842 = vst.msk [vmem:[#allocation2 + $0xc] sm:$0xf] %vm837, %v732
      %843 = vst.msk [vmem:[#allocation2 + $0x10] sm:$0xf] %vm837, %v733
      %844 = vst.msk [vmem:[#allocation2 + $0x14] sm:$0x1] %vm840, %v734
      %845 = vst.msk [vmem:[#allocation2 + $0x18] sm:$0xf] %vm837, %v735
      %846 = vst.msk [vmem:[#allocation2 + $0x1c] sm:$0xf] %vm837, %v736
      %847 = vst.msk [vmem:[#allocation2 + $0x20] sm:$0x1] %vm840, %v737
      %848 = vst.msk [vmem:[#allocation2 + $0x24] sm:$0xf] %vm837, %v738
      %849 = vst.msk [vmem:[#allocation2 + $0x28] sm:$0xf] %vm837, %v739
      %850 = vst.msk [vmem:[#allocation2 + $0x2c] sm:$0x1] %vm840, %v740
      %851 = vst.msk [vmem:[#allocation2 + $0x30] sm:$0xf] %vm837, %v741
      %852 = vst.msk [vmem:[#allocation2 + $0x34] sm:$0xf] %vm837, %v742
      %853 = vst.msk [vmem:[#allocation2 + $0x38] sm:$0x1] %vm840, %v743
      %854 = vst.msk [vmem:[#allocation2 + $0x3c] sm:$0xf] %vm837, %v744
      %855 = vst.msk [vmem:[#allocation2 + $0x40] sm:$0xf] %vm837, %v745
      %856 = vst.msk [vmem:[#allocation2 + $0x44] sm:$0x1] %vm840, %v746
      %857 = vst.msk [vmem:[#allocation2 + $0x48] sm:$0xf] %vm837, %v747
      %858 = vst.msk [vmem:[#allocation2 + $0x4c] sm:$0xf] %vm837, %v748
      %859 = vst.msk [vmem:[#allocation2 + $0x50] sm:$0x1] %vm840, %v749
      %860 = vst.msk [vmem:[#allocation2 + $0x54] sm:$0xf] %vm837, %v750
      %861 = vst.msk [vmem:[#allocation2 + $0x58] sm:$0xf] %vm837, %v751
      %862 = vst.msk [vmem:[#allocation2 + $0x5c] sm:$0x1] %vm840, %v752
      %863 = vst.msk [vmem:[#allocation2 + $0x60] sm:$0xf] %vm837, %v753
      %864 = vst.msk [vmem:[#allocation2 + $0x64] sm:$0xf] %vm837, %v754
      %865 = vst.msk [vmem:[#allocation2 + $0x68] sm:$0x1] %vm840, %v755
      %866 = vst.msk [vmem:[#allocation2 + $0x6c] sm:$0xf] %vm837, %v756
      %867 = vst.msk [vmem:[#allocation2 + $0x70] sm:$0xf] %vm837, %v757
      %868 = vst.msk [vmem:[#allocation2 + $0x74] sm:$0x1] %vm840, %v758
      %869 = vst.msk [vmem:[#allocation2 + $0x78] sm:$0xf] %vm837, %v759
      %870 = vst.msk [vmem:[#allocation2 + $0x7c] sm:$0xf] %vm837, %v760
      %871 = vst.msk [vmem:[#allocation2 + $0x80] sm:$0x1] %vm840, %v761
      %872 = vst.msk [vmem:[#allocation2 + $0x84] sm:$0xf] %vm837, %v762
      %873 = vst.msk [vmem:[#allocation2 + $0x88] sm:$0xf] %vm837, %v763
      %874 = vst.msk [vmem:[#allocation2 + $0x8c] sm:$0x1] %vm840, %v764
      %875 = vst.msk [vmem:[#allocation2 + $0x90] sm:$0xf] %vm837, %v765
      %876 = vst.msk [vmem:[#allocation2 + $0x94] sm:$0xf] %vm837, %v766
      %877 = vst.msk [vmem:[#allocation2 + $0x98] sm:$0x1] %vm840, %v767
      %878 = vst.msk [vmem:[#allocation2 + $0x9c] sm:$0xf] %vm837, %v768
      %879 = vst.msk [vmem:[#allocation2 + $0xa0] sm:$0xf] %vm837, %v769
      %880 = vst.msk [vmem:[#allocation2 + $0xa4] sm:$0x1] %vm840, %v770
      %881 = vst.msk [vmem:[#allocation2 + $0xa8] sm:$0xf] %vm837, %v771
      %882 = vst.msk [vmem:[#allocation2 + $0xac] sm:$0xf] %vm837, %v772
      %883 = vst.msk [vmem:[#allocation2 + $0xb0] sm:$0x1] %vm840, %v773
      %884 = vst.msk [vmem:[#allocation2 + $0xb4] sm:$0xf] %vm837, %v774
      %885 = vst.msk [vmem:[#allocation2 + $0xb8] sm:$0xf] %vm837, %v775
      %886 = vst.msk [vmem:[#allocation2 + $0xbc] sm:$0x1] %vm840, %v776
      %887 = vst.msk [vmem:[#allocation2 + $0xc0] sm:$0xf] %vm837, %v777
      %888 = vst.msk [vmem:[#allocation2 + $0xc4] sm:$0xf] %vm837, %v778
      %889 = vst.msk [vmem:[#allocation2 + $0xc8] sm:$0x1] %vm840, %v779
      %890 = vst.msk [vmem:[#allocation2 + $0xcc] sm:$0xf] %vm837, %v780
      %891 = vst.msk [vmem:[#allocation2 + $0xd0] sm:$0xf] %vm837, %v781
      %892 = vst.msk [vmem:[#allocation2 + $0xd4] sm:$0x1] %vm840, %v782
      %v893 = vld [vmem:[#allocation2] sm:$0xf]
      %v894 = vld [vmem:[#allocation2 + $0x4] sm:$0xf]
      %v895 = vld [vmem:[#allocation2 + $0xc] sm:$0xf]
      %v896 = vld [vmem:[#allocation2 + $0x10] sm:$0xf]
      %v897 = vld [vmem:[#allocation2 + $0x18] sm:$0xf]
      %v898 = vld [vmem:[#allocation2 + $0x1c] sm:$0xf]
      %v899 = vld [vmem:[#allocation2 + $0x24] sm:$0xf]
      %v900 = vld [vmem:[#allocation2 + $0x28] sm:$0xf]
      %v901 = vld [vmem:[#allocation2 + $0x30] sm:$0xf]
      %v902 = vld [vmem:[#allocation2 + $0x34] sm:$0xf]
      %v903 = vld [vmem:[#allocation2 + $0x3c] sm:$0xf]
      %v904 = vld [vmem:[#allocation2 + $0x40] sm:$0xf]
      %v905 = vld [vmem:[#allocation2 + $0x48] sm:$0xf]
      %v906 = vld [vmem:[#allocation2 + $0x4c] sm:$0xf]
      %v907 = vld [vmem:[#allocation2 + $0x54] sm:$0xf]
      %v908 = vld [vmem:[#allocation2 + $0x58] sm:$0xf]
      %v909 = vld [vmem:[#allocation2 + $0x60] sm:$0xf]
      %v910 = vld [vmem:[#allocation2 + $0x64] sm:$0xf]
      %v911 = vld [vmem:[#allocation2 + $0x6c] sm:$0xf]
      %v912 = vld [vmem:[#allocation2 + $0x70] sm:$0xf]
      %v913 = vld [vmem:[#allocation2 + $0x78] sm:$0xf]
      %v914 = vld [vmem:[#allocation2 + $0x7c] sm:$0xf]
      %v915 = vld [vmem:[#allocation2 + $0x84] sm:$0xf]
      %v916 = vld [vmem:[#allocation2 + $0x88] sm:$0xf]
      %v917 = vld [vmem:[#allocation2 + $0x90] sm:$0xf]
      %v918 = vld [vmem:[#allocation2 + $0x94] sm:$0xf]
      %v919 = vld [vmem:[#allocation2 + $0x9c] sm:$0xf]
      %v920 = vld [vmem:[#allocation2 + $0xa0] sm:$0xf]
      %v921 = vld [vmem:[#allocation2 + $0xa8] sm:$0xf]
      %v922 = vld [vmem:[#allocation2 + $0xac] sm:$0xf]
      %v923 = vld [vmem:[#allocation2 + $0xb4] sm:$0xf]
      %v924 = vld [vmem:[#allocation2 + $0xb8] sm:$0xf]
      %v925 = vld [vmem:[%s1] sm:$0xf]
      %v926 = vld [vmem:[%s1 + $0x4] sm:$0xf]
      %v927 = vld [vmem:[%s1 + $0x8] sm:$0xf]
      %v928 = vld [vmem:[%s1 + $0xc] sm:$0xf]
      %v929 = vld [vmem:[#allocation2 + $0x8] sm:$0x1]
      %v930 = vld [vmem:[#allocation2 + $0x14] sm:$0x1]
      %v931 = vld [vmem:[#allocation2 + $0x20] sm:$0x1]
      %v932 = vld [vmem:[#allocation2 + $0x2c] sm:$0x1]
      %v933 = vld [vmem:[#allocation2 + $0x38] sm:$0x1]
      %v934 = vld [vmem:[#allocation2 + $0x44] sm:$0x1]
      %v935 = vld [vmem:[#allocation2 + $0x50] sm:$0x1]
      %v936 = vld [vmem:[#allocation2 + $0x5c] sm:$0x1]
      %v937 = vld [vmem:[#allocation2 + $0x68] sm:$0x1]
      %v938 = vld [vmem:[#allocation2 + $0x74] sm:$0x1]
      %v939 = vld [vmem:[#allocation2 + $0x80] sm:$0x1]
      %v940 = vld [vmem:[#allocation2 + $0x8c] sm:$0x1]
      %v941 = vld [vmem:[#allocation2 + $0x98] sm:$0x1]
      %v942 = vld [vmem:[#allocation2 + $0xa4] sm:$0x1]
      %v943 = vld [vmem:[#allocation2 + $0xb0] sm:$0x1]
      %v944 = vld [vmem:[#allocation2 + $0xbc] sm:$0x1]
      %vm945 = vsmask.f32 3328
      %vm946 = vsmask.f32 7440
      %vm947 = vmor %vm945, %vm946
      %v949 = vshrl.u32 %v893, 16
      %v951 = vrot.slane %v949, 4
      %v952 = vshll.u32 %v893, 16
      %v954 = vrot.slane %v952, 5
      %v955 = vor.u32 %v951, %v954
      %v956 = vrot.slane %v955, 4
      %v958 = vshll.u32 %v894, 16
      %v960 = vrot.slane %v958, 5
      %v961 = vsel %vm947, %v956, %v960
      %v962 = vshrl.u32 %v894, 16
      %v964 = vrot.slane %v962, 4
      %v965 = vor.u32 %v964, %v960
      %v966 = vrot.slane %v965, 4
      %v968 = vshll.u32 %v929, 16
      %v970 = vrot.slane %v968, 5
      %v971 = vsel %vm947, %v966, %v970
      %v973 = vshrl.u32 %v895, 16
      %v975 = vrot.slane %v973, 4
      %v976 = vshll.u32 %v895, 16
      %v978 = vrot.slane %v976, 5
      %v979 = vor.u32 %v975, %v978
      %v980 = vrot.slane %v979, 4
      %v982 = vshll.u32 %v896, 16
      %v984 = vrot.slane %v982, 5
      %v985 = vsel %vm947, %v980, %v984
      %v986 = vshrl.u32 %v896, 16
      %v988 = vrot.slane %v986, 4
      %v989 = vor.u32 %v988, %v984
      %v990 = vrot.slane %v989, 4
      %v992 = vshll.u32 %v930, 16
      %v994 = vrot.slane %v992, 5
      %v995 = vsel %vm947, %v990, %v994
      %v997 = vshrl.u32 %v897, 16
      %v999 = vrot.slane %v997, 4
      %v1000 = vshll.u32 %v897, 16
      %v1002 = vrot.slane %v1000, 5
      %v1003 = vor.u32 %v999, %v1002
      %v1004 = vrot.slane %v1003, 4
      %v1006 = vshll.u32 %v898, 16
      %v1008 = vrot.slane %v1006, 5
      %v1009 = vsel %vm947, %v1004, %v1008
      %v1010 = vshrl.u32 %v898, 16
      %v1012 = vrot.slane %v1010, 4
      %v1013 = vor.u32 %v1012, %v1008
      %v1014 = vrot.slane %v1013, 4
      %v1016 = vshll.u32 %v931, 16
      %v1018 = vrot.slane %v1016, 5
      %v1019 = vsel %vm947, %v1014, %v1018
      %v1021 = vshrl.u32 %v899, 16
      %v1023 = vrot.slane %v1021, 4
      %v1024 = vshll.u32 %v899, 16
      %v1026 = vrot.slane %v1024, 5
      %v1027 = vor.u32 %v1023, %v1026
      %v1028 = vrot.slane %v1027, 4
      %v1030 = vshll.u32 %v900, 16
      %v1032 = vrot.slane %v1030, 5
      %v1033 = vsel %vm947, %v1028, %v1032
      %v1034 = vshrl.u32 %v900, 16
      %v1036 = vrot.slane %v1034, 4
      %v1037 = vor.u32 %v1036, %v1032
      %v1038 = vrot.slane %v1037, 4
      %v1040 = vshll.u32 %v932, 16
      %v1042 = vrot.slane %v1040, 5
      %v1043 = vsel %vm947, %v1038, %v1042
      %v1045 = vshrl.u32 %v901, 16
      %v1047 = vrot.slane %v1045, 4
      %v1048 = vshll.u32 %v901, 16
      %v1050 = vrot.slane %v1048, 5
      %v1051 = vor.u32 %v1047, %v1050
      %v1052 = vrot.slane %v1051, 4
      %v1054 = vshll.u32 %v902, 16
      %v1056 = vrot.slane %v1054, 5
      %v1057 = vsel %vm947, %v1052, %v1056
      %v1058 = vshrl.u32 %v902, 16
      %v1060 = vrot.slane %v1058, 4
      %v1061 = vor.u32 %v1060, %v1056
      %v1062 = vrot.slane %v1061, 4
      %v1064 = vshll.u32 %v933, 16
      %v1066 = vrot.slane %v1064, 5
      %v1067 = vsel %vm947, %v1062, %v1066
      %v1069 = vshrl.u32 %v903, 16
      %v1071 = vrot.slane %v1069, 4
      %v1072 = vshll.u32 %v903, 16
      %v1074 = vrot.slane %v1072, 5
      %v1075 = vor.u32 %v1071, %v1074
      %v1076 = vrot.slane %v1075, 4
      %v1078 = vshll.u32 %v904, 16
      %v1080 = vrot.slane %v1078, 5
      %v1081 = vsel %vm947, %v1076, %v1080
      %v1082 = vshrl.u32 %v904, 16
      %v1084 = vrot.slane %v1082, 4
      %v1085 = vor.u32 %v1084, %v1080
      %v1086 = vrot.slane %v1085, 4
      %v1088 = vshll.u32 %v934, 16
      %v1090 = vrot.slane %v1088, 5
      %v1091 = vsel %vm947, %v1086, %v1090
      %v1093 = vshrl.u32 %v905, 16
      %v1095 = vrot.slane %v1093, 4
      %v1096 = vshll.u32 %v905, 16
      %v1098 = vrot.slane %v1096, 5
      %v1099 = vor.u32 %v1095, %v1098
      %v1100 = vrot.slane %v1099, 4
      %v1102 = vshll.u32 %v906, 16
      %v1104 = vrot.slane %v1102, 5
      %v1105 = vsel %vm947, %v1100, %v1104
      %v1106 = vshrl.u32 %v906, 16
      %v1108 = vrot.slane %v1106, 4
      %v1109 = vor.u32 %v1108, %v1104
      %v1110 = vrot.slane %v1109, 4
      %v1112 = vshll.u32 %v935, 16
      %v1114 = vrot.slane %v1112, 5
      %v1115 = vsel %vm947, %v1110, %v1114
      %v1117 = vshrl.u32 %v907, 16
      %v1119 = vrot.slane %v1117, 4
      %v1120 = vshll.u32 %v907, 16
      %v1122 = vrot.slane %v1120, 5
      %v1123 = vor.u32 %v1119, %v1122
      %v1124 = vrot.slane %v1123, 4
      %v1126 = vshll.u32 %v908, 16
      %v1128 = vrot.slane %v1126, 5
      %v1129 = vsel %vm947, %v1124, %v1128
      %v1130 = vshrl.u32 %v908, 16
      %v1132 = vrot.slane %v1130, 4
      %v1133 = vor.u32 %v1132, %v1128
      %v1134 = vrot.slane %v1133, 4
      %v1136 = vshll.u32 %v936, 16
      %v1138 = vrot.slane %v1136, 5
      %v1139 = vsel %vm947, %v1134, %v1138
      %v1141 = vshrl.u32 %v909, 16
      %v1143 = vrot.slane %v1141, 4
      %v1144 = vshll.u32 %v909, 16
      %v1146 = vrot.slane %v1144, 5
      %v1147 = vor.u32 %v1143, %v1146
      %v1148 = vrot.slane %v1147, 4
      %v1150 = vshll.u32 %v910, 16
      %v1152 = vrot.slane %v1150, 5
      %v1153 = vsel %vm947, %v1148, %v1152
      %v1154 = vshrl.u32 %v910, 16
      %v1156 = vrot.slane %v1154, 4
      %v1157 = vor.u32 %v1156, %v1152
      %v1158 = vrot.slane %v1157, 4
      %v1160 = vshll.u32 %v937, 16
      %v1162 = vrot.slane %v1160, 5
      %v1163 = vsel %vm947, %v1158, %v1162
      %v1165 = vshrl.u32 %v911, 16
      %v1167 = vrot.slane %v1165, 4
      %v1168 = vshll.u32 %v911, 16
      %v1170 = vrot.slane %v1168, 5
      %v1171 = vor.u32 %v1167, %v1170
      %v1172 = vrot.slane %v1171, 4
      %v1174 = vshll.u32 %v912, 16
      %v1176 = vrot.slane %v1174, 5
      %v1177 = vsel %vm947, %v1172, %v1176
      %v1178 = vshrl.u32 %v912, 16
      %v1180 = vrot.slane %v1178, 4
      %v1181 = vor.u32 %v1180, %v1176
      %v1182 = vrot.slane %v1181, 4
      %v1184 = vshll.u32 %v938, 16
      %v1186 = vrot.slane %v1184, 5
      %v1187 = vsel %vm947, %v1182, %v1186
      %v1189 = vshrl.u32 %v913, 16
      %v1191 = vrot.slane %v1189, 4
      %v1192 = vshll.u32 %v913, 16
      %v1194 = vrot.slane %v1192, 5
      %v1195 = vor.u32 %v1191, %v1194
      %v1196 = vrot.slane %v1195, 4
      %v1198 = vshll.u32 %v914, 16
      %v1200 = vrot.slane %v1198, 5
      %v1201 = vsel %vm947, %v1196, %v1200
      %v1202 = vshrl.u32 %v914, 16
      %v1204 = vrot.slane %v1202, 4
      %v1205 = vor.u32 %v1204, %v1200
      %v1206 = vrot.slane %v1205, 4
      %v1208 = vshll.u32 %v939, 16
      %v1210 = vrot.slane %v1208, 5
      %v1211 = vsel %vm947, %v1206, %v1210
      %v1213 = vshrl.u32 %v915, 16
      %v1215 = vrot.slane %v1213, 4
      %v1216 = vshll.u32 %v915, 16
      %v1218 = vrot.slane %v1216, 5
      %v1219 = vor.u32 %v1215, %v1218
      %v1220 = vrot.slane %v1219, 4
      %v1222 = vshll.u32 %v916, 16
      %v1224 = vrot.slane %v1222, 5
      %v1225 = vsel %vm947, %v1220, %v1224
      %v1226 = vshrl.u32 %v916, 16
      %v1228 = vrot.slane %v1226, 4
      %v1229 = vor.u32 %v1228, %v1224
      %v1230 = vrot.slane %v1229, 4
      %v1232 = vshll.u32 %v940, 16
      %v1234 = vrot.slane %v1232, 5
      %v1235 = vsel %vm947, %v1230, %v1234
      %v1237 = vshrl.u32 %v917, 16
      %v1239 = vrot.slane %v1237, 4
      %v1240 = vshll.u32 %v917, 16
      %v1242 = vrot.slane %v1240, 5
      %v1243 = vor.u32 %v1239, %v1242
      %v1244 = vrot.slane %v1243, 4
      %v1246 = vshll.u32 %v918, 16
      %v1248 = vrot.slane %v1246, 5
      %v1249 = vsel %vm947, %v1244, %v1248
      %v1250 = vshrl.u32 %v918, 16
      %v1252 = vrot.slane %v1250, 4
      %v1253 = vor.u32 %v1252, %v1248
      %v1254 = vrot.slane %v1253, 4
      %v1256 = vshll.u32 %v941, 16
      %v1258 = vrot.slane %v1256, 5
      %v1259 = vsel %vm947, %v1254, %v1258
      %v1261 = vshrl.u32 %v919, 16
      %v1263 = vrot.slane %v1261, 4
      %v1264 = vshll.u32 %v919, 16
      %v1266 = vrot.slane %v1264, 5
      %v1267 = vor.u32 %v1263, %v1266
      %v1268 = vrot.slane %v1267, 4
      %v1270 = vshll.u32 %v920, 16
      %v1272 = vrot.slane %v1270, 5
      %v1273 = vsel %vm947, %v1268, %v1272
      %v1274 = vshrl.u32 %v920, 16
      %v1276 = vrot.slane %v1274, 4
      %v1277 = vor.u32 %v1276, %v1272
      %v1278 = vrot.slane %v1277, 4
      %v1280 = vshll.u32 %v942, 16
      %v1282 = vrot.slane %v1280, 5
      %v1283 = vsel %vm947, %v1278, %v1282
      %v1285 = vshrl.u32 %v921, 16
      %v1287 = vrot.slane %v1285, 4
      %v1288 = vshll.u32 %v921, 16
      %v1290 = vrot.slane %v1288, 5
      %v1291 = vor.u32 %v1287, %v1290
      %v1292 = vrot.slane %v1291, 4
      %v1294 = vshll.u32 %v922, 16
      %v1296 = vrot.slane %v1294, 5
      %v1297 = vsel %vm947, %v1292, %v1296
      %v1298 = vshrl.u32 %v922, 16
      %v1300 = vrot.slane %v1298, 4
      %v1301 = vor.u32 %v1300, %v1296
      %v1302 = vrot.slane %v1301, 4
      %v1304 = vshll.u32 %v943, 16
      %v1306 = vrot.slane %v1304, 5
      %v1307 = vsel %vm947, %v1302, %v1306
      %v1309 = vshrl.u32 %v923, 16
      %v1311 = vrot.slane %v1309, 4
      %v1312 = vshll.u32 %v923, 16
      %v1314 = vrot.slane %v1312, 5
      %v1315 = vor.u32 %v1311, %v1314
      %v1316 = vrot.slane %v1315, 4
      %v1318 = vshll.u32 %v924, 16
      %v1320 = vrot.slane %v1318, 5
      %v1321 = vsel %vm947, %v1316, %v1320
      %v1322 = vshrl.u32 %v924, 16
      %v1324 = vrot.slane %v1322, 4
      %v1325 = vor.u32 %v1324, %v1320
      %v1326 = vrot.slane %v1325, 4
      %v1328 = vshll.u32 %v944, 16
      %v1330 = vrot.slane %v1328, 5
      %v1331 = vsel %vm947, %v1326, %v1330
      %s1332 = scalar_lea.vmem %s1, 16
      %v1333 = vld [vmem:[%s1332] sm:$0xf]
      %v1334 = vld [vmem:[%s1332 + $0x4] sm:$0xf]
      %v1335 = vld [vmem:[%s1332 + $0x8] sm:$0xf]
      %v1336 = vld [vmem:[%s1332 + $0xc] sm:$0xf]
      %v1337 = vunpack.c.l.b16 %v961
      %v1338 = vunpack.c.l.b16 %v971
      %v1339 = vunpack.c.l.b16 %v985
      %v1340 = vunpack.c.l.b16 %v995
      %v1341 = vunpack.c.l.b16 %v1009
      %v1342 = vunpack.c.l.b16 %v1019
      %v1343 = vunpack.c.l.b16 %v1033
      %v1344 = vunpack.c.l.b16 %v1043
      %v1345 = vunpack.c.l.b16 %v1057
      %v1346 = vunpack.c.l.b16 %v1067
      %v1347 = vunpack.c.l.b16 %v1081
      %v1348 = vunpack.c.l.b16 %v1091
      %v1349 = vunpack.c.l.b16 %v1105
      %v1350 = vunpack.c.l.b16 %v1115
      %v1351 = vunpack.c.l.b16 %v1129
      %v1352 = vunpack.c.l.b16 %v1139
      %v1353 = vunpack.c.l.b16 %v1153
      %v1354 = vunpack.c.l.b16 %v1163
      %v1355 = vunpack.c.l.b16 %v1177
      %v1356 = vunpack.c.l.b16 %v1187
      %v1357 = vunpack.c.l.b16 %v1201
      %v1358 = vunpack.c.l.b16 %v1211
      %v1359 = vunpack.c.l.b16 %v1225
      %v1360 = vunpack.c.l.b16 %v1235
      %v1361 = vunpack.c.l.b16 %v1249
      %v1362 = vunpack.c.l.b16 %v1259
      %v1363 = vunpack.c.l.b16 %v1273
      %v1364 = vunpack.c.l.b16 %v1283
      %v1365 = vunpack.c.l.b16 %v1297
      %v1366 = vunpack.c.l.b16 %v1307
      %v1367 = vunpack.c.l.b16 %v1321
      %v1368 = vunpack.c.l.b16 %v1331
      %v1369 = vpack.c.b16 %v1338, %v1337
      %v1370 = vpack.c.b16 %v1340, %v1339
      %v1371 = vpack.c.b16 %v1342, %v1341
      %v1372 = vpack.c.b16 %v1344, %v1343
      %v1373 = vpack.c.b16 %v1346, %v1345
      %v1374 = vpack.c.b16 %v1348, %v1347
      %v1375 = vpack.c.b16 %v1350, %v1349
      %v1376 = vpack.c.b16 %v1352, %v1351
      %v1377 = vpack.c.b16 %v1354, %v1353
      %v1378 = vpack.c.b16 %v1356, %v1355
      %v1379 = vpack.c.b16 %v1358, %v1357
      %v1380 = vpack.c.b16 %v1360, %v1359
      %v1381 = vpack.c.b16 %v1362, %v1361
      %v1382 = vpack.c.b16 %v1364, %v1363
      %v1383 = vpack.c.b16 %v1366, %v1365
      %v1384 = vpack.c.b16 %v1368, %v1367
      %v1389 = vunpack.c.l.b16 %v1333
      %v1390 = vunpack.c.l.b16 %v1334
      %v1391 = vunpack.c.l.b16 %v1335
      %v1392 = vunpack.c.l.b16 %v1336
      %v1393 = vpack.c.b16 %v1390, %v1389
      %v1394 = vpack.c.b16 %v1392, %v1391
      %vm1397 = vcmask 261120
      %v1399 = vsel %vm1397, %v1369, 0
      %v1402 = vsel %vm1397, %v1370, 0
      %v1405 = vsel %vm1397, %v1371, 0
      %v1408 = vsel %vm1397, %v1372, 0
      %v1411 = vsel %vm1397, %v1373, 0
      %v1414 = vsel %vm1397, %v1374, 0
      %v1417 = vsel %vm1397, %v1375, 0
      %v1420 = vsel %vm1397, %v1376, 0
      %v1423 = vsel %vm1397, %v1377, 0
      %v1426 = vsel %vm1397, %v1378, 0
      %v1429 = vsel %vm1397, %v1379, 0
      %v1432 = vsel %vm1397, %v1380, 0
      %v1435 = vsel %vm1397, %v1381, 0
      %v1438 = vsel %vm1397, %v1382, 0
      %v1441 = vsel %vm1397, %v1383, 0
      %v1444 = vsel %vm1397, %v1384, 0
      %1446 = vmatprep.subr.bf16.mxu0 0
      %1447 = vmatpush1.bf16.msra.mxu0 %v1393
      %1448 = vmatprep.subr.bf16.mxu0 0
      %1449 = vmatpush1.bf16.msra.mxu0 %v1394
      %1450 = vmatprep.subr.bf16.mxu0 0
      %1451 = vmatpush1.bf16.msra.mxu0 0
      %1452 = vmatprep.subr.bf16.mxu0 0
      %1453 = vmatpush1.bf16.msra.mxu0 0
      %1454 = vmatprep.subr.bf16.mxu0 0
      %1455 = vmatpush1.bf16.msra.mxu0 0
      %1456 = vmatprep.subr.bf16.mxu0 0
      %1457 = vmatpush1.bf16.msra.mxu0 0
      %1458 = vmatprep.subr.bf16.mxu0 0
      %1459 = vmatpush1.bf16.msra.mxu0 0
      %1460 = vmatprep.subr.bf16.mxu0 0
      %1461 = vmatpush1.bf16.msra.mxu0 0
      %1462 = vmatprep.subr.bf16.mxu0 0
      %1463 = vmatpush1.bf16.msra.mxu0 0
      %1464 = vmatprep.subr.bf16.mxu0 0
      %1465 = vmatpush1.bf16.msra.mxu0 0
      %1466 = vmatprep.subr.bf16.mxu0 0
      %1467 = vmatpush1.bf16.msra.mxu0 0
      %1468 = vmatprep.subr.bf16.mxu0 0
      %1469 = vmatpush1.bf16.msra.mxu0 0
      %1470 = vmatprep.subr.bf16.mxu0 0
      %1471 = vmatpush1.bf16.msra.mxu0 0
      %1472 = vmatprep.subr.bf16.mxu0 0
      %1473 = vmatpush1.bf16.msra.mxu0 0
      %1474 = vmatprep.subr.bf16.mxu0 0
      %1475 = vmatpush1.bf16.msra.mxu0 0
      %1476 = vmatprep.subr.bf16.mxu0 0
      %1477 = vmatpush1.bf16.msra.mxu0 0
      %1478 = vmatprep.mubr.bf16.mxu0 0
      %1479 = vmatmul.mubr.bf16.gmra.mrb[0].mxu0 %v1399
      %v1480 = vpop.f32.mrb[0].mxu0
      %v1481 = vadd.f32 0.0, %v1480
      %v1482 = vpop.f32.mrb[0].mxu0
      %v1483 = vpop.f32.mrb[0].mxu0
      %v1484 = vadd.f32 0.0, %v1483
      %v1485 = vpop.f32.mrb[0].mxu0
      %1486 = vmatprep.mubr.bf16.mxu0 0
      %1487 = vmatmul.mubr.bf16.gmra.mrb[0].mxu0 %v1402
      %v1488 = vpop.f32.mrb[0].mxu0
      %v1489 = vadd.f32 0.0, %v1488
      %v1490 = vpop.f32.mrb[0].mxu0
      %v1491 = vpop.f32.mrb[0].mxu0
      %v1492 = vadd.f32 0.0, %v1491
      %v1493 = vpop.f32.mrb[0].mxu0
      %1494 = vmatprep.mubr.bf16.mxu0 0
      %1495 = vmatmul.mubr.bf16.gmra.mrb[0].mxu0 %v1405
      %v1496 = vpop.f32.mrb[0].mxu0
      %v1497 = vadd.f32 0.0, %v1496
      %v1498 = vpop.f32.mrb[0].mxu0
      %v1499 = vpop.f32.mrb[0].mxu0
      %v1500 = vadd.f32 0.0, %v1499
      %v1501 = vpop.f32.mrb[0].mxu0
      %1502 = vmatprep.mubr.bf16.mxu0 0
      %1503 = vmatmul.mubr.bf16.gmra.mrb[0].mxu0 %v1408
      %v1504 = vpop.f32.mrb[0].mxu0
      %v1505 = vadd.f32 0.0, %v1504
      %v1506 = vpop.f32.mrb[0].mxu0
      %v1507 = vpop.f32.mrb[0].mxu0
      %v1508 = vadd.f32 0.0, %v1507
      %v1509 = vpop.f32.mrb[0].mxu0
      %1510 = vmatprep.mubr.bf16.mxu0 0
      %1511 = vmatmul.mubr.bf16.gmra.mrb[0].mxu0 %v1411
      %v1512 = vpop.f32.mrb[0].mxu0
      %v1513 = vadd.f32 0.0, %v1512
      %v1514 = vpop.f32.mrb[0].mxu0
      %v1515 = vpop.f32.mrb[0].mxu0
      %v1516 = vadd.f32 0.0, %v1515
      %v1517 = vpop.f32.mrb[0].mxu0
      %1518 = vmatprep.mubr.bf16.mxu0 0
      %1519 = vmatmul.mubr.bf16.gmra.mrb[0].mxu0 %v1414
      %v1520 = vpop.f32.mrb[0].mxu0
      %v1521 = vadd.f32 0.0, %v1520
      %v1522 = vpop.f32.mrb[0].mxu0
      %v1523 = vpop.f32.mrb[0].mxu0
      %v1524 = vadd.f32 0.0, %v1523
      %v1525 = vpop.f32.mrb[0].mxu0
      %1526 = vmatprep.mubr.bf16.mxu0 0
      %1527 = vmatmul.mubr.bf16.gmra.mrb[0].mxu0 %v1417
      %v1528 = vpop.f32.mrb[0].mxu0
      %v1529 = vadd.f32 0.0, %v1528
      %v1530 = vpop.f32.mrb[0].mxu0
      %v1531 = vpop.f32.mrb[0].mxu0
      %v1532 = vadd.f32 0.0, %v1531
      %v1533 = vpop.f32.mrb[0].mxu0
      %1534 = vmatprep.mubr.bf16.mxu0 0
      %1535 = vmatmul.mubr.bf16.gmra.mrb[0].mxu0 %v1420
      %v1536 = vpop.f32.mrb[0].mxu0
      %v1537 = vadd.f32 0.0, %v1536
      %v1538 = vpop.f32.mrb[0].mxu0
      %v1539 = vpop.f32.mrb[0].mxu0
      %v1540 = vadd.f32 0.0, %v1539
      %v1541 = vpop.f32.mrb[0].mxu0
      %1542 = vmatprep.mubr.bf16.mxu0 0
      %1543 = vmatmul.mubr.bf16.gmra.mrb[0].mxu0 %v1423
      %v1544 = vpop.f32.mrb[0].mxu0
      %v1545 = vadd.f32 0.0, %v1544
      %v1546 = vpop.f32.mrb[0].mxu0
      %v1547 = vpop.f32.mrb[0].mxu0
      %v1548 = vadd.f32 0.0, %v1547
      %v1549 = vpop.f32.mrb[0].mxu0
      %1550 = vmatprep.mubr.bf16.mxu0 0
      %1551 = vmatmul.mubr.bf16.gmra.mrb[0].mxu0 %v1426
      %v1552 = vpop.f32.mrb[0].mxu0
      %v1553 = vadd.f32 0.0, %v1552
      %v1554 = vpop.f32.mrb[0].mxu0
      %v1555 = vpop.f32.mrb[0].mxu0
      %v1556 = vadd.f32 0.0, %v1555
      %v1557 = vpop.f32.mrb[0].mxu0
      %1558 = vmatprep.mubr.bf16.mxu0 0
      %1559 = vmatmul.mubr.bf16.gmra.mrb[0].mxu0 %v1429
      %v1560 = vpop.f32.mrb[0].mxu0
      %v1561 = vadd.f32 0.0, %v1560
      %v1562 = vpop.f32.mrb[0].mxu0
      %v1563 = vpop.f32.mrb[0].mxu0
      %v1564 = vadd.f32 0.0, %v1563
      %v1565 = vpop.f32.mrb[0].mxu0
      %1566 = vmatprep.mubr.bf16.mxu0 0
      %1567 = vmatmul.mubr.bf16.gmra.mrb[0].mxu0 %v1432
      %v1568 = vpop.f32.mrb[0].mxu0
      %v1569 = vadd.f32 0.0, %v1568
      %v1570 = vpop.f32.mrb[0].mxu0
      %v1571 = vpop.f32.mrb[0].mxu0
      %v1572 = vadd.f32 0.0, %v1571
      %v1573 = vpop.f32.mrb[0].mxu0
      %1574 = vmatprep.mubr.bf16.mxu0 0
      %1575 = vmatmul.mubr.bf16.gmra.mrb[0].mxu0 %v1435
      %v1576 = vpop.f32.mrb[0].mxu0
      %v1577 = vadd.f32 0.0, %v1576
      %v1578 = vpop.f32.mrb[0].mxu0
      %v1579 = vpop.f32.mrb[0].mxu0
      %v1580 = vadd.f32 0.0, %v1579
      %v1581 = vpop.f32.mrb[0].mxu0
      %1582 = vmatprep.mubr.bf16.mxu0 0
      %1583 = vmatmul.mubr.bf16.gmra.mrb[0].mxu0 %v1438
      %v1584 = vpop.f32.mrb[0].mxu0
      %v1585 = vadd.f32 0.0, %v1584
      %v1586 = vpop.f32.mrb[0].mxu0
      %v1587 = vpop.f32.mrb[0].mxu0
      %v1588 = vadd.f32 0.0, %v1587
      %v1589 = vpop.f32.mrb[0].mxu0
      %1590 = vmatprep.mubr.bf16.mxu0 0
      %1591 = vmatmul.mubr.bf16.gmra.mrb[0].mxu0 %v1441
      %v1592 = vpop.f32.mrb[0].mxu0
      %v1593 = vadd.f32 0.0, %v1592
      %v1594 = vpop.f32.mrb[0].mxu0
      %v1595 = vpop.f32.mrb[0].mxu0
      %v1596 = vadd.f32 0.0, %v1595
      %v1597 = vpop.f32.mrb[0].mxu0
      %1598 = vmatprep.mubr.bf16.mxu0 0
      %1599 = vmatmul.mubr.bf16.gmra.mrb[0].mxu0 %v1444
      %v1600 = vpop.f32.mrb[0].mxu0
      %v1601 = vadd.f32 0.0, %v1600
      %v1602 = vpop.f32.mrb[0].mxu0
      %v1603 = vpop.f32.mrb[0].mxu0
      %v1604 = vadd.f32 0.0, %v1603
      %v1605 = vpop.f32.mrb[0].mxu0
      %1606 = vdwg.mxu0
      %v1639 = vunpack.c.l.b16 %v893
      %v1640 = vunpack.c.l.b16 %v894
      %v1641 = vunpack.c.l.b16 %v895
      %v1642 = vunpack.c.l.b16 %v896
      %v1643 = vunpack.c.l.b16 %v897
      %v1644 = vunpack.c.l.b16 %v898
      %v1645 = vunpack.c.l.b16 %v899
      %v1646 = vunpack.c.l.b16 %v900
      %v1647 = vunpack.c.l.b16 %v901
      %v1648 = vunpack.c.l.b16 %v902
      %v1649 = vunpack.c.l.b16 %v903
      %v1650 = vunpack.c.l.b16 %v904
      %v1651 = vunpack.c.l.b16 %v905
      %v1652 = vunpack.c.l.b16 %v906
      %v1653 = vunpack.c.l.b16 %v907
      %v1654 = vunpack.c.l.b16 %v908
      %v1655 = vunpack.c.l.b16 %v909
      %v1656 = vunpack.c.l.b16 %v910
      %v1657 = vunpack.c.l.b16 %v911
      %v1658 = vunpack.c.l.b16 %v912
      %v1659 = vunpack.c.l.b16 %v913
      %v1660 = vunpack.c.l.b16 %v914
      %v1661 = vunpack.c.l.b16 %v915
      %v1662 = vunpack.c.l.b16 %v916
      %v1663 = vunpack.c.l.b16 %v917
      %v1664 = vunpack.c.l.b16 %v918
      %v1665 = vunpack.c.l.b16 %v919
      %v1666 = vunpack.c.l.b16 %v920
      %v1667 = vunpack.c.l.b16 %v921
      %v1668 = vunpack.c.l.b16 %v922
      %v1669 = vunpack.c.l.b16 %v923
      %v1670 = vunpack.c.l.b16 %v924
      %v1671 = vpack.c.b16 %v1640, %v1639
      %v1672 = vpack.c.b16 %v1642, %v1641
      %v1673 = vpack.c.b16 %v1644, %v1643
      %v1674 = vpack.c.b16 %v1646, %v1645
      %v1675 = vpack.c.b16 %v1648, %v1647
      %v1676 = vpack.c.b16 %v1650, %v1649
      %v1677 = vpack.c.b16 %v1652, %v1651
      %v1678 = vpack.c.b16 %v1654, %v1653
      %v1679 = vpack.c.b16 %v1656, %v1655
      %v1680 = vpack.c.b16 %v1658, %v1657
      %v1681 = vpack.c.b16 %v1660, %v1659
      %v1682 = vpack.c.b16 %v1662, %v1661
      %v1683 = vpack.c.b16 %v1664, %v1663
      %v1684 = vpack.c.b16 %v1666, %v1665
      %v1685 = vpack.c.b16 %v1668, %v1667
      %v1686 = vpack.c.b16 %v1670, %v1669
      %v1691 = vunpack.c.l.b16 %v925
      %v1692 = vunpack.c.l.b16 %v926
      %v1693 = vunpack.c.l.b16 %v927
      %v1694 = vunpack.c.l.b16 %v928
      %v1695 = vpack.c.b16 %v1692, %v1691
      %v1696 = vpack.c.b16 %v1694, %v1693
      %v1700 = vsel %vm1397, %v1671, 0
      %v1703 = vsel %vm1397, %v1672, 0
      %v1706 = vsel %vm1397, %v1673, 0
      %v1709 = vsel %vm1397, %v1674, 0
      %v1712 = vsel %vm1397, %v1675, 0
      %v1715 = vsel %vm1397, %v1676, 0
      %v1718 = vsel %vm1397, %v1677, 0
      %v1721 = vsel %vm1397, %v1678, 0
      %v1724 = vsel %vm1397, %v1679, 0
      %v1727 = vsel %vm1397, %v1680, 0
      %v1730 = vsel %vm1397, %v1681, 0
      %v1733 = vsel %vm1397, %v1682, 0
      %v1736 = vsel %vm1397, %v1683, 0
      %v1739 = vsel %vm1397, %v1684, 0
      %v1742 = vsel %vm1397, %v1685, 0
      %v1745 = vsel %vm1397, %v1686, 0
      %1747 = vmatprep.subr.bf16.mxu0 0
      %1748 = vmatpush1.bf16.msra.mxu0 %v1695
      %1749 = vmatprep.subr.bf16.mxu0 0
      %1750 = vmatpush1.bf16.msra.mxu0 %v1696
      %1751 = vmatprep.subr.bf16.mxu0 0
      %1752 = vmatpush1.bf16.msra.mxu0 0
      %1753 = vmatprep.subr.bf16.mxu0 0
      %1754 = vmatpush1.bf16.msra.mxu0 0
      %1755 = vmatprep.subr.bf16.mxu0 0
      %1756 = vmatpush1.bf16.msra.mxu0 0
      %1757 = vmatprep.subr.bf16.mxu0 0
      %1758 = vmatpush1.bf16.msra.mxu0 0
      %1759 = vmatprep.subr.bf16.mxu0 0
      %1760 = vmatpush1.bf16.msra.mxu0 0
      %1761 = vmatprep.subr.bf16.mxu0 0
      %1762 = vmatpush1.bf16.msra.mxu0 0
      %1763 = vmatprep.subr.bf16.mxu0 0
      %1764 = vmatpush1.bf16.msra.mxu0 0
      %1765 = vmatprep.subr.bf16.mxu0 0
      %1766 = vmatpush1.bf16.msra.mxu0 0
      %1767 = vmatprep.subr.bf16.mxu0 0
      %1768 = vmatpush1.bf16.msra.mxu0 0
      %1769 = vmatprep.subr.bf16.mxu0 0
      %1770 = vmatpush1.bf16.msra.mxu0 0
      %1771 = vmatprep.subr.bf16.mxu0 0
      %1772 = vmatpush1.bf16.msra.mxu0 0
      %1773 = vmatprep.subr.bf16.mxu0 0
      %1774 = vmatpush1.bf16.msra.mxu0 0
      %1775 = vmatprep.subr.bf16.mxu0 0
      %1776 = vmatpush1.bf16.msra.mxu0 0
      %1777 = vmatprep.subr.bf16.mxu0 0
      %1778 = vmatpush1.bf16.msra.mxu0 0
      %1779 = vmatprep.mubr.bf16.mxu0 0
      %1780 = vmatmul.mubr.bf16.gmra.mrb[0].mxu0 %v1700
      %v1781 = vpop.f32.mrb[0].mxu0
      %v1782 = vadd.f32 %v1481, %v1781
      %v1783 = vpop.f32.mrb[0].mxu0
      %v1784 = vpop.f32.mrb[0].mxu0
      %v1785 = vadd.f32 %v1484, %v1784
      %v1786 = vpop.f32.mrb[0].mxu0
      %1787 = vmatprep.mubr.bf16.mxu0 0
      %1788 = vmatmul.mubr.bf16.gmra.mrb[0].mxu0 %v1703
      %v1789 = vpop.f32.mrb[0].mxu0
      %v1790 = vadd.f32 %v1489, %v1789
      %v1791 = vpop.f32.mrb[0].mxu0
      %v1792 = vpop.f32.mrb[0].mxu0
      %v1793 = vadd.f32 %v1492, %v1792
      %v1794 = vpop.f32.mrb[0].mxu0
      %1795 = vmatprep.mubr.bf16.mxu0 0
      %1796 = vmatmul.mubr.bf16.gmra.mrb[0].mxu0 %v1706
      %v1797 = vpop.f32.mrb[0].mxu0
      %v1798 = vadd.f32 %v1497, %v1797
      %v1799 = vpop.f32.mrb[0].mxu0
      %v1800 = vpop.f32.mrb[0].mxu0
      %v1801 = vadd.f32 %v1500, %v1800
      %v1802 = vpop.f32.mrb[0].mxu0
      %1803 = vmatprep.mubr.bf16.mxu0 0
      %1804 = vmatmul.mubr.bf16.gmra.mrb[0].mxu0 %v1709
      %v1805 = vpop.f32.mrb[0].mxu0
      %v1806 = vadd.f32 %v1505, %v1805
      %v1807 = vpop.f32.mrb[0].mxu0
      %v1808 = vpop.f32.mrb[0].mxu0
      %v1809 = vadd.f32 %v1508, %v1808
      %v1810 = vpop.f32.mrb[0].mxu0
      %1811 = vmatprep.mubr.bf16.mxu0 0
      %1812 = vmatmul.mubr.bf16.gmra.mrb[0].mxu0 %v1712
      %v1813 = vpop.f32.mrb[0].mxu0
      %v1814 = vadd.f32 %v1513, %v1813
      %v1815 = vpop.f32.mrb[0].mxu0
      %v1816 = vpop.f32.mrb[0].mxu0
      %v1817 = vadd.f32 %v1516, %v1816
      %v1818 = vpop.f32.mrb[0].mxu0
      %1819 = vmatprep.mubr.bf16.mxu0 0
      %1820 = vmatmul.mubr.bf16.gmra.mrb[0].mxu0 %v1715
      %v1821 = vpop.f32.mrb[0].mxu0
      %v1822 = vadd.f32 %v1521, %v1821
      %v1823 = vpop.f32.mrb[0].mxu0
      %v1824 = vpop.f32.mrb[0].mxu0
      %v1825 = vadd.f32 %v1524, %v1824
      %v1826 = vpop.f32.mrb[0].mxu0
      %1827 = vmatprep.mubr.bf16.mxu0 0
      %1828 = vmatmul.mubr.bf16.gmra.mrb[0].mxu0 %v1718
      %v1829 = vpop.f32.mrb[0].mxu0
      %v1830 = vadd.f32 %v1529, %v1829
      %v1831 = vpop.f32.mrb[0].mxu0
      %v1832 = vpop.f32.mrb[0].mxu0
      %v1833 = vadd.f32 %v1532, %v1832
      %v1834 = vpop.f32.mrb[0].mxu0
      %1835 = vmatprep.mubr.bf16.mxu0 0
      %1836 = vmatmul.mubr.bf16.gmra.mrb[0].mxu0 %v1721
      %v1837 = vpop.f32.mrb[0].mxu0
      %v1838 = vadd.f32 %v1537, %v1837
      %v1839 = vpop.f32.mrb[0].mxu0
      %v1840 = vpop.f32.mrb[0].mxu0
      %v1841 = vadd.f32 %v1540, %v1840
      %v1842 = vpop.f32.mrb[0].mxu0
      %1843 = vmatprep.mubr.bf16.mxu0 0
      %1844 = vmatmul.mubr.bf16.gmra.mrb[0].mxu0 %v1724
      %v1845 = vpop.f32.mrb[0].mxu0
      %v1846 = vadd.f32 %v1545, %v1845
      %v1847 = vpop.f32.mrb[0].mxu0
      %v1848 = vpop.f32.mrb[0].mxu0
      %v1849 = vadd.f32 %v1548, %v1848
      %v1850 = vpop.f32.mrb[0].mxu0
      %1851 = vmatprep.mubr.bf16.mxu0 0
      %1852 = vmatmul.mubr.bf16.gmra.mrb[0].mxu0 %v1727
      %v1853 = vpop.f32.mrb[0].mxu0
      %v1854 = vadd.f32 %v1553, %v1853
      %v1855 = vpop.f32.mrb[0].mxu0
      %v1856 = vpop.f32.mrb[0].mxu0
      %v1857 = vadd.f32 %v1556, %v1856
      %v1858 = vpop.f32.mrb[0].mxu0
      %1859 = vmatprep.mubr.bf16.mxu0 0
      %1860 = vmatmul.mubr.bf16.gmra.mrb[0].mxu0 %v1730
      %v1861 = vpop.f32.mrb[0].mxu0
      %v1862 = vadd.f32 %v1561, %v1861
      %v1863 = vpop.f32.mrb[0].mxu0
      %v1864 = vpop.f32.mrb[0].mxu0
      %v1865 = vadd.f32 %v1564, %v1864
      %v1866 = vpop.f32.mrb[0].mxu0
      %1867 = vmatprep.mubr.bf16.mxu0 0
      %1868 = vmatmul.mubr.bf16.gmra.mrb[0].mxu0 %v1733
      %v1869 = vpop.f32.mrb[0].mxu0
      %v1870 = vadd.f32 %v1569, %v1869
      %v1871 = vpop.f32.mrb[0].mxu0
      %v1872 = vpop.f32.mrb[0].mxu0
      %v1873 = vadd.f32 %v1572, %v1872
      %v1874 = vpop.f32.mrb[0].mxu0
      %1875 = vmatprep.mubr.bf16.mxu0 0
      %1876 = vmatmul.mubr.bf16.gmra.mrb[0].mxu0 %v1736
      %v1877 = vpop.f32.mrb[0].mxu0
      %v1878 = vadd.f32 %v1577, %v1877
      %v1879 = vpop.f32.mrb[0].mxu0
      %v1880 = vpop.f32.mrb[0].mxu0
      %v1881 = vadd.f32 %v1580, %v1880
      %v1882 = vpop.f32.mrb[0].mxu0
      %1883 = vmatprep.mubr.bf16.mxu0 0
      %1884 = vmatmul.mubr.bf16.gmra.mrb[0].mxu0 %v1739
      %v1885 = vpop.f32.mrb[0].mxu0
      %v1886 = vadd.f32 %v1585, %v1885
      %v1887 = vpop.f32.mrb[0].mxu0
      %v1888 = vpop.f32.mrb[0].mxu0
      %v1889 = vadd.f32 %v1588, %v1888
      %v1890 = vpop.f32.mrb[0].mxu0
      %1891 = vmatprep.mubr.bf16.mxu0 0
      %1892 = vmatmul.mubr.bf16.gmra.mrb[0].mxu0 %v1742
      %v1893 = vpop.f32.mrb[0].mxu0
      %v1894 = vadd.f32 %v1593, %v1893
      %v1895 = vpop.f32.mrb[0].mxu0
      %v1896 = vpop.f32.mrb[0].mxu0
      %v1897 = vadd.f32 %v1596, %v1896
      %v1898 = vpop.f32.mrb[0].mxu0
      %1899 = vmatprep.mubr.bf16.mxu0 0
      %1900 = vmatmul.mubr.bf16.gmra.mrb[0].mxu0 %v1745
      %v1901 = vpop.f32.mrb[0].mxu0
      %v1902 = vadd.f32 %v1601, %v1901
      %v1903 = vpop.f32.mrb[0].mxu0
      %v1904 = vpop.f32.mrb[0].mxu0
      %v1905 = vadd.f32 %v1604, %v1904
      %v1906 = vpop.f32.mrb[0].mxu0
      %1907 = vdwg.mxu0
      %v1908 = vld [vmem:[#allocation2] sm:$0xe]
      %v1909 = vld [vmem:[#allocation2 + $0xc] sm:$0xe]
      %v1910 = vld [vmem:[#allocation2 + $0x18] sm:$0xe]
      %v1911 = vld [vmem:[#allocation2 + $0x24] sm:$0xe]
      %v1912 = vld [vmem:[#allocation2 + $0x30] sm:$0xe]
      %v1913 = vld [vmem:[#allocation2 + $0x3c] sm:$0xe]
      %v1914 = vld [vmem:[#allocation2 + $0x48] sm:$0xe]
      %v1915 = vld [vmem:[#allocation2 + $0x54] sm:$0xe]
      %v1916 = vld [vmem:[#allocation2 + $0x60] sm:$0xe]
      %v1917 = vld [vmem:[#allocation2 + $0x6c] sm:$0xe]
      %v1918 = vld [vmem:[#allocation2 + $0x78] sm:$0xe]
      %v1919 = vld [vmem:[#allocation2 + $0x84] sm:$0xe]
      %v1920 = vld [vmem:[#allocation2 + $0x90] sm:$0xe]
      %v1921 = vld [vmem:[#allocation2 + $0x9c] sm:$0xe]
      %v1922 = vld [vmem:[#allocation2 + $0xa8] sm:$0xe]
      %v1923 = vld [vmem:[#allocation2 + $0xb4] sm:$0xe]
      %vm1956 = vcmask 1042432
      %vm1957 = vcmask 1046532
      %vm1958 = vmor %vm1956, %vm1957
      %v1959 = vrot.slane %v1908, 5
      %v1960 = vrot.slane %v1959, 4
      %v1961 = vrot.slane %v894, 5
      %v1962 = vsel %vm1958, %v1960, %v1961
      %v1963 = vrot.slane %v1961, 4
      %v1964 = vrot.slane %v929, 5
      %v1965 = vsel %vm1958, %v1963, %v1964
      %v1966 = vrot.slane %v1909, 5
      %v1967 = vrot.slane %v1966, 4
      %v1968 = vrot.slane %v896, 5
      %v1969 = vsel %vm1958, %v1967, %v1968
      %v1970 = vrot.slane %v1968, 4
      %v1971 = vrot.slane %v930, 5
      %v1972 = vsel %vm1958, %v1970, %v1971
      %v1973 = vrot.slane %v1910, 5
      %v1974 = vrot.slane %v1973, 4
      %v1975 = vrot.slane %v898, 5
      %v1976 = vsel %vm1958, %v1974, %v1975
      %v1977 = vrot.slane %v1975, 4
      %v1978 = vrot.slane %v931, 5
      %v1979 = vsel %vm1958, %v1977, %v1978
      %v1980 = vrot.slane %v1911, 5
      %v1981 = vrot.slane %v1980, 4
      %v1982 = vrot.slane %v900, 5
      %v1983 = vsel %vm1958, %v1981, %v1982
      %v1984 = vrot.slane %v1982, 4
      %v1985 = vrot.slane %v932, 5
      %v1986 = vsel %vm1958, %v1984, %v1985
      %v1987 = vrot.slane %v1912, 5
      %v1988 = vrot.slane %v1987, 4
      %v1989 = vrot.slane %v902, 5
      %v1990 = vsel %vm1958, %v1988, %v1989
      %v1991 = vrot.slane %v1989, 4
      %v1992 = vrot.slane %v933, 5
      %v1993 = vsel %vm1958, %v1991, %v1992
      %v1994 = vrot.slane %v1913, 5
      %v1995 = vrot.slane %v1994, 4
      %v1996 = vrot.slane %v904, 5
      %v1997 = vsel %vm1958, %v1995, %v1996
      %v1998 = vrot.slane %v1996, 4
      %v1999 = vrot.slane %v934, 5
      %v2000 = vsel %vm1958, %v1998, %v1999
      %v2001 = vrot.slane %v1914, 5
      %v2002 = vrot.slane %v2001, 4
      %v2003 = vrot.slane %v906, 5
      %v2004 = vsel %vm1958, %v2002, %v2003
      %v2005 = vrot.slane %v2003, 4
      %v2006 = vrot.slane %v935, 5
      %v2007 = vsel %vm1958, %v2005, %v2006
      %v2008 = vrot.slane %v1915, 5
      %v2009 = vrot.slane %v2008, 4
      %v2010 = vrot.slane %v908, 5
      %v2011 = vsel %vm1958, %v2009, %v2010
      %v2012 = vrot.slane %v2010, 4
      %v2013 = vrot.slane %v936, 5
      %v2014 = vsel %vm1958, %v2012, %v2013
      %v2015 = vrot.slane %v1916, 5
      %v2016 = vrot.slane %v2015, 4
      %v2017 = vrot.slane %v910, 5
      %v2018 = vsel %vm1958, %v2016, %v2017
      %v2019 = vrot.slane %v2017, 4
      %v2020 = vrot.slane %v937, 5
      %v2021 = vsel %vm1958, %v2019, %v2020
      %v2022 = vrot.slane %v1917, 5
      %v2023 = vrot.slane %v2022, 4
      %v2024 = vrot.slane %v912, 5
      %v2025 = vsel %vm1958, %v2023, %v2024
      %v2026 = vrot.slane %v2024, 4
      %v2027 = vrot.slane %v938, 5
      %v2028 = vsel %vm1958, %v2026, %v2027
      %v2029 = vrot.slane %v1918, 5
      %v2030 = vrot.slane %v2029, 4
      %v2031 = vrot.slane %v914, 5
      %v2032 = vsel %vm1958, %v2030, %v2031
      %v2033 = vrot.slane %v2031, 4
      %v2034 = vrot.slane %v939, 5
      %v2035 = vsel %vm1958, %v2033, %v2034
      %v2036 = vrot.slane %v1919, 5
      %v2037 = vrot.slane %v2036, 4
      %v2038 = vrot.slane %v916, 5
      %v2039 = vsel %vm1958, %v2037, %v2038
      %v2040 = vrot.slane %v2038, 4
      %v2041 = vrot.slane %v940, 5
      %v2042 = vsel %vm1958, %v2040, %v2041
      %v2043 = vrot.slane %v1920, 5
      %v2044 = vrot.slane %v2043, 4
      %v2045 = vrot.slane %v918, 5
      %v2046 = vsel %vm1958, %v2044, %v2045
      %v2047 = vrot.slane %v2045, 4
      %v2048 = vrot.slane %v941, 5
      %v2049 = vsel %vm1958, %v2047, %v2048
      %v2050 = vrot.slane %v1921, 5
      %v2051 = vrot.slane %v2050, 4
      %v2052 = vrot.slane %v920, 5
      %v2053 = vsel %vm1958, %v2051, %v2052
      %v2054 = vrot.slane %v2052, 4
      %v2055 = vrot.slane %v942, 5
      %v2056 = vsel %vm1958, %v2054, %v2055
      %v2057 = vrot.slane %v1922, 5
      %v2058 = vrot.slane %v2057, 4
      %v2059 = vrot.slane %v922, 5
      %v2060 = vsel %vm1958, %v2058, %v2059
      %v2061 = vrot.slane %v2059, 4
      %v2062 = vrot.slane %v943, 5
      %v2063 = vsel %vm1958, %v2061, %v2062
      %v2064 = vrot.slane %v1923, 5
      %v2065 = vrot.slane %v2064, 4
      %v2066 = vrot.slane %v924, 5
      %v2067 = vsel %vm1958, %v2065, %v2066
      %v2068 = vrot.slane %v2066, 4
      %v2069 = vrot.slane %v944, 5
      %v2070 = vsel %vm1958, %v2068, %v2069
      %s2071 = scalar_lea.vmem %s1, 32
      %v2072 = vld [vmem:[%s2071] sm:$0xf]
      %v2073 = vld [vmem:[%s2071 + $0x4] sm:$0xf]
      %v2074 = vld [vmem:[%s2071 + $0x8] sm:$0xf]
      %v2075 = vld [vmem:[%s2071 + $0xc] sm:$0xf]
      %v2076 = vunpack.c.l.b16 %v1962
      %v2077 = vunpack.c.l.b16 %v1965
      %v2078 = vunpack.c.l.b16 %v1969
      %v2079 = vunpack.c.l.b16 %v1972
      %v2080 = vunpack.c.l.b16 %v1976
      %v2081 = vunpack.c.l.b16 %v1979
      %v2082 = vunpack.c.l.b16 %v1983
      %v2083 = vunpack.c.l.b16 %v1986
      %v2084 = vunpack.c.l.b16 %v1990
      %v2085 = vunpack.c.l.b16 %v1993
      %v2086 = vunpack.c.l.b16 %v1997
      %v2087 = vunpack.c.l.b16 %v2000
      %v2088 = vunpack.c.l.b16 %v2004
      %v2089 = vunpack.c.l.b16 %v2007
      %v2090 = vunpack.c.l.b16 %v2011
      %v2091 = vunpack.c.l.b16 %v2014
      %v2092 = vunpack.c.l.b16 %v2018
      %v2093 = vunpack.c.l.b16 %v2021
      %v2094 = vunpack.c.l.b16 %v2025
      %v2095 = vunpack.c.l.b16 %v2028
      %v2096 = vunpack.c.l.b16 %v2032
      %v2097 = vunpack.c.l.b16 %v2035
      %v2098 = vunpack.c.l.b16 %v2039
      %v2099 = vunpack.c.l.b16 %v2042
      %v2100 = vunpack.c.l.b16 %v2046
      %v2101 = vunpack.c.l.b16 %v2049
      %v2102 = vunpack.c.l.b16 %v2053
      %v2103 = vunpack.c.l.b16 %v2056
      %v2104 = vunpack.c.l.b16 %v2060
      %v2105 = vunpack.c.l.b16 %v2063
      %v2106 = vunpack.c.l.b16 %v2067
      %v2107 = vunpack.c.l.b16 %v2070
      %v2108 = vpack.c.b16 %v2077, %v2076
      %v2109 = vpack.c.b16 %v2079, %v2078
      %v2110 = vpack.c.b16 %v2081, %v2080
      %v2111 = vpack.c.b16 %v2083, %v2082
      %v2112 = vpack.c.b16 %v2085, %v2084
      %v2113 = vpack.c.b16 %v2087, %v2086
      %v2114 = vpack.c.b16 %v2089, %v2088
      %v2115 = vpack.c.b16 %v2091, %v2090
      %v2116 = vpack.c.b16 %v2093, %v2092
      %v2117 = vpack.c.b16 %v2095, %v2094
      %v2118 = vpack.c.b16 %v2097, %v2096
      %v2119 = vpack.c.b16 %v2099, %v2098
      %v2120 = vpack.c.b16 %v2101, %v2100
      %v2121 = vpack.c.b16 %v2103, %v2102
      %v2122 = vpack.c.b16 %v2105, %v2104
      %v2123 = vpack.c.b16 %v2107, %v2106
      %v2128 = vunpack.c.l.b16 %v2072
      %v2129 = vunpack.c.l.b16 %v2073
      %v2130 = vunpack.c.l.b16 %v2074
      %v2131 = vunpack.c.l.b16 %v2075
      %v2132 = vpack.c.b16 %v2129, %v2128
      %v2133 = vpack.c.b16 %v2131, %v2130
      %v2137 = vsel %vm1397, %v2108, 0
      %v2140 = vsel %vm1397, %v2109, 0
      %v2143 = vsel %vm1397, %v2110, 0
      %v2146 = vsel %vm1397, %v2111, 0
      %v2149 = vsel %vm1397, %v2112, 0
      %v2152 = vsel %vm1397, %v2113, 0
      %v2155 = vsel %vm1397, %v2114, 0
      %v2158 = vsel %vm1397, %v2115, 0
      %v2161 = vsel %vm1397, %v2116, 0
      %v2164 = vsel %vm1397, %v2117, 0
      %v2167 = vsel %vm1397, %v2118, 0
      %v2170 = vsel %vm1397, %v2119, 0
      %v2173 = vsel %vm1397, %v2120, 0
      %v2176 = vsel %vm1397, %v2121, 0
      %v2179 = vsel %vm1397, %v2122, 0
      %v2182 = vsel %vm1397, %v2123, 0
      %2184 = vmatprep.subr.bf16.mxu0 0
      %2185 = vmatpush1.bf16.msra.mxu0 %v2132
      %2186 = vmatprep.subr.bf16.mxu0 0
      %2187 = vmatpush1.bf16.msra.mxu0 %v2133
      %2188 = vmatprep.subr.bf16.mxu0 0
      %2189 = vmatpush1.bf16.msra.mxu0 0
      %2190 = vmatprep.subr.bf16.mxu0 0
      %2191 = vmatpush1.bf16.msra.mxu0 0
      %2192 = vmatprep.subr.bf16.mxu0 0
      %2193 = vmatpush1.bf16.msra.mxu0 0
      %2194 = vmatprep.subr.bf16.mxu0 0
      %2195 = vmatpush1.bf16.msra.mxu0 0
      %2196 = vmatprep.subr.bf16.mxu0 0
      %2197 = vmatpush1.bf16.msra.mxu0 0
      %2198 = vmatprep.subr.bf16.mxu0 0
      %2199 = vmatpush1.bf16.msra.mxu0 0
      %2200 = vmatprep.subr.bf16.mxu0 0
      %2201 = vmatpush1.bf16.msra.mxu0 0
      %2202 = vmatprep.subr.bf16.mxu0 0
      %2203 = vmatpush1.bf16.msra.mxu0 0
      %2204 = vmatprep.subr.bf16.mxu0 0
      %2205 = vmatpush1.bf16.msra.mxu0 0
      %2206 = vmatprep.subr.bf16.mxu0 0
      %2207 = vmatpush1.bf16.msra.mxu0 0
      %2208 = vmatprep.subr.bf16.mxu0 0
      %2209 = vmatpush1.bf16.msra.mxu0 0
      %2210 = vmatprep.subr.bf16.mxu0 0
      %2211 = vmatpush1.bf16.msra.mxu0 0
      %2212 = vmatprep.subr.bf16.mxu0 0
      %2213 = vmatpush1.bf16.msra.mxu0 0
      %2214 = vmatprep.subr.bf16.mxu0 0
      %2215 = vmatpush1.bf16.msra.mxu0 0
      %2216 = vmatprep.mubr.bf16.mxu0 0
      %2217 = vmatmul.mubr.bf16.gmra.mrb[0].mxu0 %v2137
      %v2218 = vpop.f32.mrb[0].mxu0
      %v2219 = vadd.f32 0.0, %v2218
      %v2220 = vpop.f32.mrb[0].mxu0
      %v2221 = vpop.f32.mrb[0].mxu0
      %v2222 = vadd.f32 0.0, %v2221
      %v2223 = vpop.f32.mrb[0].mxu0
      %2224 = vmatprep.mubr.bf16.mxu0 0
      %2225 = vmatmul.mubr.bf16.gmra.mrb[0].mxu0 %v2140
      %v2226 = vpop.f32.mrb[0].mxu0
      %v2227 = vadd.f32 0.0, %v2226
      %v2228 = vpop.f32.mrb[0].mxu0
      %v2229 = vpop.f32.mrb[0].mxu0
      %v2230 = vadd.f32 0.0, %v2229
      %v2231 = vpop.f32.mrb[0].mxu0
      %2232 = vmatprep.mubr.bf16.mxu0 0
      %2233 = vmatmul.mubr.bf16.gmra.mrb[0].mxu0 %v2143
      %v2234 = vpop.f32.mrb[0].mxu0
      %v2235 = vadd.f32 0.0, %v2234
      %v2236 = vpop.f32.mrb[0].mxu0
      %v2237 = vpop.f32.mrb[0].mxu0
      %v2238 = vadd.f32 0.0, %v2237
      %v2239 = vpop.f32.mrb[0].mxu0
      %2240 = vmatprep.mubr.bf16.mxu0 0
      %2241 = vmatmul.mubr.bf16.gmra.mrb[0].mxu0 %v2146
      %v2242 = vpop.f32.mrb[0].mxu0
      %v2243 = vadd.f32 0.0, %v2242
      %v2244 = vpop.f32.mrb[0].mxu0
      %v2245 = vpop.f32.mrb[0].mxu0
      %v2246 = vadd.f32 0.0, %v2245
      %v2247 = vpop.f32.mrb[0].mxu0
      %2248 = vmatprep.mubr.bf16.mxu0 0
      %2249 = vmatmul.mubr.bf16.gmra.mrb[0].mxu0 %v2149
      %v2250 = vpop.f32.mrb[0].mxu0
      %v2251 = vadd.f32 0.0, %v2250
      %v2252 = vpop.f32.mrb[0].mxu0
      %v2253 = vpop.f32.mrb[0].mxu0
      %v2254 = vadd.f32 0.0, %v2253
      %v2255 = vpop.f32.mrb[0].mxu0
      %2256 = vmatprep.mubr.bf16.mxu0 0
      %2257 = vmatmul.mubr.bf16.gmra.mrb[0].mxu0 %v2152
      %v2258 = vpop.f32.mrb[0].mxu0
      %v2259 = vadd.f32 0.0, %v2258
      %v2260 = vpop.f32.mrb[0].mxu0
      %v2261 = vpop.f32.mrb[0].mxu0
      %v2262 = vadd.f32 0.0, %v2261
      %v2263 = vpop.f32.mrb[0].mxu0
      %2264 = vmatprep.mubr.bf16.mxu0 0
      %2265 = vmatmul.mubr.bf16.gmra.mrb[0].mxu0 %v2155
      %v2266 = vpop.f32.mrb[0].mxu0
      %v2267 = vadd.f32 0.0, %v2266
      %v2268 = vpop.f32.mrb[0].mxu0
      %v2269 = vpop.f32.mrb[0].mxu0
      %v2270 = vadd.f32 0.0, %v2269
      %v2271 = vpop.f32.mrb[0].mxu0
      %2272 = vmatprep.mubr.bf16.mxu0 0
      %2273 = vmatmul.mubr.bf16.gmra.mrb[0].mxu0 %v2158
      %v2274 = vpop.f32.mrb[0].mxu0
      %v2275 = vadd.f32 0.0, %v2274
      %v2276 = vpop.f32.mrb[0].mxu0
      %v2277 = vpop.f32.mrb[0].mxu0
      %v2278 = vadd.f32 0.0, %v2277
      %v2279 = vpop.f32.mrb[0].mxu0
      %2280 = vmatprep.mubr.bf16.mxu0 0
      %2281 = vmatmul.mubr.bf16.gmra.mrb[0].mxu0 %v2161
      %v2282 = vpop.f32.mrb[0].mxu0
      %v2283 = vadd.f32 0.0, %v2282
      %v2284 = vpop.f32.mrb[0].mxu0
      %v2285 = vpop.f32.mrb[0].mxu0
      %v2286 = vadd.f32 0.0, %v2285
      %v2287 = vpop.f32.mrb[0].mxu0
      %2288 = vmatprep.mubr.bf16.mxu0 0
      %2289 = vmatmul.mubr.bf16.gmra.mrb[0].mxu0 %v2164
      %v2290 = vpop.f32.mrb[0].mxu0
      %v2291 = vadd.f32 0.0, %v2290
      %v2292 = vpop.f32.mrb[0].mxu0
      %v2293 = vpop.f32.mrb[0].mxu0
      %v2294 = vadd.f32 0.0, %v2293
      %v2295 = vpop.f32.mrb[0].mxu0
      %2296 = vmatprep.mubr.bf16.mxu0 0
      %2297 = vmatmul.mubr.bf16.gmra.mrb[0].mxu0 %v2167
      %v2298 = vpop.f32.mrb[0].mxu0
      %v2299 = vadd.f32 0.0, %v2298
      %v2300 = vpop.f32.mrb[0].mxu0
      %v2301 = vpop.f32.mrb[0].mxu0
      %v2302 = vadd.f32 0.0, %v2301
      %v2303 = vpop.f32.mrb[0].mxu0
      %2304 = vmatprep.mubr.bf16.mxu0 0
      %2305 = vmatmul.mubr.bf16.gmra.mrb[0].mxu0 %v2170
      %v2306 = vpop.f32.mrb[0].mxu0
      %v2307 = vadd.f32 0.0, %v2306
      %v2308 = vpop.f32.mrb[0].mxu0
      %v2309 = vpop.f32.mrb[0].mxu0
      %v2310 = vadd.f32 0.0, %v2309
      %v2311 = vpop.f32.mrb[0].mxu0
      %2312 = vmatprep.mubr.bf16.mxu0 0
      %2313 = vmatmul.mubr.bf16.gmra.mrb[0].mxu0 %v2173
      %v2314 = vpop.f32.mrb[0].mxu0
      %v2315 = vadd.f32 0.0, %v2314
      %v2316 = vpop.f32.mrb[0].mxu0
      %v2317 = vpop.f32.mrb[0].mxu0
      %v2318 = vadd.f32 0.0, %v2317
      %v2319 = vpop.f32.mrb[0].mxu0
      %2320 = vmatprep.mubr.bf16.mxu0 0
      %2321 = vmatmul.mubr.bf16.gmra.mrb[0].mxu0 %v2176
      %v2322 = vpop.f32.mrb[0].mxu0
      %v2323 = vadd.f32 0.0, %v2322
      %v2324 = vpop.f32.mrb[0].mxu0
      %v2325 = vpop.f32.mrb[0].mxu0
      %v2326 = vadd.f32 0.0, %v2325
      %v2327 = vpop.f32.mrb[0].mxu0
      %2328 = vmatprep.mubr.bf16.mxu0 0
      %2329 = vmatmul.mubr.bf16.gmra.mrb[0].mxu0 %v2179
      %v2330 = vpop.f32.mrb[0].mxu0
      %v2331 = vadd.f32 0.0, %v2330
      %v2332 = vpop.f32.mrb[0].mxu0
      %v2333 = vpop.f32.mrb[0].mxu0
      %v2334 = vadd.f32 0.0, %v2333
      %v2335 = vpop.f32.mrb[0].mxu0
      %2336 = vmatprep.mubr.bf16.mxu0 0
      %2337 = vmatmul.mubr.bf16.gmra.mrb[0].mxu0 %v2182
      %v2338 = vpop.f32.mrb[0].mxu0
      %v2339 = vadd.f32 0.0, %v2338
      %v2340 = vpop.f32.mrb[0].mxu0
      %v2341 = vpop.f32.mrb[0].mxu0
      %v2342 = vadd.f32 0.0, %v2341
      %v2343 = vpop.f32.mrb[0].mxu0
      %2344 = vdwg.mxu0
      %v2345 = vadd.f32 %v1782, %v2219
      %v2346 = vadd.f32 %v1785, %v2222
      %v2347 = vadd.f32 %v1790, %v2227
      %v2348 = vadd.f32 %v1793, %v2230
      %v2349 = vadd.f32 %v1798, %v2235
      %v2350 = vadd.f32 %v1801, %v2238
      %v2351 = vadd.f32 %v1806, %v2243
      %v2352 = vadd.f32 %v1809, %v2246
      %v2353 = vadd.f32 %v1814, %v2251
      %v2354 = vadd.f32 %v1817, %v2254
      %v2355 = vadd.f32 %v1822, %v2259
      %v2356 = vadd.f32 %v1825, %v2262
      %v2357 = vadd.f32 %v1830, %v2267
      %v2358 = vadd.f32 %v1833, %v2270
      %v2359 = vadd.f32 %v1838, %v2275
      %v2360 = vadd.f32 %v1841, %v2278
      %v2361 = vadd.f32 %v1846, %v2283
      %v2362 = vadd.f32 %v1849, %v2286
      %v2363 = vadd.f32 %v1854, %v2291
      %v2364 = vadd.f32 %v1857, %v2294
      %v2365 = vadd.f32 %v1862, %v2299
      %v2366 = vadd.f32 %v1865, %v2302
      %v2367 = vadd.f32 %v1870, %v2307
      %v2368 = vadd.f32 %v1873, %v2310
      %v2369 = vadd.f32 %v1878, %v2315
      %v2370 = vadd.f32 %v1881, %v2318
      %v2371 = vadd.f32 %v1886, %v2323
      %v2372 = vadd.f32 %v1889, %v2326
      %v2373 = vadd.f32 %v1894, %v2331
      %v2374 = vadd.f32 %v1897, %v2334
      %v2375 = vadd.f32 %v1902, %v2339
      %v2376 = vadd.f32 %v1905, %v2342
      %s2377 = scalar_lea.vmem [#allocation2], 12
      %v2378 = vld [vmem:[%s2377] sm:$0xf]
      %v2379 = vld [vmem:[%s2377 + $0x4] sm:$0xf]
      %v2380 = vld [vmem:[%s2377 + $0xc] sm:$0xf]
      %v2381 = vld [vmem:[%s2377 + $0x10] sm:$0xf]
      %v2382 = vld [vmem:[%s2377 + $0x18] sm:$0xf]
      %v2383 = vld [vmem:[%s2377 + $0x1c] sm:$0xf]
      %v2384 = vld [vmem:[%s2377 + $0x24] sm:$0xf]
      %v2385 = vld [vmem:[%s2377 + $0x28] sm:$0xf]
      %v2386 = vld [vmem:[%s2377 + $0x30] sm:$0xf]
      %v2387 = vld [vmem:[%s2377 + $0x34] sm:$0xf]
      %v2388 = vld [vmem:[%s2377 + $0x3c] sm:$0xf]
      %v2389 = vld [vmem:[%s2377 + $0x40] sm:$0xf]
      %v2390 = vld [vmem:[%s2377 + $0x48] sm:$0xf]
      %v2391 = vld [vmem:[%s2377 + $0x4c] sm:$0xf]
      %v2392 = vld [vmem:[%s2377 + $0x54] sm:$0xf]
      %v2393 = vld [vmem:[%s2377 + $0x58] sm:$0xf]
      %v2394 = vld [vmem:[%s2377 + $0x60] sm:$0xf]
      %v2395 = vld [vmem:[%s2377 + $0x64] sm:$0xf]
      %v2396 = vld [vmem:[%s2377 + $0x6c] sm:$0xf]
      %v2397 = vld [vmem:[%s2377 + $0x70] sm:$0xf]
      %v2398 = vld [vmem:[%s2377 + $0x78] sm:$0xf]
      %v2399 = vld [vmem:[%s2377 + $0x7c] sm:$0xf]
      %v2400 = vld [vmem:[%s2377 + $0x84] sm:$0xf]
      %v2401 = vld [vmem:[%s2377 + $0x88] sm:$0xf]
      %v2402 = vld [vmem:[%s2377 + $0x90] sm:$0xf]
      %v2403 = vld [vmem:[%s2377 + $0x94] sm:$0xf]
      %v2404 = vld [vmem:[%s2377 + $0x9c] sm:$0xf]
      %v2405 = vld [vmem:[%s2377 + $0xa0] sm:$0xf]
      %v2406 = vld [vmem:[%s2377 + $0xa8] sm:$0xf]
      %v2407 = vld [vmem:[%s2377 + $0xac] sm:$0xf]
      %v2408 = vld [vmem:[%s2377 + $0xb4] sm:$0xf]
      %v2409 = vld [vmem:[%s2377 + $0xb8] sm:$0xf]
      %s2410 = scalar_lea.vmem %s1, 48
      %v2411 = vld [vmem:[%s2410] sm:$0xf]
      %v2412 = vld [vmem:[%s2410 + $0x4] sm:$0xf]
      %v2413 = vld [vmem:[%s2410 + $0x8] sm:$0xf]
      %v2414 = vld [vmem:[%s2410 + $0xc] sm:$0xf]
      %v2447 = vunpack.c.l.b16 %v2378
      %v2448 = vunpack.c.l.b16 %v2379
      %v2449 = vunpack.c.l.b16 %v2380
      %v2450 = vunpack.c.l.b16 %v2381
      %v2451 = vunpack.c.l.b16 %v2382
      %v2452 = vunpack.c.l.b16 %v2383
      %v2453 = vunpack.c.l.b16 %v2384
      %v2454 = vunpack.c.l.b16 %v2385
      %v2455 = vunpack.c.l.b16 %v2386
      %v2456 = vunpack.c.l.b16 %v2387
      %v2457 = vunpack.c.l.b16 %v2388
      %v2458 = vunpack.c.l.b16 %v2389
      %v2459 = vunpack.c.l.b16 %v2390
      %v2460 = vunpack.c.l.b16 %v2391
      %v2461 = vunpack.c.l.b16 %v2392
      %v2462 = vunpack.c.l.b16 %v2393
      %v2463 = vunpack.c.l.b16 %v2394
      %v2464 = vunpack.c.l.b16 %v2395
      %v2465 = vunpack.c.l.b16 %v2396
      %v2466 = vunpack.c.l.b16 %v2397
      %v2467 = vunpack.c.l.b16 %v2398
      %v2468 = vunpack.c.l.b16 %v2399
      %v2469 = vunpack.c.l.b16 %v2400
      %v2470 = vunpack.c.l.b16 %v2401
      %v2471 = vunpack.c.l.b16 %v2402
      %v2472 = vunpack.c.l.b16 %v2403
      %v2473 = vunpack.c.l.b16 %v2404
      %v2474 = vunpack.c.l.b16 %v2405
      %v2475 = vunpack.c.l.b16 %v2406
      %v2476 = vunpack.c.l.b16 %v2407
      %v2477 = vunpack.c.l.b16 %v2408
      %v2478 = vunpack.c.l.b16 %v2409
      %v2479 = vpack.c.b16 %v2448, %v2447
      %v2480 = vpack.c.b16 %v2450, %v2449
      %v2481 = vpack.c.b16 %v2452, %v2451
      %v2482 = vpack.c.b16 %v2454, %v2453
      %v2483 = vpack.c.b16 %v2456, %v2455
      %v2484 = vpack.c.b16 %v2458, %v2457
      %v2485 = vpack.c.b16 %v2460, %v2459
      %v2486 = vpack.c.b16 %v2462, %v2461
      %v2487 = vpack.c.b16 %v2464, %v2463
      %v2488 = vpack.c.b16 %v2466, %v2465
      %v2489 = vpack.c.b16 %v2468, %v2467
      %v2490 = vpack.c.b16 %v2470, %v2469
      %v2491 = vpack.c.b16 %v2472, %v2471
      %v2492 = vpack.c.b16 %v2474, %v2473
      %v2493 = vpack.c.b16 %v2476, %v2475
      %v2494 = vpack.c.b16 %v2478, %v2477
      %v2499 = vunpack.c.l.b16 %v2411
      %v2500 = vunpack.c.l.b16 %v2412
      %v2501 = vunpack.c.l.b16 %v2413
      %v2502 = vunpack.c.l.b16 %v2414
      %v2503 = vpack.c.b16 %v2500, %v2499
      %v2504 = vpack.c.b16 %v2502, %v2501
      %v2508 = vsel %vm1397, %v2479, 0
      %v2511 = vsel %vm1397, %v2480, 0
      %v2514 = vsel %vm1397, %v2481, 0
      %v2517 = vsel %vm1397, %v2482, 0
      %v2520 = vsel %vm1397, %v2483, 0
      %v2523 = vsel %vm1397, %v2484, 0
      %v2526 = vsel %vm1397, %v2485, 0
      %v2529 = vsel %vm1397, %v2486, 0
      %v2532 = vsel %vm1397, %v2487, 0
      %v2535 = vsel %vm1397, %v2488, 0
      %v2538 = vsel %vm1397, %v2489, 0
      %v2541 = vsel %vm1397, %v2490, 0
      %v2544 = vsel %vm1397, %v2491, 0
      %v2547 = vsel %vm1397, %v2492, 0
      %v2550 = vsel %vm1397, %v2493, 0
      %v2553 = vsel %vm1397, %v2494, 0
      %2555 = vmatprep.subr.bf16.mxu0 0
      %2556 = vmatpush1.bf16.msra.mxu0 %v2503
      %2557 = vmatprep.subr.bf16.mxu0 0
      %2558 = vmatpush1.bf16.msra.mxu0 %v2504
      %2559 = vmatprep.subr.bf16.mxu0 0
      %2560 = vmatpush1.bf16.msra.mxu0 0
      %2561 = vmatprep.subr.bf16.mxu0 0
      %2562 = vmatpush1.bf16.msra.mxu0 0
      %2563 = vmatprep.subr.bf16.mxu0 0
      %2564 = vmatpush1.bf16.msra.mxu0 0
      %2565 = vmatprep.subr.bf16.mxu0 0
      %2566 = vmatpush1.bf16.msra.mxu0 0
      %2567 = vmatprep.subr.bf16.mxu0 0
      %2568 = vmatpush1.bf16.msra.mxu0 0
      %2569 = vmatprep.subr.bf16.mxu0 0
      %2570 = vmatpush1.bf16.msra.mxu0 0
      %2571 = vmatprep.subr.bf16.mxu0 0
      %2572 = vmatpush1.bf16.msra.mxu0 0
      %2573 = vmatprep.subr.bf16.mxu0 0
      %2574 = vmatpush1.bf16.msra.mxu0 0
      %2575 = vmatprep.subr.bf16.mxu0 0
      %2576 = vmatpush1.bf16.msra.mxu0 0
      %2577 = vmatprep.subr.bf16.mxu0 0
      %2578 = vmatpush1.bf16.msra.mxu0 0
      %2579 = vmatprep.subr.bf16.mxu0 0
      %2580 = vmatpush1.bf16.msra.mxu0 0
      %2581 = vmatprep.subr.bf16.mxu0 0
      %2582 = vmatpush1.bf16.msra.mxu0 0
      %2583 = vmatprep.subr.bf16.mxu0 0
      %2584 = vmatpush1.bf16.msra.mxu0 0
      %2585 = vmatprep.subr.bf16.mxu0 0
      %2586 = vmatpush1.bf16.msra.mxu0 0
      %2587 = vmatprep.mubr.bf16.mxu0 0
      %2588 = vmatmul.mubr.bf16.gmra.mrb[0].mxu0 %v2508
      %v2589 = vpop.f32.mrb[0].mxu0
      %v2590 = vadd.f32 0.0, %v2589
      %v2591 = vpop.f32.mrb[0].mxu0
      %v2592 = vpop.f32.mrb[0].mxu0
      %v2593 = vadd.f32 0.0, %v2592
      %v2594 = vpop.f32.mrb[0].mxu0
      %2595 = vmatprep.mubr.bf16.mxu0 0
      %2596 = vmatmul.mubr.bf16.gmra.mrb[0].mxu0 %v2511
      %v2597 = vpop.f32.mrb[0].mxu0
      %v2598 = vadd.f32 0.0, %v2597
      %v2599 = vpop.f32.mrb[0].mxu0
      %v2600 = vpop.f32.mrb[0].mxu0
      %v2601 = vadd.f32 0.0, %v2600
      %v2602 = vpop.f32.mrb[0].mxu0
      %2603 = vmatprep.mubr.bf16.mxu0 0
      %2604 = vmatmul.mubr.bf16.gmra.mrb[0].mxu0 %v2514
      %v2605 = vpop.f32.mrb[0].mxu0
      %v2606 = vadd.f32 0.0, %v2605
      %v2607 = vpop.f32.mrb[0].mxu0
      %v2608 = vpop.f32.mrb[0].mxu0
      %v2609 = vadd.f32 0.0, %v2608
      %v2610 = vpop.f32.mrb[0].mxu0
      %2611 = vmatprep.mubr.bf16.mxu0 0
      %2612 = vmatmul.mubr.bf16.gmra.mrb[0].mxu0 %v2517
      %v2613 = vpop.f32.mrb[0].mxu0
      %v2614 = vadd.f32 0.0, %v2613
      %v2615 = vpop.f32.mrb[0].mxu0
      %v2616 = vpop.f32.mrb[0].mxu0
      %v2617 = vadd.f32 0.0, %v2616
      %v2618 = vpop.f32.mrb[0].mxu0
      %2619 = vmatprep.mubr.bf16.mxu0 0
      %2620 = vmatmul.mubr.bf16.gmra.mrb[0].mxu0 %v2520
      %v2621 = vpop.f32.mrb[0].mxu0
      %v2622 = vadd.f32 0.0, %v2621
      %v2623 = vpop.f32.mrb[0].mxu0
      %v2624 = vpop.f32.mrb[0].mxu0
      %v2625 = vadd.f32 0.0, %v2624
      %v2626 = vpop.f32.mrb[0].mxu0
      %2627 = vmatprep.mubr.bf16.mxu0 0
      %2628 = vmatmul.mubr.bf16.gmra.mrb[0].mxu0 %v2523
      %v2629 = vpop.f32.mrb[0].mxu0
      %v2630 = vadd.f32 0.0, %v2629
      %v2631 = vpop.f32.mrb[0].mxu0
      %v2632 = vpop.f32.mrb[0].mxu0
      %v2633 = vadd.f32 0.0, %v2632
      %v2634 = vpop.f32.mrb[0].mxu0
      %2635 = vmatprep.mubr.bf16.mxu0 0
      %2636 = vmatmul.mubr.bf16.gmra.mrb[0].mxu0 %v2526
      %v2637 = vpop.f32.mrb[0].mxu0
      %v2638 = vadd.f32 0.0, %v2637
      %v2639 = vpop.f32.mrb[0].mxu0
      %v2640 = vpop.f32.mrb[0].mxu0
      %v2641 = vadd.f32 0.0, %v2640
      %v2642 = vpop.f32.mrb[0].mxu0
      %2643 = vmatprep.mubr.bf16.mxu0 0
      %2644 = vmatmul.mubr.bf16.gmra.mrb[0].mxu0 %v2529
      %v2645 = vpop.f32.mrb[0].mxu0
      %v2646 = vadd.f32 0.0, %v2645
      %v2647 = vpop.f32.mrb[0].mxu0
      %v2648 = vpop.f32.mrb[0].mxu0
      %v2649 = vadd.f32 0.0, %v2648
      %v2650 = vpop.f32.mrb[0].mxu0
      %2651 = vmatprep.mubr.bf16.mxu0 0
      %2652 = vmatmul.mubr.bf16.gmra.mrb[0].mxu0 %v2532
      %v2653 = vpop.f32.mrb[0].mxu0
      %v2654 = vadd.f32 0.0, %v2653
      %v2655 = vpop.f32.mrb[0].mxu0
      %v2656 = vpop.f32.mrb[0].mxu0
      %v2657 = vadd.f32 0.0, %v2656
      %v2658 = vpop.f32.mrb[0].mxu0
      %2659 = vmatprep.mubr.bf16.mxu0 0
      %2660 = vmatmul.mubr.bf16.gmra.mrb[0].mxu0 %v2535
      %v2661 = vpop.f32.mrb[0].mxu0
      %v2662 = vadd.f32 0.0, %v2661
      %v2663 = vpop.f32.mrb[0].mxu0
      %v2664 = vpop.f32.mrb[0].mxu0
      %v2665 = vadd.f32 0.0, %v2664
      %v2666 = vpop.f32.mrb[0].mxu0
      %2667 = vmatprep.mubr.bf16.mxu0 0
      %2668 = vmatmul.mubr.bf16.gmra.mrb[0].mxu0 %v2538
      %v2669 = vpop.f32.mrb[0].mxu0
      %v2670 = vadd.f32 0.0, %v2669
      %v2671 = vpop.f32.mrb[0].mxu0
      %v2672 = vpop.f32.mrb[0].mxu0
      %v2673 = vadd.f32 0.0, %v2672
      %v2674 = vpop.f32.mrb[0].mxu0
      %2675 = vmatprep.mubr.bf16.mxu0 0
      %2676 = vmatmul.mubr.bf16.gmra.mrb[0].mxu0 %v2541
      %v2677 = vpop.f32.mrb[0].mxu0
      %v2678 = vadd.f32 0.0, %v2677
      %v2679 = vpop.f32.mrb[0].mxu0
      %v2680 = vpop.f32.mrb[0].mxu0
      %v2681 = vadd.f32 0.0, %v2680
      %v2682 = vpop.f32.mrb[0].mxu0
      %2683 = vmatprep.mubr.bf16.mxu0 0
      %2684 = vmatmul.mubr.bf16.gmra.mrb[0].mxu0 %v2544
      %v2685 = vpop.f32.mrb[0].mxu0
      %v2686 = vadd.f32 0.0, %v2685
      %v2687 = vpop.f32.mrb[0].mxu0
      %v2688 = vpop.f32.mrb[0].mxu0
      %v2689 = vadd.f32 0.0, %v2688
      %v2690 = vpop.f32.mrb[0].mxu0
      %2691 = vmatprep.mubr.bf16.mxu0 0
      %2692 = vmatmul.mubr.bf16.gmra.mrb[0].mxu0 %v2547
      %v2693 = vpop.f32.mrb[0].mxu0
      %v2694 = vadd.f32 0.0, %v2693
      %v2695 = vpop.f32.mrb[0].mxu0
      %v2696 = vpop.f32.mrb[0].mxu0
      %v2697 = vadd.f32 0.0, %v2696
      %v2698 = vpop.f32.mrb[0].mxu0
      %2699 = vmatprep.mubr.bf16.mxu0 0
      %2700 = vmatmul.mubr.bf16.gmra.mrb[0].mxu0 %v2550
      %v2701 = vpop.f32.mrb[0].mxu0
      %v2702 = vadd.f32 0.0, %v2701
      %v2703 = vpop.f32.mrb[0].mxu0
      %v2704 = vpop.f32.mrb[0].mxu0
      %v2705 = vadd.f32 0.0, %v2704
      %v2706 = vpop.f32.mrb[0].mxu0
      %2707 = vmatprep.mubr.bf16.mxu0 0
      %2708 = vmatmul.mubr.bf16.gmra.mrb[0].mxu0 %v2553
      %v2709 = vpop.f32.mrb[0].mxu0
      %v2710 = vadd.f32 0.0, %v2709
      %v2711 = vpop.f32.mrb[0].mxu0
      %v2712 = vpop.f32.mrb[0].mxu0
      %v2713 = vadd.f32 0.0, %v2712
      %v2714 = vpop.f32.mrb[0].mxu0
      %2715 = vdwg.mxu0
      %v2716 = vadd.f32 %v2345, %v2590
      %v2717 = vadd.f32 %v2346, %v2593
      %v2718 = vadd.f32 %v2347, %v2598
      %v2719 = vadd.f32 %v2348, %v2601
      %v2720 = vadd.f32 %v2349, %v2606
      %v2721 = vadd.f32 %v2350, %v2609
      %v2722 = vadd.f32 %v2351, %v2614
      %v2723 = vadd.f32 %v2352, %v2617
      %v2724 = vadd.f32 %v2353, %v2622
      %v2725 = vadd.f32 %v2354, %v2625
      %v2726 = vadd.f32 %v2355, %v2630
      %v2727 = vadd.f32 %v2356, %v2633
      %v2728 = vadd.f32 %v2357, %v2638
      %v2729 = vadd.f32 %v2358, %v2641
      %v2730 = vadd.f32 %v2359, %v2646
      %v2731 = vadd.f32 %v2360, %v2649
      %v2732 = vadd.f32 %v2361, %v2654
      %v2733 = vadd.f32 %v2362, %v2657
      %v2734 = vadd.f32 %v2363, %v2662
      %v2735 = vadd.f32 %v2364, %v2665
      %v2736 = vadd.f32 %v2365, %v2670
      %v2737 = vadd.f32 %v2366, %v2673
      %v2738 = vadd.f32 %v2367, %v2678
      %v2739 = vadd.f32 %v2368, %v2681
      %v2740 = vadd.f32 %v2369, %v2686
      %v2741 = vadd.f32 %v2370, %v2689
      %v2742 = vadd.f32 %v2371, %v2694
      %v2743 = vadd.f32 %v2372, %v2697
      %v2744 = vadd.f32 %v2373, %v2702
      %v2745 = vadd.f32 %v2374, %v2705
      %v2746 = vadd.f32 %v2375, %v2710
      %v2747 = vadd.f32 %v2376, %v2713
      %v2748 = vld [vmem:[%s2377] sm:$0xf]
      %v2749 = vld [vmem:[%s2377 + $0x4] sm:$0xf]
      %v2750 = vld [vmem:[%s2377 + $0x8] sm:$0x1]
      %v2751 = vld [vmem:[%s2377 + $0xc] sm:$0xf]
      %v2752 = vld [vmem:[%s2377 + $0x10] sm:$0xf]
      %v2753 = vld [vmem:[%s2377 + $0x14] sm:$0x1]
      %v2754 = vld [vmem:[%s2377 + $0x18] sm:$0xf]
      %v2755 = vld [vmem:[%s2377 + $0x1c] sm:$0xf]
      %v2756 = vld [vmem:[%s2377 + $0x20] sm:$0x1]
      %v2757 = vld [vmem:[%s2377 + $0x24] sm:$0xf]
      %v2758 = vld [vmem:[%s2377 + $0x28] sm:$0xf]
      %v2759 = vld [vmem:[%s2377 + $0x2c] sm:$0x1]
      %v2760 = vld [vmem:[%s2377 + $0x30] sm:$0xf]
      %v2761 = vld [vmem:[%s2377 + $0x34] sm:$0xf]
      %v2762 = vld [vmem:[%s2377 + $0x38] sm:$0x1]
      %v2763 = vld [vmem:[%s2377 + $0x3c] sm:$0xf]
      %v2764 = vld [vmem:[%s2377 + $0x40] sm:$0xf]
      %v2765 = vld [vmem:[%s2377 + $0x44] sm:$0x1]
      %v2766 = vld [vmem:[%s2377 + $0x48] sm:$0xf]
      %v2767 = vld [vmem:[%s2377 + $0x4c] sm:$0xf]
      %v2768 = vld [vmem:[%s2377 + $0x50] sm:$0x1]
      %v2769 = vld [vmem:[%s2377 + $0x54] sm:$0xf]
      %v2770 = vld [vmem:[%s2377 + $0x58] sm:$0xf]
      %v2771 = vld [vmem:[%s2377 + $0x5c] sm:$0x1]
      %v2772 = vld [vmem:[%s2377 + $0x60] sm:$0xf]
      %v2773 = vld [vmem:[%s2377 + $0x64] sm:$0xf]
      %v2774 = vld [vmem:[%s2377 + $0x68] sm:$0x1]
      %v2775 = vld [vmem:[%s2377 + $0x6c] sm:$0xf]
      %v2776 = vld [vmem:[%s2377 + $0x70] sm:$0xf]
      %v2777 = vld [vmem:[%s2377 + $0x74] sm:$0x1]
      %v2778 = vld [vmem:[%s2377 + $0x78] sm:$0xf]
      %v2779 = vld [vmem:[%s2377 + $0x7c] sm:$0xf]
      %v2780 = vld [vmem:[%s2377 + $0x80] sm:$0x1]
      %v2781 = vld [vmem:[%s2377 + $0x84] sm:$0xf]
      %v2782 = vld [vmem:[%s2377 + $0x88] sm:$0xf]
      %v2783 = vld [vmem:[%s2377 + $0x8c] sm:$0x1]
      %v2784 = vld [vmem:[%s2377 + $0x90] sm:$0xf]
      %v2785 = vld [vmem:[%s2377 + $0x94] sm:$0xf]
      %v2786 = vld [vmem:[%s2377 + $0x98] sm:$0x1]
      %v2787 = vld [vmem:[%s2377 + $0x9c] sm:$0xf]
      %v2788 = vld [vmem:[%s2377 + $0xa0] sm:$0xf]
      %v2789 = vld [vmem:[%s2377 + $0xa4] sm:$0x1]
      %v2790 = vld [vmem:[%s2377 + $0xa8] sm:$0xf]
      %v2791 = vld [vmem:[%s2377 + $0xac] sm:$0xf]
      %v2792 = vld [vmem:[%s2377 + $0xb0] sm:$0x1]
      %v2793 = vld [vmem:[%s2377 + $0xb4] sm:$0xf]
      %v2794 = vld [vmem:[%s2377 + $0xb8] sm:$0xf]
      %v2795 = vld [vmem:[%s2377 + $0xbc] sm:$0x1]
      %v2797 = vshrl.u32 %v2748, 16
      %v2799 = vrot.slane %v2797, 4
      %v2800 = vshll.u32 %v2748, 16
      %v2802 = vrot.slane %v2800, 5
      %v2803 = vor.u32 %v2799, %v2802
      %v2804 = vrot.slane %v2803, 4
      %v2806 = vshll.u32 %v2749, 16
      %v2808 = vrot.slane %v2806, 5
      %v2809 = vsel %vm947, %v2804, %v2808
      %v2810 = vshrl.u32 %v2749, 16
      %v2812 = vrot.slane %v2810, 4
      %v2813 = vor.u32 %v2812, %v2808
      %v2814 = vrot.slane %v2813, 4
      %v2816 = vshll.u32 %v2750, 16
      %v2818 = vrot.slane %v2816, 5
      %v2819 = vsel %vm947, %v2814, %v2818
      %v2821 = vshrl.u32 %v2751, 16
      %v2823 = vrot.slane %v2821, 4
      %v2824 = vshll.u32 %v2751, 16
      %v2826 = vrot.slane %v2824, 5
      %v2827 = vor.u32 %v2823, %v2826
      %v2828 = vrot.slane %v2827, 4
      %v2830 = vshll.u32 %v2752, 16
      %v2832 = vrot.slane %v2830, 5
      %v2833 = vsel %vm947, %v2828, %v2832
      %v2834 = vshrl.u32 %v2752, 16
      %v2836 = vrot.slane %v2834, 4
      %v2837 = vor.u32 %v2836, %v2832
      %v2838 = vrot.slane %v2837, 4
      %v2840 = vshll.u32 %v2753, 16
      %v2842 = vrot.slane %v2840, 5
      %v2843 = vsel %vm947, %v2838, %v2842
      %v2845 = vshrl.u32 %v2754, 16
      %v2847 = vrot.slane %v2845, 4
      %v2848 = vshll.u32 %v2754, 16
      %v2850 = vrot.slane %v2848, 5
      %v2851 = vor.u32 %v2847, %v2850
      %v2852 = vrot.slane %v2851, 4
      %v2854 = vshll.u32 %v2755, 16
      %v2856 = vrot.slane %v2854, 5
      %v2857 = vsel %vm947, %v2852, %v2856
      %v2858 = vshrl.u32 %v2755, 16
      %v2860 = vrot.slane %v2858, 4
      %v2861 = vor.u32 %v2860, %v2856
      %v2862 = vrot.slane %v2861, 4
      %v2864 = vshll.u32 %v2756, 16
      %v2866 = vrot.slane %v2864, 5
      %v2867 = vsel %vm947, %v2862, %v2866
      %v2869 = vshrl.u32 %v2757, 16
      %v2871 = vrot.slane %v2869, 4
      %v2872 = vshll.u32 %v2757, 16
      %v2874 = vrot.slane %v2872, 5
      %v2875 = vor.u32 %v2871, %v2874
      %v2876 = vrot.slane %v2875, 4
      %v2878 = vshll.u32 %v2758, 16
      %v2880 = vrot.slane %v2878, 5
      %v2881 = vsel %vm947, %v2876, %v2880
      %v2882 = vshrl.u32 %v2758, 16
      %v2884 = vrot.slane %v2882, 4
      %v2885 = vor.u32 %v2884, %v2880
      %v2886 = vrot.slane %v2885, 4
      %v2888 = vshll.u32 %v2759, 16
      %v2890 = vrot.slane %v2888, 5
      %v2891 = vsel %vm947, %v2886, %v2890
      %v2893 = vshrl.u32 %v2760, 16
      %v2895 = vrot.slane %v2893, 4
      %v2896 = vshll.u32 %v2760, 16
      %v2898 = vrot.slane %v2896, 5
      %v2899 = vor.u32 %v2895, %v2898
      %v2900 = vrot.slane %v2899, 4
      %v2902 = vshll.u32 %v2761, 16
      %v2904 = vrot.slane %v2902, 5
      %v2905 = vsel %vm947, %v2900, %v2904
      %v2906 = vshrl.u32 %v2761, 16
      %v2908 = vrot.slane %v2906, 4
      %v2909 = vor.u32 %v2908, %v2904
      %v2910 = vrot.slane %v2909, 4
      %v2912 = vshll.u32 %v2762, 16
      %v2914 = vrot.slane %v2912, 5
      %v2915 = vsel %vm947, %v2910, %v2914
      %v2917 = vshrl.u32 %v2763, 16
      %v2919 = vrot.slane %v2917, 4
      %v2920 = vshll.u32 %v2763, 16
      %v2922 = vrot.slane %v2920, 5
      %v2923 = vor.u32 %v2919, %v2922
      %v2924 = vrot.slane %v2923, 4
      %v2926 = vshll.u32 %v2764, 16
      %v2928 = vrot.slane %v2926, 5
      %v2929 = vsel %vm947, %v2924, %v2928
      %v2930 = vshrl.u32 %v2764, 16
      %v2932 = vrot.slane %v2930, 4
      %v2933 = vor.u32 %v2932, %v2928
      %v2934 = vrot.slane %v2933, 4
      %v2936 = vshll.u32 %v2765, 16
      %v2938 = vrot.slane %v2936, 5
      %v2939 = vsel %vm947, %v2934, %v2938
      %v2941 = vshrl.u32 %v2766, 16
      %v2943 = vrot.slane %v2941, 4
      %v2944 = vshll.u32 %v2766, 16
      %v2946 = vrot.slane %v2944, 5
      %v2947 = vor.u32 %v2943, %v2946
      %v2948 = vrot.slane %v2947, 4
      %v2950 = vshll.u32 %v2767, 16
      %v2952 = vrot.slane %v2950, 5
      %v2953 = vsel %vm947, %v2948, %v2952
      %v2954 = vshrl.u32 %v2767, 16
      %v2956 = vrot.slane %v2954, 4
      %v2957 = vor.u32 %v2956, %v2952
      %v2958 = vrot.slane %v2957, 4
      %v2960 = vshll.u32 %v2768, 16
      %v2962 = vrot.slane %v2960, 5
      %v2963 = vsel %vm947, %v2958, %v2962
      %v2965 = vshrl.u32 %v2769, 16
      %v2967 = vrot.slane %v2965, 4
      %v2968 = vshll.u32 %v2769, 16
      %v2970 = vrot.slane %v2968, 5
      %v2971 = vor.u32 %v2967, %v2970
      %v2972 = vrot.slane %v2971, 4
      %v2974 = vshll.u32 %v2770, 16
      %v2976 = vrot.slane %v2974, 5
      %v2977 = vsel %vm947, %v2972, %v2976
      %v2978 = vshrl.u32 %v2770, 16
      %v2980 = vrot.slane %v2978, 4
      %v2981 = vor.u32 %v2980, %v2976
      %v2982 = vrot.slane %v2981, 4
      %v2984 = vshll.u32 %v2771, 16
      %v2986 = vrot.slane %v2984, 5
      %v2987 = vsel %vm947, %v2982, %v2986
      %v2989 = vshrl.u32 %v2772, 16
      %v2991 = vrot.slane %v2989, 4
      %v2992 = vshll.u32 %v2772, 16
      %v2994 = vrot.slane %v2992, 5
      %v2995 = vor.u32 %v2991, %v2994
      %v2996 = vrot.slane %v2995, 4
      %v2998 = vshll.u32 %v2773, 16
      %v3000 = vrot.slane %v2998, 5
      %v3001 = vsel %vm947, %v2996, %v3000
      %v3002 = vshrl.u32 %v2773, 16
      %v3004 = vrot.slane %v3002, 4
      %v3005 = vor.u32 %v3004, %v3000
      %v3006 = vrot.slane %v3005, 4
      %v3008 = vshll.u32 %v2774, 16
      %v3010 = vrot.slane %v3008, 5
      %v3011 = vsel %vm947, %v3006, %v3010
      %v3013 = vshrl.u32 %v2775, 16
      %v3015 = vrot.slane %v3013, 4
      %v3016 = vshll.u32 %v2775, 16
      %v3018 = vrot.slane %v3016, 5
      %v3019 = vor.u32 %v3015, %v3018
      %v3020 = vrot.slane %v3019, 4
      %v3022 = vshll.u32 %v2776, 16
      %v3024 = vrot.slane %v3022, 5
      %v3025 = vsel %vm947, %v3020, %v3024
      %v3026 = vshrl.u32 %v2776, 16
      %v3028 = vrot.slane %v3026, 4
      %v3029 = vor.u32 %v3028, %v3024
      %v3030 = vrot.slane %v3029, 4
      %v3032 = vshll.u32 %v2777, 16
      %v3034 = vrot.slane %v3032, 5
      %v3035 = vsel %vm947, %v3030, %v3034
      %v3037 = vshrl.u32 %v2778, 16
      %v3039 = vrot.slane %v3037, 4
      %v3040 = vshll.u32 %v2778, 16
      %v3042 = vrot.slane %v3040, 5
      %v3043 = vor.u32 %v3039, %v3042
      %v3044 = vrot.slane %v3043, 4
      %v3046 = vshll.u32 %v2779, 16
      %v3048 = vrot.slane %v3046, 5
      %v3049 = vsel %vm947, %v3044, %v3048
      %v3050 = vshrl.u32 %v2779, 16
      %v3052 = vrot.slane %v3050, 4
      %v3053 = vor.u32 %v3052, %v3048
      %v3054 = vrot.slane %v3053, 4
      %v3056 = vshll.u32 %v2780, 16
      %v3058 = vrot.slane %v3056, 5
      %v3059 = vsel %vm947, %v3054, %v3058
      %v3061 = vshrl.u32 %v2781, 16
      %v3063 = vrot.slane %v3061, 4
      %v3064 = vshll.u32 %v2781, 16
      %v3066 = vrot.slane %v3064, 5
      %v3067 = vor.u32 %v3063, %v3066
      %v3068 = vrot.slane %v3067, 4
      %v3070 = vshll.u32 %v2782, 16
      %v3072 = vrot.slane %v3070, 5
      %v3073 = vsel %vm947, %v3068, %v3072
      %v3074 = vshrl.u32 %v2782, 16
      %v3076 = vrot.slane %v3074, 4
      %v3077 = vor.u32 %v3076, %v3072
      %v3078 = vrot.slane %v3077, 4
      %v3080 = vshll.u32 %v2783, 16
      %v3082 = vrot.slane %v3080, 5
      %v3083 = vsel %vm947, %v3078, %v3082
      %v3085 = vshrl.u32 %v2784, 16
      %v3087 = vrot.slane %v3085, 4
      %v3088 = vshll.u32 %v2784, 16
      %v3090 = vrot.slane %v3088, 5
      %v3091 = vor.u32 %v3087, %v3090
      %v3092 = vrot.slane %v3091, 4
      %v3094 = vshll.u32 %v2785, 16
      %v3096 = vrot.slane %v3094, 5
      %v3097 = vsel %vm947, %v3092, %v3096
      %v3098 = vshrl.u32 %v2785, 16
      %v3100 = vrot.slane %v3098, 4
      %v3101 = vor.u32 %v3100, %v3096
      %v3102 = vrot.slane %v3101, 4
      %v3104 = vshll.u32 %v2786, 16
      %v3106 = vrot.slane %v3104, 5
      %v3107 = vsel %vm947, %v3102, %v3106
      %v3109 = vshrl.u32 %v2787, 16
      %v3111 = vrot.slane %v3109, 4
      %v3112 = vshll.u32 %v2787, 16
      %v3114 = vrot.slane %v3112, 5
      %v3115 = vor.u32 %v3111, %v3114
      %v3116 = vrot.slane %v3115, 4
      %v3118 = vshll.u32 %v2788, 16
      %v3120 = vrot.slane %v3118, 5
      %v3121 = vsel %vm947, %v3116, %v3120
      %v3122 = vshrl.u32 %v2788, 16
      %v3124 = vrot.slane %v3122, 4
      %v3125 = vor.u32 %v3124, %v3120
      %v3126 = vrot.slane %v3125, 4
      %v3128 = vshll.u32 %v2789, 16
      %v3130 = vrot.slane %v3128, 5
      %v3131 = vsel %vm947, %v3126, %v3130
      %v3133 = vshrl.u32 %v2790, 16
      %v3135 = vrot.slane %v3133, 4
      %v3136 = vshll.u32 %v2790, 16
      %v3138 = vrot.slane %v3136, 5
      %v3139 = vor.u32 %v3135, %v3138
      %v3140 = vrot.slane %v3139, 4
      %v3142 = vshll.u32 %v2791, 16
      %v3144 = vrot.slane %v3142, 5
      %v3145 = vsel %vm947, %v3140, %v3144
      %v3146 = vshrl.u32 %v2791, 16
      %v3148 = vrot.slane %v3146, 4
      %v3149 = vor.u32 %v3148, %v3144
      %v3150 = vrot.slane %v3149, 4
      %v3152 = vshll.u32 %v2792, 16
      %v3154 = vrot.slane %v3152, 5
      %v3155 = vsel %vm947, %v3150, %v3154
      %v3157 = vshrl.u32 %v2793, 16
      %v3159 = vrot.slane %v3157, 4
      %v3160 = vshll.u32 %v2793, 16
      %v3162 = vrot.slane %v3160, 5
      %v3163 = vor.u32 %v3159, %v3162
      %v3164 = vrot.slane %v3163, 4
      %v3166 = vshll.u32 %v2794, 16
      %v3168 = vrot.slane %v3166, 5
      %v3169 = vsel %vm947, %v3164, %v3168
      %v3170 = vshrl.u32 %v2794, 16
      %v3172 = vrot.slane %v3170, 4
      %v3173 = vor.u32 %v3172, %v3168
      %v3174 = vrot.slane %v3173, 4
      %v3176 = vshll.u32 %v2795, 16
      %v3178 = vrot.slane %v3176, 5
      %v3179 = vsel %vm947, %v3174, %v3178
      %s3180 = scalar_lea.vmem %s1, 64
      %v3181 = vld [vmem:[%s3180] sm:$0xf]
      %v3182 = vld [vmem:[%s3180 + $0x4] sm:$0xf]
      %v3183 = vld [vmem:[%s3180 + $0x8] sm:$0xf]
      %v3184 = vld [vmem:[%s3180 + $0xc] sm:$0xf]
      %v3185 = vunpack.c.l.b16 %v2809
      %v3186 = vunpack.c.l.b16 %v2819
      %v3187 = vunpack.c.l.b16 %v2833
      %v3188 = vunpack.c.l.b16 %v2843
      %v3189 = vunpack.c.l.b16 %v2857
      %v3190 = vunpack.c.l.b16 %v2867
      %v3191 = vunpack.c.l.b16 %v2881
      %v3192 = vunpack.c.l.b16 %v2891
      %v3193 = vunpack.c.l.b16 %v2905
      %v3194 = vunpack.c.l.b16 %v2915
      %v3195 = vunpack.c.l.b16 %v2929
      %v3196 = vunpack.c.l.b16 %v2939
      %v3197 = vunpack.c.l.b16 %v2953
      %v3198 = vunpack.c.l.b16 %v2963
      %v3199 = vunpack.c.l.b16 %v2977
      %v3200 = vunpack.c.l.b16 %v2987
      %v3201 = vunpack.c.l.b16 %v3001
      %v3202 = vunpack.c.l.b16 %v3011
      %v3203 = vunpack.c.l.b16 %v3025
      %v3204 = vunpack.c.l.b16 %v3035
      %v3205 = vunpack.c.l.b16 %v3049
      %v3206 = vunpack.c.l.b16 %v3059
      %v3207 = vunpack.c.l.b16 %v3073
      %v3208 = vunpack.c.l.b16 %v3083
      %v3209 = vunpack.c.l.b16 %v3097
      %v3210 = vunpack.c.l.b16 %v3107
      %v3211 = vunpack.c.l.b16 %v3121
      %v3212 = vunpack.c.l.b16 %v3131
      %v3213 = vunpack.c.l.b16 %v3145
      %v3214 = vunpack.c.l.b16 %v3155
      %v3215 = vunpack.c.l.b16 %v3169
      %v3216 = vunpack.c.l.b16 %v3179
      %v3217 = vpack.c.b16 %v3186, %v3185
      %v3218 = vpack.c.b16 %v3188, %v3187
      %v3219 = vpack.c.b16 %v3190, %v3189
      %v3220 = vpack.c.b16 %v3192, %v3191
      %v3221 = vpack.c.b16 %v3194, %v3193
      %v3222 = vpack.c.b16 %v3196, %v3195
      %v3223 = vpack.c.b16 %v3198, %v3197
      %v3224 = vpack.c.b16 %v3200, %v3199
      %v3225 = vpack.c.b16 %v3202, %v3201
      %v3226 = vpack.c.b16 %v3204, %v3203
      %v3227 = vpack.c.b16 %v3206, %v3205
      %v3228 = vpack.c.b16 %v3208, %v3207
      %v3229 = vpack.c.b16 %v3210, %v3209
      %v3230 = vpack.c.b16 %v3212, %v3211
      %v3231 = vpack.c.b16 %v3214, %v3213
      %v3232 = vpack.c.b16 %v3216, %v3215
      %v3237 = vunpack.c.l.b16 %v3181
      %v3238 = vunpack.c.l.b16 %v3182
      %v3239 = vunpack.c.l.b16 %v3183
      %v3240 = vunpack.c.l.b16 %v3184
      %v3241 = vpack.c.b16 %v3238, %v3237
      %v3242 = vpack.c.b16 %v3240, %v3239
      %v3246 = vsel %vm1397, %v3217, 0
      %v3249 = vsel %vm1397, %v3218, 0
      %v3252 = vsel %vm1397, %v3219, 0
      %v3255 = vsel %vm1397, %v3220, 0
      %v3258 = vsel %vm1397, %v3221, 0
      %v3261 = vsel %vm1397, %v3222, 0
      %v3264 = vsel %vm1397, %v3223, 0
      %v3267 = vsel %vm1397, %v3224, 0
      %v3270 = vsel %vm1397, %v3225, 0
      %v3273 = vsel %vm1397, %v3226, 0
      %v3276 = vsel %vm1397, %v3227, 0
      %v3279 = vsel %vm1397, %v3228, 0
      %v3282 = vsel %vm1397, %v3229, 0
      %v3285 = vsel %vm1397, %v3230, 0
      %v3288 = vsel %vm1397, %v3231, 0
      %v3291 = vsel %vm1397, %v3232, 0
      %3293 = vmatprep.subr.bf16.mxu0 0
      %3294 = vmatpush1.bf16.msra.mxu0 %v3241
      %3295 = vmatprep.subr.bf16.mxu0 0
      %3296 = vmatpush1.bf16.msra.mxu0 %v3242
      %3297 = vmatprep.subr.bf16.mxu0 0
      %3298 = vmatpush1.bf16.msra.mxu0 0
      %3299 = vmatprep.subr.bf16.mxu0 0
      %3300 = vmatpush1.bf16.msra.mxu0 0
      %3301 = vmatprep.subr.bf16.mxu0 0
      %3302 = vmatpush1.bf16.msra.mxu0 0
      %3303 = vmatprep.subr.bf16.mxu0 0
      %3304 = vmatpush1.bf16.msra.mxu0 0
      %3305 = vmatprep.subr.bf16.mxu0 0
      %3306 = vmatpush1.bf16.msra.mxu0 0
      %3307 = vmatprep.subr.bf16.mxu0 0
      %3308 = vmatpush1.bf16.msra.mxu0 0
      %3309 = vmatprep.subr.bf16.mxu0 0
      %3310 = vmatpush1.bf16.msra.mxu0 0
      %3311 = vmatprep.subr.bf16.mxu0 0
      %3312 = vmatpush1.bf16.msra.mxu0 0
      %3313 = vmatprep.subr.bf16.mxu0 0
      %3314 = vmatpush1.bf16.msra.mxu0 0
      %3315 = vmatprep.subr.bf16.mxu0 0
      %3316 = vmatpush1.bf16.msra.mxu0 0
      %3317 = vmatprep.subr.bf16.mxu0 0
      %3318 = vmatpush1.bf16.msra.mxu0 0
      %3319 = vmatprep.subr.bf16.mxu0 0
      %3320 = vmatpush1.bf16.msra.mxu0 0
      %3321 = vmatprep.subr.bf16.mxu0 0
      %3322 = vmatpush1.bf16.msra.mxu0 0
      %3323 = vmatprep.subr.bf16.mxu0 0
      %3324 = vmatpush1.bf16.msra.mxu0 0
      %3325 = vmatprep.mubr.bf16.mxu0 0
      %3326 = vmatmul.mubr.bf16.gmra.mrb[0].mxu0 %v3246
      %v3327 = vpop.f32.mrb[0].mxu0
      %v3328 = vadd.f32 0.0, %v3327
      %v3329 = vpop.f32.mrb[0].mxu0
      %v3330 = vpop.f32.mrb[0].mxu0
      %v3331 = vadd.f32 0.0, %v3330
      %v3332 = vpop.f32.mrb[0].mxu0
      %3333 = vmatprep.mubr.bf16.mxu0 0
      %3334 = vmatmul.mubr.bf16.gmra.mrb[0].mxu0 %v3249
      %v3335 = vpop.f32.mrb[0].mxu0
      %v3336 = vadd.f32 0.0, %v3335
      %v3337 = vpop.f32.mrb[0].mxu0
      %v3338 = vpop.f32.mrb[0].mxu0
      %v3339 = vadd.f32 0.0, %v3338
      %v3340 = vpop.f32.mrb[0].mxu0
      %3341 = vmatprep.mubr.bf16.mxu0 0
      %3342 = vmatmul.mubr.bf16.gmra.mrb[0].mxu0 %v3252
      %v3343 = vpop.f32.mrb[0].mxu0
      %v3344 = vadd.f32 0.0, %v3343
      %v3345 = vpop.f32.mrb[0].mxu0
      %v3346 = vpop.f32.mrb[0].mxu0
      %v3347 = vadd.f32 0.0, %v3346
      %v3348 = vpop.f32.mrb[0].mxu0
      %3349 = vmatprep.mubr.bf16.mxu0 0
      %3350 = vmatmul.mubr.bf16.gmra.mrb[0].mxu0 %v3255
      %v3351 = vpop.f32.mrb[0].mxu0
      %v3352 = vadd.f32 0.0, %v3351
      %v3353 = vpop.f32.mrb[0].mxu0
      %v3354 = vpop.f32.mrb[0].mxu0
      %v3355 = vadd.f32 0.0, %v3354
      %v3356 = vpop.f32.mrb[0].mxu0
      %3357 = vmatprep.mubr.bf16.mxu0 0
      %3358 = vmatmul.mubr.bf16.gmra.mrb[0].mxu0 %v3258
      %v3359 = vpop.f32.mrb[0].mxu0
      %v3360 = vadd.f32 0.0, %v3359
      %v3361 = vpop.f32.mrb[0].mxu0
      %v3362 = vpop.f32.mrb[0].mxu0
      %v3363 = vadd.f32 0.0, %v3362
      %v3364 = vpop.f32.mrb[0].mxu0
      %3365 = vmatprep.mubr.bf16.mxu0 0
      %3366 = vmatmul.mubr.bf16.gmra.mrb[0].mxu0 %v3261
      %v3367 = vpop.f32.mrb[0].mxu0
      %v3368 = vadd.f32 0.0, %v3367
      %v3369 = vpop.f32.mrb[0].mxu0
      %v3370 = vpop.f32.mrb[0].mxu0
      %v3371 = vadd.f32 0.0, %v3370
      %v3372 = vpop.f32.mrb[0].mxu0
      %3373 = vmatprep.mubr.bf16.mxu0 0
      %3374 = vmatmul.mubr.bf16.gmra.mrb[0].mxu0 %v3264
      %v3375 = vpop.f32.mrb[0].mxu0
      %v3376 = vadd.f32 0.0, %v3375
      %v3377 = vpop.f32.mrb[0].mxu0
      %v3378 = vpop.f32.mrb[0].mxu0
      %v3379 = vadd.f32 0.0, %v3378
      %v3380 = vpop.f32.mrb[0].mxu0
      %3381 = vmatprep.mubr.bf16.mxu0 0
      %3382 = vmatmul.mubr.bf16.gmra.mrb[0].mxu0 %v3267
      %v3383 = vpop.f32.mrb[0].mxu0
      %v3384 = vadd.f32 0.0, %v3383
      %v3385 = vpop.f32.mrb[0].mxu0
      %v3386 = vpop.f32.mrb[0].mxu0
      %v3387 = vadd.f32 0.0, %v3386
      %v3388 = vpop.f32.mrb[0].mxu0
      %3389 = vmatprep.mubr.bf16.mxu0 0
      %3390 = vmatmul.mubr.bf16.gmra.mrb[0].mxu0 %v3270
      %v3391 = vpop.f32.mrb[0].mxu0
      %v3392 = vadd.f32 0.0, %v3391
      %v3393 = vpop.f32.mrb[0].mxu0
      %v3394 = vpop.f32.mrb[0].mxu0
      %v3395 = vadd.f32 0.0, %v3394
      %v3396 = vpop.f32.mrb[0].mxu0
      %3397 = vmatprep.mubr.bf16.mxu0 0
      %3398 = vmatmul.mubr.bf16.gmra.mrb[0].mxu0 %v3273
      %v3399 = vpop.f32.mrb[0].mxu0
      %v3400 = vadd.f32 0.0, %v3399
      %v3401 = vpop.f32.mrb[0].mxu0
      %v3402 = vpop.f32.mrb[0].mxu0
      %v3403 = vadd.f32 0.0, %v3402
      %v3404 = vpop.f32.mrb[0].mxu0
      %3405 = vmatprep.mubr.bf16.mxu0 0
      %3406 = vmatmul.mubr.bf16.gmra.mrb[0].mxu0 %v3276
      %v3407 = vpop.f32.mrb[0].mxu0
      %v3408 = vadd.f32 0.0, %v3407
      %v3409 = vpop.f32.mrb[0].mxu0
      %v3410 = vpop.f32.mrb[0].mxu0
      %v3411 = vadd.f32 0.0, %v3410
      %v3412 = vpop.f32.mrb[0].mxu0
      %3413 = vmatprep.mubr.bf16.mxu0 0
      %3414 = vmatmul.mubr.bf16.gmra.mrb[0].mxu0 %v3279
      %v3415 = vpop.f32.mrb[0].mxu0
      %v3416 = vadd.f32 0.0, %v3415
      %v3417 = vpop.f32.mrb[0].mxu0
      %v3418 = vpop.f32.mrb[0].mxu0
      %v3419 = vadd.f32 0.0, %v3418
      %v3420 = vpop.f32.mrb[0].mxu0
      %3421 = vmatprep.mubr.bf16.mxu0 0
      %3422 = vmatmul.mubr.bf16.gmra.mrb[0].mxu0 %v3282
      %v3423 = vpop.f32.mrb[0].mxu0
      %v3424 = vadd.f32 0.0, %v3423
      %v3425 = vpop.f32.mrb[0].mxu0
      %v3426 = vpop.f32.mrb[0].mxu0
      %v3427 = vadd.f32 0.0, %v3426
      %v3428 = vpop.f32.mrb[0].mxu0
      %3429 = vmatprep.mubr.bf16.mxu0 0
      %3430 = vmatmul.mubr.bf16.gmra.mrb[0].mxu0 %v3285
      %v3431 = vpop.f32.mrb[0].mxu0
      %v3432 = vadd.f32 0.0, %v3431
      %v3433 = vpop.f32.mrb[0].mxu0
      %v3434 = vpop.f32.mrb[0].mxu0
      %v3435 = vadd.f32 0.0, %v3434
      %v3436 = vpop.f32.mrb[0].mxu0
      %3437 = vmatprep.mubr.bf16.mxu0 0
      %3438 = vmatmul.mubr.bf16.gmra.mrb[0].mxu0 %v3288
      %v3439 = vpop.f32.mrb[0].mxu0
      %v3440 = vadd.f32 0.0, %v3439
      %v3441 = vpop.f32.mrb[0].mxu0
      %v3442 = vpop.f32.mrb[0].mxu0
      %v3443 = vadd.f32 0.0, %v3442
      %v3444 = vpop.f32.mrb[0].mxu0
      %3445 = vmatprep.mubr.bf16.mxu0 0
      %3446 = vmatmul.mubr.bf16.gmra.mrb[0].mxu0 %v3291
      %v3447 = vpop.f32.mrb[0].mxu0
      %v3448 = vadd.f32 0.0, %v3447
      %v3449 = vpop.f32.mrb[0].mxu0
      %v3450 = vpop.f32.mrb[0].mxu0
      %v3451 = vadd.f32 0.0, %v3450
      %v3452 = vpop.f32.mrb[0].mxu0
      %3453 = vdwg.mxu0
      %v3454 = vadd.f32 %v2716, %v3328
      %v3455 = vadd.f32 %v2717, %v3331
      %v3456 = vadd.f32 %v2718, %v3336
      %v3457 = vadd.f32 %v2719, %v3339
      %v3458 = vadd.f32 %v2720, %v3344
      %v3459 = vadd.f32 %v2721, %v3347
      %v3460 = vadd.f32 %v2722, %v3352
      %v3461 = vadd.f32 %v2723, %v3355
      %v3462 = vadd.f32 %v2724, %v3360
      %v3463 = vadd.f32 %v2725, %v3363
      %v3464 = vadd.f32 %v2726, %v3368
      %v3465 = vadd.f32 %v2727, %v3371
      %v3466 = vadd.f32 %v2728, %v3376
      %v3467 = vadd.f32 %v2729, %v3379
      %v3468 = vadd.f32 %v2730, %v3384
      %v3469 = vadd.f32 %v2731, %v3387
      %v3470 = vadd.f32 %v2732, %v3392
      %v3471 = vadd.f32 %v2733, %v3395
      %v3472 = vadd.f32 %v2734, %v3400
      %v3473 = vadd.f32 %v2735, %v3403
      %v3474 = vadd.f32 %v2736, %v3408
      %v3475 = vadd.f32 %v2737, %v3411
      %v3476 = vadd.f32 %v2738, %v3416
      %v3477 = vadd.f32 %v2739, %v3419
      %v3478 = vadd.f32 %v2740, %v3424
      %v3479 = vadd.f32 %v2741, %v3427
      %v3480 = vadd.f32 %v2742, %v3432
      %v3481 = vadd.f32 %v2743, %v3435
      %v3482 = vadd.f32 %v2744, %v3440
      %v3483 = vadd.f32 %v2745, %v3443
      %v3484 = vadd.f32 %v2746, %v3448
      %v3485 = vadd.f32 %v2747, %v3451
      %v3486 = vld [vmem:[%s2377] sm:$0xe]
      %v3487 = vld [vmem:[%s2377 + $0xc] sm:$0xe]
      %v3488 = vld [vmem:[%s2377 + $0x18] sm:$0xe]
      %v3489 = vld [vmem:[%s2377 + $0x24] sm:$0xe]
      %v3490 = vld [vmem:[%s2377 + $0x30] sm:$0xe]
      %v3491 = vld [vmem:[%s2377 + $0x3c] sm:$0xe]
      %v3492 = vld [vmem:[%s2377 + $0x48] sm:$0xe]
      %v3493 = vld [vmem:[%s2377 + $0x54] sm:$0xe]
      %v3494 = vld [vmem:[%s2377 + $0x60] sm:$0xe]
      %v3495 = vld [vmem:[%s2377 + $0x6c] sm:$0xe]
      %v3496 = vld [vmem:[%s2377 + $0x78] sm:$0xe]
      %v3497 = vld [vmem:[%s2377 + $0x84] sm:$0xe]
      %v3498 = vld [vmem:[%s2377 + $0x90] sm:$0xe]
      %v3499 = vld [vmem:[%s2377 + $0x9c] sm:$0xe]
      %v3500 = vld [vmem:[%s2377 + $0xa8] sm:$0xe]
      %v3501 = vld [vmem:[%s2377 + $0xb4] sm:$0xe]
      %v3550 = vrot.slane %v3486, 5
      %v3551 = vrot.slane %v3550, 4
      %v3552 = vrot.slane %v2749, 5
      %v3553 = vsel %vm1958, %v3551, %v3552
      %v3554 = vrot.slane %v3552, 4
      %v3555 = vrot.slane %v2750, 5
      %v3556 = vsel %vm1958, %v3554, %v3555
      %v3557 = vrot.slane %v3487, 5
      %v3558 = vrot.slane %v3557, 4
      %v3559 = vrot.slane %v2752, 5
      %v3560 = vsel %vm1958, %v3558, %v3559
      %v3561 = vrot.slane %v3559, 4
      %v3562 = vrot.slane %v2753, 5
      %v3563 = vsel %vm1958, %v3561, %v3562
      %v3564 = vrot.slane %v3488, 5
      %v3565 = vrot.slane %v3564, 4
      %v3566 = vrot.slane %v2755, 5
      %v3567 = vsel %vm1958, %v3565, %v3566
      %v3568 = vrot.slane %v3566, 4
      %v3569 = vrot.slane %v2756, 5
      %v3570 = vsel %vm1958, %v3568, %v3569
      %v3571 = vrot.slane %v3489, 5
      %v3572 = vrot.slane %v3571, 4
      %v3573 = vrot.slane %v2758, 5
      %v3574 = vsel %vm1958, %v3572, %v3573
      %v3575 = vrot.slane %v3573, 4
      %v3576 = vrot.slane %v2759, 5
      %v3577 = vsel %vm1958, %v3575, %v3576
      %v3578 = vrot.slane %v3490, 5
      %v3579 = vrot.slane %v3578, 4
      %v3580 = vrot.slane %v2761, 5
      %v3581 = vsel %vm1958, %v3579, %v3580
      %v3582 = vrot.slane %v3580, 4
      %v3583 = vrot.slane %v2762, 5
      %v3584 = vsel %vm1958, %v3582, %v3583
      %v3585 = vrot.slane %v3491, 5
      %v3586 = vrot.slane %v3585, 4
      %v3587 = vrot.slane %v2764, 5
      %v3588 = vsel %vm1958, %v3586, %v3587
      %v3589 = vrot.slane %v3587, 4
      %v3590 = vrot.slane %v2765, 5
      %v3591 = vsel %vm1958, %v3589, %v3590
      %v3592 = vrot.slane %v3492, 5
      %v3593 = vrot.slane %v3592, 4
      %v3594 = vrot.slane %v2767, 5
      %v3595 = vsel %vm1958, %v3593, %v3594
      %v3596 = vrot.slane %v3594, 4
      %v3597 = vrot.slane %v2768, 5
      %v3598 = vsel %vm1958, %v3596, %v3597
      %v3599 = vrot.slane %v3493, 5
      %v3600 = vrot.slane %v3599, 4
      %v3601 = vrot.slane %v2770, 5
      %v3602 = vsel %vm1958, %v3600, %v3601
      %v3603 = vrot.slane %v3601, 4
      %v3604 = vrot.slane %v2771, 5
      %v3605 = vsel %vm1958, %v3603, %v3604
      %v3606 = vrot.slane %v3494, 5
      %v3607 = vrot.slane %v3606, 4
      %v3608 = vrot.slane %v2773, 5
      %v3609 = vsel %vm1958, %v3607, %v3608
      %v3610 = vrot.slane %v3608, 4
      %v3611 = vrot.slane %v2774, 5
      %v3612 = vsel %vm1958, %v3610, %v3611
      %v3613 = vrot.slane %v3495, 5
      %v3614 = vrot.slane %v3613, 4
      %v3615 = vrot.slane %v2776, 5
      %v3616 = vsel %vm1958, %v3614, %v3615
      %v3617 = vrot.slane %v3615, 4
      %v3618 = vrot.slane %v2777, 5
      %v3619 = vsel %vm1958, %v3617, %v3618
      %v3620 = vrot.slane %v3496, 5
      %v3621 = vrot.slane %v3620, 4
      %v3622 = vrot.slane %v2779, 5
      %v3623 = vsel %vm1958, %v3621, %v3622
      %v3624 = vrot.slane %v3622, 4
      %v3625 = vrot.slane %v2780, 5
      %v3626 = vsel %vm1958, %v3624, %v3625
      %v3627 = vrot.slane %v3497, 5
      %v3628 = vrot.slane %v3627, 4
      %v3629 = vrot.slane %v2782, 5
      %v3630 = vsel %vm1958, %v3628, %v3629
      %v3631 = vrot.slane %v3629, 4
      %v3632 = vrot.slane %v2783, 5
      %v3633 = vsel %vm1958, %v3631, %v3632
      %v3634 = vrot.slane %v3498, 5
      %v3635 = vrot.slane %v3634, 4
      %v3636 = vrot.slane %v2785, 5
      %v3637 = vsel %vm1958, %v3635, %v3636
      %v3638 = vrot.slane %v3636, 4
      %v3639 = vrot.slane %v2786, 5
      %v3640 = vsel %vm1958, %v3638, %v3639
      %v3641 = vrot.slane %v3499, 5
      %v3642 = vrot.slane %v3641, 4
      %v3643 = vrot.slane %v2788, 5
      %v3644 = vsel %vm1958, %v3642, %v3643
      %v3645 = vrot.slane %v3643, 4
      %v3646 = vrot.slane %v2789, 5
      %v3647 = vsel %vm1958, %v3645, %v3646
      %v3648 = vrot.slane %v3500, 5
      %v3649 = vrot.slane %v3648, 4
      %v3650 = vrot.slane %v2791, 5
      %v3651 = vsel %vm1958, %v3649, %v3650
      %v3652 = vrot.slane %v3650, 4
      %v3653 = vrot.slane %v2792, 5
      %v3654 = vsel %vm1958, %v3652, %v3653
      %v3655 = vrot.slane %v3501, 5
      %v3656 = vrot.slane %v3655, 4
      %v3657 = vrot.slane %v2794, 5
      %v3658 = vsel %vm1958, %v3656, %v3657
      %v3659 = vrot.slane %v3657, 4
      %v3660 = vrot.slane %v2795, 5
      %v3661 = vsel %vm1958, %v3659, %v3660
      %s3662 = scalar_lea.vmem %s1, 80
      %v3663 = vld [vmem:[%s3662] sm:$0xf]
      %v3664 = vld [vmem:[%s3662 + $0x4] sm:$0xf]
      %v3665 = vld [vmem:[%s3662 + $0x8] sm:$0xf]
      %v3666 = vld [vmem:[%s3662 + $0xc] sm:$0xf]
      %v3667 = vunpack.c.l.b16 %v3553
      %v3668 = vunpack.c.l.b16 %v3556
      %v3669 = vunpack.c.l.b16 %v3560
      %v3670 = vunpack.c.l.b16 %v3563
      %v3671 = vunpack.c.l.b16 %v3567
      %v3672 = vunpack.c.l.b16 %v3570
      %v3673 = vunpack.c.l.b16 %v3574
      %v3674 = vunpack.c.l.b16 %v3577
      %v3675 = vunpack.c.l.b16 %v3581
      %v3676 = vunpack.c.l.b16 %v3584
      %v3677 = vunpack.c.l.b16 %v3588
      %v3678 = vunpack.c.l.b16 %v3591
      %v3679 = vunpack.c.l.b16 %v3595
      %v3680 = vunpack.c.l.b16 %v3598
      %v3681 = vunpack.c.l.b16 %v3602
      %v3682 = vunpack.c.l.b16 %v3605
      %v3683 = vunpack.c.l.b16 %v3609
      %v3684 = vunpack.c.l.b16 %v3612
      %v3685 = vunpack.c.l.b16 %v3616
      %v3686 = vunpack.c.l.b16 %v3619
      %v3687 = vunpack.c.l.b16 %v3623
      %v3688 = vunpack.c.l.b16 %v3626
      %v3689 = vunpack.c.l.b16 %v3630
      %v3690 = vunpack.c.l.b16 %v3633
      %v3691 = vunpack.c.l.b16 %v3637
      %v3692 = vunpack.c.l.b16 %v3640
      %v3693 = vunpack.c.l.b16 %v3644
      %v3694 = vunpack.c.l.b16 %v3647
      %v3695 = vunpack.c.l.b16 %v3651
      %v3696 = vunpack.c.l.b16 %v3654
      %v3697 = vunpack.c.l.b16 %v3658
      %v3698 = vunpack.c.l.b16 %v3661
      %v3699 = vpack.c.b16 %v3668, %v3667
      %v3700 = vpack.c.b16 %v3670, %v3669
      %v3701 = vpack.c.b16 %v3672, %v3671
      %v3702 = vpack.c.b16 %v3674, %v3673
      %v3703 = vpack.c.b16 %v3676, %v3675
      %v3704 = vpack.c.b16 %v3678, %v3677
      %v3705 = vpack.c.b16 %v3680, %v3679
      %v3706 = vpack.c.b16 %v3682, %v3681
      %v3707 = vpack.c.b16 %v3684, %v3683
      %v3708 = vpack.c.b16 %v3686, %v3685
      %v3709 = vpack.c.b16 %v3688, %v3687
      %v3710 = vpack.c.b16 %v3690, %v3689
      %v3711 = vpack.c.b16 %v3692, %v3691
      %v3712 = vpack.c.b16 %v3694, %v3693
      %v3713 = vpack.c.b16 %v3696, %v3695
      %v3714 = vpack.c.b16 %v3698, %v3697
      %v3719 = vunpack.c.l.b16 %v3663
      %v3720 = vunpack.c.l.b16 %v3664
      %v3721 = vunpack.c.l.b16 %v3665
      %v3722 = vunpack.c.l.b16 %v3666
      %v3723 = vpack.c.b16 %v3720, %v3719
      %v3724 = vpack.c.b16 %v3722, %v3721
      %v3728 = vsel %vm1397, %v3699, 0
      %v3731 = vsel %vm1397, %v3700, 0
      %v3734 = vsel %vm1397, %v3701, 0
      %v3737 = vsel %vm1397, %v3702, 0
      %v3740 = vsel %vm1397, %v3703, 0
      %v3743 = vsel %vm1397, %v3704, 0
      %v3746 = vsel %vm1397, %v3705, 0
      %v3749 = vsel %vm1397, %v3706, 0
      %v3752 = vsel %vm1397, %v3707, 0
      %v3755 = vsel %vm1397, %v3708, 0
      %v3758 = vsel %vm1397, %v3709, 0
      %v3761 = vsel %vm1397, %v3710, 0
      %v3764 = vsel %vm1397, %v3711, 0
      %v3767 = vsel %vm1397, %v3712, 0
      %v3770 = vsel %vm1397, %v3713, 0
      %v3773 = vsel %vm1397, %v3714, 0
      %3775 = vmatprep.subr.bf16.mxu0 0
      %3776 = vmatpush1.bf16.msra.mxu0 %v3723
      %3777 = vmatprep.subr.bf16.mxu0 0
      %3778 = vmatpush1.bf16.msra.mxu0 %v3724
      %3779 = vmatprep.subr.bf16.mxu0 0
      %3780 = vmatpush1.bf16.msra.mxu0 0
      %3781 = vmatprep.subr.bf16.mxu0 0
      %3782 = vmatpush1.bf16.msra.mxu0 0
      %3783 = vmatprep.subr.bf16.mxu0 0
      %3784 = vmatpush1.bf16.msra.mxu0 0
      %3785 = vmatprep.subr.bf16.mxu0 0
      %3786 = vmatpush1.bf16.msra.mxu0 0
      %3787 = vmatprep.subr.bf16.mxu0 0
      %3788 = vmatpush1.bf16.msra.mxu0 0
      %3789 = vmatprep.subr.bf16.mxu0 0
      %3790 = vmatpush1.bf16.msra.mxu0 0
      %3791 = vmatprep.subr.bf16.mxu0 0
      %3792 = vmatpush1.bf16.msra.mxu0 0
      %3793 = vmatprep.subr.bf16.mxu0 0
      %3794 = vmatpush1.bf16.msra.mxu0 0
      %3795 = vmatprep.subr.bf16.mxu0 0
      %3796 = vmatpush1.bf16.msra.mxu0 0
      %3797 = vmatprep.subr.bf16.mxu0 0
      %3798 = vmatpush1.bf16.msra.mxu0 0
      %3799 = vmatprep.subr.bf16.mxu0 0
      %3800 = vmatpush1.bf16.msra.mxu0 0
      %3801 = vmatprep.subr.bf16.mxu0 0
      %3802 = vmatpush1.bf16.msra.mxu0 0
      %3803 = vmatprep.subr.bf16.mxu0 0
      %3804 = vmatpush1.bf16.msra.mxu0 0
      %3805 = vmatprep.subr.bf16.mxu0 0
      %3806 = vmatpush1.bf16.msra.mxu0 0
      %3807 = vmatprep.mubr.bf16.mxu0 0
      %3808 = vmatmul.mubr.bf16.gmra.mrb[0].mxu0 %v3728
      %v3809 = vpop.f32.mrb[0].mxu0
      %v3810 = vadd.f32 0.0, %v3809
      %v3811 = vpop.f32.mrb[0].mxu0
      %v3812 = vpop.f32.mrb[0].mxu0
      %v3813 = vadd.f32 0.0, %v3812
      %v3814 = vpop.f32.mrb[0].mxu0
      %3815 = vmatprep.mubr.bf16.mxu0 0
      %3816 = vmatmul.mubr.bf16.gmra.mrb[0].mxu0 %v3731
      %v3817 = vpop.f32.mrb[0].mxu0
      %v3818 = vadd.f32 0.0, %v3817
      %v3819 = vpop.f32.mrb[0].mxu0
      %v3820 = vpop.f32.mrb[0].mxu0
      %v3821 = vadd.f32 0.0, %v3820
      %v3822 = vpop.f32.mrb[0].mxu0
      %3823 = vmatprep.mubr.bf16.mxu0 0
      %3824 = vmatmul.mubr.bf16.gmra.mrb[0].mxu0 %v3734
      %v3825 = vpop.f32.mrb[0].mxu0
      %v3826 = vadd.f32 0.0, %v3825
      %v3827 = vpop.f32.mrb[0].mxu0
      %v3828 = vpop.f32.mrb[0].mxu0
      %v3829 = vadd.f32 0.0, %v3828
      %v3830 = vpop.f32.mrb[0].mxu0
      %3831 = vmatprep.mubr.bf16.mxu0 0
      %3832 = vmatmul.mubr.bf16.gmra.mrb[0].mxu0 %v3737
      %v3833 = vpop.f32.mrb[0].mxu0
      %v3834 = vadd.f32 0.0, %v3833
      %v3835 = vpop.f32.mrb[0].mxu0
      %v3836 = vpop.f32.mrb[0].mxu0
      %v3837 = vadd.f32 0.0, %v3836
      %v3838 = vpop.f32.mrb[0].mxu0
      %3839 = vmatprep.mubr.bf16.mxu0 0
      %3840 = vmatmul.mubr.bf16.gmra.mrb[0].mxu0 %v3740
      %v3841 = vpop.f32.mrb[0].mxu0
      %v3842 = vadd.f32 0.0, %v3841
      %v3843 = vpop.f32.mrb[0].mxu0
      %v3844 = vpop.f32.mrb[0].mxu0
      %v3845 = vadd.f32 0.0, %v3844
      %v3846 = vpop.f32.mrb[0].mxu0
      %3847 = vmatprep.mubr.bf16.mxu0 0
      %3848 = vmatmul.mubr.bf16.gmra.mrb[0].mxu0 %v3743
      %v3849 = vpop.f32.mrb[0].mxu0
      %v3850 = vadd.f32 0.0, %v3849
      %v3851 = vpop.f32.mrb[0].mxu0
      %v3852 = vpop.f32.mrb[0].mxu0
      %v3853 = vadd.f32 0.0, %v3852
      %v3854 = vpop.f32.mrb[0].mxu0
      %3855 = vmatprep.mubr.bf16.mxu0 0
      %3856 = vmatmul.mubr.bf16.gmra.mrb[0].mxu0 %v3746
      %v3857 = vpop.f32.mrb[0].mxu0
      %v3858 = vadd.f32 0.0, %v3857
      %v3859 = vpop.f32.mrb[0].mxu0
      %v3860 = vpop.f32.mrb[0].mxu0
      %v3861 = vadd.f32 0.0, %v3860
      %v3862 = vpop.f32.mrb[0].mxu0
      %3863 = vmatprep.mubr.bf16.mxu0 0
      %3864 = vmatmul.mubr.bf16.gmra.mrb[0].mxu0 %v3749
      %v3865 = vpop.f32.mrb[0].mxu0
      %v3866 = vadd.f32 0.0, %v3865
      %v3867 = vpop.f32.mrb[0].mxu0
      %v3868 = vpop.f32.mrb[0].mxu0
      %v3869 = vadd.f32 0.0, %v3868
      %v3870 = vpop.f32.mrb[0].mxu0
      %3871 = vmatprep.mubr.bf16.mxu0 0
      %3872 = vmatmul.mubr.bf16.gmra.mrb[0].mxu0 %v3752
      %v3873 = vpop.f32.mrb[0].mxu0
      %v3874 = vadd.f32 0.0, %v3873
      %v3875 = vpop.f32.mrb[0].mxu0
      %v3876 = vpop.f32.mrb[0].mxu0
      %v3877 = vadd.f32 0.0, %v3876
      %v3878 = vpop.f32.mrb[0].mxu0
      %3879 = vmatprep.mubr.bf16.mxu0 0
      %3880 = vmatmul.mubr.bf16.gmra.mrb[0].mxu0 %v3755
      %v3881 = vpop.f32.mrb[0].mxu0
      %v3882 = vadd.f32 0.0, %v3881
      %v3883 = vpop.f32.mrb[0].mxu0
      %v3884 = vpop.f32.mrb[0].mxu0
      %v3885 = vadd.f32 0.0, %v3884
      %v3886 = vpop.f32.mrb[0].mxu0
      %3887 = vmatprep.mubr.bf16.mxu0 0
      %3888 = vmatmul.mubr.bf16.gmra.mrb[0].mxu0 %v3758
      %v3889 = vpop.f32.mrb[0].mxu0
      %v3890 = vadd.f32 0.0, %v3889
      %v3891 = vpop.f32.mrb[0].mxu0
      %v3892 = vpop.f32.mrb[0].mxu0
      %v3893 = vadd.f32 0.0, %v3892
      %v3894 = vpop.f32.mrb[0].mxu0
      %3895 = vmatprep.mubr.bf16.mxu0 0
      %3896 = vmatmul.mubr.bf16.gmra.mrb[0].mxu0 %v3761
      %v3897 = vpop.f32.mrb[0].mxu0
      %v3898 = vadd.f32 0.0, %v3897
      %v3899 = vpop.f32.mrb[0].mxu0
      %v3900 = vpop.f32.mrb[0].mxu0
      %v3901 = vadd.f32 0.0, %v3900
      %v3902 = vpop.f32.mrb[0].mxu0
      %3903 = vmatprep.mubr.bf16.mxu0 0
      %3904 = vmatmul.mubr.bf16.gmra.mrb[0].mxu0 %v3764
      %v3905 = vpop.f32.mrb[0].mxu0
      %v3906 = vadd.f32 0.0, %v3905
      %v3907 = vpop.f32.mrb[0].mxu0
      %v3908 = vpop.f32.mrb[0].mxu0
      %v3909 = vadd.f32 0.0, %v3908
      %v3910 = vpop.f32.mrb[0].mxu0
      %3911 = vmatprep.mubr.bf16.mxu0 0
      %3912 = vmatmul.mubr.bf16.gmra.mrb[0].mxu0 %v3767
      %v3913 = vpop.f32.mrb[0].mxu0
      %v3914 = vadd.f32 0.0, %v3913
      %v3915 = vpop.f32.mrb[0].mxu0
      %v3916 = vpop.f32.mrb[0].mxu0
      %v3917 = vadd.f32 0.0, %v3916
      %v3918 = vpop.f32.mrb[0].mxu0
      %3919 = vmatprep.mubr.bf16.mxu0 0
      %3920 = vmatmul.mubr.bf16.gmra.mrb[0].mxu0 %v3770
      %v3921 = vpop.f32.mrb[0].mxu0
      %v3922 = vadd.f32 0.0, %v3921
      %v3923 = vpop.f32.mrb[0].mxu0
      %v3924 = vpop.f32.mrb[0].mxu0
      %v3925 = vadd.f32 0.0, %v3924
      %v3926 = vpop.f32.mrb[0].mxu0
      %3927 = vmatprep.mubr.bf16.mxu0 0
      %3928 = vmatmul.mubr.bf16.gmra.mrb[0].mxu0 %v3773
      %v3929 = vpop.f32.mrb[0].mxu0
      %v3930 = vadd.f32 0.0, %v3929
      %v3931 = vpop.f32.mrb[0].mxu0
      %v3932 = vpop.f32.mrb[0].mxu0
      %v3933 = vadd.f32 0.0, %v3932
      %v3934 = vpop.f32.mrb[0].mxu0
      %3935 = vdwg.mxu0
      %v3936 = vadd.f32 %v3454, %v3810
      %v3937 = vadd.f32 %v3455, %v3813
      %v3938 = vadd.f32 %v3456, %v3818
      %v3939 = vadd.f32 %v3457, %v3821
      %v3940 = vadd.f32 %v3458, %v3826
      %v3941 = vadd.f32 %v3459, %v3829
      %v3942 = vadd.f32 %v3460, %v3834
      %v3943 = vadd.f32 %v3461, %v3837
      %v3944 = vadd.f32 %v3462, %v3842
      %v3945 = vadd.f32 %v3463, %v3845
      %v3946 = vadd.f32 %v3464, %v3850
      %v3947 = vadd.f32 %v3465, %v3853
      %v3948 = vadd.f32 %v3466, %v3858
      %v3949 = vadd.f32 %v3467, %v3861
      %v3950 = vadd.f32 %v3468, %v3866
      %v3951 = vadd.f32 %v3469, %v3869
      %v3952 = vadd.f32 %v3470, %v3874
      %v3953 = vadd.f32 %v3471, %v3877
      %v3954 = vadd.f32 %v3472, %v3882
      %v3955 = vadd.f32 %v3473, %v3885
      %v3956 = vadd.f32 %v3474, %v3890
      %v3957 = vadd.f32 %v3475, %v3893
      %v3958 = vadd.f32 %v3476, %v3898
      %v3959 = vadd.f32 %v3477, %v3901
      %v3960 = vadd.f32 %v3478, %v3906
      %v3961 = vadd.f32 %v3479, %v3909
      %v3962 = vadd.f32 %v3480, %v3914
      %v3963 = vadd.f32 %v3481, %v3917
      %v3964 = vadd.f32 %v3482, %v3922
      %v3965 = vadd.f32 %v3483, %v3925
      %v3966 = vadd.f32 %v3484, %v3930
      %v3967 = vadd.f32 %v3485, %v3933
      %s3968 = scalar_lea.vmem [#allocation2], 24
      %v3969 = vld [vmem:[%s3968] sm:$0xf]
      %v3970 = vld [vmem:[%s3968 + $0x4] sm:$0xf]
      %v3971 = vld [vmem:[%s3968 + $0xc] sm:$0xf]
      %v3972 = vld [vmem:[%s3968 + $0x10] sm:$0xf]
      %v3973 = vld [vmem:[%s3968 + $0x18] sm:$0xf]
      %v3974 = vld [vmem:[%s3968 + $0x1c] sm:$0xf]
      %v3975 = vld [vmem:[%s3968 + $0x24] sm:$0xf]
      %v3976 = vld [vmem:[%s3968 + $0x28] sm:$0xf]
      %v3977 = vld [vmem:[%s3968 + $0x30] sm:$0xf]
      %v3978 = vld [vmem:[%s3968 + $0x34] sm:$0xf]
      %v3979 = vld [vmem:[%s3968 + $0x3c] sm:$0xf]
      %v3980 = vld [vmem:[%s3968 + $0x40] sm:$0xf]
      %v3981 = vld [vmem:[%s3968 + $0x48] sm:$0xf]
      %v3982 = vld [vmem:[%s3968 + $0x4c] sm:$0xf]
      %v3983 = vld [vmem:[%s3968 + $0x54] sm:$0xf]
      %v3984 = vld [vmem:[%s3968 + $0x58] sm:$0xf]
      %v3985 = vld [vmem:[%s3968 + $0x60] sm:$0xf]
      %v3986 = vld [vmem:[%s3968 + $0x64] sm:$0xf]
      %v3987 = vld [vmem:[%s3968 + $0x6c] sm:$0xf]
      %v3988 = vld [vmem:[%s3968 + $0x70] sm:$0xf]
      %v3989 = vld [vmem:[%s3968 + $0x78] sm:$0xf]
      %v3990 = vld [vmem:[%s3968 + $0x7c] sm:$0xf]
      %v3991 = vld [vmem:[%s3968 + $0x84] sm:$0xf]
      %v3992 = vld [vmem:[%s3968 + $0x88] sm:$0xf]
      %v3993 = vld [vmem:[%s3968 + $0x90] sm:$0xf]
      %v3994 = vld [vmem:[%s3968 + $0x94] sm:$0xf]
      %v3995 = vld [vmem:[%s3968 + $0x9c] sm:$0xf]
      %v3996 = vld [vmem:[%s3968 + $0xa0] sm:$0xf]
      %v3997 = vld [vmem:[%s3968 + $0xa8] sm:$0xf]
      %v3998 = vld [vmem:[%s3968 + $0xac] sm:$0xf]
      %v3999 = vld [vmem:[%s3968 + $0xb4] sm:$0xf]
      %v4000 = vld [vmem:[%s3968 + $0xb8] sm:$0xf]
      %s4001 = scalar_lea.vmem %s1, 96
      %v4002 = vld [vmem:[%s4001] sm:$0xf]
      %v4003 = vld [vmem:[%s4001 + $0x4] sm:$0xf]
      %v4004 = vld [vmem:[%s4001 + $0x8] sm:$0xf]
      %v4005 = vld [vmem:[%s4001 + $0xc] sm:$0xf]
      %v4038 = vunpack.c.l.b16 %v3969
      %v4039 = vunpack.c.l.b16 %v3970
      %v4040 = vunpack.c.l.b16 %v3971
      %v4041 = vunpack.c.l.b16 %v3972
      %v4042 = vunpack.c.l.b16 %v3973
      %v4043 = vunpack.c.l.b16 %v3974
      %v4044 = vunpack.c.l.b16 %v3975
      %v4045 = vunpack.c.l.b16 %v3976
      %v4046 = vunpack.c.l.b16 %v3977
      %v4047 = vunpack.c.l.b16 %v3978
      %v4048 = vunpack.c.l.b16 %v3979
      %v4049 = vunpack.c.l.b16 %v3980
      %v4050 = vunpack.c.l.b16 %v3981
      %v4051 = vunpack.c.l.b16 %v3982
      %v4052 = vunpack.c.l.b16 %v3983
      %v4053 = vunpack.c.l.b16 %v3984
      %v4054 = vunpack.c.l.b16 %v3985
      %v4055 = vunpack.c.l.b16 %v3986
      %v4056 = vunpack.c.l.b16 %v3987
      %v4057 = vunpack.c.l.b16 %v3988
      %v4058 = vunpack.c.l.b16 %v3989
      %v4059 = vunpack.c.l.b16 %v3990
      %v4060 = vunpack.c.l.b16 %v3991
      %v4061 = vunpack.c.l.b16 %v3992
      %v4062 = vunpack.c.l.b16 %v3993
      %v4063 = vunpack.c.l.b16 %v3994
      %v4064 = vunpack.c.l.b16 %v3995
      %v4065 = vunpack.c.l.b16 %v3996
      %v4066 = vunpack.c.l.b16 %v3997
      %v4067 = vunpack.c.l.b16 %v3998
      %v4068 = vunpack.c.l.b16 %v3999
      %v4069 = vunpack.c.l.b16 %v4000
      %v4070 = vpack.c.b16 %v4039, %v4038
      %v4071 = vpack.c.b16 %v4041, %v4040
      %v4072 = vpack.c.b16 %v4043, %v4042
      %v4073 = vpack.c.b16 %v4045, %v4044
      %v4074 = vpack.c.b16 %v4047, %v4046
      %v4075 = vpack.c.b16 %v4049, %v4048
      %v4076 = vpack.c.b16 %v4051, %v4050
      %v4077 = vpack.c.b16 %v4053, %v4052
      %v4078 = vpack.c.b16 %v4055, %v4054
      %v4079 = vpack.c.b16 %v4057, %v4056
      %v4080 = vpack.c.b16 %v4059, %v4058
      %v4081 = vpack.c.b16 %v4061, %v4060
      %v4082 = vpack.c.b16 %v4063, %v4062
      %v4083 = vpack.c.b16 %v4065, %v4064
      %v4084 = vpack.c.b16 %v4067, %v4066
      %v4085 = vpack.c.b16 %v4069, %v4068
      %v4090 = vunpack.c.l.b16 %v4002
      %v4091 = vunpack.c.l.b16 %v4003
      %v4092 = vunpack.c.l.b16 %v4004
      %v4093 = vunpack.c.l.b16 %v4005
      %v4094 = vpack.c.b16 %v4091, %v4090
      %v4095 = vpack.c.b16 %v4093, %v4092
      %v4099 = vsel %vm1397, %v4070, 0
      %v4102 = vsel %vm1397, %v4071, 0
      %v4105 = vsel %vm1397, %v4072, 0
      %v4108 = vsel %vm1397, %v4073, 0
      %v4111 = vsel %vm1397, %v4074, 0
      %v4114 = vsel %vm1397, %v4075, 0
      %v4117 = vsel %vm1397, %v4076, 0
      %v4120 = vsel %vm1397, %v4077, 0
      %v4123 = vsel %vm1397, %v4078, 0
      %v4126 = vsel %vm1397, %v4079, 0
      %v4129 = vsel %vm1397, %v4080, 0
      %v4132 = vsel %vm1397, %v4081, 0
      %v4135 = vsel %vm1397, %v4082, 0
      %v4138 = vsel %vm1397, %v4083, 0
      %v4141 = vsel %vm1397, %v4084, 0
      %v4144 = vsel %vm1397, %v4085, 0
      %4146 = vmatprep.subr.bf16.mxu0 0
      %4147 = vmatpush1.bf16.msra.mxu0 %v4094
      %4148 = vmatprep.subr.bf16.mxu0 0
      %4149 = vmatpush1.bf16.msra.mxu0 %v4095
      %4150 = vmatprep.subr.bf16.mxu0 0
      %4151 = vmatpush1.bf16.msra.mxu0 0
      %4152 = vmatprep.subr.bf16.mxu0 0
      %4153 = vmatpush1.bf16.msra.mxu0 0
      %4154 = vmatprep.subr.bf16.mxu0 0
      %4155 = vmatpush1.bf16.msra.mxu0 0
      %4156 = vmatprep.subr.bf16.mxu0 0
      %4157 = vmatpush1.bf16.msra.mxu0 0
      %4158 = vmatprep.subr.bf16.mxu0 0
      %4159 = vmatpush1.bf16.msra.mxu0 0
      %4160 = vmatprep.subr.bf16.mxu0 0
      %4161 = vmatpush1.bf16.msra.mxu0 0
      %4162 = vmatprep.subr.bf16.mxu0 0
      %4163 = vmatpush1.bf16.msra.mxu0 0
      %4164 = vmatprep.subr.bf16.mxu0 0
      %4165 = vmatpush1.bf16.msra.mxu0 0
      %4166 = vmatprep.subr.bf16.mxu0 0
      %4167 = vmatpush1.bf16.msra.mxu0 0
      %4168 = vmatprep.subr.bf16.mxu0 0
      %4169 = vmatpush1.bf16.msra.mxu0 0
      %4170 = vmatprep.subr.bf16.mxu0 0
      %4171 = vmatpush1.bf16.msra.mxu0 0
      %4172 = vmatprep.subr.bf16.mxu0 0
      %4173 = vmatpush1.bf16.msra.mxu0 0
      %4174 = vmatprep.subr.bf16.mxu0 0
      %4175 = vmatpush1.bf16.msra.mxu0 0
      %4176 = vmatprep.subr.bf16.mxu0 0
      %4177 = vmatpush1.bf16.msra.mxu0 0
      %4178 = vmatprep.mubr.bf16.mxu0 0
      %4179 = vmatmul.mubr.bf16.gmra.mrb[0].mxu0 %v4099
      %v4180 = vpop.f32.mrb[0].mxu0
      %v4181 = vadd.f32 0.0, %v4180
      %v4182 = vpop.f32.mrb[0].mxu0
      %v4183 = vpop.f32.mrb[0].mxu0
      %v4184 = vadd.f32 0.0, %v4183
      %v4185 = vpop.f32.mrb[0].mxu0
      %4186 = vmatprep.mubr.bf16.mxu0 0
      %4187 = vmatmul.mubr.bf16.gmra.mrb[0].mxu0 %v4102
      %v4188 = vpop.f32.mrb[0].mxu0
      %v4189 = vadd.f32 0.0, %v4188
      %v4190 = vpop.f32.mrb[0].mxu0
      %v4191 = vpop.f32.mrb[0].mxu0
      %v4192 = vadd.f32 0.0, %v4191
      %v4193 = vpop.f32.mrb[0].mxu0
      %4194 = vmatprep.mubr.bf16.mxu0 0
      %4195 = vmatmul.mubr.bf16.gmra.mrb[0].mxu0 %v4105
      %v4196 = vpop.f32.mrb[0].mxu0
      %v4197 = vadd.f32 0.0, %v4196
      %v4198 = vpop.f32.mrb[0].mxu0
      %v4199 = vpop.f32.mrb[0].mxu0
      %v4200 = vadd.f32 0.0, %v4199
      %v4201 = vpop.f32.mrb[0].mxu0
      %4202 = vmatprep.mubr.bf16.mxu0 0
      %4203 = vmatmul.mubr.bf16.gmra.mrb[0].mxu0 %v4108
      %v4204 = vpop.f32.mrb[0].mxu0
      %v4205 = vadd.f32 0.0, %v4204
      %v4206 = vpop.f32.mrb[0].mxu0
      %v4207 = vpop.f32.mrb[0].mxu0
      %v4208 = vadd.f32 0.0, %v4207
      %v4209 = vpop.f32.mrb[0].mxu0
      %4210 = vmatprep.mubr.bf16.mxu0 0
      %4211 = vmatmul.mubr.bf16.gmra.mrb[0].mxu0 %v4111
      %v4212 = vpop.f32.mrb[0].mxu0
      %v4213 = vadd.f32 0.0, %v4212
      %v4214 = vpop.f32.mrb[0].mxu0
      %v4215 = vpop.f32.mrb[0].mxu0
      %v4216 = vadd.f32 0.0, %v4215
      %v4217 = vpop.f32.mrb[0].mxu0
      %4218 = vmatprep.mubr.bf16.mxu0 0
      %4219 = vmatmul.mubr.bf16.gmra.mrb[0].mxu0 %v4114
      %v4220 = vpop.f32.mrb[0].mxu0
      %v4221 = vadd.f32 0.0, %v4220
      %v4222 = vpop.f32.mrb[0].mxu0
      %v4223 = vpop.f32.mrb[0].mxu0
      %v4224 = vadd.f32 0.0, %v4223
      %v4225 = vpop.f32.mrb[0].mxu0
      %4226 = vmatprep.mubr.bf16.mxu0 0
      %4227 = vmatmul.mubr.bf16.gmra.mrb[0].mxu0 %v4117
      %v4228 = vpop.f32.mrb[0].mxu0
      %v4229 = vadd.f32 0.0, %v4228
      %v4230 = vpop.f32.mrb[0].mxu0
      %v4231 = vpop.f32.mrb[0].mxu0
      %v4232 = vadd.f32 0.0, %v4231
      %v4233 = vpop.f32.mrb[0].mxu0
      %4234 = vmatprep.mubr.bf16.mxu0 0
      %4235 = vmatmul.mubr.bf16.gmra.mrb[0].mxu0 %v4120
      %v4236 = vpop.f32.mrb[0].mxu0
      %v4237 = vadd.f32 0.0, %v4236
      %v4238 = vpop.f32.mrb[0].mxu0
      %v4239 = vpop.f32.mrb[0].mxu0
      %v4240 = vadd.f32 0.0, %v4239
      %v4241 = vpop.f32.mrb[0].mxu0
      %4242 = vmatprep.mubr.bf16.mxu0 0
      %4243 = vmatmul.mubr.bf16.gmra.mrb[0].mxu0 %v4123
      %v4244 = vpop.f32.mrb[0].mxu0
      %v4245 = vadd.f32 0.0, %v4244
      %v4246 = vpop.f32.mrb[0].mxu0
      %v4247 = vpop.f32.mrb[0].mxu0
      %v4248 = vadd.f32 0.0, %v4247
      %v4249 = vpop.f32.mrb[0].mxu0
      %4250 = vmatprep.mubr.bf16.mxu0 0
      %4251 = vmatmul.mubr.bf16.gmra.mrb[0].mxu0 %v4126
      %v4252 = vpop.f32.mrb[0].mxu0
      %v4253 = vadd.f32 0.0, %v4252
      %v4254 = vpop.f32.mrb[0].mxu0
      %v4255 = vpop.f32.mrb[0].mxu0
      %v4256 = vadd.f32 0.0, %v4255
      %v4257 = vpop.f32.mrb[0].mxu0
      %4258 = vmatprep.mubr.bf16.mxu0 0
      %4259 = vmatmul.mubr.bf16.gmra.mrb[0].mxu0 %v4129
      %v4260 = vpop.f32.mrb[0].mxu0
      %v4261 = vadd.f32 0.0, %v4260
      %v4262 = vpop.f32.mrb[0].mxu0
      %v4263 = vpop.f32.mrb[0].mxu0
      %v4264 = vadd.f32 0.0, %v4263
      %v4265 = vpop.f32.mrb[0].mxu0
      %4266 = vmatprep.mubr.bf16.mxu0 0
      %4267 = vmatmul.mubr.bf16.gmra.mrb[0].mxu0 %v4132
      %v4268 = vpop.f32.mrb[0].mxu0
      %v4269 = vadd.f32 0.0, %v4268
      %v4270 = vpop.f32.mrb[0].mxu0
      %v4271 = vpop.f32.mrb[0].mxu0
      %v4272 = vadd.f32 0.0, %v4271
      %v4273 = vpop.f32.mrb[0].mxu0
      %4274 = vmatprep.mubr.bf16.mxu0 0
      %4275 = vmatmul.mubr.bf16.gmra.mrb[0].mxu0 %v4135
      %v4276 = vpop.f32.mrb[0].mxu0
      %v4277 = vadd.f32 0.0, %v4276
      %v4278 = vpop.f32.mrb[0].mxu0
      %v4279 = vpop.f32.mrb[0].mxu0
      %v4280 = vadd.f32 0.0, %v4279
      %v4281 = vpop.f32.mrb[0].mxu0
      %4282 = vmatprep.mubr.bf16.mxu0 0
      %4283 = vmatmul.mubr.bf16.gmra.mrb[0].mxu0 %v4138
      %v4284 = vpop.f32.mrb[0].mxu0
      %v4285 = vadd.f32 0.0, %v4284
      %v4286 = vpop.f32.mrb[0].mxu0
      %v4287 = vpop.f32.mrb[0].mxu0
      %v4288 = vadd.f32 0.0, %v4287
      %v4289 = vpop.f32.mrb[0].mxu0
      %4290 = vmatprep.mubr.bf16.mxu0 0
      %4291 = vmatmul.mubr.bf16.gmra.mrb[0].mxu0 %v4141
      %v4292 = vpop.f32.mrb[0].mxu0
      %v4293 = vadd.f32 0.0, %v4292
      %v4294 = vpop.f32.mrb[0].mxu0
      %v4295 = vpop.f32.mrb[0].mxu0
      %v4296 = vadd.f32 0.0, %v4295
      %v4297 = vpop.f32.mrb[0].mxu0
      %4298 = vmatprep.mubr.bf16.mxu0 0
      %4299 = vmatmul.mubr.bf16.gmra.mrb[0].mxu0 %v4144
      %v4300 = vpop.f32.mrb[0].mxu0
      %v4301 = vadd.f32 0.0, %v4300
      %v4302 = vpop.f32.mrb[0].mxu0
      %v4303 = vpop.f32.mrb[0].mxu0
      %v4304 = vadd.f32 0.0, %v4303
      %v4305 = vpop.f32.mrb[0].mxu0
      %4306 = vdwg.mxu0
      %v4307 = vadd.f32 %v3936, %v4181
      %v4308 = vadd.f32 %v3937, %v4184
      %v4309 = vadd.f32 %v3938, %v4189
      %v4310 = vadd.f32 %v3939, %v4192
      %v4311 = vadd.f32 %v3940, %v4197
      %v4312 = vadd.f32 %v3941, %v4200
      %v4313 = vadd.f32 %v3942, %v4205
      %v4314 = vadd.f32 %v3943, %v4208
      %v4315 = vadd.f32 %v3944, %v4213
      %v4316 = vadd.f32 %v3945, %v4216
      %v4317 = vadd.f32 %v3946, %v4221
      %v4318 = vadd.f32 %v3947, %v4224
      %v4319 = vadd.f32 %v3948, %v4229
      %v4320 = vadd.f32 %v3949, %v4232
      %v4321 = vadd.f32 %v3950, %v4237
      %v4322 = vadd.f32 %v3951, %v4240
      %v4323 = vadd.f32 %v3952, %v4245
      %v4324 = vadd.f32 %v3953, %v4248
      %v4325 = vadd.f32 %v3954, %v4253
      %v4326 = vadd.f32 %v3955, %v4256
      %v4327 = vadd.f32 %v3956, %v4261
      %v4328 = vadd.f32 %v3957, %v4264
      %v4329 = vadd.f32 %v3958, %v4269
      %v4330 = vadd.f32 %v3959, %v4272
      %v4331 = vadd.f32 %v3960, %v4277
      %v4332 = vadd.f32 %v3961, %v4280
      %v4333 = vadd.f32 %v3962, %v4285
      %v4334 = vadd.f32 %v3963, %v4288
      %v4335 = vadd.f32 %v3964, %v4293
      %v4336 = vadd.f32 %v3965, %v4296
      %v4337 = vadd.f32 %v3966, %v4301
      %v4338 = vadd.f32 %v3967, %v4304
      %v4339 = vld [vmem:[%s3968] sm:$0xf]
      %v4340 = vld [vmem:[%s3968 + $0x4] sm:$0xf]
      %v4341 = vld [vmem:[%s3968 + $0x8] sm:$0x1]
      %v4342 = vld [vmem:[%s3968 + $0xc] sm:$0xf]
      %v4343 = vld [vmem:[%s3968 + $0x10] sm:$0xf]
      %v4344 = vld [vmem:[%s3968 + $0x14] sm:$0x1]
      %v4345 = vld [vmem:[%s3968 + $0x18] sm:$0xf]
      %v4346 = vld [vmem:[%s3968 + $0x1c] sm:$0xf]
      %v4347 = vld [vmem:[%s3968 + $0x20] sm:$0x1]
      %v4348 = vld [vmem:[%s3968 + $0x24] sm:$0xf]
      %v4349 = vld [vmem:[%s3968 + $0x28] sm:$0xf]
      %v4350 = vld [vmem:[%s3968 + $0x2c] sm:$0x1]
      %v4351 = vld [vmem:[%s3968 + $0x30] sm:$0xf]
      %v4352 = vld [vmem:[%s3968 + $0x34] sm:$0xf]
      %v4353 = vld [vmem:[%s3968 + $0x38] sm:$0x1]
      %v4354 = vld [vmem:[%s3968 + $0x3c] sm:$0xf]
      %v4355 = vld [vmem:[%s3968 + $0x40] sm:$0xf]
      %v4356 = vld [vmem:[%s3968 + $0x44] sm:$0x1]
      %v4357 = vld [vmem:[%s3968 + $0x48] sm:$0xf]
      %v4358 = vld [vmem:[%s3968 + $0x4c] sm:$0xf]
      %v4359 = vld [vmem:[%s3968 + $0x50] sm:$0x1]
      %v4360 = vld [vmem:[%s3968 + $0x54] sm:$0xf]
      %v4361 = vld [vmem:[%s3968 + $0x58] sm:$0xf]
      %v4362 = vld [vmem:[%s3968 + $0x5c] sm:$0x1]
      %v4363 = vld [vmem:[%s3968 + $0x60] sm:$0xf]
      %v4364 = vld [vmem:[%s3968 + $0x64] sm:$0xf]
      %v4365 = vld [vmem:[%s3968 + $0x68] sm:$0x1]
      %v4366 = vld [vmem:[%s3968 + $0x6c] sm:$0xf]
      %v4367 = vld [vmem:[%s3968 + $0x70] sm:$0xf]
      %v4368 = vld [vmem:[%s3968 + $0x74] sm:$0x1]
      %v4369 = vld [vmem:[%s3968 + $0x78] sm:$0xf]
      %v4370 = vld [vmem:[%s3968 + $0x7c] sm:$0xf]
      %v4371 = vld [vmem:[%s3968 + $0x80] sm:$0x1]
      %v4372 = vld [vmem:[%s3968 + $0x84] sm:$0xf]
      %v4373 = vld [vmem:[%s3968 + $0x88] sm:$0xf]
      %v4374 = vld [vmem:[%s3968 + $0x8c] sm:$0x1]
      %v4375 = vld [vmem:[%s3968 + $0x90] sm:$0xf]
      %v4376 = vld [vmem:[%s3968 + $0x94] sm:$0xf]
      %v4377 = vld [vmem:[%s3968 + $0x98] sm:$0x1]
      %v4378 = vld [vmem:[%s3968 + $0x9c] sm:$0xf]
      %v4379 = vld [vmem:[%s3968 + $0xa0] sm:$0xf]
      %v4380 = vld [vmem:[%s3968 + $0xa4] sm:$0x1]
      %v4381 = vld [vmem:[%s3968 + $0xa8] sm:$0xf]
      %v4382 = vld [vmem:[%s3968 + $0xac] sm:$0xf]
      %v4383 = vld [vmem:[%s3968 + $0xb0] sm:$0x1]
      %v4384 = vld [vmem:[%s3968 + $0xb4] sm:$0xf]
      %v4385 = vld [vmem:[%s3968 + $0xb8] sm:$0xf]
      %v4386 = vld [vmem:[%s3968 + $0xbc] sm:$0x1]
      %v4388 = vshrl.u32 %v4339, 16
      %v4390 = vrot.slane %v4388, 4
      %v4391 = vshll.u32 %v4339, 16
      %v4393 = vrot.slane %v4391, 5
      %v4394 = vor.u32 %v4390, %v4393
      %v4395 = vrot.slane %v4394, 4
      %v4397 = vshll.u32 %v4340, 16
      %v4399 = vrot.slane %v4397, 5
      %v4400 = vsel %vm947, %v4395, %v4399
      %v4401 = vshrl.u32 %v4340, 16
      %v4403 = vrot.slane %v4401, 4
      %v4404 = vor.u32 %v4403, %v4399
      %v4405 = vrot.slane %v4404, 4
      %v4407 = vshll.u32 %v4341, 16
      %v4409 = vrot.slane %v4407, 5
      %v4410 = vsel %vm947, %v4405, %v4409
      %v4412 = vshrl.u32 %v4342, 16
      %v4414 = vrot.slane %v4412, 4
      %v4415 = vshll.u32 %v4342, 16
      %v4417 = vrot.slane %v4415, 5
      %v4418 = vor.u32 %v4414, %v4417
      %v4419 = vrot.slane %v4418, 4
      %v4421 = vshll.u32 %v4343, 16
      %v4423 = vrot.slane %v4421, 5
      %v4424 = vsel %vm947, %v4419, %v4423
      %v4425 = vshrl.u32 %v4343, 16
      %v4427 = vrot.slane %v4425, 4
      %v4428 = vor.u32 %v4427, %v4423
      %v4429 = vrot.slane %v4428, 4
      %v4431 = vshll.u32 %v4344, 16
      %v4433 = vrot.slane %v4431, 5
      %v4434 = vsel %vm947, %v4429, %v4433
      %v4436 = vshrl.u32 %v4345, 16
      %v4438 = vrot.slane %v4436, 4
      %v4439 = vshll.u32 %v4345, 16
      %v4441 = vrot.slane %v4439, 5
      %v4442 = vor.u32 %v4438, %v4441
      %v4443 = vrot.slane %v4442, 4
      %v4445 = vshll.u32 %v4346, 16
      %v4447 = vrot.slane %v4445, 5
      %v4448 = vsel %vm947, %v4443, %v4447
      %v4449 = vshrl.u32 %v4346, 16
      %v4451 = vrot.slane %v4449, 4
      %v4452 = vor.u32 %v4451, %v4447
      %v4453 = vrot.slane %v4452, 4
      %v4455 = vshll.u32 %v4347, 16
      %v4457 = vrot.slane %v4455, 5
      %v4458 = vsel %vm947, %v4453, %v4457
      %v4460 = vshrl.u32 %v4348, 16
      %v4462 = vrot.slane %v4460, 4
      %v4463 = vshll.u32 %v4348, 16
      %v4465 = vrot.slane %v4463, 5
      %v4466 = vor.u32 %v4462, %v4465
      %v4467 = vrot.slane %v4466, 4
      %v4469 = vshll.u32 %v4349, 16
      %v4471 = vrot.slane %v4469, 5
      %v4472 = vsel %vm947, %v4467, %v4471
      %v4473 = vshrl.u32 %v4349, 16
      %v4475 = vrot.slane %v4473, 4
      %v4476 = vor.u32 %v4475, %v4471
      %v4477 = vrot.slane %v4476, 4
      %v4479 = vshll.u32 %v4350, 16
      %v4481 = vrot.slane %v4479, 5
      %v4482 = vsel %vm947, %v4477, %v4481
      %v4484 = vshrl.u32 %v4351, 16
      %v4486 = vrot.slane %v4484, 4
      %v4487 = vshll.u32 %v4351, 16
      %v4489 = vrot.slane %v4487, 5
      %v4490 = vor.u32 %v4486, %v4489
      %v4491 = vrot.slane %v4490, 4
      %v4493 = vshll.u32 %v4352, 16
      %v4495 = vrot.slane %v4493, 5
      %v4496 = vsel %vm947, %v4491, %v4495
      %v4497 = vshrl.u32 %v4352, 16
      %v4499 = vrot.slane %v4497, 4
      %v4500 = vor.u32 %v4499, %v4495
      %v4501 = vrot.slane %v4500, 4
      %v4503 = vshll.u32 %v4353, 16
      %v4505 = vrot.slane %v4503, 5
      %v4506 = vsel %vm947, %v4501, %v4505
      %v4508 = vshrl.u32 %v4354, 16
      %v4510 = vrot.slane %v4508, 4
      %v4511 = vshll.u32 %v4354, 16
      %v4513 = vrot.slane %v4511, 5
      %v4514 = vor.u32 %v4510, %v4513
      %v4515 = vrot.slane %v4514, 4
      %v4517 = vshll.u32 %v4355, 16
      %v4519 = vrot.slane %v4517, 5
      %v4520 = vsel %vm947, %v4515, %v4519
      %v4521 = vshrl.u32 %v4355, 16
      %v4523 = vrot.slane %v4521, 4
      %v4524 = vor.u32 %v4523, %v4519
      %v4525 = vrot.slane %v4524, 4
      %v4527 = vshll.u32 %v4356, 16
      %v4529 = vrot.slane %v4527, 5
      %v4530 = vsel %vm947, %v4525, %v4529
      %v4532 = vshrl.u32 %v4357, 16
      %v4534 = vrot.slane %v4532, 4
      %v4535 = vshll.u32 %v4357, 16
      %v4537 = vrot.slane %v4535, 5
      %v4538 = vor.u32 %v4534, %v4537
      %v4539 = vrot.slane %v4538, 4
      %v4541 = vshll.u32 %v4358, 16
      %v4543 = vrot.slane %v4541, 5
      %v4544 = vsel %vm947, %v4539, %v4543
      %v4545 = vshrl.u32 %v4358, 16
      %v4547 = vrot.slane %v4545, 4
      %v4548 = vor.u32 %v4547, %v4543
      %v4549 = vrot.slane %v4548, 4
      %v4551 = vshll.u32 %v4359, 16
      %v4553 = vrot.slane %v4551, 5
      %v4554 = vsel %vm947, %v4549, %v4553
      %v4556 = vshrl.u32 %v4360, 16
      %v4558 = vrot.slane %v4556, 4
      %v4559 = vshll.u32 %v4360, 16
      %v4561 = vrot.slane %v4559, 5
      %v4562 = vor.u32 %v4558, %v4561
      %v4563 = vrot.slane %v4562, 4
      %v4565 = vshll.u32 %v4361, 16
      %v4567 = vrot.slane %v4565, 5
      %v4568 = vsel %vm947, %v4563, %v4567
      %v4569 = vshrl.u32 %v4361, 16
      %v4571 = vrot.slane %v4569, 4
      %v4572 = vor.u32 %v4571, %v4567
      %v4573 = vrot.slane %v4572, 4
      %v4575 = vshll.u32 %v4362, 16
      %v4577 = vrot.slane %v4575, 5
      %v4578 = vsel %vm947, %v4573, %v4577
      %v4580 = vshrl.u32 %v4363, 16
      %v4582 = vrot.slane %v4580, 4
      %v4583 = vshll.u32 %v4363, 16
      %v4585 = vrot.slane %v4583, 5
      %v4586 = vor.u32 %v4582, %v4585
      %v4587 = vrot.slane %v4586, 4
      %v4589 = vshll.u32 %v4364, 16
      %v4591 = vrot.slane %v4589, 5
      %v4592 = vsel %vm947, %v4587, %v4591
      %v4593 = vshrl.u32 %v4364, 16
      %v4595 = vrot.slane %v4593, 4
      %v4596 = vor.u32 %v4595, %v4591
      %v4597 = vrot.slane %v4596, 4
      %v4599 = vshll.u32 %v4365, 16
      %v4601 = vrot.slane %v4599, 5
      %v4602 = vsel %vm947, %v4597, %v4601
      %v4604 = vshrl.u32 %v4366, 16
      %v4606 = vrot.slane %v4604, 4
      %v4607 = vshll.u32 %v4366, 16
      %v4609 = vrot.slane %v4607, 5
      %v4610 = vor.u32 %v4606, %v4609
      %v4611 = vrot.slane %v4610, 4
      %v4613 = vshll.u32 %v4367, 16
      %v4615 = vrot.slane %v4613, 5
      %v4616 = vsel %vm947, %v4611, %v4615
      %v4617 = vshrl.u32 %v4367, 16
      %v4619 = vrot.slane %v4617, 4
      %v4620 = vor.u32 %v4619, %v4615
      %v4621 = vrot.slane %v4620, 4
      %v4623 = vshll.u32 %v4368, 16
      %v4625 = vrot.slane %v4623, 5
      %v4626 = vsel %vm947, %v4621, %v4625
      %v4628 = vshrl.u32 %v4369, 16
      %v4630 = vrot.slane %v4628, 4
      %v4631 = vshll.u32 %v4369, 16
      %v4633 = vrot.slane %v4631, 5
      %v4634 = vor.u32 %v4630, %v4633
      %v4635 = vrot.slane %v4634, 4
      %v4637 = vshll.u32 %v4370, 16
      %v4639 = vrot.slane %v4637, 5
      %v4640 = vsel %vm947, %v4635, %v4639
      %v4641 = vshrl.u32 %v4370, 16
      %v4643 = vrot.slane %v4641, 4
      %v4644 = vor.u32 %v4643, %v4639
      %v4645 = vrot.slane %v4644, 4
      %v4647 = vshll.u32 %v4371, 16
      %v4649 = vrot.slane %v4647, 5
      %v4650 = vsel %vm947, %v4645, %v4649
      %v4652 = vshrl.u32 %v4372, 16
      %v4654 = vrot.slane %v4652, 4
      %v4655 = vshll.u32 %v4372, 16
      %v4657 = vrot.slane %v4655, 5
      %v4658 = vor.u32 %v4654, %v4657
      %v4659 = vrot.slane %v4658, 4
      %v4661 = vshll.u32 %v4373, 16
      %v4663 = vrot.slane %v4661, 5
      %v4664 = vsel %vm947, %v4659, %v4663
      %v4665 = vshrl.u32 %v4373, 16
      %v4667 = vrot.slane %v4665, 4
      %v4668 = vor.u32 %v4667, %v4663
      %v4669 = vrot.slane %v4668, 4
      %v4671 = vshll.u32 %v4374, 16
      %v4673 = vrot.slane %v4671, 5
      %v4674 = vsel %vm947, %v4669, %v4673
      %v4676 = vshrl.u32 %v4375, 16
      %v4678 = vrot.slane %v4676, 4
      %v4679 = vshll.u32 %v4375, 16
      %v4681 = vrot.slane %v4679, 5
      %v4682 = vor.u32 %v4678, %v4681
      %v4683 = vrot.slane %v4682, 4
      %v4685 = vshll.u32 %v4376, 16
      %v4687 = vrot.slane %v4685, 5
      %v4688 = vsel %vm947, %v4683, %v4687
      %v4689 = vshrl.u32 %v4376, 16
      %v4691 = vrot.slane %v4689, 4
      %v4692 = vor.u32 %v4691, %v4687
      %v4693 = vrot.slane %v4692, 4
      %v4695 = vshll.u32 %v4377, 16
      %v4697 = vrot.slane %v4695, 5
      %v4698 = vsel %vm947, %v4693, %v4697
      %v4700 = vshrl.u32 %v4378, 16
      %v4702 = vrot.slane %v4700, 4
      %v4703 = vshll.u32 %v4378, 16
      %v4705 = vrot.slane %v4703, 5
      %v4706 = vor.u32 %v4702, %v4705
      %v4707 = vrot.slane %v4706, 4
      %v4709 = vshll.u32 %v4379, 16
      %v4711 = vrot.slane %v4709, 5
      %v4712 = vsel %vm947, %v4707, %v4711
      %v4713 = vshrl.u32 %v4379, 16
      %v4715 = vrot.slane %v4713, 4
      %v4716 = vor.u32 %v4715, %v4711
      %v4717 = vrot.slane %v4716, 4
      %v4719 = vshll.u32 %v4380, 16
      %v4721 = vrot.slane %v4719, 5
      %v4722 = vsel %vm947, %v4717, %v4721
      %v4724 = vshrl.u32 %v4381, 16
      %v4726 = vrot.slane %v4724, 4
      %v4727 = vshll.u32 %v4381, 16
      %v4729 = vrot.slane %v4727, 5
      %v4730 = vor.u32 %v4726, %v4729
      %v4731 = vrot.slane %v4730, 4
      %v4733 = vshll.u32 %v4382, 16
      %v4735 = vrot.slane %v4733, 5
      %v4736 = vsel %vm947, %v4731, %v4735
      %v4737 = vshrl.u32 %v4382, 16
      %v4739 = vrot.slane %v4737, 4
      %v4740 = vor.u32 %v4739, %v4735
      %v4741 = vrot.slane %v4740, 4
      %v4743 = vshll.u32 %v4383, 16
      %v4745 = vrot.slane %v4743, 5
      %v4746 = vsel %vm947, %v4741, %v4745
      %v4748 = vshrl.u32 %v4384, 16
      %v4750 = vrot.slane %v4748, 4
      %v4751 = vshll.u32 %v4384, 16
      %v4753 = vrot.slane %v4751, 5
      %v4754 = vor.u32 %v4750, %v4753
      %v4755 = vrot.slane %v4754, 4
      %v4757 = vshll.u32 %v4385, 16
      %v4759 = vrot.slane %v4757, 5
      %v4760 = vsel %vm947, %v4755, %v4759
      %v4761 = vshrl.u32 %v4385, 16
      %v4763 = vrot.slane %v4761, 4
      %v4764 = vor.u32 %v4763, %v4759
      %v4765 = vrot.slane %v4764, 4
      %v4767 = vshll.u32 %v4386, 16
      %v4769 = vrot.slane %v4767, 5
      %v4770 = vsel %vm947, %v4765, %v4769
      %s4771 = scalar_lea.vmem %s1, 112
      %v4772 = vld [vmem:[%s4771] sm:$0xf]
      %v4773 = vld [vmem:[%s4771 + $0x4] sm:$0xf]
      %v4774 = vld [vmem:[%s4771 + $0x8] sm:$0xf]
      %v4775 = vld [vmem:[%s4771 + $0xc] sm:$0xf]
      %v4776 = vunpack.c.l.b16 %v4400
      %v4777 = vunpack.c.l.b16 %v4410
      %v4778 = vunpack.c.l.b16 %v4424
      %v4779 = vunpack.c.l.b16 %v4434
      %v4780 = vunpack.c.l.b16 %v4448
      %v4781 = vunpack.c.l.b16 %v4458
      %v4782 = vunpack.c.l.b16 %v4472
      %v4783 = vunpack.c.l.b16 %v4482
      %v4784 = vunpack.c.l.b16 %v4496
      %v4785 = vunpack.c.l.b16 %v4506
      %v4786 = vunpack.c.l.b16 %v4520
      %v4787 = vunpack.c.l.b16 %v4530
      %v4788 = vunpack.c.l.b16 %v4544
      %v4789 = vunpack.c.l.b16 %v4554
      %v4790 = vunpack.c.l.b16 %v4568
      %v4791 = vunpack.c.l.b16 %v4578
      %v4792 = vunpack.c.l.b16 %v4592
      %v4793 = vunpack.c.l.b16 %v4602
      %v4794 = vunpack.c.l.b16 %v4616
      %v4795 = vunpack.c.l.b16 %v4626
      %v4796 = vunpack.c.l.b16 %v4640
      %v4797 = vunpack.c.l.b16 %v4650
      %v4798 = vunpack.c.l.b16 %v4664
      %v4799 = vunpack.c.l.b16 %v4674
      %v4800 = vunpack.c.l.b16 %v4688
      %v4801 = vunpack.c.l.b16 %v4698
      %v4802 = vunpack.c.l.b16 %v4712
      %v4803 = vunpack.c.l.b16 %v4722
      %v4804 = vunpack.c.l.b16 %v4736
      %v4805 = vunpack.c.l.b16 %v4746
      %v4806 = vunpack.c.l.b16 %v4760
      %v4807 = vunpack.c.l.b16 %v4770
      %v4808 = vpack.c.b16 %v4777, %v4776
      %v4809 = vpack.c.b16 %v4779, %v4778
      %v4810 = vpack.c.b16 %v4781, %v4780
      %v4811 = vpack.c.b16 %v4783, %v4782
      %v4812 = vpack.c.b16 %v4785, %v4784
      %v4813 = vpack.c.b16 %v4787, %v4786
      %v4814 = vpack.c.b16 %v4789, %v4788
      %v4815 = vpack.c.b16 %v4791, %v4790
      %v4816 = vpack.c.b16 %v4793, %v4792
      %v4817 = vpack.c.b16 %v4795, %v4794
      %v4818 = vpack.c.b16 %v4797, %v4796
      %v4819 = vpack.c.b16 %v4799, %v4798
      %v4820 = vpack.c.b16 %v4801, %v4800
      %v4821 = vpack.c.b16 %v4803, %v4802
      %v4822 = vpack.c.b16 %v4805, %v4804
      %v4823 = vpack.c.b16 %v4807, %v4806
      %v4828 = vunpack.c.l.b16 %v4772
      %v4829 = vunpack.c.l.b16 %v4773
      %v4830 = vunpack.c.l.b16 %v4774
      %v4831 = vunpack.c.l.b16 %v4775
      %v4832 = vpack.c.b16 %v4829, %v4828
      %v4833 = vpack.c.b16 %v4831, %v4830
      %v4837 = vsel %vm1397, %v4808, 0
      %v4840 = vsel %vm1397, %v4809, 0
      %v4843 = vsel %vm1397, %v4810, 0
      %v4846 = vsel %vm1397, %v4811, 0
      %v4849 = vsel %vm1397, %v4812, 0
      %v4852 = vsel %vm1397, %v4813, 0
      %v4855 = vsel %vm1397, %v4814, 0
      %v4858 = vsel %vm1397, %v4815, 0
      %v4861 = vsel %vm1397, %v4816, 0
      %v4864 = vsel %vm1397, %v4817, 0
      %v4867 = vsel %vm1397, %v4818, 0
      %v4870 = vsel %vm1397, %v4819, 0
      %v4873 = vsel %vm1397, %v4820, 0
      %v4876 = vsel %vm1397, %v4821, 0
      %v4879 = vsel %vm1397, %v4822, 0
      %v4882 = vsel %vm1397, %v4823, 0
      %4884 = vmatprep.subr.bf16.mxu0 0
      %4885 = vmatpush1.bf16.msra.mxu0 %v4832
      %4886 = vmatprep.subr.bf16.mxu0 0
      %4887 = vmatpush1.bf16.msra.mxu0 %v4833
      %4888 = vmatprep.subr.bf16.mxu0 0
      %4889 = vmatpush1.bf16.msra.mxu0 0
      %4890 = vmatprep.subr.bf16.mxu0 0
      %4891 = vmatpush1.bf16.msra.mxu0 0
      %4892 = vmatprep.subr.bf16.mxu0 0
      %4893 = vmatpush1.bf16.msra.mxu0 0
      %4894 = vmatprep.subr.bf16.mxu0 0
      %4895 = vmatpush1.bf16.msra.mxu0 0
      %4896 = vmatprep.subr.bf16.mxu0 0
      %4897 = vmatpush1.bf16.msra.mxu0 0
      %4898 = vmatprep.subr.bf16.mxu0 0
      %4899 = vmatpush1.bf16.msra.mxu0 0
      %4900 = vmatprep.subr.bf16.mxu0 0
      %4901 = vmatpush1.bf16.msra.mxu0 0
      %4902 = vmatprep.subr.bf16.mxu0 0
      %4903 = vmatpush1.bf16.msra.mxu0 0
      %4904 = vmatprep.subr.bf16.mxu0 0
      %4905 = vmatpush1.bf16.msra.mxu0 0
      %4906 = vmatprep.subr.bf16.mxu0 0
      %4907 = vmatpush1.bf16.msra.mxu0 0
      %4908 = vmatprep.subr.bf16.mxu0 0
      %4909 = vmatpush1.bf16.msra.mxu0 0
      %4910 = vmatprep.subr.bf16.mxu0 0
      %4911 = vmatpush1.bf16.msra.mxu0 0
      %4912 = vmatprep.subr.bf16.mxu0 0
      %4913 = vmatpush1.bf16.msra.mxu0 0
      %4914 = vmatprep.subr.bf16.mxu0 0
      %4915 = vmatpush1.bf16.msra.mxu0 0
      %4916 = vmatprep.mubr.bf16.mxu0 0
      %4917 = vmatmul.mubr.bf16.gmra.mrb[0].mxu0 %v4837
      %v4918 = vpop.f32.mrb[0].mxu0
      %v4919 = vadd.f32 0.0, %v4918
      %v4920 = vpop.f32.mrb[0].mxu0
      %v4921 = vpop.f32.mrb[0].mxu0
      %v4922 = vadd.f32 0.0, %v4921
      %v4923 = vpop.f32.mrb[0].mxu0
      %4924 = vmatprep.mubr.bf16.mxu0 0
      %4925 = vmatmul.mubr.bf16.gmra.mrb[0].mxu0 %v4840
      %v4926 = vpop.f32.mrb[0].mxu0
      %v4927 = vadd.f32 0.0, %v4926
      %v4928 = vpop.f32.mrb[0].mxu0
      %v4929 = vpop.f32.mrb[0].mxu0
      %v4930 = vadd.f32 0.0, %v4929
      %v4931 = vpop.f32.mrb[0].mxu0
      %4932 = vmatprep.mubr.bf16.mxu0 0
      %4933 = vmatmul.mubr.bf16.gmra.mrb[0].mxu0 %v4843
      %v4934 = vpop.f32.mrb[0].mxu0
      %v4935 = vadd.f32 0.0, %v4934
      %v4936 = vpop.f32.mrb[0].mxu0
      %v4937 = vpop.f32.mrb[0].mxu0
      %v4938 = vadd.f32 0.0, %v4937
      %v4939 = vpop.f32.mrb[0].mxu0
      %4940 = vmatprep.mubr.bf16.mxu0 0
      %4941 = vmatmul.mubr.bf16.gmra.mrb[0].mxu0 %v4846
      %v4942 = vpop.f32.mrb[0].mxu0
      %v4943 = vadd.f32 0.0, %v4942
      %v4944 = vpop.f32.mrb[0].mxu0
      %v4945 = vpop.f32.mrb[0].mxu0
      %v4946 = vadd.f32 0.0, %v4945
      %v4947 = vpop.f32.mrb[0].mxu0
      %4948 = vmatprep.mubr.bf16.mxu0 0
      %4949 = vmatmul.mubr.bf16.gmra.mrb[0].mxu0 %v4849
      %v4950 = vpop.f32.mrb[0].mxu0
      %v4951 = vadd.f32 0.0, %v4950
      %v4952 = vpop.f32.mrb[0].mxu0
      %v4953 = vpop.f32.mrb[0].mxu0
      %v4954 = vadd.f32 0.0, %v4953
      %v4955 = vpop.f32.mrb[0].mxu0
      %4956 = vmatprep.mubr.bf16.mxu0 0
      %4957 = vmatmul.mubr.bf16.gmra.mrb[0].mxu0 %v4852
      %v4958 = vpop.f32.mrb[0].mxu0
      %v4959 = vadd.f32 0.0, %v4958
      %v4960 = vpop.f32.mrb[0].mxu0
      %v4961 = vpop.f32.mrb[0].mxu0
      %v4962 = vadd.f32 0.0, %v4961
      %v4963 = vpop.f32.mrb[0].mxu0
      %4964 = vmatprep.mubr.bf16.mxu0 0
      %4965 = vmatmul.mubr.bf16.gmra.mrb[0].mxu0 %v4855
      %v4966 = vpop.f32.mrb[0].mxu0
      %v4967 = vadd.f32 0.0, %v4966
      %v4968 = vpop.f32.mrb[0].mxu0
      %v4969 = vpop.f32.mrb[0].mxu0
      %v4970 = vadd.f32 0.0, %v4969
      %v4971 = vpop.f32.mrb[0].mxu0
      %4972 = vmatprep.mubr.bf16.mxu0 0
      %4973 = vmatmul.mubr.bf16.gmra.mrb[0].mxu0 %v4858
      %v4974 = vpop.f32.mrb[0].mxu0
      %v4975 = vadd.f32 0.0, %v4974
      %v4976 = vpop.f32.mrb[0].mxu0
      %v4977 = vpop.f32.mrb[0].mxu0
      %v4978 = vadd.f32 0.0, %v4977
      %v4979 = vpop.f32.mrb[0].mxu0
      %4980 = vmatprep.mubr.bf16.mxu0 0
      %4981 = vmatmul.mubr.bf16.gmra.mrb[0].mxu0 %v4861
      %v4982 = vpop.f32.mrb[0].mxu0
      %v4983 = vadd.f32 0.0, %v4982
      %v4984 = vpop.f32.mrb[0].mxu0
      %v4985 = vpop.f32.mrb[0].mxu0
      %v4986 = vadd.f32 0.0, %v4985
      %v4987 = vpop.f32.mrb[0].mxu0
      %4988 = vmatprep.mubr.bf16.mxu0 0
      %4989 = vmatmul.mubr.bf16.gmra.mrb[0].mxu0 %v4864
      %v4990 = vpop.f32.mrb[0].mxu0
      %v4991 = vadd.f32 0.0, %v4990
      %v4992 = vpop.f32.mrb[0].mxu0
      %v4993 = vpop.f32.mrb[0].mxu0
      %v4994 = vadd.f32 0.0, %v4993
      %v4995 = vpop.f32.mrb[0].mxu0
      %4996 = vmatprep.mubr.bf16.mxu0 0
      %4997 = vmatmul.mubr.bf16.gmra.mrb[0].mxu0 %v4867
      %v4998 = vpop.f32.mrb[0].mxu0
      %v4999 = vadd.f32 0.0, %v4998
      %v5000 = vpop.f32.mrb[0].mxu0
      %v5001 = vpop.f32.mrb[0].mxu0
      %v5002 = vadd.f32 0.0, %v5001
      %v5003 = vpop.f32.mrb[0].mxu0
      %5004 = vmatprep.mubr.bf16.mxu0 0
      %5005 = vmatmul.mubr.bf16.gmra.mrb[0].mxu0 %v4870
      %v5006 = vpop.f32.mrb[0].mxu0
      %v5007 = vadd.f32 0.0, %v5006
      %v5008 = vpop.f32.mrb[0].mxu0
      %v5009 = vpop.f32.mrb[0].mxu0
      %v5010 = vadd.f32 0.0, %v5009
      %v5011 = vpop.f32.mrb[0].mxu0
      %5012 = vmatprep.mubr.bf16.mxu0 0
      %5013 = vmatmul.mubr.bf16.gmra.mrb[0].mxu0 %v4873
      %v5014 = vpop.f32.mrb[0].mxu0
      %v5015 = vadd.f32 0.0, %v5014
      %v5016 = vpop.f32.mrb[0].mxu0
      %v5017 = vpop.f32.mrb[0].mxu0
      %v5018 = vadd.f32 0.0, %v5017
      %v5019 = vpop.f32.mrb[0].mxu0
      %5020 = vmatprep.mubr.bf16.mxu0 0
      %5021 = vmatmul.mubr.bf16.gmra.mrb[0].mxu0 %v4876
      %v5022 = vpop.f32.mrb[0].mxu0
      %v5023 = vadd.f32 0.0, %v5022
      %v5024 = vpop.f32.mrb[0].mxu0
      %v5025 = vpop.f32.mrb[0].mxu0
      %v5026 = vadd.f32 0.0, %v5025
      %v5027 = vpop.f32.mrb[0].mxu0
      %5028 = vmatprep.mubr.bf16.mxu0 0
      %5029 = vmatmul.mubr.bf16.gmra.mrb[0].mxu0 %v4879
      %v5030 = vpop.f32.mrb[0].mxu0
      %v5031 = vadd.f32 0.0, %v5030
      %v5032 = vpop.f32.mrb[0].mxu0
      %v5033 = vpop.f32.mrb[0].mxu0
      %v5034 = vadd.f32 0.0, %v5033
      %v5035 = vpop.f32.mrb[0].mxu0
      %5036 = vmatprep.mubr.bf16.mxu0 0
      %5037 = vmatmul.mubr.bf16.gmra.mrb[0].mxu0 %v4882
      %v5038 = vpop.f32.mrb[0].mxu0
      %v5039 = vadd.f32 0.0, %v5038
      %v5040 = vpop.f32.mrb[0].mxu0
      %v5041 = vpop.f32.mrb[0].mxu0
      %v5042 = vadd.f32 0.0, %v5041
      %v5043 = vpop.f32.mrb[0].mxu0
      %5044 = vdwg.mxu0
      %v5045 = vadd.f32 %v4307, %v4919
      %v5046 = vadd.f32 %v4308, %v4922
      %v5047 = vadd.f32 %v4309, %v4927
      %v5048 = vadd.f32 %v4310, %v4930
      %v5049 = vadd.f32 %v4311, %v4935
      %v5050 = vadd.f32 %v4312, %v4938
      %v5051 = vadd.f32 %v4313, %v4943
      %v5052 = vadd.f32 %v4314, %v4946
      %v5053 = vadd.f32 %v4315, %v4951
      %v5054 = vadd.f32 %v4316, %v4954
      %v5055 = vadd.f32 %v4317, %v4959
      %v5056 = vadd.f32 %v4318, %v4962
      %v5057 = vadd.f32 %v4319, %v4967
      %v5058 = vadd.f32 %v4320, %v4970
      %v5059 = vadd.f32 %v4321, %v4975
      %v5060 = vadd.f32 %v4322, %v4978
      %v5061 = vadd.f32 %v4323, %v4983
      %v5062 = vadd.f32 %v4324, %v4986
      %v5063 = vadd.f32 %v4325, %v4991
      %v5064 = vadd.f32 %v4326, %v4994
      %v5065 = vadd.f32 %v4327, %v4999
      %v5066 = vadd.f32 %v4328, %v5002
      %v5067 = vadd.f32 %v4329, %v5007
      %v5068 = vadd.f32 %v4330, %v5010
      %v5069 = vadd.f32 %v4331, %v5015
      %v5070 = vadd.f32 %v4332, %v5018
      %v5071 = vadd.f32 %v4333, %v5023
      %v5072 = vadd.f32 %v4334, %v5026
      %v5073 = vadd.f32 %v4335, %v5031
      %v5074 = vadd.f32 %v4336, %v5034
      %v5075 = vadd.f32 %v4337, %v5039
      %v5076 = vadd.f32 %v4338, %v5042
      %v5077 = vld [vmem:[%s3968] sm:$0xe]
      %v5078 = vld [vmem:[%s3968 + $0xc] sm:$0xe]
      %v5079 = vld [vmem:[%s3968 + $0x18] sm:$0xe]
      %v5080 = vld [vmem:[%s3968 + $0x24] sm:$0xe]
      %v5081 = vld [vmem:[%s3968 + $0x30] sm:$0xe]
      %v5082 = vld [vmem:[%s3968 + $0x3c] sm:$0xe]
      %v5083 = vld [vmem:[%s3968 + $0x48] sm:$0xe]
      %v5084 = vld [vmem:[%s3968 + $0x54] sm:$0xe]
      %v5085 = vld [vmem:[%s3968 + $0x60] sm:$0xe]
      %v5086 = vld [vmem:[%s3968 + $0x6c] sm:$0xe]
      %v5087 = vld [vmem:[%s3968 + $0x78] sm:$0xe]
      %v5088 = vld [vmem:[%s3968 + $0x84] sm:$0xe]
      %v5089 = vld [vmem:[%s3968 + $0x90] sm:$0xe]
      %v5090 = vld [vmem:[%s3968 + $0x9c] sm:$0xe]
      %v5091 = vld [vmem:[%s3968 + $0xa8] sm:$0xe]
      %v5092 = vld [vmem:[%s3968 + $0xb4] sm:$0xe]
      %v5141 = vrot.slane %v5077, 5
      %v5142 = vrot.slane %v5141, 4
      %v5143 = vrot.slane %v4340, 5
      %v5144 = vsel %vm1958, %v5142, %v5143
      %v5145 = vrot.slane %v5143, 4
      %v5146 = vrot.slane %v4341, 5
      %v5147 = vsel %vm1958, %v5145, %v5146
      %v5148 = vrot.slane %v5078, 5
      %v5149 = vrot.slane %v5148, 4
      %v5150 = vrot.slane %v4343, 5
      %v5151 = vsel %vm1958, %v5149, %v5150
      %v5152 = vrot.slane %v5150, 4
      %v5153 = vrot.slane %v4344, 5
      %v5154 = vsel %vm1958, %v5152, %v5153
      %v5155 = vrot.slane %v5079, 5
      %v5156 = vrot.slane %v5155, 4
      %v5157 = vrot.slane %v4346, 5
      %v5158 = vsel %vm1958, %v5156, %v5157
      %v5159 = vrot.slane %v5157, 4
      %v5160 = vrot.slane %v4347, 5
      %v5161 = vsel %vm1958, %v5159, %v5160
      %v5162 = vrot.slane %v5080, 5
      %v5163 = vrot.slane %v5162, 4
      %v5164 = vrot.slane %v4349, 5
      %v5165 = vsel %vm1958, %v5163, %v5164
      %v5166 = vrot.slane %v5164, 4
      %v5167 = vrot.slane %v4350, 5
      %v5168 = vsel %vm1958, %v5166, %v5167
      %v5169 = vrot.slane %v5081, 5
      %v5170 = vrot.slane %v5169, 4
      %v5171 = vrot.slane %v4352, 5
      %v5172 = vsel %vm1958, %v5170, %v5171
      %v5173 = vrot.slane %v5171, 4
      %v5174 = vrot.slane %v4353, 5
      %v5175 = vsel %vm1958, %v5173, %v5174
      %v5176 = vrot.slane %v5082, 5
      %v5177 = vrot.slane %v5176, 4
      %v5178 = vrot.slane %v4355, 5
      %v5179 = vsel %vm1958, %v5177, %v5178
      %v5180 = vrot.slane %v5178, 4
      %v5181 = vrot.slane %v4356, 5
      %v5182 = vsel %vm1958, %v5180, %v5181
      %v5183 = vrot.slane %v5083, 5
      %v5184 = vrot.slane %v5183, 4
      %v5185 = vrot.slane %v4358, 5
      %v5186 = vsel %vm1958, %v5184, %v5185
      %v5187 = vrot.slane %v5185, 4
      %v5188 = vrot.slane %v4359, 5
      %v5189 = vsel %vm1958, %v5187, %v5188
      %v5190 = vrot.slane %v5084, 5
      %v5191 = vrot.slane %v5190, 4
      %v5192 = vrot.slane %v4361, 5
      %v5193 = vsel %vm1958, %v5191, %v5192
      %v5194 = vrot.slane %v5192, 4
      %v5195 = vrot.slane %v4362, 5
      %v5196 = vsel %vm1958, %v5194, %v5195
      %v5197 = vrot.slane %v5085, 5
      %v5198 = vrot.slane %v5197, 4
      %v5199 = vrot.slane %v4364, 5
      %v5200 = vsel %vm1958, %v5198, %v5199
      %v5201 = vrot.slane %v5199, 4
      %v5202 = vrot.slane %v4365, 5
      %v5203 = vsel %vm1958, %v5201, %v5202
      %v5204 = vrot.slane %v5086, 5
      %v5205 = vrot.slane %v5204, 4
      %v5206 = vrot.slane %v4367, 5
      %v5207 = vsel %vm1958, %v5205, %v5206
      %v5208 = vrot.slane %v5206, 4
      %v5209 = vrot.slane %v4368, 5
      %v5210 = vsel %vm1958, %v5208, %v5209
      %v5211 = vrot.slane %v5087, 5
      %v5212 = vrot.slane %v5211, 4
      %v5213 = vrot.slane %v4370, 5
      %v5214 = vsel %vm1958, %v5212, %v5213
      %v5215 = vrot.slane %v5213, 4
      %v5216 = vrot.slane %v4371, 5
      %v5217 = vsel %vm1958, %v5215, %v5216
      %v5218 = vrot.slane %v5088, 5
      %v5219 = vrot.slane %v5218, 4
      %v5220 = vrot.slane %v4373, 5
      %v5221 = vsel %vm1958, %v5219, %v5220
      %v5222 = vrot.slane %v5220, 4
      %v5223 = vrot.slane %v4374, 5
      %v5224 = vsel %vm1958, %v5222, %v5223
      %v5225 = vrot.slane %v5089, 5
      %v5226 = vrot.slane %v5225, 4
      %v5227 = vrot.slane %v4376, 5
      %v5228 = vsel %vm1958, %v5226, %v5227
      %v5229 = vrot.slane %v5227, 4
      %v5230 = vrot.slane %v4377, 5
      %v5231 = vsel %vm1958, %v5229, %v5230
      %v5232 = vrot.slane %v5090, 5
      %v5233 = vrot.slane %v5232, 4
      %v5234 = vrot.slane %v4379, 5
      %v5235 = vsel %vm1958, %v5233, %v5234
      %v5236 = vrot.slane %v5234, 4
      %v5237 = vrot.slane %v4380, 5
      %v5238 = vsel %vm1958, %v5236, %v5237
      %v5239 = vrot.slane %v5091, 5
      %v5240 = vrot.slane %v5239, 4
      %v5241 = vrot.slane %v4382, 5
      %v5242 = vsel %vm1958, %v5240, %v5241
      %v5243 = vrot.slane %v5241, 4
      %v5244 = vrot.slane %v4383, 5
      %v5245 = vsel %vm1958, %v5243, %v5244
      %v5246 = vrot.slane %v5092, 5
      %v5247 = vrot.slane %v5246, 4
      %v5248 = vrot.slane %v4385, 5
      %v5249 = vsel %vm1958, %v5247, %v5248
      %v5250 = vrot.slane %v5248, 4
      %v5251 = vrot.slane %v4386, 5
      %v5252 = vsel %vm1958, %v5250, %v5251
      %s5253 = scalar_lea.vmem %s1, 128
      %v5254 = vld [vmem:[%s5253] sm:$0xf]
      %v5255 = vld [vmem:[%s5253 + $0x4] sm:$0xf]
      %v5256 = vld [vmem:[%s5253 + $0x8] sm:$0xf]
      %v5257 = vld [vmem:[%s5253 + $0xc] sm:$0xf]
      %v5258 = vunpack.c.l.b16 %v5144
      %v5259 = vunpack.c.l.b16 %v5147
      %v5260 = vunpack.c.l.b16 %v5151
      %v5261 = vunpack.c.l.b16 %v5154
      %v5262 = vunpack.c.l.b16 %v5158
      %v5263 = vunpack.c.l.b16 %v5161
      %v5264 = vunpack.c.l.b16 %v5165
      %v5265 = vunpack.c.l.b16 %v5168
      %v5266 = vunpack.c.l.b16 %v5172
      %v5267 = vunpack.c.l.b16 %v5175
      %v5268 = vunpack.c.l.b16 %v5179
      %v5269 = vunpack.c.l.b16 %v5182
      %v5270 = vunpack.c.l.b16 %v5186
      %v5271 = vunpack.c.l.b16 %v5189
      %v5272 = vunpack.c.l.b16 %v5193
      %v5273 = vunpack.c.l.b16 %v5196
      %v5274 = vunpack.c.l.b16 %v5200
      %v5275 = vunpack.c.l.b16 %v5203
      %v5276 = vunpack.c.l.b16 %v5207
      %v5277 = vunpack.c.l.b16 %v5210
      %v5278 = vunpack.c.l.b16 %v5214
      %v5279 = vunpack.c.l.b16 %v5217
      %v5280 = vunpack.c.l.b16 %v5221
      %v5281 = vunpack.c.l.b16 %v5224
      %v5282 = vunpack.c.l.b16 %v5228
      %v5283 = vunpack.c.l.b16 %v5231
      %v5284 = vunpack.c.l.b16 %v5235
      %v5285 = vunpack.c.l.b16 %v5238
      %v5286 = vunpack.c.l.b16 %v5242
      %v5287 = vunpack.c.l.b16 %v5245
      %v5288 = vunpack.c.l.b16 %v5249
      %v5289 = vunpack.c.l.b16 %v5252
      %v5290 = vpack.c.b16 %v5259, %v5258
      %v5291 = vpack.c.b16 %v5261, %v5260
      %v5292 = vpack.c.b16 %v5263, %v5262
      %v5293 = vpack.c.b16 %v5265, %v5264
      %v5294 = vpack.c.b16 %v5267, %v5266
      %v5295 = vpack.c.b16 %v5269, %v5268
      %v5296 = vpack.c.b16 %v5271, %v5270
      %v5297 = vpack.c.b16 %v5273, %v5272
      %v5298 = vpack.c.b16 %v5275, %v5274
      %v5299 = vpack.c.b16 %v5277, %v5276
      %v5300 = vpack.c.b16 %v5279, %v5278
      %v5301 = vpack.c.b16 %v5281, %v5280
      %v5302 = vpack.c.b16 %v5283, %v5282
      %v5303 = vpack.c.b16 %v5285, %v5284
      %v5304 = vpack.c.b16 %v5287, %v5286
      %v5305 = vpack.c.b16 %v5289, %v5288
      %v5310 = vunpack.c.l.b16 %v5254
      %v5311 = vunpack.c.l.b16 %v5255
      %v5312 = vunpack.c.l.b16 %v5256
      %v5313 = vunpack.c.l.b16 %v5257
      %v5314 = vpack.c.b16 %v5311, %v5310
      %v5315 = vpack.c.b16 %v5313, %v5312
      %v5319 = vsel %vm1397, %v5290, 0
      %v5322 = vsel %vm1397, %v5291, 0
      %v5325 = vsel %vm1397, %v5292, 0
      %v5328 = vsel %vm1397, %v5293, 0
      %v5331 = vsel %vm1397, %v5294, 0
      %v5334 = vsel %vm1397, %v5295, 0
      %v5337 = vsel %vm1397, %v5296, 0
      %v5340 = vsel %vm1397, %v5297, 0
      %v5343 = vsel %vm1397, %v5298, 0
      %v5346 = vsel %vm1397, %v5299, 0
      %v5349 = vsel %vm1397, %v5300, 0
      %v5352 = vsel %vm1397, %v5301, 0
      %v5355 = vsel %vm1397, %v5302, 0
      %v5358 = vsel %vm1397, %v5303, 0
      %v5361 = vsel %vm1397, %v5304, 0
      %v5364 = vsel %vm1397, %v5305, 0
      %5366 = vmatprep.subr.bf16.mxu0 0
      %5367 = vmatpush1.bf16.msra.mxu0 %v5314
      %5368 = vmatprep.subr.bf16.mxu0 0
      %5369 = vmatpush1.bf16.msra.mxu0 %v5315
      %5370 = vmatprep.subr.bf16.mxu0 0
      %5371 = vmatpush1.bf16.msra.mxu0 0
      %5372 = vmatprep.subr.bf16.mxu0 0
      %5373 = vmatpush1.bf16.msra.mxu0 0
      %5374 = vmatprep.subr.bf16.mxu0 0
      %5375 = vmatpush1.bf16.msra.mxu0 0
      %5376 = vmatprep.subr.bf16.mxu0 0
      %5377 = vmatpush1.bf16.msra.mxu0 0
      %5378 = vmatprep.subr.bf16.mxu0 0
      %5379 = vmatpush1.bf16.msra.mxu0 0
      %5380 = vmatprep.subr.bf16.mxu0 0
      %5381 = vmatpush1.bf16.msra.mxu0 0
      %5382 = vmatprep.subr.bf16.mxu0 0
      %5383 = vmatpush1.bf16.msra.mxu0 0
      %5384 = vmatprep.subr.bf16.mxu0 0
      %5385 = vmatpush1.bf16.msra.mxu0 0
      %5386 = vmatprep.subr.bf16.mxu0 0
      %5387 = vmatpush1.bf16.msra.mxu0 0
      %5388 = vmatprep.subr.bf16.mxu0 0
      %5389 = vmatpush1.bf16.msra.mxu0 0
      %5390 = vmatprep.subr.bf16.mxu0 0
      %5391 = vmatpush1.bf16.msra.mxu0 0
      %5392 = vmatprep.subr.bf16.mxu0 0
      %5393 = vmatpush1.bf16.msra.mxu0 0
      %5394 = vmatprep.subr.bf16.mxu0 0
      %5395 = vmatpush1.bf16.msra.mxu0 0
      %5396 = vmatprep.subr.bf16.mxu0 0
      %5397 = vmatpush1.bf16.msra.mxu0 0
      %5398 = vmatprep.mubr.bf16.mxu0 0
      %5399 = vmatmul.mubr.bf16.gmra.mrb[0].mxu0 %v5319
      %v5400 = vpop.f32.mrb[0].mxu0
      %v5401 = vadd.f32 0.0, %v5400
      %v5402 = vpop.f32.mrb[0].mxu0
      %v5403 = vpop.f32.mrb[0].mxu0
      %v5404 = vadd.f32 0.0, %v5403
      %v5405 = vpop.f32.mrb[0].mxu0
      %5406 = vmatprep.mubr.bf16.mxu0 0
      %5407 = vmatmul.mubr.bf16.gmra.mrb[0].mxu0 %v5322
      %v5408 = vpop.f32.mrb[0].mxu0
      %v5409 = vadd.f32 0.0, %v5408
      %v5410 = vpop.f32.mrb[0].mxu0
      %v5411 = vpop.f32.mrb[0].mxu0
      %v5412 = vadd.f32 0.0, %v5411
      %v5413 = vpop.f32.mrb[0].mxu0
      %5414 = vmatprep.mubr.bf16.mxu0 0
      %5415 = vmatmul.mubr.bf16.gmra.mrb[0].mxu0 %v5325
      %v5416 = vpop.f32.mrb[0].mxu0
      %v5417 = vadd.f32 0.0, %v5416
      %v5418 = vpop.f32.mrb[0].mxu0
      %v5419 = vpop.f32.mrb[0].mxu0
      %v5420 = vadd.f32 0.0, %v5419
      %v5421 = vpop.f32.mrb[0].mxu0
      %5422 = vmatprep.mubr.bf16.mxu0 0
      %5423 = vmatmul.mubr.bf16.gmra.mrb[0].mxu0 %v5328
      %v5424 = vpop.f32.mrb[0].mxu0
      %v5425 = vadd.f32 0.0, %v5424
      %v5426 = vpop.f32.mrb[0].mxu0
      %v5427 = vpop.f32.mrb[0].mxu0
      %v5428 = vadd.f32 0.0, %v5427
      %v5429 = vpop.f32.mrb[0].mxu0
      %5430 = vmatprep.mubr.bf16.mxu0 0
      %5431 = vmatmul.mubr.bf16.gmra.mrb[0].mxu0 %v5331
      %v5432 = vpop.f32.mrb[0].mxu0
      %v5433 = vadd.f32 0.0, %v5432
      %v5434 = vpop.f32.mrb[0].mxu0
      %v5435 = vpop.f32.mrb[0].mxu0
      %v5436 = vadd.f32 0.0, %v5435
      %v5437 = vpop.f32.mrb[0].mxu0
      %5438 = vmatprep.mubr.bf16.mxu0 0
      %5439 = vmatmul.mubr.bf16.gmra.mrb[0].mxu0 %v5334
      %v5440 = vpop.f32.mrb[0].mxu0
      %v5441 = vadd.f32 0.0, %v5440
      %v5442 = vpop.f32.mrb[0].mxu0
      %v5443 = vpop.f32.mrb[0].mxu0
      %v5444 = vadd.f32 0.0, %v5443
      %v5445 = vpop.f32.mrb[0].mxu0
      %5446 = vmatprep.mubr.bf16.mxu0 0
      %5447 = vmatmul.mubr.bf16.gmra.mrb[0].mxu0 %v5337
      %v5448 = vpop.f32.mrb[0].mxu0
      %v5449 = vadd.f32 0.0, %v5448
      %v5450 = vpop.f32.mrb[0].mxu0
      %v5451 = vpop.f32.mrb[0].mxu0
      %v5452 = vadd.f32 0.0, %v5451
      %v5453 = vpop.f32.mrb[0].mxu0
      %5454 = vmatprep.mubr.bf16.mxu0 0
      %5455 = vmatmul.mubr.bf16.gmra.mrb[0].mxu0 %v5340
      %v5456 = vpop.f32.mrb[0].mxu0
      %v5457 = vadd.f32 0.0, %v5456
      %v5458 = vpop.f32.mrb[0].mxu0
      %v5459 = vpop.f32.mrb[0].mxu0
      %v5460 = vadd.f32 0.0, %v5459
      %v5461 = vpop.f32.mrb[0].mxu0
      %5462 = vmatprep.mubr.bf16.mxu0 0
      %5463 = vmatmul.mubr.bf16.gmra.mrb[0].mxu0 %v5343
      %v5464 = vpop.f32.mrb[0].mxu0
      %v5465 = vadd.f32 0.0, %v5464
      %v5466 = vpop.f32.mrb[0].mxu0
      %v5467 = vpop.f32.mrb[0].mxu0
      %v5468 = vadd.f32 0.0, %v5467
      %v5469 = vpop.f32.mrb[0].mxu0
      %5470 = vmatprep.mubr.bf16.mxu0 0
      %5471 = vmatmul.mubr.bf16.gmra.mrb[0].mxu0 %v5346
      %v5472 = vpop.f32.mrb[0].mxu0
      %v5473 = vadd.f32 0.0, %v5472
      %v5474 = vpop.f32.mrb[0].mxu0
      %v5475 = vpop.f32.mrb[0].mxu0
      %v5476 = vadd.f32 0.0, %v5475
      %v5477 = vpop.f32.mrb[0].mxu0
      %5478 = vmatprep.mubr.bf16.mxu0 0
      %5479 = vmatmul.mubr.bf16.gmra.mrb[0].mxu0 %v5349
      %v5480 = vpop.f32.mrb[0].mxu0
      %v5481 = vadd.f32 0.0, %v5480
      %v5482 = vpop.f32.mrb[0].mxu0
      %v5483 = vpop.f32.mrb[0].mxu0
      %v5484 = vadd.f32 0.0, %v5483
      %v5485 = vpop.f32.mrb[0].mxu0
      %5486 = vmatprep.mubr.bf16.mxu0 0
      %5487 = vmatmul.mubr.bf16.gmra.mrb[0].mxu0 %v5352
      %v5488 = vpop.f32.mrb[0].mxu0
      %v5489 = vadd.f32 0.0, %v5488
      %v5490 = vpop.f32.mrb[0].mxu0
      %v5491 = vpop.f32.mrb[0].mxu0
      %v5492 = vadd.f32 0.0, %v5491
      %v5493 = vpop.f32.mrb[0].mxu0
      %5494 = vmatprep.mubr.bf16.mxu0 0
      %5495 = vmatmul.mubr.bf16.gmra.mrb[0].mxu0 %v5355
      %v5496 = vpop.f32.mrb[0].mxu0
      %v5497 = vadd.f32 0.0, %v5496
      %v5498 = vpop.f32.mrb[0].mxu0
      %v5499 = vpop.f32.mrb[0].mxu0
      %v5500 = vadd.f32 0.0, %v5499
      %v5501 = vpop.f32.mrb[0].mxu0
      %5502 = vmatprep.mubr.bf16.mxu0 0
      %5503 = vmatmul.mubr.bf16.gmra.mrb[0].mxu0 %v5358
      %v5504 = vpop.f32.mrb[0].mxu0
      %v5505 = vadd.f32 0.0, %v5504
      %v5506 = vpop.f32.mrb[0].mxu0
      %v5507 = vpop.f32.mrb[0].mxu0
      %v5508 = vadd.f32 0.0, %v5507
      %v5509 = vpop.f32.mrb[0].mxu0
      %5510 = vmatprep.mubr.bf16.mxu0 0
      %5511 = vmatmul.mubr.bf16.gmra.mrb[0].mxu0 %v5361
      %v5512 = vpop.f32.mrb[0].mxu0
      %v5513 = vadd.f32 0.0, %v5512
      %v5514 = vpop.f32.mrb[0].mxu0
      %v5515 = vpop.f32.mrb[0].mxu0
      %v5516 = vadd.f32 0.0, %v5515
      %v5517 = vpop.f32.mrb[0].mxu0
      %5518 = vmatprep.mubr.bf16.mxu0 0
      %5519 = vmatmul.mubr.bf16.gmra.mrb[0].mxu0 %v5364
      %v5520 = vpop.f32.mrb[0].mxu0
      %v5521 = vadd.f32 0.0, %v5520
      %v5522 = vpop.f32.mrb[0].mxu0
      %v5523 = vpop.f32.mrb[0].mxu0
      %v5524 = vadd.f32 0.0, %v5523
      %v5525 = vpop.f32.mrb[0].mxu0
      %5526 = vdwg.mxu0
      %v5527 = vadd.f32 %v5045, %v5401
      %v5528 = vadd.f32 %v5046, %v5404
      %v5529 = vadd.f32 %v5047, %v5409
      %v5530 = vadd.f32 %v5048, %v5412
      %v5531 = vadd.f32 %v5049, %v5417
      %v5532 = vadd.f32 %v5050, %v5420
      %v5533 = vadd.f32 %v5051, %v5425
      %v5534 = vadd.f32 %v5052, %v5428
      %v5535 = vadd.f32 %v5053, %v5433
      %v5536 = vadd.f32 %v5054, %v5436
      %v5537 = vadd.f32 %v5055, %v5441
      %v5538 = vadd.f32 %v5056, %v5444
      %v5539 = vadd.f32 %v5057, %v5449
      %v5540 = vadd.f32 %v5058, %v5452
      %v5541 = vadd.f32 %v5059, %v5457
      %v5542 = vadd.f32 %v5060, %v5460
      %v5543 = vadd.f32 %v5061, %v5465
      %v5544 = vadd.f32 %v5062, %v5468
      %v5545 = vadd.f32 %v5063, %v5473
      %v5546 = vadd.f32 %v5064, %v5476
      %v5547 = vadd.f32 %v5065, %v5481
      %v5548 = vadd.f32 %v5066, %v5484
      %v5549 = vadd.f32 %v5067, %v5489
      %v5550 = vadd.f32 %v5068, %v5492
      %v5551 = vadd.f32 %v5069, %v5497
      %v5552 = vadd.f32 %v5070, %v5500
      %v5553 = vadd.f32 %v5071, %v5505
      %v5554 = vadd.f32 %v5072, %v5508
      %v5555 = vadd.f32 %v5073, %v5513
      %v5556 = vadd.f32 %v5074, %v5516
      %v5557 = vadd.f32 %v5075, %v5521
      %v5558 = vadd.f32 %v5076, %v5524
      %v5559 = vld [vmem:[%s2] sm:$0x1]
      %v5561 = vlaneseq
      %v5562 = vshrl.u32 %v5561, 7
      %v5563 = vsub.s32 0, %v5562
      %v5564 = vrot.slane %v5559, %v5563
      %v5566 = vadd.f32 %v5527, %v5564
      %v5567 = vadd.f32 %v5528, %v5564
      %v5568 = vadd.f32 %v5529, %v5564
      %v5569 = vadd.f32 %v5530, %v5564
      %v5570 = vadd.f32 %v5531, %v5564
      %v5571 = vadd.f32 %v5532, %v5564
      %v5572 = vadd.f32 %v5533, %v5564
      %v5573 = vadd.f32 %v5534, %v5564
      %v5574 = vadd.f32 %v5535, %v5564
      %v5575 = vadd.f32 %v5536, %v5564
      %v5576 = vadd.f32 %v5537, %v5564
      %v5577 = vadd.f32 %v5538, %v5564
      %v5578 = vadd.f32 %v5539, %v5564
      %v5579 = vadd.f32 %v5540, %v5564
      %v5580 = vadd.f32 %v5541, %v5564
      %v5581 = vadd.f32 %v5542, %v5564
      %v5582 = vadd.f32 %v5543, %v5564
      %v5583 = vadd.f32 %v5544, %v5564
      %v5584 = vadd.f32 %v5545, %v5564
      %v5585 = vadd.f32 %v5546, %v5564
      %v5586 = vadd.f32 %v5547, %v5564
      %v5587 = vadd.f32 %v5548, %v5564
      %v5588 = vadd.f32 %v5549, %v5564
      %v5589 = vadd.f32 %v5550, %v5564
      %v5590 = vadd.f32 %v5551, %v5564
      %v5591 = vadd.f32 %v5552, %v5564
      %v5592 = vadd.f32 %v5553, %v5564
      %v5593 = vadd.f32 %v5554, %v5564
      %v5594 = vadd.f32 %v5555, %v5564
      %v5595 = vadd.f32 %v5556, %v5564
      %v5596 = vadd.f32 %v5557, %v5564
      %v5597 = vadd.f32 %v5558, %v5564
      %v5598 = vadd.f32 %v5566, %v5567
      %v5599 = vadd.f32 %v5598, %v5568
      %v5600 = vadd.f32 %v5599, %v5569
      %v5601 = vadd.f32 %v5600, %v5570
      %v5602 = vadd.f32 %v5601, %v5571
      %v5603 = vadd.f32 %v5602, %v5572
      %v5604 = vadd.f32 %v5603, %v5573
      %v5605 = vadd.f32 %v5604, %v5574
      %v5606 = vadd.f32 %v5605, %v5575
      %v5607 = vadd.f32 %v5606, %v5576
      %v5608 = vadd.f32 %v5607, %v5577
      %v5609 = vadd.f32 %v5608, %v5578
      %v5610 = vadd.f32 %v5609, %v5579
      %v5611 = vadd.f32 %v5610, %v5580
      %v5612 = vadd.f32 %v5611, %v5581
      %v5613 = vadd.f32 %v5612, %v5582
      %v5614 = vadd.f32 %v5613, %v5583
      %v5615 = vadd.f32 %v5614, %v5584
      %v5616 = vadd.f32 %v5615, %v5585
      %v5617 = vadd.f32 %v5616, %v5586
      %v5618 = vadd.f32 %v5617, %v5587
      %v5619 = vadd.f32 %v5618, %v5588
      %v5620 = vadd.f32 %v5619, %v5589
      %v5621 = vadd.f32 %v5620, %v5590
      %v5622 = vadd.f32 %v5621, %v5591
      %v5623 = vadd.f32 %v5622, %v5592
      %v5624 = vadd.f32 %v5623, %v5593
      %v5625 = vadd.f32 %v5624, %v5594
      %v5626 = vadd.f32 %v5625, %v5595
      %v5627 = vadd.f32 %v5626, %v5596
      %v5628 = vadd.f32 %v5627, %v5597
      %v5629 = vrot.slane %v5628, 4
      %v5630 = vadd.f32 %v5628, %v5629
      %v5631 = vrot.slane %v5630, 2
      %v5632 = vadd.f32 %v5630, %v5631
      %v5633 = vrot.slane %v5632, 1
      %v5634 = vadd.f32 %v5632, %v5633
      %5635 = vst [vmem:[%s292] sm:$0x1] %v5634
      %v5636 = vmul.f32 %v5566, %v5566
      %v5637 = vmul.f32 %v5567, %v5567
      %v5638 = vmul.f32 %v5568, %v5568
      %v5639 = vmul.f32 %v5569, %v5569
      %v5640 = vmul.f32 %v5570, %v5570
      %v5641 = vmul.f32 %v5571, %v5571
      %v5642 = vmul.f32 %v5572, %v5572
      %v5643 = vmul.f32 %v5573, %v5573
      %v5644 = vmul.f32 %v5574, %v5574
      %v5645 = vmul.f32 %v5575, %v5575
      %v5646 = vmul.f32 %v5576, %v5576
      %v5647 = vmul.f32 %v5577, %v5577
      %v5648 = vmul.f32 %v5578, %v5578
      %v5649 = vmul.f32 %v5579, %v5579
      %v5650 = vmul.f32 %v5580, %v5580
      %v5651 = vmul.f32 %v5581, %v5581
      %v5652 = vmul.f32 %v5582, %v5582
      %v5653 = vmul.f32 %v5583, %v5583
      %v5654 = vmul.f32 %v5584, %v5584
      %v5655 = vmul.f32 %v5585, %v5585
      %v5656 = vmul.f32 %v5586, %v5586
      %v5657 = vmul.f32 %v5587, %v5587
      %v5658 = vmul.f32 %v5588, %v5588
      %v5659 = vmul.f32 %v5589, %v5589
      %v5660 = vmul.f32 %v5590, %v5590
      %v5661 = vmul.f32 %v5591, %v5591
      %v5662 = vmul.f32 %v5592, %v5592
      %v5663 = vmul.f32 %v5593, %v5593
      %v5664 = vmul.f32 %v5594, %v5594
      %v5665 = vmul.f32 %v5595, %v5595
      %v5666 = vmul.f32 %v5596, %v5596
      %v5667 = vmul.f32 %v5597, %v5597
      %v5668 = vadd.f32 %v5636, %v5637
      %v5669 = vadd.f32 %v5668, %v5638
      %v5670 = vadd.f32 %v5669, %v5639
      %v5671 = vadd.f32 %v5670, %v5640
      %v5672 = vadd.f32 %v5671, %v5641
      %v5673 = vadd.f32 %v5672, %v5642
      %v5674 = vadd.f32 %v5673, %v5643
      %v5675 = vadd.f32 %v5674, %v5644
      %v5676 = vadd.f32 %v5675, %v5645
      %v5677 = vadd.f32 %v5676, %v5646
      %v5678 = vadd.f32 %v5677, %v5647
      %v5679 = vadd.f32 %v5678, %v5648
      %v5680 = vadd.f32 %v5679, %v5649
      %v5681 = vadd.f32 %v5680, %v5650
      %v5682 = vadd.f32 %v5681, %v5651
      %v5683 = vadd.f32 %v5682, %v5652
      %v5684 = vadd.f32 %v5683, %v5653
      %v5685 = vadd.f32 %v5684, %v5654
      %v5686 = vadd.f32 %v5685, %v5655
      %v5687 = vadd.f32 %v5686, %v5656
      %v5688 = vadd.f32 %v5687, %v5657
      %v5689 = vadd.f32 %v5688, %v5658
      %v5690 = vadd.f32 %v5689, %v5659
      %v5691 = vadd.f32 %v5690, %v5660
      %v5692 = vadd.f32 %v5691, %v5661
      %v5693 = vadd.f32 %v5692, %v5662
      %v5694 = vadd.f32 %v5693, %v5663
      %v5695 = vadd.f32 %v5694, %v5664
      %v5696 = vadd.f32 %v5695, %v5665
      %v5697 = vadd.f32 %v5696, %v5666
      %v5698 = vadd.f32 %v5697, %v5667
      %v5699 = vrot.slane %v5698, 4
      %v5700 = vadd.f32 %v5698, %v5699
      %v5701 = vrot.slane %v5700, 2
      %v5702 = vadd.f32 %v5700, %v5701
      %v5703 = vrot.slane %v5702, 1
      %v5704 = vadd.f32 %v5702, %v5703
      %5705 = vst [vmem:[%s295] sm:$0x1] %v5704
      %v5706 = vpack.c.bf16 %v5567, %v5566
      %v5707 = vpack.c.bf16 %v5569, %v5568
      %v5708 = vpack.c.bf16 %v5571, %v5570
      %v5709 = vpack.c.bf16 %v5573, %v5572
      %v5710 = vpack.c.bf16 %v5575, %v5574
      %v5711 = vpack.c.bf16 %v5577, %v5576
      %v5712 = vpack.c.bf16 %v5579, %v5578
      %v5713 = vpack.c.bf16 %v5581, %v5580
      %v5714 = vpack.c.bf16 %v5583, %v5582
      %v5715 = vpack.c.bf16 %v5585, %v5584
      %v5716 = vpack.c.bf16 %v5587, %v5586
      %v5717 = vpack.c.bf16 %v5589, %v5588
      %v5718 = vpack.c.bf16 %v5591, %v5590
      %v5719 = vpack.c.bf16 %v5593, %v5592
      %v5720 = vpack.c.bf16 %v5595, %v5594
      %v5721 = vpack.c.bf16 %v5597, %v5596
      %v5738 = vunpack.c.l.b16 %v5706
      %v5739 = vunpack.c.h.b16 %v5706
      %v5740 = vunpack.c.l.b16 %v5707
      %v5741 = vunpack.c.h.b16 %v5707
      %v5742 = vunpack.c.l.b16 %v5708
      %v5743 = vunpack.c.h.b16 %v5708
      %v5744 = vunpack.c.l.b16 %v5709
      %v5745 = vunpack.c.h.b16 %v5709
      %v5746 = vunpack.c.l.b16 %v5710
      %v5747 = vunpack.c.h.b16 %v5710
      %v5748 = vunpack.c.l.b16 %v5711
      %v5749 = vunpack.c.h.b16 %v5711
      %v5750 = vunpack.c.l.b16 %v5712
      %v5751 = vunpack.c.h.b16 %v5712
      %v5752 = vunpack.c.l.b16 %v5713
      %v5753 = vunpack.c.h.b16 %v5713
      %v5754 = vunpack.c.l.b16 %v5714
      %v5755 = vunpack.c.h.b16 %v5714
      %v5756 = vunpack.c.l.b16 %v5715
      %v5757 = vunpack.c.h.b16 %v5715
      %v5758 = vunpack.c.l.b16 %v5716
      %v5759 = vunpack.c.h.b16 %v5716
      %v5760 = vunpack.c.l.b16 %v5717
      %v5761 = vunpack.c.h.b16 %v5717
      %v5762 = vunpack.c.l.b16 %v5718
      %v5763 = vunpack.c.h.b16 %v5718
      %v5764 = vunpack.c.l.b16 %v5719
      %v5765 = vunpack.c.h.b16 %v5719
      %v5766 = vunpack.c.l.b16 %v5720
      %v5767 = vunpack.c.h.b16 %v5720
      %v5768 = vunpack.c.l.b16 %v5721
      %v5769 = vunpack.c.h.b16 %v5721
      %v5770 = vpack.c.b16 %v5738, %v5738
      %v5771 = vpack.c.b16 %v5739, %v5739
      %v5772 = vpack.c.b16 %v5740, %v5740
      %v5773 = vpack.c.b16 %v5741, %v5741
      %v5774 = vpack.c.b16 %v5742, %v5742
      %v5775 = vpack.c.b16 %v5743, %v5743
      %v5776 = vpack.c.b16 %v5744, %v5744
      %v5777 = vpack.c.b16 %v5745, %v5745
      %v5778 = vpack.c.b16 %v5746, %v5746
      %v5779 = vpack.c.b16 %v5747, %v5747
      %v5780 = vpack.c.b16 %v5748, %v5748
      %v5781 = vpack.c.b16 %v5749, %v5749
      %v5782 = vpack.c.b16 %v5750, %v5750
      %v5783 = vpack.c.b16 %v5751, %v5751
      %v5784 = vpack.c.b16 %v5752, %v5752
      %v5785 = vpack.c.b16 %v5753, %v5753
      %v5786 = vpack.c.b16 %v5754, %v5754
      %v5787 = vpack.c.b16 %v5755, %v5755
      %v5788 = vpack.c.b16 %v5756, %v5756
      %v5789 = vpack.c.b16 %v5757, %v5757
      %v5790 = vpack.c.b16 %v5758, %v5758
      %v5791 = vpack.c.b16 %v5759, %v5759
      %v5792 = vpack.c.b16 %v5760, %v5760
      %v5793 = vpack.c.b16 %v5761, %v5761
      %v5794 = vpack.c.b16 %v5762, %v5762
      %v5795 = vpack.c.b16 %v5763, %v5763
      %v5796 = vpack.c.b16 %v5764, %v5764
      %v5797 = vpack.c.b16 %v5765, %v5765
      %v5798 = vpack.c.b16 %v5766, %v5766
      %v5799 = vpack.c.b16 %v5767, %v5767
      %v5800 = vpack.c.b16 %v5768, %v5768
      %v5801 = vpack.c.b16 %v5769, %v5769
      %5834 = vst [vmem:[%s289] sm:$0xf] %v5770
      %5835 = vst [vmem:[%s289 + $0x4] sm:$0xf] %v5771
      %5836 = vst [vmem:[%s289 + $0x8] sm:$0xf] %v5772
      %5837 = vst [vmem:[%s289 + $0xc] sm:$0xf] %v5773
      %5838 = vst [vmem:[%s289 + $0x10] sm:$0xf] %v5774
      %5839 = vst [vmem:[%s289 + $0x14] sm:$0xf] %v5775
      %5840 = vst [vmem:[%s289 + $0x18] sm:$0xf] %v5776
      %5841 = vst [vmem:[%s289 + $0x1c] sm:$0xf] %v5777
      %5842 = vst [vmem:[%s289 + $0x20] sm:$0xf] %v5778
      %5843 = vst [vmem:[%s289 + $0x24] sm:$0xf] %v5779
      %5844 = vst [vmem:[%s289 + $0x28] sm:$0xf] %v5780
      %5845 = vst [vmem:[%s289 + $0x2c] sm:$0xf] %v5781
      %5846 = vst [vmem:[%s289 + $0x30] sm:$0xf] %v5782
      %5847 = vst [vmem:[%s289 + $0x34] sm:$0xf] %v5783
      %5848 = vst [vmem:[%s289 + $0x38] sm:$0xf] %v5784
      %5849 = vst [vmem:[%s289 + $0x3c] sm:$0xf] %v5785
      %5850 = vst [vmem:[%s289 + $0x40] sm:$0xf] %v5786
      %5851 = vst [vmem:[%s289 + $0x44] sm:$0xf] %v5787
      %5852 = vst [vmem:[%s289 + $0x48] sm:$0xf] %v5788
      %5853 = vst [vmem:[%s289 + $0x4c] sm:$0xf] %v5789
      %5854 = vst [vmem:[%s289 + $0x50] sm:$0xf] %v5790
      %5855 = vst [vmem:[%s289 + $0x54] sm:$0xf] %v5791
      %5856 = vst [vmem:[%s289 + $0x58] sm:$0xf] %v5792
      %5857 = vst [vmem:[%s289 + $0x5c] sm:$0xf] %v5793
      %5858 = vst [vmem:[%s289 + $0x60] sm:$0xf] %v5794
      %5859 = vst [vmem:[%s289 + $0x64] sm:$0xf] %v5795
      %5860 = vst [vmem:[%s289 + $0x68] sm:$0xf] %v5796
      %5861 = vst [vmem:[%s289 + $0x6c] sm:$0xf] %v5797
      %5862 = vst [vmem:[%s289 + $0x70] sm:$0xf] %v5798
      %5863 = vst [vmem:[%s289 + $0x74] sm:$0xf] %v5799
      %5864 = vst [vmem:[%s289 + $0x78] sm:$0xf] %v5800
      %5865 = vst [vmem:[%s289 + $0x7c] sm:$0xf] %v5801
      %p5866 = scmp.lt.s32.totalorder %s19, 1
      %s5867 = scalar_select %p5866, %s19, 1
      %s5868 = smul.addr %s5867, 32
      %s5869 = smul.addr %s5868, 4
      %s5870 = scalar_lea.vmem %s5, %s5869
      %p5871 = scmp.lt.s32.totalorder %s19, 1
      %s5872 = scalar_select %p5871, %s19, 1
      %s5873 = scalar_lea.vmem %s6, %s5872
      %p5874 = scmp.lt.s32.totalorder %s19, 1
      %s5875 = scalar_select %p5874, %s19, 1
      %s5876 = scalar_lea.vmem %s7, %s5875
      // Predicated region
      $region41: #{res_block_2d.4} parent=39 // pred_check
        %p5877 = pneg %p147
      $region42: #{res_block_2d.4} parent=39 // pred_check_branch
        %5879 = sbr.rel (%p5877) target = $region44
      $region43: #{res_block_2d.4} parent=39 // pred_region
        _
      $region44: #{res_block_2d.4} parent=39 // pred_fallthru
        _
      // Predicated region
      $region45: #{res_block_2d.4} parent=39 // pred_check
        %p5880 = pneg %p173
      $region46: #{res_block_2d.4} parent=39 // pred_check_branch
        %5882 = sbr.rel (%p5880) target = $region48
      $region47: #{res_block_2d.4} parent=39 // pred_region
        _
      $region48: #{res_block_2d.4} parent=39 // pred_fallthru
        _
      // Predicated region
      $region49: #{res_block_2d.4} parent=39 // pred_check
        %p5883 = pneg %p199
      $region50: #{res_block_2d.4} parent=39 // pred_check_branch
        %5885 = sbr.rel (%p5883) target = $region52
      $region51: #{res_block_2d.4} parent=39 // pred_region
        _
      $region52: #{res_block_2d.4} parent=39 // pred_fallthru
        _
    $region40: #{res_block_2d.4} parent=5 // pred_fallthru
      _
    %p5886 = scmp.le.s32.totalorder 2, %s14
    // Predicated region
    $region53: #{res_block_2d.4} parent=5 // pred_check
      %p5887 = pneg %p5886
    $region54: #{res_block_2d.4} parent=5 // pred_check_branch
      %5889 = sbr.rel (%p5887) target = $region56
    $region55: #{res_block_2d.4} parent=5 // pred_region
      %s5890 = ssub.s32 %s14, 2
      // Predicated region
      $region57: #{res_block_2d.4} parent=55 // pred_check
        %p5891 = pneg %p153
      $region58: #{res_block_2d.4} parent=55 // pred_check_branch
        %5893 = sbr.rel (%p5891) target = $region60
      $region59: #{res_block_2d.4} parent=55 // pred_region
        %p5894 = scmp.lt.s32.totalorder %s20, 1
        %s5895 = scalar_select %p5894, %s20, 1
        %s5896 = smul.addr %s5895, 32
        %s5897 = smul.addr %s5896, 4
        %s5898 = scalar_lea.vmem %s5, %s5897
      $region60: #{res_block_2d.4} parent=55 // pred_fallthru
        _
      // Predicated region
      $region61: #{res_block_2d.4} parent=55 // pred_check
        %p5899 = pneg %p179
      $region62: #{res_block_2d.4} parent=55 // pred_check_branch
        %5901 = sbr.rel (%p5899) target = $region64
      $region63: #{res_block_2d.4} parent=55 // pred_region
        %p5902 = scmp.lt.s32.totalorder %s20, 1
        %s5903 = scalar_select %p5902, %s20, 1
        %s5904 = scalar_lea.vmem %s6, %s5903
      $region64: #{res_block_2d.4} parent=55 // pred_fallthru
        _
      // Predicated region
      $region65: #{res_block_2d.4} parent=55 // pred_check
        %p5905 = pneg %p205
      $region66: #{res_block_2d.4} parent=55 // pred_check_branch
        %5907 = sbr.rel (%p5905) target = $region68
      $region67: #{res_block_2d.4} parent=55 // pred_region
        %p5908 = scmp.lt.s32.totalorder %s20, 1
        %s5909 = scalar_select %p5908, %s20, 1
        %s5910 = scalar_lea.vmem %s7, %s5909
      $region68: #{res_block_2d.4} parent=55 // pred_fallthru
        _
    $region56: #{res_block_2d.4} parent=5 // pred_fallthru
      _
  $region6: #{res_block_2d.4} parent=0 // loop_footer
    %s18 = sadd.s32 1, %s14
  $region7: #{res_block_2d.4} parent=0 // loop_footer_branch
    %13 = sbr.rel target = $region3
  $region8: #{res_block_2d.4} parent=0 // loop_exit
    _

// kernel: res_block_2d.5
$region0: #{res_block_2d.5}
  #allocation0 [shape = 'u32[]', space=smem, size = 0x4, offset = 0x4, fixed_abs, tag = 'smem constant byte address 0x4 - core index']
  #allocation1 [shape = 'u32[144,128]{1,0:T(1,128)}', space=vmem, size = 0x12000, scoped, tag = 'internal scratch']
  #allocation2 [shape = 'bf16[18,18,128]{2,1,0:T(8,128)(2,1)}', space=vmem, size = 0x1b000, scoped, tag = 'scratch operand']
  %s0 = inlined_call_operand.vmem [shape: bf16[2,18,18,128], index: 0, kind: input, shape index: {}]
  %s1 = inlined_call_operand.vmem [shape: bf16[9,128,32], index: 1, kind: input, shape index: {}]
  %s2 = inlined_call_operand.vmem [shape: f32[1,32], index: 2, kind: input, shape index: {}]
  %s3 = inlined_call_operand.vmem [shape: f32[1,1,128], index: 3, kind: input, shape index: {}]
  %s4 = inlined_call_operand.vmem [shape: f32[1,1,128], index: 4, kind: input, shape index: {}]
  %s5 = inlined_call_operand.vmem [shape: f32[2,16,16,32], index: 5, kind: input, shape index: {}]
  %s6 = inlined_call_operand.hbm [shape: f32[2,16,16,32], index: 6, kind: output, shape index: {}]
  %s7 = sld [smem:[#allocation0]]
  $region57: #{res_block_2d.5} parent=0
    _
  %s9 = ssub.s32 1, %s7
  %s10 = scalar_select 0, %s9, %s7
  $region1: #{res_block_2d.5} parent=0
    #allocation3 [shape = 'u8[262144]{0}', space=vmem, size = 0x40000, scoped, tag = 'output window, operand 0']
    #allocation4 [shape = 's32[2]{0}', space=sflag, size = 0x8, scoped, tag = 'scoped memory for res_block_2d.5']
    %11 = vsyncpa [#allocation4], 0
    %s12 = scalar_lea.sflag [#allocation4], 1
    %13 = vsyncpa %s12, 0
    loop: start=0, step=1, limit=4
    $region2: #{res_block_2d.5} parent=1 // loop_pre_header
      _
    $region3: #{res_block_2d.5} parent=1 // loop_header
      %s15 = sphi 0, %s19
      %p16 = scmp.ge.s32.totalorder %s15, 4
      %s25 = sphi 0, %s27
      %s28 = sphi 0, %s25
      %s29 = sphi 0, %s28
      %s45 = sphi 0, %s29
      %s49 = sphi 0, %s49
      %s51 = sphi 0, %s49
      %s52 = sphi 0, %s51
      %s66 = sphi 0, %s52
      %s70 = sphi 0, %s70
      %s72 = sphi 0, %s70
      %s73 = sphi 0, %s72
      %s87 = sphi 0, %s73
      %s91 = sphi 0, %s91
      %s93 = sphi 0, %s91
      %s94 = sphi 0, %s93
      %s108 = sphi 0, %s94
      %s112 = sphi 0, %s112
      %s114 = sphi 0, %s112
      %s115 = sphi 0, %s114
      %s129 = sphi 0, %s115
      %s135 = sphi 0, %s137
      %s138 = sphi 0, %s135
      %s139 = sphi 0, %s138
      %s155 = sphi 0, %s139
      %s161 = sphi 0, %s163
      %s164 = sphi 0, %s161
      %s165 = sphi 0, %s164
      %s181 = sphi 0, %s165
    $region4: #{res_block_2d.5} parent=1 // loop_header_branch
      %18 = sbr.rel (%p16) target = $region8
    $region5: #{res_block_2d.5} parent=1 // loop_body
      %s20 = ssub.s32 %s15, 1
      %s21 = ssub.s32 %s15, 2
      %s22 = sadd.s32 %s15, 1
      %s23 = ssub.s32 %s15, %s22
      %p24 = scmp.eq.s32.totalorder %s23, 0
      %s26 = sadd.s32 %s25, 1
      %s27 = scalar_select %p24, %s25, %s26
      %p30 = pneg %p24
      %p31 = scmp.eq.s32.totalorder %s15, 1
      %p32 = por %p30, %p31
      %p33 = scmp.ne.s32.totalorder %s25, %s28
      %p34 = scmp.eq.s32.totalorder %s15, 0
      %p35 = por %p33, %p34
      %p36 = scmp.ne.s32.totalorder %s25, %s28
      %p37 = scmp.eq.s32.totalorder %s20, 1
      %p38 = por %p36, %p37
      %p39 = scmp.ne.s32.totalorder %s28, %s29
      %p40 = scmp.eq.s32.totalorder %s20, 0
      %p41 = por %p39, %p40
      %p42 = scmp.ne.s32.totalorder %s28, %s29
      %p43 = scmp.eq.s32.totalorder %s21, 1
      %p44 = por %p42, %p43
      %p46 = scmp.ne.s32.totalorder %s29, %s45
      %p47 = scmp.eq.s32.totalorder %s21, 0
      %p48 = por %p46, %p47
      %s50 = sadd.s32 %s49, 1
      %p53 = scmp.eq.s32.totalorder %s15, 1
      %p54 = scmp.ne.s32.totalorder %s49, %s51
      %p55 = scmp.eq.s32.totalorder %s15, 0
      %p56 = por %p54, %p55
      %p57 = scmp.ne.s32.totalorder %s49, %s51
      %p58 = scmp.eq.s32.totalorder %s20, 1
      %p59 = por %p57, %p58
      %p60 = scmp.ne.s32.totalorder %s51, %s52
      %p61 = scmp.eq.s32.totalorder %s20, 0
      %p62 = por %p60, %p61
      %p63 = scmp.ne.s32.totalorder %s51, %s52
      %p64 = scmp.eq.s32.totalorder %s21, 1
      %p65 = por %p63, %p64
      %p67 = scmp.ne.s32.totalorder %s52, %s66
      %p68 = scmp.eq.s32.totalorder %s21, 0
      %p69 = por %p67, %p68
      %s71 = sadd.s32 %s70, 1
      %p74 = scmp.eq.s32.totalorder %s15, 1
      %p75 = scmp.ne.s32.totalorder %s70, %s72
      %p76 = scmp.eq.s32.totalorder %s15, 0
      %p77 = por %p75, %p76
      %p78 = scmp.ne.s32.totalorder %s70, %s72
      %p79 = scmp.eq.s32.totalorder %s20, 1
      %p80 = por %p78, %p79
      %p81 = scmp.ne.s32.totalorder %s72, %s73
      %p82 = scmp.eq.s32.totalorder %s20, 0
      %p83 = por %p81, %p82
      %p84 = scmp.ne.s32.totalorder %s72, %s73
      %p85 = scmp.eq.s32.totalorder %s21, 1
      %p86 = por %p84, %p85
      %p88 = scmp.ne.s32.totalorder %s73, %s87
      %p89 = scmp.eq.s32.totalorder %s21, 0
      %p90 = por %p88, %p89
      %s92 = sadd.s32 %s91, 1
      %p95 = scmp.eq.s32.totalorder %s15, 1
      %p96 = scmp.ne.s32.totalorder %s91, %s93
      %p97 = scmp.eq.s32.totalorder %s15, 0
      %p98 = por %p96, %p97
      %p99 = scmp.ne.s32.totalorder %s91, %s93
      %p100 = scmp.eq.s32.totalorder %s20, 1
      %p101 = por %p99, %p100
      %p102 = scmp.ne.s32.totalorder %s93, %s94
      %p103 = scmp.eq.s32.totalorder %s20, 0
      %p104 = por %p102, %p103
      %p105 = scmp.ne.s32.totalorder %s93, %s94
      %p106 = scmp.eq.s32.totalorder %s21, 1
      %p107 = por %p105, %p106
      %p109 = scmp.ne.s32.totalorder %s94, %s108
      %p110 = scmp.eq.s32.totalorder %s21, 0
      %p111 = por %p109, %p110
      %s113 = sadd.s32 %s112, 1
      %p116 = scmp.eq.s32.totalorder %s15, 1
      %p117 = scmp.ne.s32.totalorder %s112, %s114
      %p118 = scmp.eq.s32.totalorder %s15, 0
      %p119 = por %p117, %p118
      %p120 = scmp.ne.s32.totalorder %s112, %s114
      %p121 = scmp.eq.s32.totalorder %s20, 1
      %p122 = por %p120, %p121
      %p123 = scmp.ne.s32.totalorder %s114, %s115
      %p124 = scmp.eq.s32.totalorder %s20, 0
      %p125 = por %p123, %p124
      %p126 = scmp.ne.s32.totalorder %s114, %s115
      %p127 = scmp.eq.s32.totalorder %s21, 1
      %p128 = por %p126, %p127
      %p130 = scmp.ne.s32.totalorder %s115, %s129
      %p131 = scmp.eq.s32.totalorder %s21, 0
      %p132 = por %p130, %p131
      %s133 = ssub.s32 %s15, %s22
      %p134 = scmp.eq.s32.totalorder %s133, 0
      %s136 = sadd.s32 %s135, 1
      %s137 = scalar_select %p134, %s135, %s136
      %p140 = pneg %p134
      %p141 = scmp.eq.s32.totalorder %s15, 1
      %p142 = por %p140, %p141
      %p143 = scmp.ne.s32.totalorder %s135, %s138
      %p144 = scmp.eq.s32.totalorder %s15, 0
      %p145 = por %p143, %p144
      %p146 = scmp.ne.s32.totalorder %s135, %s138
      %p147 = scmp.eq.s32.totalorder %s20, 1
      %p148 = por %p146, %p147
      %p149 = scmp.ne.s32.totalorder %s138, %s139
      %p150 = scmp.eq.s32.totalorder %s20, 0
      %p151 = por %p149, %p150
      %p152 = scmp.ne.s32.totalorder %s138, %s139
      %p153 = scmp.eq.s32.totalorder %s21, 1
      %p154 = por %p152, %p153
      %p156 = scmp.ne.s32.totalorder %s139, %s155
      %p157 = scmp.eq.s32.totalorder %s21, 0
      %p158 = por %p156, %p157
      %s159 = ssub.s32 %s15, %s22
      %p160 = scmp.eq.s32.totalorder %s159, 0
      %s162 = sadd.s32 %s161, 1
      %s163 = scalar_select %p160, %s161, %s162
      %p166 = pneg %p160
      %p167 = scmp.eq.s32.totalorder %s15, 1
      %p168 = por %p166, %p167
      %p169 = scmp.ne.s32.totalorder %s161, %s164
      %p170 = scmp.eq.s32.totalorder %s15, 0
      %p171 = por %p169, %p170
      %p172 = scmp.ne.s32.totalorder %s161, %s164
      %p173 = scmp.eq.s32.totalorder %s20, 1
      %p174 = por %p172, %p173
      %p175 = scmp.ne.s32.totalorder %s164, %s165
      %p176 = scmp.eq.s32.totalorder %s20, 0
      %p177 = por %p175, %p176
      %p178 = scmp.ne.s32.totalorder %s164, %s165
      %p179 = scmp.eq.s32.totalorder %s21, 1
      %p180 = por %p178, %p179
      %p182 = scmp.ne.s32.totalorder %s165, %s181
      %p183 = scmp.eq.s32.totalorder %s21, 0
      %p184 = por %p182, %p183
      %p185 = scmp.le.s32.totalorder 1, %s15
      %p186 = scmp.lt.s32.totalorder %s15, 3
      %p187 = pnand %p185, %p186
      %p188 = pneg %p187
      // Predicated region
      $region9: #{res_block_2d.5} parent=5 // pred_check
        _
      $region10: #{res_block_2d.5} parent=5 // pred_check_branch
        %190 = sbr.rel (%p187) target = $region12
      $region11: #{res_block_2d.5} parent=5 // pred_region
        %s191 = ssub.s32 %s15, 1
        // Predicated region
        $region13: #{res_block_2d.5} parent=11 // pred_check
          %p192 = pneg %p62
        $region14: #{res_block_2d.5} parent=11 // pred_check_branch
          %194 = sbr.rel (%p192) target = $region16
        $region15: #{res_block_2d.5} parent=11 // pred_region
          _
        $region16: #{res_block_2d.5} parent=11 // pred_fallthru
          _
        // Predicated region
        $region17: #{res_block_2d.5} parent=11 // pred_check
          %p195 = pneg %p83
        $region18: #{res_block_2d.5} parent=11 // pred_check_branch
          %197 = sbr.rel (%p195) target = $region20
        $region19: #{res_block_2d.5} parent=11 // pred_region
          _
        $region20: #{res_block_2d.5} parent=11 // pred_fallthru
          _
        // Predicated region
        $region21: #{res_block_2d.5} parent=11 // pred_check
          %p198 = pneg %p104
        $region22: #{res_block_2d.5} parent=11 // pred_check_branch
          %200 = sbr.rel (%p198) target = $region24
        $region23: #{res_block_2d.5} parent=11 // pred_region
          _
        $region24: #{res_block_2d.5} parent=11 // pred_fallthru
          _
        // Predicated region
        $region25: #{res_block_2d.5} parent=11 // pred_check
          %p201 = pneg %p125
        $region26: #{res_block_2d.5} parent=11 // pred_check_branch
          %203 = sbr.rel (%p201) target = $region28
        $region27: #{res_block_2d.5} parent=11 // pred_region
          _
        $region28: #{res_block_2d.5} parent=11 // pred_fallthru
          _
      $region12: #{res_block_2d.5} parent=5 // pred_fallthru
        _
      %p204 = scmp.lt.s32.totalorder %s15, 2
      // Predicated region
      $region29: #{res_block_2d.5} parent=5 // pred_check
        %p205 = pneg %p204
      $region30: #{res_block_2d.5} parent=5 // pred_check_branch
        %207 = sbr.rel (%p205) target = $region32
      $region31: #{res_block_2d.5} parent=5 // pred_region
        // Predicated region
        $region33: #{res_block_2d.5} parent=31 // pred_check
          %p208 = pneg %p35
        $region34: #{res_block_2d.5} parent=31 // pred_check_branch
          %210 = sbr.rel (%p208) target = $region36
        $region35: #{res_block_2d.5} parent=31 // pred_region
          %p211 = scmp.lt.s32.totalorder %s15, 1
          %s212 = scalar_select %p211, %s15, 1
          %s213 = smul.addr %s212, 54
          %s214 = smul.addr %s213, 4
          %s215 = scalar_lea.vmem %s0, %s214
        $region36: #{res_block_2d.5} parent=31 // pred_fallthru
          _
        // Predicated region
        $region37: #{res_block_2d.5} parent=31 // pred_check
          %p216 = pneg %p145
        $region38: #{res_block_2d.5} parent=31 // pred_check_branch
          %218 = sbr.rel (%p216) target = $region40
        $region39: #{res_block_2d.5} parent=31 // pred_region
          %p219 = scmp.lt.s32.totalorder %s15, 1
          %s220 = scalar_select %p219, %s15, 1
          %s221 = smul.addr %s220, 32
          %s222 = smul.addr %s221, 8
          %s223 = scalar_lea.vmem %s5, %s222
        $region40: #{res_block_2d.5} parent=31 // pred_fallthru
          _
      $region32: #{res_block_2d.5} parent=5 // pred_fallthru
        _
      %p224 = scmp.le.s32.totalorder 1, %s15
      %p225 = scmp.lt.s32.totalorder %s15, 3
      %p226 = pnand %p224, %p225
      %p227 = pneg %p226
      // Predicated region
      $region41: #{res_block_2d.5} parent=5 // pred_check
        _
      $region42: #{res_block_2d.5} parent=5 // pred_check_branch
        %229 = sbr.rel (%p226) target = $region44
      $region43: #{res_block_2d.5} parent=5 // pred_region
        %s230 = ssub.s32 %s15, 1
        %p231 = scmp.lt.s32.totalorder %s20, 1
        %s232 = scalar_select %p231, %s20, 1
        %s233 = smul.addr %s232, 54
        %s234 = smul.addr %s233, 4
        %s235 = scalar_lea.vmem %s0, %s234
        %p236 = pneg %p41
        %p237 = pneg %p38
        %p238 = pneg %p62
        %p239 = pneg %p59
        %p240 = pneg %p83
        %p241 = pneg %p80
        %p242 = pneg %p104
        %p243 = pneg %p101
        %p244 = pneg %p125
        %p245 = pneg %p122
        %p246 = scmp.lt.s32.totalorder %s20, 1
        %s247 = scalar_select %p246, %s20, 1
        %s248 = smul.addr %s247, 32
        %s249 = smul.addr %s248, 8
        %s250 = scalar_lea.vmem %s5, %s249
        %p251 = pneg %p151
        %p252 = pneg %p148
        %p253 = pneg %p177
        %p254 = pneg %p174
        %s255 = sand.u32 %s164, 1
        %s256 = scalar_lea.sflag [#allocation4], %s255
        %s257 = sand.u32 %s164, 1
        %s258 = smul.addr %s257, 256
        %s259 = scalar_lea.vmem [#allocation3], %s258
        %p260 = scmp.lt.s32.totalorder %s20, 1
        %s261 = scalar_select %p260, %s20, 1
        %s262 = smul.addr %s261, 54
        %s263 = smul.addr %s262, 4
        %s264 = scalar_lea.vmem %s0, %s263
        %p265 = scmp.lt.s32.totalorder %s20, 1
        %s266 = scalar_select %p265, %s20, 1
        %s267 = smul.addr %s266, 32
        %s268 = smul.addr %s267, 8
        %s269 = scalar_lea.vmem %s5, %s268
        %v271 = vld [vmem:[%s264] sm:$0xf]
        %v272 = vld [vmem:[%s264 + $0x4] sm:$0xf]
        %v273 = vld [vmem:[%s264 + $0x8] sm:$0x1]
        %v274 = vld [vmem:[%s264 + $0xc] sm:$0xf]
        %v275 = vld [vmem:[%s264 + $0x10] sm:$0xf]
        %v276 = vld [vmem:[%s264 + $0x14] sm:$0x1]
        %v277 = vld [vmem:[%s264 + $0x18] sm:$0xf]
        %v278 = vld [vmem:[%s264 + $0x1c] sm:$0xf]
        %v279 = vld [vmem:[%s264 + $0x20] sm:$0x1]
        %v280 = vld [vmem:[%s264 + $0x24] sm:$0xf]
        %v281 = vld [vmem:[%s264 + $0x28] sm:$0xf]
        %v282 = vld [vmem:[%s264 + $0x2c] sm:$0x1]
        %v283 = vld [vmem:[%s264 + $0x30] sm:$0xf]
        %v284 = vld [vmem:[%s264 + $0x34] sm:$0xf]
        %v285 = vld [vmem:[%s264 + $0x38] sm:$0x1]
        %v286 = vld [vmem:[%s264 + $0x3c] sm:$0xf]
        %v287 = vld [vmem:[%s264 + $0x40] sm:$0xf]
        %v288 = vld [vmem:[%s264 + $0x44] sm:$0x1]
        %v289 = vld [vmem:[%s264 + $0x48] sm:$0xf]
        %v290 = vld [vmem:[%s264 + $0x4c] sm:$0xf]
        %v291 = vld [vmem:[%s264 + $0x50] sm:$0x1]
        %v292 = vld [vmem:[%s264 + $0x54] sm:$0xf]
        %v293 = vld [vmem:[%s264 + $0x58] sm:$0xf]
        %v294 = vld [vmem:[%s264 + $0x5c] sm:$0x1]
        %v295 = vld [vmem:[%s264 + $0x60] sm:$0xf]
        %v296 = vld [vmem:[%s264 + $0x64] sm:$0xf]
        %v297 = vld [vmem:[%s264 + $0x68] sm:$0x1]
        %v298 = vld [vmem:[%s264 + $0x6c] sm:$0xf]
        %v299 = vld [vmem:[%s264 + $0x70] sm:$0xf]
        %v300 = vld [vmem:[%s264 + $0x74] sm:$0x1]
        %v301 = vld [vmem:[%s264 + $0x78] sm:$0xf]
        %v302 = vld [vmem:[%s264 + $0x7c] sm:$0xf]
        %v303 = vld [vmem:[%s264 + $0x80] sm:$0x1]
        %v304 = vld [vmem:[%s264 + $0x84] sm:$0xf]
        %v305 = vld [vmem:[%s264 + $0x88] sm:$0xf]
        %v306 = vld [vmem:[%s264 + $0x8c] sm:$0x1]
        %v307 = vld [vmem:[%s264 + $0x90] sm:$0xf]
        %v308 = vld [vmem:[%s264 + $0x94] sm:$0xf]
        %v309 = vld [vmem:[%s264 + $0x98] sm:$0x1]
        %v310 = vld [vmem:[%s264 + $0x9c] sm:$0xf]
        %v311 = vld [vmem:[%s264 + $0xa0] sm:$0xf]
        %v312 = vld [vmem:[%s264 + $0xa4] sm:$0x1]
        %v313 = vld [vmem:[%s264 + $0xa8] sm:$0xf]
        %v314 = vld [vmem:[%s264 + $0xac] sm:$0xf]
        %v315 = vld [vmem:[%s264 + $0xb0] sm:$0x1]
        %v316 = vld [vmem:[%s264 + $0xb4] sm:$0xf]
        %v317 = vld [vmem:[%s264 + $0xb8] sm:$0xf]
        %v318 = vld [vmem:[%s264 + $0xbc] sm:$0x1]
        %v319 = vld [vmem:[%s264 + $0xc0] sm:$0xf]
        %v320 = vld [vmem:[%s264 + $0xc4] sm:$0xf]
        %v321 = vld [vmem:[%s264 + $0xc8] sm:$0x1]
        %v322 = vld [vmem:[%s264 + $0xcc] sm:$0xf]
        %v323 = vld [vmem:[%s264 + $0xd0] sm:$0xf]
        %v324 = vld [vmem:[%s264 + $0xd4] sm:$0x1]
        %v325 = vunpack.c.l.bf16 %v271
        %v326 = vunpack.c.l.bf16 %v272
        %v327 = vunpack.c.l.bf16 %v273
        %v328 = vunpack.c.l.bf16 %v274
        %v329 = vunpack.c.l.bf16 %v275
        %v330 = vunpack.c.l.bf16 %v276
        %v331 = vunpack.c.l.bf16 %v277
        %v332 = vunpack.c.l.bf16 %v278
        %v333 = vunpack.c.l.bf16 %v279
        %v334 = vunpack.c.l.bf16 %v280
        %v335 = vunpack.c.l.bf16 %v281
        %v336 = vunpack.c.l.bf16 %v282
        %v337 = vunpack.c.l.bf16 %v283
        %v338 = vunpack.c.l.bf16 %v284
        %v339 = vunpack.c.l.bf16 %v285
        %v340 = vunpack.c.l.bf16 %v286
        %v341 = vunpack.c.l.bf16 %v287
        %v342 = vunpack.c.l.bf16 %v288
        %v343 = vunpack.c.l.bf16 %v289
        %v344 = vunpack.c.l.bf16 %v290
        %v345 = vunpack.c.l.bf16 %v291
        %v346 = vunpack.c.l.bf16 %v292
        %v347 = vunpack.c.l.bf16 %v293
        %v348 = vunpack.c.l.bf16 %v294
        %v349 = vunpack.c.l.bf16 %v295
        %v350 = vunpack.c.l.bf16 %v296
        %v351 = vunpack.c.l.bf16 %v297
        %v352 = vunpack.c.l.bf16 %v298
        %v353 = vunpack.c.l.bf16 %v299
        %v354 = vunpack.c.l.bf16 %v300
        %v355 = vunpack.c.l.bf16 %v301
        %v356 = vunpack.c.l.bf16 %v302
        %v357 = vunpack.c.l.bf16 %v303
        %v358 = vunpack.c.l.bf16 %v304
        %v359 = vunpack.c.l.bf16 %v305
        %v360 = vunpack.c.l.bf16 %v306
        %v361 = vunpack.c.l.bf16 %v307
        %v362 = vunpack.c.l.bf16 %v308
        %v363 = vunpack.c.l.bf16 %v309
        %v364 = vunpack.c.l.bf16 %v310
        %v365 = vunpack.c.l.bf16 %v311
        %v366 = vunpack.c.l.bf16 %v312
        %v367 = vunpack.c.l.bf16 %v313
        %v368 = vunpack.c.l.bf16 %v314
        %v369 = vunpack.c.l.bf16 %v315
        %v370 = vunpack.c.l.bf16 %v316
        %v371 = vunpack.c.l.bf16 %v317
        %v372 = vunpack.c.l.bf16 %v318
        %v373 = vunpack.c.l.bf16 %v319
        %v374 = vunpack.c.l.bf16 %v320
        %v375 = vunpack.c.l.bf16 %v321
        %v376 = vunpack.c.l.bf16 %v322
        %v377 = vunpack.c.l.bf16 %v323
        %v378 = vunpack.c.l.bf16 %v324
        %v379 = vld [vmem:[%s3] sm:$0x1]
        %v381 = vlaneseq
        %v382 = vshrl.u32 %v381, 7
        %v383 = vsub.s32 0, %v382
        %v384 = vrot.slane %v379, %v383
        %v386 = vmul.f32 %v325, %v384
        %v387 = vmul.f32 %v326, %v384
        %v388 = vmul.f32 %v327, %v384
        %v389 = vmul.f32 %v328, %v384
        %v390 = vmul.f32 %v329, %v384
        %v391 = vmul.f32 %v330, %v384
        %v392 = vmul.f32 %v331, %v384
        %v393 = vmul.f32 %v332, %v384
        %v394 = vmul.f32 %v333, %v384
        %v395 = vmul.f32 %v334, %v384
        %v396 = vmul.f32 %v335, %v384
        %v397 = vmul.f32 %v336, %v384
        %v398 = vmul.f32 %v337, %v384
        %v399 = vmul.f32 %v338, %v384
        %v400 = vmul.f32 %v339, %v384
        %v401 = vmul.f32 %v340, %v384
        %v402 = vmul.f32 %v341, %v384
        %v403 = vmul.f32 %v342, %v384
        %v404 = vmul.f32 %v343, %v384
        %v405 = vmul.f32 %v344, %v384
        %v406 = vmul.f32 %v345, %v384
        %v407 = vmul.f32 %v346, %v384
        %v408 = vmul.f32 %v347, %v384
        %v409 = vmul.f32 %v348, %v384
        %v410 = vmul.f32 %v349, %v384
        %v411 = vmul.f32 %v350, %v384
        %v412 = vmul.f32 %v351, %v384
        %v413 = vmul.f32 %v352, %v384
        %v414 = vmul.f32 %v353, %v384
        %v415 = vmul.f32 %v354, %v384
        %v416 = vmul.f32 %v355, %v384
        %v417 = vmul.f32 %v356, %v384
        %v418 = vmul.f32 %v357, %v384
        %v419 = vmul.f32 %v358, %v384
        %v420 = vmul.f32 %v359, %v384
        %v421 = vmul.f32 %v360, %v384
        %v422 = vmul.f32 %v361, %v384
        %v423 = vmul.f32 %v362, %v384
        %v424 = vmul.f32 %v363, %v384
        %v425 = vmul.f32 %v364, %v384
        %v426 = vmul.f32 %v365, %v384
        %v427 = vmul.f32 %v366, %v384
        %v428 = vmul.f32 %v367, %v384
        %v429 = vmul.f32 %v368, %v384
        %v430 = vmul.f32 %v369, %v384
        %v431 = vmul.f32 %v370, %v384
        %v432 = vmul.f32 %v371, %v384
        %v433 = vmul.f32 %v372, %v384
        %v434 = vmul.f32 %v373, %v384
        %v435 = vmul.f32 %v374, %v384
        %v436 = vmul.f32 %v375, %v384
        %v437 = vmul.f32 %v376, %v384
        %v438 = vmul.f32 %v377, %v384
        %v439 = vmul.f32 %v378, %v384
        %v440 = vld [vmem:[%s4] sm:$0x1]
        %v442 = vlaneseq
        %v443 = vshrl.u32 %v442, 7
        %v444 = vsub.s32 0, %v443
        %v445 = vrot.slane %v440, %v444
        %v447 = vadd.f32 %v386, %v445
        %v448 = vadd.f32 %v387, %v445
        %v449 = vadd.f32 %v388, %v445
        %v450 = vadd.f32 %v389, %v445
        %v451 = vadd.f32 %v390, %v445
        %v452 = vadd.f32 %v391, %v445
        %v453 = vadd.f32 %v392, %v445
        %v454 = vadd.f32 %v393, %v445
        %v455 = vadd.f32 %v394, %v445
        %v456 = vadd.f32 %v395, %v445
        %v457 = vadd.f32 %v396, %v445
        %v458 = vadd.f32 %v397, %v445
        %v459 = vadd.f32 %v398, %v445
        %v460 = vadd.f32 %v399, %v445
        %v461 = vadd.f32 %v400, %v445
        %v462 = vadd.f32 %v401, %v445
        %v463 = vadd.f32 %v402, %v445
        %v464 = vadd.f32 %v403, %v445
        %v465 = vadd.f32 %v404, %v445
        %v466 = vadd.f32 %v405, %v445
        %v467 = vadd.f32 %v406, %v445
        %v468 = vadd.f32 %v407, %v445
        %v469 = vadd.f32 %v408, %v445
        %v470 = vadd.f32 %v409, %v445
        %v471 = vadd.f32 %v410, %v445
        %v472 = vadd.f32 %v411, %v445
        %v473 = vadd.f32 %v412, %v445
        %v474 = vadd.f32 %v413, %v445
        %v475 = vadd.f32 %v414, %v445
        %v476 = vadd.f32 %v415, %v445
        %v477 = vadd.f32 %v416, %v445
        %v478 = vadd.f32 %v417, %v445
        %v479 = vadd.f32 %v418, %v445
        %v480 = vadd.f32 %v419, %v445
        %v481 = vadd.f32 %v420, %v445
        %v482 = vadd.f32 %v421, %v445
        %v483 = vadd.f32 %v422, %v445
        %v484 = vadd.f32 %v423, %v445
        %v485 = vadd.f32 %v424, %v445
        %v486 = vadd.f32 %v425, %v445
        %v487 = vadd.f32 %v426, %v445
        %v488 = vadd.f32 %v427, %v445
        %v489 = vadd.f32 %v428, %v445
        %v490 = vadd.f32 %v429, %v445
        %v491 = vadd.f32 %v430, %v445
        %v492 = vadd.f32 %v431, %v445
        %v493 = vadd.f32 %v432, %v445
        %v494 = vadd.f32 %v433, %v445
        %v495 = vadd.f32 %v434, %v445
        %v496 = vadd.f32 %v435, %v445
        %v497 = vadd.f32 %v436, %v445
        %v498 = vadd.f32 %v437, %v445
        %v499 = vadd.f32 %v438, %v445
        %v500 = vadd.f32 %v439, %v445
        %v501 = vmax.f32 %v447, 0.0
        %v502 = vmax.f32 %v448, 0.0
        %v503 = vmax.f32 %v449, 0.0
        %v504 = vmax.f32 %v450, 0.0
        %v505 = vmax.f32 %v451, 0.0
        %v506 = vmax.f32 %v452, 0.0
        %v507 = vmax.f32 %v453, 0.0
        %v508 = vmax.f32 %v454, 0.0
        %v509 = vmax.f32 %v455, 0.0
        %v510 = vmax.f32 %v456, 0.0
        %v511 = vmax.f32 %v457, 0.0
        %v512 = vmax.f32 %v458, 0.0
        %v513 = vmax.f32 %v459, 0.0
        %v514 = vmax.f32 %v460, 0.0
        %v515 = vmax.f32 %v461, 0.0
        %v516 = vmax.f32 %v462, 0.0
        %v517 = vmax.f32 %v463, 0.0
        %v518 = vmax.f32 %v464, 0.0
        %v519 = vmax.f32 %v465, 0.0
        %v520 = vmax.f32 %v466, 0.0
        %v521 = vmax.f32 %v467, 0.0
        %v522 = vmax.f32 %v468, 0.0
        %v523 = vmax.f32 %v469, 0.0
        %v524 = vmax.f32 %v470, 0.0
        %v525 = vmax.f32 %v471, 0.0
        %v526 = vmax.f32 %v472, 0.0
        %v527 = vmax.f32 %v473, 0.0
        %v528 = vmax.f32 %v474, 0.0
        %v529 = vmax.f32 %v475, 0.0
        %v530 = vmax.f32 %v476, 0.0
        %v531 = vmax.f32 %v477, 0.0
        %v532 = vmax.f32 %v478, 0.0
        %v533 = vmax.f32 %v479, 0.0
        %v534 = vmax.f32 %v480, 0.0
        %v535 = vmax.f32 %v481, 0.0
        %v536 = vmax.f32 %v482, 0.0
        %v537 = vmax.f32 %v483, 0.0
        %v538 = vmax.f32 %v484, 0.0
        %v539 = vmax.f32 %v485, 0.0
        %v540 = vmax.f32 %v486, 0.0
        %v541 = vmax.f32 %v487, 0.0
        %v542 = vmax.f32 %v488, 0.0
        %v543 = vmax.f32 %v489, 0.0
        %v544 = vmax.f32 %v490, 0.0
        %v545 = vmax.f32 %v491, 0.0
        %v546 = vmax.f32 %v492, 0.0
        %v547 = vmax.f32 %v493, 0.0
        %v548 = vmax.f32 %v494, 0.0
        %v549 = vmax.f32 %v495, 0.0
        %v550 = vmax.f32 %v496, 0.0
        %v551 = vmax.f32 %v497, 0.0
        %v552 = vmax.f32 %v498, 0.0
        %v553 = vmax.f32 %v499, 0.0
        %v554 = vmax.f32 %v500, 0.0
        %v555 = vlaneseq
        %v556 = vshrl.u32 %v555, 7
        %v557 = vadd.s32 %v556, 8
        %v558 = vadd.s32 %v556, 16
        %vm559 = vcmp.ge.s32.totalorder %v556, 1
        %vm560 = vcmp.ge.s32.totalorder %v557, 1
        %vm561 = vcmp.ge.s32.totalorder %v558, 1
        %vm562 = vmand 0, %vm559
        %vm563 = vmand 0, %vm560
        %vm564 = vmand 0, %vm561
        %vm565 = vmand 1, %vm559
        %vm566 = vmand 1, %vm560
        %vm567 = vmand 1, %vm561
        %vm568 = vcmp.lt.s32.totalorder %v556, 17
        %vm569 = vcmp.lt.s32.totalorder %v557, 17
        %vm570 = vcmp.lt.s32.totalorder %v558, 17
        %vm571 = vmand %vm562, %vm568
        %vm572 = vmand %vm563, %vm569
        %vm573 = vmand %vm564, %vm570
        %vm574 = vmand %vm565, %vm568
        %vm575 = vmand %vm566, %vm569
        %vm576 = vmand %vm567, %vm570
        %v577 = vsel %vm571, %v501, 0.0
        %v578 = vsel %vm572, %v502, 0.0
        %v579 = vsel %vm573, %v503, 0.0
        %v580 = vsel %vm574, %v504, 0.0
        %v581 = vsel %vm575, %v505, 0.0
        %v582 = vsel %vm576, %v506, 0.0
        %v583 = vsel %vm574, %v507, 0.0
        %v584 = vsel %vm575, %v508, 0.0
        %v585 = vsel %vm576, %v509, 0.0
        %v586 = vsel %vm574, %v510, 0.0
        %v587 = vsel %vm575, %v511, 0.0
        %v588 = vsel %vm576, %v512, 0.0
        %v589 = vsel %vm574, %v513, 0.0
        %v590 = vsel %vm575, %v514, 0.0
        %v591 = vsel %vm576, %v515, 0.0
        %v592 = vsel %vm574, %v516, 0.0
        %v593 = vsel %vm575, %v517, 0.0
        %v594 = vsel %vm576, %v518, 0.0
        %v595 = vsel %vm574, %v519, 0.0
        %v596 = vsel %vm575, %v520, 0.0
        %v597 = vsel %vm576, %v521, 0.0
        %v598 = vsel %vm574, %v522, 0.0
        %v599 = vsel %vm575, %v523, 0.0
        %v600 = vsel %vm576, %v524, 0.0
        %v601 = vsel %vm574, %v525, 0.0
        %v602 = vsel %vm575, %v526, 0.0
        %v603 = vsel %vm576, %v527, 0.0
        %v604 = vsel %vm574, %v528, 0.0
        %v605 = vsel %vm575, %v529, 0.0
        %v606 = vsel %vm576, %v530, 0.0
        %v607 = vsel %vm574, %v531, 0.0
        %v608 = vsel %vm575, %v532, 0.0
        %v609 = vsel %vm576, %v533, 0.0
        %v610 = vsel %vm574, %v534, 0.0
        %v611 = vsel %vm575, %v535, 0.0
        %v612 = vsel %vm576, %v536, 0.0
        %v613 = vsel %vm574, %v537, 0.0
        %v614 = vsel %vm575, %v538, 0.0
        %v615 = vsel %vm576, %v539, 0.0
        %v616 = vsel %vm574, %v540, 0.0
        %v617 = vsel %vm575, %v541, 0.0
        %v618 = vsel %vm576, %v542, 0.0
        %v619 = vsel %vm574, %v543, 0.0
        %v620 = vsel %vm575, %v544, 0.0
        %v621 = vsel %vm576, %v545, 0.0
        %v622 = vsel %vm574, %v546, 0.0
        %v623 = vsel %vm575, %v547, 0.0
        %v624 = vsel %vm576, %v548, 0.0
        %v625 = vsel %vm574, %v549, 0.0
        %v626 = vsel %vm575, %v550, 0.0
        %v627 = vsel %vm576, %v551, 0.0
        %v628 = vsel %vm571, %v552, 0.0
        %v629 = vsel %vm572, %v553, 0.0
        %v630 = vsel %vm573, %v554, 0.0
        %v631 = vpack.c.bf16 %v578, %v577
        %v632 = vpack.c.bf16 %v579, %v579
        %v633 = vpack.c.bf16 %v581, %v580
        %v634 = vpack.c.bf16 %v582, %v582
        %v635 = vpack.c.bf16 %v584, %v583
        %v636 = vpack.c.bf16 %v585, %v585
        %v637 = vpack.c.bf16 %v587, %v586
        %v638 = vpack.c.bf16 %v588, %v588
        %v639 = vpack.c.bf16 %v590, %v589
        %v640 = vpack.c.bf16 %v591, %v591
        %v641 = vpack.c.bf16 %v593, %v592
        %v642 = vpack.c.bf16 %v594, %v594
        %v643 = vpack.c.bf16 %v596, %v595
        %v644 = vpack.c.bf16 %v597, %v597
        %v645 = vpack.c.bf16 %v599, %v598
        %v646 = vpack.c.bf16 %v600, %v600
        %v647 = vpack.c.bf16 %v602, %v601
        %v648 = vpack.c.bf16 %v603, %v603
        %v649 = vpack.c.bf16 %v605, %v604
        %v650 = vpack.c.bf16 %v606, %v606
        %v651 = vpack.c.bf16 %v608, %v607
        %v652 = vpack.c.bf16 %v609, %v609
        %v653 = vpack.c.bf16 %v611, %v610
        %v654 = vpack.c.bf16 %v612, %v612
        %v655 = vpack.c.bf16 %v614, %v613
        %v656 = vpack.c.bf16 %v615, %v615
        %v657 = vpack.c.bf16 %v617, %v616
        %v658 = vpack.c.bf16 %v618, %v618
        %v659 = vpack.c.bf16 %v620, %v619
        %v660 = vpack.c.bf16 %v621, %v621
        %v661 = vpack.c.bf16 %v623, %v622
        %v662 = vpack.c.bf16 %v624, %v624
        %v663 = vpack.c.bf16 %v626, %v625
        %v664 = vpack.c.bf16 %v627, %v627
        %v665 = vpack.c.bf16 %v629, %v628
        %v666 = vpack.c.bf16 %v630, %v630
        %v703 = vunpack.c.l.b16 %v631
        %v704 = vunpack.c.h.b16 %v631
        %v705 = vunpack.c.l.b16 %v632
        %v706 = vunpack.c.l.b16 %v633
        %v707 = vunpack.c.h.b16 %v633
        %v708 = vunpack.c.l.b16 %v634
        %v709 = vunpack.c.l.b16 %v635
        %v710 = vunpack.c.h.b16 %v635
        %v711 = vunpack.c.l.b16 %v636
        %v712 = vunpack.c.l.b16 %v637
        %v713 = vunpack.c.h.b16 %v637
        %v714 = vunpack.c.l.b16 %v638
        %v715 = vunpack.c.l.b16 %v639
        %v716 = vunpack.c.h.b16 %v639
        %v717 = vunpack.c.l.b16 %v640
        %v718 = vunpack.c.l.b16 %v641
        %v719 = vunpack.c.h.b16 %v641
        %v720 = vunpack.c.l.b16 %v642
        %v721 = vunpack.c.l.b16 %v643
        %v722 = vunpack.c.h.b16 %v643
        %v723 = vunpack.c.l.b16 %v644
        %v724 = vunpack.c.l.b16 %v645
        %v725 = vunpack.c.h.b16 %v645
        %v726 = vunpack.c.l.b16 %v646
        %v727 = vunpack.c.l.b16 %v647
        %v728 = vunpack.c.h.b16 %v647
        %v729 = vunpack.c.l.b16 %v648
        %v730 = vunpack.c.l.b16 %v649
        %v731 = vunpack.c.h.b16 %v649
        %v732 = vunpack.c.l.b16 %v650
        %v733 = vunpack.c.l.b16 %v651
        %v734 = vunpack.c.h.b16 %v651
        %v735 = vunpack.c.l.b16 %v652
        %v736 = vunpack.c.l.b16 %v653
        %v737 = vunpack.c.h.b16 %v653
        %v738 = vunpack.c.l.b16 %v654
        %v739 = vunpack.c.l.b16 %v655
        %v740 = vunpack.c.h.b16 %v655
        %v741 = vunpack.c.l.b16 %v656
        %v742 = vunpack.c.l.b16 %v657
        %v743 = vunpack.c.h.b16 %v657
        %v744 = vunpack.c.l.b16 %v658
        %v745 = vunpack.c.l.b16 %v659
        %v746 = vunpack.c.h.b16 %v659
        %v747 = vunpack.c.l.b16 %v660
        %v748 = vunpack.c.l.b16 %v661
        %v749 = vunpack.c.h.b16 %v661
        %v750 = vunpack.c.l.b16 %v662
        %v751 = vunpack.c.l.b16 %v663
        %v752 = vunpack.c.h.b16 %v663
        %v753 = vunpack.c.l.b16 %v664
        %v754 = vunpack.c.l.b16 %v665
        %v755 = vunpack.c.h.b16 %v665
        %v756 = vunpack.c.l.b16 %v666
        %v757 = vpack.c.b16 %v703, %v703
        %v758 = vpack.c.b16 %v704, %v704
        %v759 = vpack.c.b16 %v705, %v705
        %v760 = vpack.c.b16 %v706, %v706
        %v761 = vpack.c.b16 %v707, %v707
        %v762 = vpack.c.b16 %v708, %v708
        %v763 = vpack.c.b16 %v709, %v709
        %v764 = vpack.c.b16 %v710, %v710
        %v765 = vpack.c.b16 %v711, %v711
        %v766 = vpack.c.b16 %v712, %v712
        %v767 = vpack.c.b16 %v713, %v713
        %v768 = vpack.c.b16 %v714, %v714
        %v769 = vpack.c.b16 %v715, %v715
        %v770 = vpack.c.b16 %v716, %v716
        %v771 = vpack.c.b16 %v717, %v717
        %v772 = vpack.c.b16 %v718, %v718
        %v773 = vpack.c.b16 %v719, %v719
        %v774 = vpack.c.b16 %v720, %v720
        %v775 = vpack.c.b16 %v721, %v721
        %v776 = vpack.c.b16 %v722, %v722
        %v777 = vpack.c.b16 %v723, %v723
        %v778 = vpack.c.b16 %v724, %v724
        %v779 = vpack.c.b16 %v725, %v725
        %v780 = vpack.c.b16 %v726, %v726
        %v781 = vpack.c.b16 %v727, %v727
        %v782 = vpack.c.b16 %v728, %v728
        %v783 = vpack.c.b16 %v729, %v729
        %v784 = vpack.c.b16 %v730, %v730
        %v785 = vpack.c.b16 %v731, %v731
        %v786 = vpack.c.b16 %v732, %v732
        %v787 = vpack.c.b16 %v733, %v733
        %v788 = vpack.c.b16 %v734, %v734
        %v789 = vpack.c.b16 %v735, %v735
        %v790 = vpack.c.b16 %v736, %v736
        %v791 = vpack.c.b16 %v737, %v737
        %v792 = vpack.c.b16 %v738, %v738
        %v793 = vpack.c.b16 %v739, %v739
        %v794 = vpack.c.b16 %v740, %v740
        %v795 = vpack.c.b16 %v741, %v741
        %v796 = vpack.c.b16 %v742, %v742
        %v797 = vpack.c.b16 %v743, %v743
        %v798 = vpack.c.b16 %v744, %v744
        %v799 = vpack.c.b16 %v745, %v745
        %v800 = vpack.c.b16 %v746, %v746
        %v801 = vpack.c.b16 %v747, %v747
        %v802 = vpack.c.b16 %v748, %v748
        %v803 = vpack.c.b16 %v749, %v749
        %v804 = vpack.c.b16 %v750, %v750
        %v805 = vpack.c.b16 %v751, %v751
        %v806 = vpack.c.b16 %v752, %v752
        %v807 = vpack.c.b16 %v753, %v753
        %v808 = vpack.c.b16 %v754, %v754
        %v809 = vpack.c.b16 %v755, %v755
        %v810 = vpack.c.b16 %v756, %v756
        %865 = vst [vmem:[#allocation2] sm:$0xf] %v757
        %866 = vst [vmem:[#allocation2 + $0x4] sm:$0xf] %v758
        %867 = vst [vmem:[#allocation2 + $0x8] sm:$0x1] %v759
        %868 = vst [vmem:[#allocation2 + $0xc] sm:$0xf] %v760
        %869 = vst [vmem:[#allocation2 + $0x10] sm:$0xf] %v761
        %870 = vst [vmem:[#allocation2 + $0x14] sm:$0x1] %v762
        %871 = vst [vmem:[#allocation2 + $0x18] sm:$0xf] %v763
        %872 = vst [vmem:[#allocation2 + $0x1c] sm:$0xf] %v764
        %873 = vst [vmem:[#allocation2 + $0x20] sm:$0x1] %v765
        %874 = vst [vmem:[#allocation2 + $0x24] sm:$0xf] %v766
        %875 = vst [vmem:[#allocation2 + $0x28] sm:$0xf] %v767
        %876 = vst [vmem:[#allocation2 + $0x2c] sm:$0x1] %v768
        %877 = vst [vmem:[#allocation2 + $0x30] sm:$0xf] %v769
        %878 = vst [vmem:[#allocation2 + $0x34] sm:$0xf] %v770
        %879 = vst [vmem:[#allocation2 + $0x38] sm:$0x1] %v771
        %880 = vst [vmem:[#allocation2 + $0x3c] sm:$0xf] %v772
        %881 = vst [vmem:[#allocation2 + $0x40] sm:$0xf] %v773
        %882 = vst [vmem:[#allocation2 + $0x44] sm:$0x1] %v774
        %883 = vst [vmem:[#allocation2 + $0x48] sm:$0xf] %v775
        %884 = vst [vmem:[#allocation2 + $0x4c] sm:$0xf] %v776
        %885 = vst [vmem:[#allocation2 + $0x50] sm:$0x1] %v777
        %886 = vst [vmem:[#allocation2 + $0x54] sm:$0xf] %v778
        %887 = vst [vmem:[#allocation2 + $0x58] sm:$0xf] %v779
        %888 = vst [vmem:[#allocation2 + $0x5c] sm:$0x1] %v780
        %889 = vst [vmem:[#allocation2 + $0x60] sm:$0xf] %v781
        %890 = vst [vmem:[#allocation2 + $0x64] sm:$0xf] %v782
        %891 = vst [vmem:[#allocation2 + $0x68] sm:$0x1] %v783
        %892 = vst [vmem:[#allocation2 + $0x6c] sm:$0xf] %v784
        %893 = vst [vmem:[#allocation2 + $0x70] sm:$0xf] %v785
        %894 = vst [vmem:[#allocation2 + $0x74] sm:$0x1] %v786
        %895 = vst [vmem:[#allocation2 + $0x78] sm:$0xf] %v787
        %896 = vst [vmem:[#allocation2 + $0x7c] sm:$0xf] %v788
        %897 = vst [vmem:[#allocation2 + $0x80] sm:$0x1] %v789
        %898 = vst [vmem:[#allocation2 + $0x84] sm:$0xf] %v790
        %899 = vst [vmem:[#allocation2 + $0x88] sm:$0xf] %v791
        %900 = vst [vmem:[#allocation2 + $0x8c] sm:$0x1] %v792
        %901 = vst [vmem:[#allocation2 + $0x90] sm:$0xf] %v793
        %902 = vst [vmem:[#allocation2 + $0x94] sm:$0xf] %v794
        %903 = vst [vmem:[#allocation2 + $0x98] sm:$0x1] %v795
        %904 = vst [vmem:[#allocation2 + $0x9c] sm:$0xf] %v796
        %905 = vst [vmem:[#allocation2 + $0xa0] sm:$0xf] %v797
        %906 = vst [vmem:[#allocation2 + $0xa4] sm:$0x1] %v798
        %907 = vst [vmem:[#allocation2 + $0xa8] sm:$0xf] %v799
        %908 = vst [vmem:[#allocation2 + $0xac] sm:$0xf] %v800
        %909 = vst [vmem:[#allocation2 + $0xb0] sm:$0x1] %v801
        %910 = vst [vmem:[#allocation2 + $0xb4] sm:$0xf] %v802
        %911 = vst [vmem:[#allocation2 + $0xb8] sm:$0xf] %v803
        %912 = vst [vmem:[#allocation2 + $0xbc] sm:$0x1] %v804
        %913 = vst [vmem:[#allocation2 + $0xc0] sm:$0xf] %v805
        %914 = vst [vmem:[#allocation2 + $0xc4] sm:$0xf] %v806
        %915 = vst [vmem:[#allocation2 + $0xc8] sm:$0x1] %v807
        %916 = vst [vmem:[#allocation2 + $0xcc] sm:$0xf] %v808
        %917 = vst [vmem:[#allocation2 + $0xd0] sm:$0xf] %v809
        %918 = vst [vmem:[#allocation2 + $0xd4] sm:$0x1] %v810
        %v919 = vld [vmem:[#allocation2] sm:$0xf]
        %v920 = vld [vmem:[#allocation2 + $0x4] sm:$0xf]
        %v921 = vld [vmem:[#allocation2 + $0xc] sm:$0xf]
        %v922 = vld [vmem:[#allocation2 + $0x10] sm:$0xf]
        %v923 = vld [vmem:[#allocation2 + $0x18] sm:$0xf]
        %v924 = vld [vmem:[#allocation2 + $0x1c] sm:$0xf]
        %v925 = vld [vmem:[#allocation2 + $0x24] sm:$0xf]
        %v926 = vld [vmem:[#allocation2 + $0x28] sm:$0xf]
        %v927 = vld [vmem:[#allocation2 + $0x30] sm:$0xf]
        %v928 = vld [vmem:[#allocation2 + $0x34] sm:$0xf]
        %v929 = vld [vmem:[#allocation2 + $0x3c] sm:$0xf]
        %v930 = vld [vmem:[#allocation2 + $0x40] sm:$0xf]
        %v931 = vld [vmem:[#allocation2 + $0x48] sm:$0xf]
        %v932 = vld [vmem:[#allocation2 + $0x4c] sm:$0xf]
        %v933 = vld [vmem:[#allocation2 + $0x54] sm:$0xf]
        %v934 = vld [vmem:[#allocation2 + $0x58] sm:$0xf]
        %v935 = vld [vmem:[#allocation2 + $0x60] sm:$0xf]
        %v936 = vld [vmem:[#allocation2 + $0x64] sm:$0xf]
        %v937 = vld [vmem:[#allocation2 + $0x6c] sm:$0xf]
        %v938 = vld [vmem:[#allocation2 + $0x70] sm:$0xf]
        %v939 = vld [vmem:[#allocation2 + $0x78] sm:$0xf]
        %v940 = vld [vmem:[#allocation2 + $0x7c] sm:$0xf]
        %v941 = vld [vmem:[#allocation2 + $0x84] sm:$0xf]
        %v942 = vld [vmem:[#allocation2 + $0x88] sm:$0xf]
        %v943 = vld [vmem:[#allocation2 + $0x90] sm:$0xf]
        %v944 = vld [vmem:[#allocation2 + $0x94] sm:$0xf]
        %v945 = vld [vmem:[#allocation2 + $0x9c] sm:$0xf]
        %v946 = vld [vmem:[#allocation2 + $0xa0] sm:$0xf]
        %v947 = vld [vmem:[#allocation2 + $0xa8] sm:$0xf]
        %v948 = vld [vmem:[#allocation2 + $0xac] sm:$0xf]
        %v949 = vld [vmem:[#allocation2 + $0xb4] sm:$0xf]
        %v950 = vld [vmem:[#allocation2 + $0xb8] sm:$0xf]
        %v951 = vld [vmem:[%s1] sm:$0xf]
        %v952 = vld [vmem:[%s1 + $0x4] sm:$0xf]
        %v953 = vld [vmem:[%s1 + $0x8] sm:$0xf]
        %v954 = vld [vmem:[%s1 + $0xc] sm:$0xf]
        %v955 = vld [vmem:[%s1 + $0x10] sm:$0xf]
        %v956 = vld [vmem:[%s1 + $0x14] sm:$0xf]
        %v957 = vld [vmem:[%s1 + $0x18] sm:$0xf]
        %v958 = vld [vmem:[%s1 + $0x1c] sm:$0xf]
        %v959 = vld [vmem:[%s1 + $0x20] sm:$0xf]
        %v960 = vld [vmem:[%s1 + $0x24] sm:$0xf]
        %v961 = vld [vmem:[%s1 + $0x28] sm:$0xf]
        %v962 = vld [vmem:[%s1 + $0x2c] sm:$0xf]
        %v963 = vld [vmem:[%s1 + $0x30] sm:$0xf]
        %v964 = vld [vmem:[%s1 + $0x34] sm:$0xf]
        %v965 = vld [vmem:[%s1 + $0x38] sm:$0xf]
        %v966 = vld [vmem:[%s1 + $0x3c] sm:$0xf]
        %v967 = vld [vmem:[#allocation2 + $0x8] sm:$0x1]
        %v968 = vld [vmem:[#allocation2 + $0x14] sm:$0x1]
        %v969 = vld [vmem:[#allocation2 + $0x20] sm:$0x1]
        %v970 = vld [vmem:[#allocation2 + $0x2c] sm:$0x1]
        %v971 = vld [vmem:[#allocation2 + $0x38] sm:$0x1]
        %v972 = vld [vmem:[#allocation2 + $0x44] sm:$0x1]
        %v973 = vld [vmem:[#allocation2 + $0x50] sm:$0x1]
        %v974 = vld [vmem:[#allocation2 + $0x5c] sm:$0x1]
        %v975 = vld [vmem:[#allocation2 + $0x68] sm:$0x1]
        %v976 = vld [vmem:[#allocation2 + $0x74] sm:$0x1]
        %v977 = vld [vmem:[#allocation2 + $0x80] sm:$0x1]
        %v978 = vld [vmem:[#allocation2 + $0x8c] sm:$0x1]
        %v979 = vld [vmem:[#allocation2 + $0x98] sm:$0x1]
        %v980 = vld [vmem:[#allocation2 + $0xa4] sm:$0x1]
        %v981 = vld [vmem:[#allocation2 + $0xb0] sm:$0x1]
        %v982 = vld [vmem:[#allocation2 + $0xbc] sm:$0x1]
        %vm983 = vsmask.f32 3328
        %vm984 = vsmask.f32 7440
        %vm985 = vmor %vm983, %vm984
        %v987 = vshrl.u32 %v919, 16
        %v989 = vrot.slane %v987, 4
        %v990 = vshll.u32 %v919, 16
        %v992 = vrot.slane %v990, 5
        %v993 = vor.u32 %v989, %v992
        %v994 = vrot.slane %v993, 4
        %v996 = vshll.u32 %v920, 16
        %v998 = vrot.slane %v996, 5
        %v999 = vsel %vm985, %v994, %v998
        %v1000 = vshrl.u32 %v920, 16
        %v1002 = vrot.slane %v1000, 4
        %v1003 = vor.u32 %v1002, %v998
        %v1004 = vrot.slane %v1003, 4
        %v1006 = vshll.u32 %v967, 16
        %v1008 = vrot.slane %v1006, 5
        %v1009 = vsel %vm985, %v1004, %v1008
        %v1011 = vshrl.u32 %v921, 16
        %v1013 = vrot.slane %v1011, 4
        %v1014 = vshll.u32 %v921, 16
        %v1016 = vrot.slane %v1014, 5
        %v1017 = vor.u32 %v1013, %v1016
        %v1018 = vrot.slane %v1017, 4
        %v1020 = vshll.u32 %v922, 16
        %v1022 = vrot.slane %v1020, 5
        %v1023 = vsel %vm985, %v1018, %v1022
        %v1024 = vshrl.u32 %v922, 16
        %v1026 = vrot.slane %v1024, 4
        %v1027 = vor.u32 %v1026, %v1022
        %v1028 = vrot.slane %v1027, 4
        %v1030 = vshll.u32 %v968, 16
        %v1032 = vrot.slane %v1030, 5
        %v1033 = vsel %vm985, %v1028, %v1032
        %v1035 = vshrl.u32 %v923, 16
        %v1037 = vrot.slane %v1035, 4
        %v1038 = vshll.u32 %v923, 16
        %v1040 = vrot.slane %v1038, 5
        %v1041 = vor.u32 %v1037, %v1040
        %v1042 = vrot.slane %v1041, 4
        %v1044 = vshll.u32 %v924, 16
        %v1046 = vrot.slane %v1044, 5
        %v1047 = vsel %vm985, %v1042, %v1046
        %v1048 = vshrl.u32 %v924, 16
        %v1050 = vrot.slane %v1048, 4
        %v1051 = vor.u32 %v1050, %v1046
        %v1052 = vrot.slane %v1051, 4
        %v1054 = vshll.u32 %v969, 16
        %v1056 = vrot.slane %v1054, 5
        %v1057 = vsel %vm985, %v1052, %v1056
        %v1059 = vshrl.u32 %v925, 16
        %v1061 = vrot.slane %v1059, 4
        %v1062 = vshll.u32 %v925, 16
        %v1064 = vrot.slane %v1062, 5
        %v1065 = vor.u32 %v1061, %v1064
        %v1066 = vrot.slane %v1065, 4
        %v1068 = vshll.u32 %v926, 16
        %v1070 = vrot.slane %v1068, 5
        %v1071 = vsel %vm985, %v1066, %v1070
        %v1072 = vshrl.u32 %v926, 16
        %v1074 = vrot.slane %v1072, 4
        %v1075 = vor.u32 %v1074, %v1070
        %v1076 = vrot.slane %v1075, 4
        %v1078 = vshll.u32 %v970, 16
        %v1080 = vrot.slane %v1078, 5
        %v1081 = vsel %vm985, %v1076, %v1080
        %v1083 = vshrl.u32 %v927, 16
        %v1085 = vrot.slane %v1083, 4
        %v1086 = vshll.u32 %v927, 16
        %v1088 = vrot.slane %v1086, 5
        %v1089 = vor.u32 %v1085, %v1088
        %v1090 = vrot.slane %v1089, 4
        %v1092 = vshll.u32 %v928, 16
        %v1094 = vrot.slane %v1092, 5
        %v1095 = vsel %vm985, %v1090, %v1094
        %v1096 = vshrl.u32 %v928, 16
        %v1098 = vrot.slane %v1096, 4
        %v1099 = vor.u32 %v1098, %v1094
        %v1100 = vrot.slane %v1099, 4
        %v1102 = vshll.u32 %v971, 16
        %v1104 = vrot.slane %v1102, 5
        %v1105 = vsel %vm985, %v1100, %v1104
        %v1107 = vshrl.u32 %v929, 16
        %v1109 = vrot.slane %v1107, 4
        %v1110 = vshll.u32 %v929, 16
        %v1112 = vrot.slane %v1110, 5
        %v1113 = vor.u32 %v1109, %v1112
        %v1114 = vrot.slane %v1113, 4
        %v1116 = vshll.u32 %v930, 16
        %v1118 = vrot.slane %v1116, 5
        %v1119 = vsel %vm985, %v1114, %v1118
        %v1120 = vshrl.u32 %v930, 16
        %v1122 = vrot.slane %v1120, 4
        %v1123 = vor.u32 %v1122, %v1118
        %v1124 = vrot.slane %v1123, 4
        %v1126 = vshll.u32 %v972, 16
        %v1128 = vrot.slane %v1126, 5
        %v1129 = vsel %vm985, %v1124, %v1128
        %v1131 = vshrl.u32 %v931, 16
        %v1133 = vrot.slane %v1131, 4
        %v1134 = vshll.u32 %v931, 16
        %v1136 = vrot.slane %v1134, 5
        %v1137 = vor.u32 %v1133, %v1136
        %v1138 = vrot.slane %v1137, 4
        %v1140 = vshll.u32 %v932, 16
        %v1142 = vrot.slane %v1140, 5
        %v1143 = vsel %vm985, %v1138, %v1142
        %v1144 = vshrl.u32 %v932, 16
        %v1146 = vrot.slane %v1144, 4
        %v1147 = vor.u32 %v1146, %v1142
        %v1148 = vrot.slane %v1147, 4
        %v1150 = vshll.u32 %v973, 16
        %v1152 = vrot.slane %v1150, 5
        %v1153 = vsel %vm985, %v1148, %v1152
        %v1155 = vshrl.u32 %v933, 16
        %v1157 = vrot.slane %v1155, 4
        %v1158 = vshll.u32 %v933, 16
        %v1160 = vrot.slane %v1158, 5
        %v1161 = vor.u32 %v1157, %v1160
        %v1162 = vrot.slane %v1161, 4
        %v1164 = vshll.u32 %v934, 16
        %v1166 = vrot.slane %v1164, 5
        %v1167 = vsel %vm985, %v1162, %v1166
        %v1168 = vshrl.u32 %v934, 16
        %v1170 = vrot.slane %v1168, 4
        %v1171 = vor.u32 %v1170, %v1166
        %v1172 = vrot.slane %v1171, 4
        %v1174 = vshll.u32 %v974, 16
        %v1176 = vrot.slane %v1174, 5
        %v1177 = vsel %vm985, %v1172, %v1176
        %v1179 = vshrl.u32 %v935, 16
        %v1181 = vrot.slane %v1179, 4
        %v1182 = vshll.u32 %v935, 16
        %v1184 = vrot.slane %v1182, 5
        %v1185 = vor.u32 %v1181, %v1184
        %v1186 = vrot.slane %v1185, 4
        %v1188 = vshll.u32 %v936, 16
        %v1190 = vrot.slane %v1188, 5
        %v1191 = vsel %vm985, %v1186, %v1190
        %v1192 = vshrl.u32 %v936, 16
        %v1194 = vrot.slane %v1192, 4
        %v1195 = vor.u32 %v1194, %v1190
        %v1196 = vrot.slane %v1195, 4
        %v1198 = vshll.u32 %v975, 16
        %v1200 = vrot.slane %v1198, 5
        %v1201 = vsel %vm985, %v1196, %v1200
        %v1203 = vshrl.u32 %v937, 16
        %v1205 = vrot.slane %v1203, 4
        %v1206 = vshll.u32 %v937, 16
        %v1208 = vrot.slane %v1206, 5
        %v1209 = vor.u32 %v1205, %v1208
        %v1210 = vrot.slane %v1209, 4
        %v1212 = vshll.u32 %v938, 16
        %v1214 = vrot.slane %v1212, 5
        %v1215 = vsel %vm985, %v1210, %v1214
        %v1216 = vshrl.u32 %v938, 16
        %v1218 = vrot.slane %v1216, 4
        %v1219 = vor.u32 %v1218, %v1214
        %v1220 = vrot.slane %v1219, 4
        %v1222 = vshll.u32 %v976, 16
        %v1224 = vrot.slane %v1222, 5
        %v1225 = vsel %vm985, %v1220, %v1224
        %v1227 = vshrl.u32 %v939, 16
        %v1229 = vrot.slane %v1227, 4
        %v1230 = vshll.u32 %v939, 16
        %v1232 = vrot.slane %v1230, 5
        %v1233 = vor.u32 %v1229, %v1232
        %v1234 = vrot.slane %v1233, 4
        %v1236 = vshll.u32 %v940, 16
        %v1238 = vrot.slane %v1236, 5
        %v1239 = vsel %vm985, %v1234, %v1238
        %v1240 = vshrl.u32 %v940, 16
        %v1242 = vrot.slane %v1240, 4
        %v1243 = vor.u32 %v1242, %v1238
        %v1244 = vrot.slane %v1243, 4
        %v1246 = vshll.u32 %v977, 16
        %v1248 = vrot.slane %v1246, 5
        %v1249 = vsel %vm985, %v1244, %v1248
        %v1251 = vshrl.u32 %v941, 16
        %v1253 = vrot.slane %v1251, 4
        %v1254 = vshll.u32 %v941, 16
        %v1256 = vrot.slane %v1254, 5
        %v1257 = vor.u32 %v1253, %v1256
        %v1258 = vrot.slane %v1257, 4
        %v1260 = vshll.u32 %v942, 16
        %v1262 = vrot.slane %v1260, 5
        %v1263 = vsel %vm985, %v1258, %v1262
        %v1264 = vshrl.u32 %v942, 16
        %v1266 = vrot.slane %v1264, 4
        %v1267 = vor.u32 %v1266, %v1262
        %v1268 = vrot.slane %v1267, 4
        %v1270 = vshll.u32 %v978, 16
        %v1272 = vrot.slane %v1270, 5
        %v1273 = vsel %vm985, %v1268, %v1272
        %v1275 = vshrl.u32 %v943, 16
        %v1277 = vrot.slane %v1275, 4
        %v1278 = vshll.u32 %v943, 16
        %v1280 = vrot.slane %v1278, 5
        %v1281 = vor.u32 %v1277, %v1280
        %v1282 = vrot.slane %v1281, 4
        %v1284 = vshll.u32 %v944, 16
        %v1286 = vrot.slane %v1284, 5
        %v1287 = vsel %vm985, %v1282, %v1286
        %v1288 = vshrl.u32 %v944, 16
        %v1290 = vrot.slane %v1288, 4
        %v1291 = vor.u32 %v1290, %v1286
        %v1292 = vrot.slane %v1291, 4
        %v1294 = vshll.u32 %v979, 16
        %v1296 = vrot.slane %v1294, 5
        %v1297 = vsel %vm985, %v1292, %v1296
        %v1299 = vshrl.u32 %v945, 16
        %v1301 = vrot.slane %v1299, 4
        %v1302 = vshll.u32 %v945, 16
        %v1304 = vrot.slane %v1302, 5
        %v1305 = vor.u32 %v1301, %v1304
        %v1306 = vrot.slane %v1305, 4
        %v1308 = vshll.u32 %v946, 16
        %v1310 = vrot.slane %v1308, 5
        %v1311 = vsel %vm985, %v1306, %v1310
        %v1312 = vshrl.u32 %v946, 16
        %v1314 = vrot.slane %v1312, 4
        %v1315 = vor.u32 %v1314, %v1310
        %v1316 = vrot.slane %v1315, 4
        %v1318 = vshll.u32 %v980, 16
        %v1320 = vrot.slane %v1318, 5
        %v1321 = vsel %vm985, %v1316, %v1320
        %v1323 = vshrl.u32 %v947, 16
        %v1325 = vrot.slane %v1323, 4
        %v1326 = vshll.u32 %v947, 16
        %v1328 = vrot.slane %v1326, 5
        %v1329 = vor.u32 %v1325, %v1328
        %v1330 = vrot.slane %v1329, 4
        %v1332 = vshll.u32 %v948, 16
        %v1334 = vrot.slane %v1332, 5
        %v1335 = vsel %vm985, %v1330, %v1334
        %v1336 = vshrl.u32 %v948, 16
        %v1338 = vrot.slane %v1336, 4
        %v1339 = vor.u32 %v1338, %v1334
        %v1340 = vrot.slane %v1339, 4
        %v1342 = vshll.u32 %v981, 16
        %v1344 = vrot.slane %v1342, 5
        %v1345 = vsel %vm985, %v1340, %v1344
        %v1347 = vshrl.u32 %v949, 16
        %v1349 = vrot.slane %v1347, 4
        %v1350 = vshll.u32 %v949, 16
        %v1352 = vrot.slane %v1350, 5
        %v1353 = vor.u32 %v1349, %v1352
        %v1354 = vrot.slane %v1353, 4
        %v1356 = vshll.u32 %v950, 16
        %v1358 = vrot.slane %v1356, 5
        %v1359 = vsel %vm985, %v1354, %v1358
        %v1360 = vshrl.u32 %v950, 16
        %v1362 = vrot.slane %v1360, 4
        %v1363 = vor.u32 %v1362, %v1358
        %v1364 = vrot.slane %v1363, 4
        %v1366 = vshll.u32 %v982, 16
        %v1368 = vrot.slane %v1366, 5
        %v1369 = vsel %vm985, %v1364, %v1368
        %s1370 = scalar_lea.vmem %s1, 64
        %v1371 = vld [vmem:[%s1370] sm:$0xf]
        %v1372 = vld [vmem:[%s1370 + $0x4] sm:$0xf]
        %v1373 = vld [vmem:[%s1370 + $0x8] sm:$0xf]
        %v1374 = vld [vmem:[%s1370 + $0xc] sm:$0xf]
        %v1375 = vld [vmem:[%s1370 + $0x10] sm:$0xf]
        %v1376 = vld [vmem:[%s1370 + $0x14] sm:$0xf]
        %v1377 = vld [vmem:[%s1370 + $0x18] sm:$0xf]
        %v1378 = vld [vmem:[%s1370 + $0x1c] sm:$0xf]
        %v1379 = vld [vmem:[%s1370 + $0x20] sm:$0xf]
        %v1380 = vld [vmem:[%s1370 + $0x24] sm:$0xf]
        %v1381 = vld [vmem:[%s1370 + $0x28] sm:$0xf]
        %v1382 = vld [vmem:[%s1370 + $0x2c] sm:$0xf]
        %v1383 = vld [vmem:[%s1370 + $0x30] sm:$0xf]
        %v1384 = vld [vmem:[%s1370 + $0x34] sm:$0xf]
        %v1385 = vld [vmem:[%s1370 + $0x38] sm:$0xf]
        %v1386 = vld [vmem:[%s1370 + $0x3c] sm:$0xf]
        %v1387 = vunpack.c.l.b16 %v999
        %v1388 = vunpack.c.l.b16 %v1009
        %v1389 = vunpack.c.l.b16 %v1023
        %v1390 = vunpack.c.l.b16 %v1033
        %v1391 = vunpack.c.l.b16 %v1047
        %v1392 = vunpack.c.l.b16 %v1057
        %v1393 = vunpack.c.l.b16 %v1071
        %v1394 = vunpack.c.l.b16 %v1081
        %v1395 = vunpack.c.l.b16 %v1095
        %v1396 = vunpack.c.l.b16 %v1105
        %v1397 = vunpack.c.l.b16 %v1119
        %v1398 = vunpack.c.l.b16 %v1129
        %v1399 = vunpack.c.l.b16 %v1143
        %v1400 = vunpack.c.l.b16 %v1153
        %v1401 = vunpack.c.l.b16 %v1167
        %v1402 = vunpack.c.l.b16 %v1177
        %v1403 = vunpack.c.l.b16 %v1191
        %v1404 = vunpack.c.l.b16 %v1201
        %v1405 = vunpack.c.l.b16 %v1215
        %v1406 = vunpack.c.l.b16 %v1225
        %v1407 = vunpack.c.l.b16 %v1239
        %v1408 = vunpack.c.l.b16 %v1249
        %v1409 = vunpack.c.l.b16 %v1263
        %v1410 = vunpack.c.l.b16 %v1273
        %v1411 = vunpack.c.l.b16 %v1287
        %v1412 = vunpack.c.l.b16 %v1297
        %v1413 = vunpack.c.l.b16 %v1311
        %v1414 = vunpack.c.l.b16 %v1321
        %v1415 = vunpack.c.l.b16 %v1335
        %v1416 = vunpack.c.l.b16 %v1345
        %v1417 = vunpack.c.l.b16 %v1359
        %v1418 = vunpack.c.l.b16 %v1369
        %v1419 = vpack.c.b16 %v1388, %v1387
        %v1420 = vpack.c.b16 %v1390, %v1389
        %v1421 = vpack.c.b16 %v1392, %v1391
        %v1422 = vpack.c.b16 %v1394, %v1393
        %v1423 = vpack.c.b16 %v1396, %v1395
        %v1424 = vpack.c.b16 %v1398, %v1397
        %v1425 = vpack.c.b16 %v1400, %v1399
        %v1426 = vpack.c.b16 %v1402, %v1401
        %v1427 = vpack.c.b16 %v1404, %v1403
        %v1428 = vpack.c.b16 %v1406, %v1405
        %v1429 = vpack.c.b16 %v1408, %v1407
        %v1430 = vpack.c.b16 %v1410, %v1409
        %v1431 = vpack.c.b16 %v1412, %v1411
        %v1432 = vpack.c.b16 %v1414, %v1413
        %v1433 = vpack.c.b16 %v1416, %v1415
        %v1434 = vpack.c.b16 %v1418, %v1417
        %v1467 = vunpack.c.l.b16 %v1371
        %v1468 = vunpack.c.l.b16 %v1372
        %v1469 = vunpack.c.l.b16 %v1373
        %v1470 = vunpack.c.l.b16 %v1374
        %v1471 = vunpack.c.l.b16 %v1375
        %v1472 = vunpack.c.l.b16 %v1376
        %v1473 = vunpack.c.l.b16 %v1377
        %v1474 = vunpack.c.l.b16 %v1378
        %v1475 = vunpack.c.l.b16 %v1379
        %v1476 = vunpack.c.l.b16 %v1380
        %v1477 = vunpack.c.l.b16 %v1381
        %v1478 = vunpack.c.l.b16 %v1382
        %v1479 = vunpack.c.l.b16 %v1383
        %v1480 = vunpack.c.l.b16 %v1384
        %v1481 = vunpack.c.l.b16 %v1385
        %v1482 = vunpack.c.l.b16 %v1386
        %v1483 = vpack.c.b16 %v1468, %v1467
        %v1484 = vpack.c.b16 %v1470, %v1469
        %v1485 = vpack.c.b16 %v1472, %v1471
        %v1486 = vpack.c.b16 %v1474, %v1473
        %v1487 = vpack.c.b16 %v1476, %v1475
        %v1488 = vpack.c.b16 %v1478, %v1477
        %v1489 = vpack.c.b16 %v1480, %v1479
        %v1490 = vpack.c.b16 %v1482, %v1481
        %1499 = vmatprep.subr.bf16.mxu0 0
        %1500 = vmatpush1.bf16.msra.mxu0 %v1483
        %1501 = vmatprep.subr.bf16.mxu0 0
        %1502 = vmatpush1.bf16.msra.mxu0 %v1484
        %1503 = vmatprep.subr.bf16.mxu0 0
        %1504 = vmatpush1.bf16.msra.mxu0 %v1485
        %1505 = vmatprep.subr.bf16.mxu0 0
        %1506 = vmatpush1.bf16.msra.mxu0 %v1486
        %1507 = vmatprep.subr.bf16.mxu0 0
        %1508 = vmatpush1.bf16.msra.mxu0 %v1487
        %1509 = vmatprep.subr.bf16.mxu0 0
        %1510 = vmatpush1.bf16.msra.mxu0 %v1488
        %1511 = vmatprep.subr.bf16.mxu0 0
        %1512 = vmatpush1.bf16.msra.mxu0 %v1489
        %1513 = vmatprep.subr.bf16.mxu0 0
        %1514 = vmatpush1.bf16.msra.mxu0 %v1490
        %1515 = vmatprep.subr.bf16.mxu0 0
        %1516 = vmatpush1.bf16.msra.mxu0 0
        %1517 = vmatprep.subr.bf16.mxu0 0
        %1518 = vmatpush1.bf16.msra.mxu0 0
        %1519 = vmatprep.subr.bf16.mxu0 0
        %1520 = vmatpush1.bf16.msra.mxu0 0
        %1521 = vmatprep.subr.bf16.mxu0 0
        %1522 = vmatpush1.bf16.msra.mxu0 0
        %1523 = vmatprep.subr.bf16.mxu0 0
        %1524 = vmatpush1.bf16.msra.mxu0 0
        %1525 = vmatprep.subr.bf16.mxu0 0
        %1526 = vmatpush1.bf16.msra.mxu0 0
        %1527 = vmatprep.subr.bf16.mxu0 0
        %1528 = vmatpush1.bf16.msra.mxu0 0
        %1529 = vmatprep.subr.bf16.mxu0 0
        %1530 = vmatpush1.bf16.msra.mxu0 0
        %1531 = vmatprep.mubr.bf16.mxu0 0
        %1532 = vmatmul.mubr.bf16.gmra.mrb[0].mxu0 %v1419
        %v1533 = vpop.f32.mrb[0].mxu0
        %v1534 = vadd.f32 0.0, %v1533
        %v1535 = vpop.f32.mrb[0].mxu0
        %v1536 = vpop.f32.mrb[0].mxu0
        %v1537 = vadd.f32 0.0, %v1536
        %v1538 = vpop.f32.mrb[0].mxu0
        %1539 = vmatprep.mubr.bf16.mxu0 0
        %1540 = vmatmul.mubr.bf16.gmra.mrb[0].mxu0 %v1420
        %v1541 = vpop.f32.mrb[0].mxu0
        %v1542 = vadd.f32 0.0, %v1541
        %v1543 = vpop.f32.mrb[0].mxu0
        %v1544 = vpop.f32.mrb[0].mxu0
        %v1545 = vadd.f32 0.0, %v1544
        %v1546 = vpop.f32.mrb[0].mxu0
        %1547 = vmatprep.mubr.bf16.mxu0 0
        %1548 = vmatmul.mubr.bf16.gmra.mrb[0].mxu0 %v1421
        %v1549 = vpop.f32.mrb[0].mxu0
        %v1550 = vadd.f32 0.0, %v1549
        %v1551 = vpop.f32.mrb[0].mxu0
        %v1552 = vpop.f32.mrb[0].mxu0
        %v1553 = vadd.f32 0.0, %v1552
        %v1554 = vpop.f32.mrb[0].mxu0
        %1555 = vmatprep.mubr.bf16.mxu0 0
        %1556 = vmatmul.mubr.bf16.gmra.mrb[0].mxu0 %v1422
        %v1557 = vpop.f32.mrb[0].mxu0
        %v1558 = vadd.f32 0.0, %v1557
        %v1559 = vpop.f32.mrb[0].mxu0
        %v1560 = vpop.f32.mrb[0].mxu0
        %v1561 = vadd.f32 0.0, %v1560
        %v1562 = vpop.f32.mrb[0].mxu0
        %1563 = vmatprep.mubr.bf16.mxu0 0
        %1564 = vmatmul.mubr.bf16.gmra.mrb[0].mxu0 %v1423
        %v1565 = vpop.f32.mrb[0].mxu0
        %v1566 = vadd.f32 0.0, %v1565
        %v1567 = vpop.f32.mrb[0].mxu0
        %v1568 = vpop.f32.mrb[0].mxu0
        %v1569 = vadd.f32 0.0, %v1568
        %v1570 = vpop.f32.mrb[0].mxu0
        %1571 = vmatprep.mubr.bf16.mxu0 0
        %1572 = vmatmul.mubr.bf16.gmra.mrb[0].mxu0 %v1424
        %v1573 = vpop.f32.mrb[0].mxu0
        %v1574 = vadd.f32 0.0, %v1573
        %v1575 = vpop.f32.mrb[0].mxu0
        %v1576 = vpop.f32.mrb[0].mxu0
        %v1577 = vadd.f32 0.0, %v1576
        %v1578 = vpop.f32.mrb[0].mxu0
        %1579 = vmatprep.mubr.bf16.mxu0 0
        %1580 = vmatmul.mubr.bf16.gmra.mrb[0].mxu0 %v1425
        %v1581 = vpop.f32.mrb[0].mxu0
        %v1582 = vadd.f32 0.0, %v1581
        %v1583 = vpop.f32.mrb[0].mxu0
        %v1584 = vpop.f32.mrb[0].mxu0
        %v1585 = vadd.f32 0.0, %v1584
        %v1586 = vpop.f32.mrb[0].mxu0
        %1587 = vmatprep.mubr.bf16.mxu0 0
        %1588 = vmatmul.mubr.bf16.gmra.mrb[0].mxu0 %v1426
        %v1589 = vpop.f32.mrb[0].mxu0
        %v1590 = vadd.f32 0.0, %v1589
        %v1591 = vpop.f32.mrb[0].mxu0
        %v1592 = vpop.f32.mrb[0].mxu0
        %v1593 = vadd.f32 0.0, %v1592
        %v1594 = vpop.f32.mrb[0].mxu0
        %1595 = vmatprep.mubr.bf16.mxu0 0
        %1596 = vmatmul.mubr.bf16.gmra.mrb[0].mxu0 %v1427
        %v1597 = vpop.f32.mrb[0].mxu0
        %v1598 = vadd.f32 0.0, %v1597
        %v1599 = vpop.f32.mrb[0].mxu0
        %v1600 = vpop.f32.mrb[0].mxu0
        %v1601 = vadd.f32 0.0, %v1600
        %v1602 = vpop.f32.mrb[0].mxu0
        %1603 = vmatprep.mubr.bf16.mxu0 0
        %1604 = vmatmul.mubr.bf16.gmra.mrb[0].mxu0 %v1428
        %v1605 = vpop.f32.mrb[0].mxu0
        %v1606 = vadd.f32 0.0, %v1605
        %v1607 = vpop.f32.mrb[0].mxu0
        %v1608 = vpop.f32.mrb[0].mxu0
        %v1609 = vadd.f32 0.0, %v1608
        %v1610 = vpop.f32.mrb[0].mxu0
        %1611 = vmatprep.mubr.bf16.mxu0 0
        %1612 = vmatmul.mubr.bf16.gmra.mrb[0].mxu0 %v1429
        %v1613 = vpop.f32.mrb[0].mxu0
        %v1614 = vadd.f32 0.0, %v1613
        %v1615 = vpop.f32.mrb[0].mxu0
        %v1616 = vpop.f32.mrb[0].mxu0
        %v1617 = vadd.f32 0.0, %v1616
        %v1618 = vpop.f32.mrb[0].mxu0
        %1619 = vmatprep.mubr.bf16.mxu0 0
        %1620 = vmatmul.mubr.bf16.gmra.mrb[0].mxu0 %v1430
        %v1621 = vpop.f32.mrb[0].mxu0
        %v1622 = vadd.f32 0.0, %v1621
        %v1623 = vpop.f32.mrb[0].mxu0
        %v1624 = vpop.f32.mrb[0].mxu0
        %v1625 = vadd.f32 0.0, %v1624
        %v1626 = vpop.f32.mrb[0].mxu0
        %1627 = vmatprep.mubr.bf16.mxu0 0
        %1628 = vmatmul.mubr.bf16.gmra.mrb[0].mxu0 %v1431
        %v1629 = vpop.f32.mrb[0].mxu0
        %v1630 = vadd.f32 0.0, %v1629
        %v1631 = vpop.f32.mrb[0].mxu0
        %v1632 = vpop.f32.mrb[0].mxu0
        %v1633 = vadd.f32 0.0, %v1632
        %v1634 = vpop.f32.mrb[0].mxu0
        %1635 = vmatprep.mubr.bf16.mxu0 0
        %1636 = vmatmul.mubr.bf16.gmra.mrb[0].mxu0 %v1432
        %v1637 = vpop.f32.mrb[0].mxu0
        %v1638 = vadd.f32 0.0, %v1637
        %v1639 = vpop.f32.mrb[0].mxu0
        %v1640 = vpop.f32.mrb[0].mxu0
        %v1641 = vadd.f32 0.0, %v1640
        %v1642 = vpop.f32.mrb[0].mxu0
        %1643 = vmatprep.mubr.bf16.mxu0 0
        %1644 = vmatmul.mubr.bf16.gmra.mrb[0].mxu0 %v1433
        %v1645 = vpop.f32.mrb[0].mxu0
        %v1646 = vadd.f32 0.0, %v1645
        %v1647 = vpop.f32.mrb[0].mxu0
        %v1648 = vpop.f32.mrb[0].mxu0
        %v1649 = vadd.f32 0.0, %v1648
        %v1650 = vpop.f32.mrb[0].mxu0
        %1651 = vmatprep.mubr.bf16.mxu0 0
        %1652 = vmatmul.mubr.bf16.gmra.mrb[0].mxu0 %v1434
        %v1653 = vpop.f32.mrb[0].mxu0
        %v1654 = vadd.f32 0.0, %v1653
        %v1655 = vpop.f32.mrb[0].mxu0
        %v1656 = vpop.f32.mrb[0].mxu0
        %v1657 = vadd.f32 0.0, %v1656
        %v1658 = vpop.f32.mrb[0].mxu0
        %1659 = vdwg.mxu0
        %v1692 = vunpack.c.l.b16 %v919
        %v1693 = vunpack.c.l.b16 %v920
        %v1694 = vunpack.c.l.b16 %v921
        %v1695 = vunpack.c.l.b16 %v922
        %v1696 = vunpack.c.l.b16 %v923
        %v1697 = vunpack.c.l.b16 %v924
        %v1698 = vunpack.c.l.b16 %v925
        %v1699 = vunpack.c.l.b16 %v926
        %v1700 = vunpack.c.l.b16 %v927
        %v1701 = vunpack.c.l.b16 %v928
        %v1702 = vunpack.c.l.b16 %v929
        %v1703 = vunpack.c.l.b16 %v930
        %v1704 = vunpack.c.l.b16 %v931
        %v1705 = vunpack.c.l.b16 %v932
        %v1706 = vunpack.c.l.b16 %v933
        %v1707 = vunpack.c.l.b16 %v934
        %v1708 = vunpack.c.l.b16 %v935
        %v1709 = vunpack.c.l.b16 %v936
        %v1710 = vunpack.c.l.b16 %v937
        %v1711 = vunpack.c.l.b16 %v938
        %v1712 = vunpack.c.l.b16 %v939
        %v1713 = vunpack.c.l.b16 %v940
        %v1714 = vunpack.c.l.b16 %v941
        %v1715 = vunpack.c.l.b16 %v942
        %v1716 = vunpack.c.l.b16 %v943
        %v1717 = vunpack.c.l.b16 %v944
        %v1718 = vunpack.c.l.b16 %v945
        %v1719 = vunpack.c.l.b16 %v946
        %v1720 = vunpack.c.l.b16 %v947
        %v1721 = vunpack.c.l.b16 %v948
        %v1722 = vunpack.c.l.b16 %v949
        %v1723 = vunpack.c.l.b16 %v950
        %v1724 = vpack.c.b16 %v1693, %v1692
        %v1725 = vpack.c.b16 %v1695, %v1694
        %v1726 = vpack.c.b16 %v1697, %v1696
        %v1727 = vpack.c.b16 %v1699, %v1698
        %v1728 = vpack.c.b16 %v1701, %v1700
        %v1729 = vpack.c.b16 %v1703, %v1702
        %v1730 = vpack.c.b16 %v1705, %v1704
        %v1731 = vpack.c.b16 %v1707, %v1706
        %v1732 = vpack.c.b16 %v1709, %v1708
        %v1733 = vpack.c.b16 %v1711, %v1710
        %v1734 = vpack.c.b16 %v1713, %v1712
        %v1735 = vpack.c.b16 %v1715, %v1714
        %v1736 = vpack.c.b16 %v1717, %v1716
        %v1737 = vpack.c.b16 %v1719, %v1718
        %v1738 = vpack.c.b16 %v1721, %v1720
        %v1739 = vpack.c.b16 %v1723, %v1722
        %v1772 = vunpack.c.l.b16 %v951
        %v1773 = vunpack.c.l.b16 %v952
        %v1774 = vunpack.c.l.b16 %v953
        %v1775 = vunpack.c.l.b16 %v954
        %v1776 = vunpack.c.l.b16 %v955
        %v1777 = vunpack.c.l.b16 %v956
        %v1778 = vunpack.c.l.b16 %v957
        %v1779 = vunpack.c.l.b16 %v958
        %v1780 = vunpack.c.l.b16 %v959
        %v1781 = vunpack.c.l.b16 %v960
        %v1782 = vunpack.c.l.b16 %v961
        %v1783 = vunpack.c.l.b16 %v962
        %v1784 = vunpack.c.l.b16 %v963
        %v1785 = vunpack.c.l.b16 %v964
        %v1786 = vunpack.c.l.b16 %v965
        %v1787 = vunpack.c.l.b16 %v966
        %v1788 = vpack.c.b16 %v1773, %v1772
        %v1789 = vpack.c.b16 %v1775, %v1774
        %v1790 = vpack.c.b16 %v1777, %v1776
        %v1791 = vpack.c.b16 %v1779, %v1778
        %v1792 = vpack.c.b16 %v1781, %v1780
        %v1793 = vpack.c.b16 %v1783, %v1782
        %v1794 = vpack.c.b16 %v1785, %v1784
        %v1795 = vpack.c.b16 %v1787, %v1786
        %1804 = vmatprep.subr.bf16.mxu0 0
        %1805 = vmatpush1.bf16.msra.mxu0 %v1788
        %1806 = vmatprep.subr.bf16.mxu0 0
        %1807 = vmatpush1.bf16.msra.mxu0 %v1789
        %1808 = vmatprep.subr.bf16.mxu0 0
        %1809 = vmatpush1.bf16.msra.mxu0 %v1790
        %1810 = vmatprep.subr.bf16.mxu0 0
        %1811 = vmatpush1.bf16.msra.mxu0 %v1791
        %1812 = vmatprep.subr.bf16.mxu0 0
        %1813 = vmatpush1.bf16.msra.mxu0 %v1792
        %1814 = vmatprep.subr.bf16.mxu0 0
        %1815 = vmatpush1.bf16.msra.mxu0 %v1793
        %1816 = vmatprep.subr.bf16.mxu0 0
        %1817 = vmatpush1.bf16.msra.mxu0 %v1794
        %1818 = vmatprep.subr.bf16.mxu0 0
        %1819 = vmatpush1.bf16.msra.mxu0 %v1795
        %1820 = vmatprep.subr.bf16.mxu0 0
        %1821 = vmatpush1.bf16.msra.mxu0 0
        %1822 = vmatprep.subr.bf16.mxu0 0
        %1823 = vmatpush1.bf16.msra.mxu0 0
        %1824 = vmatprep.subr.bf16.mxu0 0
        %1825 = vmatpush1.bf16.msra.mxu0 0
        %1826 = vmatprep.subr.bf16.mxu0 0
        %1827 = vmatpush1.bf16.msra.mxu0 0
        %1828 = vmatprep.subr.bf16.mxu0 0
        %1829 = vmatpush1.bf16.msra.mxu0 0
        %1830 = vmatprep.subr.bf16.mxu0 0
        %1831 = vmatpush1.bf16.msra.mxu0 0
        %1832 = vmatprep.subr.bf16.mxu0 0
        %1833 = vmatpush1.bf16.msra.mxu0 0
        %1834 = vmatprep.subr.bf16.mxu0 0
        %1835 = vmatpush1.bf16.msra.mxu0 0
        %1836 = vmatprep.mubr.bf16.mxu0 0
        %1837 = vmatmul.mubr.bf16.gmra.mrb[0].mxu0 %v1724
        %v1838 = vpop.f32.mrb[0].mxu0
        %v1839 = vadd.f32 %v1534, %v1838
        %v1840 = vpop.f32.mrb[0].mxu0
        %v1841 = vpop.f32.mrb[0].mxu0
        %v1842 = vadd.f32 %v1537, %v1841
        %v1843 = vpop.f32.mrb[0].mxu0
        %1844 = vmatprep.mubr.bf16.mxu0 0
        %1845 = vmatmul.mubr.bf16.gmra.mrb[0].mxu0 %v1725
        %v1846 = vpop.f32.mrb[0].mxu0
        %v1847 = vadd.f32 %v1542, %v1846
        %v1848 = vpop.f32.mrb[0].mxu0
        %v1849 = vpop.f32.mrb[0].mxu0
        %v1850 = vadd.f32 %v1545, %v1849
        %v1851 = vpop.f32.mrb[0].mxu0
        %1852 = vmatprep.mubr.bf16.mxu0 0
        %1853 = vmatmul.mubr.bf16.gmra.mrb[0].mxu0 %v1726
        %v1854 = vpop.f32.mrb[0].mxu0
        %v1855 = vadd.f32 %v1550, %v1854
        %v1856 = vpop.f32.mrb[0].mxu0
        %v1857 = vpop.f32.mrb[0].mxu0
        %v1858 = vadd.f32 %v1553, %v1857
        %v1859 = vpop.f32.mrb[0].mxu0
        %1860 = vmatprep.mubr.bf16.mxu0 0
        %1861 = vmatmul.mubr.bf16.gmra.mrb[0].mxu0 %v1727
        %v1862 = vpop.f32.mrb[0].mxu0
        %v1863 = vadd.f32 %v1558, %v1862
        %v1864 = vpop.f32.mrb[0].mxu0
        %v1865 = vpop.f32.mrb[0].mxu0
        %v1866 = vadd.f32 %v1561, %v1865
        %v1867 = vpop.f32.mrb[0].mxu0
        %1868 = vmatprep.mubr.bf16.mxu0 0
        %1869 = vmatmul.mubr.bf16.gmra.mrb[0].mxu0 %v1728
        %v1870 = vpop.f32.mrb[0].mxu0
        %v1871 = vadd.f32 %v1566, %v1870
        %v1872 = vpop.f32.mrb[0].mxu0
        %v1873 = vpop.f32.mrb[0].mxu0
        %v1874 = vadd.f32 %v1569, %v1873
        %v1875 = vpop.f32.mrb[0].mxu0
        %1876 = vmatprep.mubr.bf16.mxu0 0
        %1877 = vmatmul.mubr.bf16.gmra.mrb[0].mxu0 %v1729
        %v1878 = vpop.f32.mrb[0].mxu0
        %v1879 = vadd.f32 %v1574, %v1878
        %v1880 = vpop.f32.mrb[0].mxu0
        %v1881 = vpop.f32.mrb[0].mxu0
        %v1882 = vadd.f32 %v1577, %v1881
        %v1883 = vpop.f32.mrb[0].mxu0
        %1884 = vmatprep.mubr.bf16.mxu0 0
        %1885 = vmatmul.mubr.bf16.gmra.mrb[0].mxu0 %v1730
        %v1886 = vpop.f32.mrb[0].mxu0
        %v1887 = vadd.f32 %v1582, %v1886
        %v1888 = vpop.f32.mrb[0].mxu0
        %v1889 = vpop.f32.mrb[0].mxu0
        %v1890 = vadd.f32 %v1585, %v1889
        %v1891 = vpop.f32.mrb[0].mxu0
        %1892 = vmatprep.mubr.bf16.mxu0 0
        %1893 = vmatmul.mubr.bf16.gmra.mrb[0].mxu0 %v1731
        %v1894 = vpop.f32.mrb[0].mxu0
        %v1895 = vadd.f32 %v1590, %v1894
        %v1896 = vpop.f32.mrb[0].mxu0
        %v1897 = vpop.f32.mrb[0].mxu0
        %v1898 = vadd.f32 %v1593, %v1897
        %v1899 = vpop.f32.mrb[0].mxu0
        %1900 = vmatprep.mubr.bf16.mxu0 0
        %1901 = vmatmul.mubr.bf16.gmra.mrb[0].mxu0 %v1732
        %v1902 = vpop.f32.mrb[0].mxu0
        %v1903 = vadd.f32 %v1598, %v1902
        %v1904 = vpop.f32.mrb[0].mxu0
        %v1905 = vpop.f32.mrb[0].mxu0
        %v1906 = vadd.f32 %v1601, %v1905
        %v1907 = vpop.f32.mrb[0].mxu0
        %1908 = vmatprep.mubr.bf16.mxu0 0
        %1909 = vmatmul.mubr.bf16.gmra.mrb[0].mxu0 %v1733
        %v1910 = vpop.f32.mrb[0].mxu0
        %v1911 = vadd.f32 %v1606, %v1910
        %v1912 = vpop.f32.mrb[0].mxu0
        %v1913 = vpop.f32.mrb[0].mxu0
        %v1914 = vadd.f32 %v1609, %v1913
        %v1915 = vpop.f32.mrb[0].mxu0
        %1916 = vmatprep.mubr.bf16.mxu0 0
        %1917 = vmatmul.mubr.bf16.gmra.mrb[0].mxu0 %v1734
        %v1918 = vpop.f32.mrb[0].mxu0
        %v1919 = vadd.f32 %v1614, %v1918
        %v1920 = vpop.f32.mrb[0].mxu0
        %v1921 = vpop.f32.mrb[0].mxu0
        %v1922 = vadd.f32 %v1617, %v1921
        %v1923 = vpop.f32.mrb[0].mxu0
        %1924 = vmatprep.mubr.bf16.mxu0 0
        %1925 = vmatmul.mubr.bf16.gmra.mrb[0].mxu0 %v1735
        %v1926 = vpop.f32.mrb[0].mxu0
        %v1927 = vadd.f32 %v1622, %v1926
        %v1928 = vpop.f32.mrb[0].mxu0
        %v1929 = vpop.f32.mrb[0].mxu0
        %v1930 = vadd.f32 %v1625, %v1929
        %v1931 = vpop.f32.mrb[0].mxu0
        %1932 = vmatprep.mubr.bf16.mxu0 0
        %1933 = vmatmul.mubr.bf16.gmra.mrb[0].mxu0 %v1736
        %v1934 = vpop.f32.mrb[0].mxu0
        %v1935 = vadd.f32 %v1630, %v1934
        %v1936 = vpop.f32.mrb[0].mxu0
        %v1937 = vpop.f32.mrb[0].mxu0
        %v1938 = vadd.f32 %v1633, %v1937
        %v1939 = vpop.f32.mrb[0].mxu0
        %1940 = vmatprep.mubr.bf16.mxu0 0
        %1941 = vmatmul.mubr.bf16.gmra.mrb[0].mxu0 %v1737
        %v1942 = vpop.f32.mrb[0].mxu0
        %v1943 = vadd.f32 %v1638, %v1942
        %v1944 = vpop.f32.mrb[0].mxu0
        %v1945 = vpop.f32.mrb[0].mxu0
        %v1946 = vadd.f32 %v1641, %v1945
        %v1947 = vpop.f32.mrb[0].mxu0
        %1948 = vmatprep.mubr.bf16.mxu0 0
        %1949 = vmatmul.mubr.bf16.gmra.mrb[0].mxu0 %v1738
        %v1950 = vpop.f32.mrb[0].mxu0
        %v1951 = vadd.f32 %v1646, %v1950
        %v1952 = vpop.f32.mrb[0].mxu0
        %v1953 = vpop.f32.mrb[0].mxu0
        %v1954 = vadd.f32 %v1649, %v1953
        %v1955 = vpop.f32.mrb[0].mxu0
        %1956 = vmatprep.mubr.bf16.mxu0 0
        %1957 = vmatmul.mubr.bf16.gmra.mrb[0].mxu0 %v1739
        %v1958 = vpop.f32.mrb[0].mxu0
        %v1959 = vadd.f32 %v1654, %v1958
        %v1960 = vpop.f32.mrb[0].mxu0
        %v1961 = vpop.f32.mrb[0].mxu0
        %v1962 = vadd.f32 %v1657, %v1961
        %v1963 = vpop.f32.mrb[0].mxu0
        %1964 = vdwg.mxu0
        %v1965 = vld [vmem:[#allocation2] sm:$0xe]
        %v1966 = vld [vmem:[#allocation2 + $0xc] sm:$0xe]
        %v1967 = vld [vmem:[#allocation2 + $0x18] sm:$0xe]
        %v1968 = vld [vmem:[#allocation2 + $0x24] sm:$0xe]
        %v1969 = vld [vmem:[#allocation2 + $0x30] sm:$0xe]
        %v1970 = vld [vmem:[#allocation2 + $0x3c] sm:$0xe]
        %v1971 = vld [vmem:[#allocation2 + $0x48] sm:$0xe]
        %v1972 = vld [vmem:[#allocation2 + $0x54] sm:$0xe]
        %v1973 = vld [vmem:[#allocation2 + $0x60] sm:$0xe]
        %v1974 = vld [vmem:[#allocation2 + $0x6c] sm:$0xe]
        %v1975 = vld [vmem:[#allocation2 + $0x78] sm:$0xe]
        %v1976 = vld [vmem:[#allocation2 + $0x84] sm:$0xe]
        %v1977 = vld [vmem:[#allocation2 + $0x90] sm:$0xe]
        %v1978 = vld [vmem:[#allocation2 + $0x9c] sm:$0xe]
        %v1979 = vld [vmem:[#allocation2 + $0xa8] sm:$0xe]
        %v1980 = vld [vmem:[#allocation2 + $0xb4] sm:$0xe]
        %vm2013 = vcmask 1042432
        %vm2014 = vcmask 1046532
        %vm2015 = vmor %vm2013, %vm2014
        %v2016 = vrot.slane %v1965, 5
        %v2017 = vrot.slane %v2016, 4
        %v2018 = vrot.slane %v920, 5
        %v2019 = vsel %vm2015, %v2017, %v2018
        %v2020 = vrot.slane %v2018, 4
        %v2021 = vrot.slane %v967, 5
        %v2022 = vsel %vm2015, %v2020, %v2021
        %v2023 = vrot.slane %v1966, 5
        %v2024 = vrot.slane %v2023, 4
        %v2025 = vrot.slane %v922, 5
        %v2026 = vsel %vm2015, %v2024, %v2025
        %v2027 = vrot.slane %v2025, 4
        %v2028 = vrot.slane %v968, 5
        %v2029 = vsel %vm2015, %v2027, %v2028
        %v2030 = vrot.slane %v1967, 5
        %v2031 = vrot.slane %v2030, 4
        %v2032 = vrot.slane %v924, 5
        %v2033 = vsel %vm2015, %v2031, %v2032
        %v2034 = vrot.slane %v2032, 4
        %v2035 = vrot.slane %v969, 5
        %v2036 = vsel %vm2015, %v2034, %v2035
        %v2037 = vrot.slane %v1968, 5
        %v2038 = vrot.slane %v2037, 4
        %v2039 = vrot.slane %v926, 5
        %v2040 = vsel %vm2015, %v2038, %v2039
        %v2041 = vrot.slane %v2039, 4
        %v2042 = vrot.slane %v970, 5
        %v2043 = vsel %vm2015, %v2041, %v2042
        %v2044 = vrot.slane %v1969, 5
        %v2045 = vrot.slane %v2044, 4
        %v2046 = vrot.slane %v928, 5
        %v2047 = vsel %vm2015, %v2045, %v2046
        %v2048 = vrot.slane %v2046, 4
        %v2049 = vrot.slane %v971, 5
        %v2050 = vsel %vm2015, %v2048, %v2049
        %v2051 = vrot.slane %v1970, 5
        %v2052 = vrot.slane %v2051, 4
        %v2053 = vrot.slane %v930, 5
        %v2054 = vsel %vm2015, %v2052, %v2053
        %v2055 = vrot.slane %v2053, 4
        %v2056 = vrot.slane %v972, 5
        %v2057 = vsel %vm2015, %v2055, %v2056
        %v2058 = vrot.slane %v1971, 5
        %v2059 = vrot.slane %v2058, 4
        %v2060 = vrot.slane %v932, 5
        %v2061 = vsel %vm2015, %v2059, %v2060
        %v2062 = vrot.slane %v2060, 4
        %v2063 = vrot.slane %v973, 5
        %v2064 = vsel %vm2015, %v2062, %v2063
        %v2065 = vrot.slane %v1972, 5
        %v2066 = vrot.slane %v2065, 4
        %v2067 = vrot.slane %v934, 5
        %v2068 = vsel %vm2015, %v2066, %v2067
        %v2069 = vrot.slane %v2067, 4
        %v2070 = vrot.slane %v974, 5
        %v2071 = vsel %vm2015, %v2069, %v2070
        %v2072 = vrot.slane %v1973, 5
        %v2073 = vrot.slane %v2072, 4
        %v2074 = vrot.slane %v936, 5
        %v2075 = vsel %vm2015, %v2073, %v2074
        %v2076 = vrot.slane %v2074, 4
        %v2077 = vrot.slane %v975, 5
        %v2078 = vsel %vm2015, %v2076, %v2077
        %v2079 = vrot.slane %v1974, 5
        %v2080 = vrot.slane %v2079, 4
        %v2081 = vrot.slane %v938, 5
        %v2082 = vsel %vm2015, %v2080, %v2081
        %v2083 = vrot.slane %v2081, 4
        %v2084 = vrot.slane %v976, 5
        %v2085 = vsel %vm2015, %v2083, %v2084
        %v2086 = vrot.slane %v1975, 5
        %v2087 = vrot.slane %v2086, 4
        %v2088 = vrot.slane %v940, 5
        %v2089 = vsel %vm2015, %v2087, %v2088
        %v2090 = vrot.slane %v2088, 4
        %v2091 = vrot.slane %v977, 5
        %v2092 = vsel %vm2015, %v2090, %v2091
        %v2093 = vrot.slane %v1976, 5
        %v2094 = vrot.slane %v2093, 4
        %v2095 = vrot.slane %v942, 5
        %v2096 = vsel %vm2015, %v2094, %v2095
        %v2097 = vrot.slane %v2095, 4
        %v2098 = vrot.slane %v978, 5
        %v2099 = vsel %vm2015, %v2097, %v2098
        %v2100 = vrot.slane %v1977, 5
        %v2101 = vrot.slane %v2100, 4
        %v2102 = vrot.slane %v944, 5
        %v2103 = vsel %vm2015, %v2101, %v2102
        %v2104 = vrot.slane %v2102, 4
        %v2105 = vrot.slane %v979, 5
        %v2106 = vsel %vm2015, %v2104, %v2105
        %v2107 = vrot.slane %v1978, 5
        %v2108 = vrot.slane %v2107, 4
        %v2109 = vrot.slane %v946, 5
        %v2110 = vsel %vm2015, %v2108, %v2109
        %v2111 = vrot.slane %v2109, 4
        %v2112 = vrot.slane %v980, 5
        %v2113 = vsel %vm2015, %v2111, %v2112
        %v2114 = vrot.slane %v1979, 5
        %v2115 = vrot.slane %v2114, 4
        %v2116 = vrot.slane %v948, 5
        %v2117 = vsel %vm2015, %v2115, %v2116
        %v2118 = vrot.slane %v2116, 4
        %v2119 = vrot.slane %v981, 5
        %v2120 = vsel %vm2015, %v2118, %v2119
        %v2121 = vrot.slane %v1980, 5
        %v2122 = vrot.slane %v2121, 4
        %v2123 = vrot.slane %v950, 5
        %v2124 = vsel %vm2015, %v2122, %v2123
        %v2125 = vrot.slane %v2123, 4
        %v2126 = vrot.slane %v982, 5
        %v2127 = vsel %vm2015, %v2125, %v2126
        %s2128 = scalar_lea.vmem %s1, 128
        %v2129 = vld [vmem:[%s2128] sm:$0xf]
        %v2130 = vld [vmem:[%s2128 + $0x4] sm:$0xf]
        %v2131 = vld [vmem:[%s2128 + $0x8] sm:$0xf]
        %v2132 = vld [vmem:[%s2128 + $0xc] sm:$0xf]
        %v2133 = vld [vmem:[%s2128 + $0x10] sm:$0xf]
        %v2134 = vld [vmem:[%s2128 + $0x14] sm:$0xf]
        %v2135 = vld [vmem:[%s2128 + $0x18] sm:$0xf]
        %v2136 = vld [vmem:[%s2128 + $0x1c] sm:$0xf]
        %v2137 = vld [vmem:[%s2128 + $0x20] sm:$0xf]
        %v2138 = vld [vmem:[%s2128 + $0x24] sm:$0xf]
        %v2139 = vld [vmem:[%s2128 + $0x28] sm:$0xf]
        %v2140 = vld [vmem:[%s2128 + $0x2c] sm:$0xf]
        %v2141 = vld [vmem:[%s2128 + $0x30] sm:$0xf]
        %v2142 = vld [vmem:[%s2128 + $0x34] sm:$0xf]
        %v2143 = vld [vmem:[%s2128 + $0x38] sm:$0xf]
        %v2144 = vld [vmem:[%s2128 + $0x3c] sm:$0xf]
        %v2145 = vunpack.c.l.b16 %v2019
        %v2146 = vunpack.c.l.b16 %v2022
        %v2147 = vunpack.c.l.b16 %v2026
        %v2148 = vunpack.c.l.b16 %v2029
        %v2149 = vunpack.c.l.b16 %v2033
        %v2150 = vunpack.c.l.b16 %v2036
        %v2151 = vunpack.c.l.b16 %v2040
        %v2152 = vunpack.c.l.b16 %v2043
        %v2153 = vunpack.c.l.b16 %v2047
        %v2154 = vunpack.c.l.b16 %v2050
        %v2155 = vunpack.c.l.b16 %v2054
        %v2156 = vunpack.c.l.b16 %v2057
        %v2157 = vunpack.c.l.b16 %v2061
        %v2158 = vunpack.c.l.b16 %v2064
        %v2159 = vunpack.c.l.b16 %v2068
        %v2160 = vunpack.c.l.b16 %v2071
        %v2161 = vunpack.c.l.b16 %v2075
        %v2162 = vunpack.c.l.b16 %v2078
        %v2163 = vunpack.c.l.b16 %v2082
        %v2164 = vunpack.c.l.b16 %v2085
        %v2165 = vunpack.c.l.b16 %v2089
        %v2166 = vunpack.c.l.b16 %v2092
        %v2167 = vunpack.c.l.b16 %v2096
        %v2168 = vunpack.c.l.b16 %v2099
        %v2169 = vunpack.c.l.b16 %v2103
        %v2170 = vunpack.c.l.b16 %v2106
        %v2171 = vunpack.c.l.b16 %v2110
        %v2172 = vunpack.c.l.b16 %v2113
        %v2173 = vunpack.c.l.b16 %v2117
        %v2174 = vunpack.c.l.b16 %v2120
        %v2175 = vunpack.c.l.b16 %v2124
        %v2176 = vunpack.c.l.b16 %v2127
        %v2177 = vpack.c.b16 %v2146, %v2145
        %v2178 = vpack.c.b16 %v2148, %v2147
        %v2179 = vpack.c.b16 %v2150, %v2149
        %v2180 = vpack.c.b16 %v2152, %v2151
        %v2181 = vpack.c.b16 %v2154, %v2153
        %v2182 = vpack.c.b16 %v2156, %v2155
        %v2183 = vpack.c.b16 %v2158, %v2157
        %v2184 = vpack.c.b16 %v2160, %v2159
        %v2185 = vpack.c.b16 %v2162, %v2161
        %v2186 = vpack.c.b16 %v2164, %v2163
        %v2187 = vpack.c.b16 %v2166, %v2165
        %v2188 = vpack.c.b16 %v2168, %v2167
        %v2189 = vpack.c.b16 %v2170, %v2169
        %v2190 = vpack.c.b16 %v2172, %v2171
        %v2191 = vpack.c.b16 %v2174, %v2173
        %v2192 = vpack.c.b16 %v2176, %v2175
        %v2225 = vunpack.c.l.b16 %v2129
        %v2226 = vunpack.c.l.b16 %v2130
        %v2227 = vunpack.c.l.b16 %v2131
        %v2228 = vunpack.c.l.b16 %v2132
        %v2229 = vunpack.c.l.b16 %v2133
        %v2230 = vunpack.c.l.b16 %v2134
        %v2231 = vunpack.c.l.b16 %v2135
        %v2232 = vunpack.c.l.b16 %v2136
        %v2233 = vunpack.c.l.b16 %v2137
        %v2234 = vunpack.c.l.b16 %v2138
        %v2235 = vunpack.c.l.b16 %v2139
        %v2236 = vunpack.c.l.b16 %v2140
        %v2237 = vunpack.c.l.b16 %v2141
        %v2238 = vunpack.c.l.b16 %v2142
        %v2239 = vunpack.c.l.b16 %v2143
        %v2240 = vunpack.c.l.b16 %v2144
        %v2241 = vpack.c.b16 %v2226, %v2225
        %v2242 = vpack.c.b16 %v2228, %v2227
        %v2243 = vpack.c.b16 %v2230, %v2229
        %v2244 = vpack.c.b16 %v2232, %v2231
        %v2245 = vpack.c.b16 %v2234, %v2233
        %v2246 = vpack.c.b16 %v2236, %v2235
        %v2247 = vpack.c.b16 %v2238, %v2237
        %v2248 = vpack.c.b16 %v2240, %v2239
        %2257 = vmatprep.subr.bf16.mxu0 0
        %2258 = vmatpush1.bf16.msra.mxu0 %v2241
        %2259 = vmatprep.subr.bf16.mxu0 0
        %2260 = vmatpush1.bf16.msra.mxu0 %v2242
        %2261 = vmatprep.subr.bf16.mxu0 0
        %2262 = vmatpush1.bf16.msra.mxu0 %v2243
        %2263 = vmatprep.subr.bf16.mxu0 0
        %2264 = vmatpush1.bf16.msra.mxu0 %v2244
        %2265 = vmatprep.subr.bf16.mxu0 0
        %2266 = vmatpush1.bf16.msra.mxu0 %v2245
        %2267 = vmatprep.subr.bf16.mxu0 0
        %2268 = vmatpush1.bf16.msra.mxu0 %v2246
        %2269 = vmatprep.subr.bf16.mxu0 0
        %2270 = vmatpush1.bf16.msra.mxu0 %v2247
        %2271 = vmatprep.subr.bf16.mxu0 0
        %2272 = vmatpush1.bf16.msra.mxu0 %v2248
        %2273 = vmatprep.subr.bf16.mxu0 0
        %2274 = vmatpush1.bf16.msra.mxu0 0
        %2275 = vmatprep.subr.bf16.mxu0 0
        %2276 = vmatpush1.bf16.msra.mxu0 0
        %2277 = vmatprep.subr.bf16.mxu0 0
        %2278 = vmatpush1.bf16.msra.mxu0 0
        %2279 = vmatprep.subr.bf16.mxu0 0
        %2280 = vmatpush1.bf16.msra.mxu0 0
        %2281 = vmatprep.subr.bf16.mxu0 0
        %2282 = vmatpush1.bf16.msra.mxu0 0
        %2283 = vmatprep.subr.bf16.mxu0 0
        %2284 = vmatpush1.bf16.msra.mxu0 0
        %2285 = vmatprep.subr.bf16.mxu0 0
        %2286 = vmatpush1.bf16.msra.mxu0 0
        %2287 = vmatprep.subr.bf16.mxu0 0
        %2288 = vmatpush1.bf16.msra.mxu0 0
        %2289 = vmatprep.mubr.bf16.mxu0 0
        %2290 = vmatmul.mubr.bf16.gmra.mrb[0].mxu0 %v2177
        %v2291 = vpop.f32.mrb[0].mxu0
        %v2292 = vadd.f32 0.0, %v2291
        %v2293 = vpop.f32.mrb[0].mxu0
        %v2294 = vpop.f32.mrb[0].mxu0
        %v2295 = vadd.f32 0.0, %v2294
        %v2296 = vpop.f32.mrb[0].mxu0
        %2297 = vmatprep.mubr.bf16.mxu0 0
        %2298 = vmatmul.mubr.bf16.gmra.mrb[0].mxu0 %v2178
        %v2299 = vpop.f32.mrb[0].mxu0
        %v2300 = vadd.f32 0.0, %v2299
        %v2301 = vpop.f32.mrb[0].mxu0
        %v2302 = vpop.f32.mrb[0].mxu0
        %v2303 = vadd.f32 0.0, %v2302
        %v2304 = vpop.f32.mrb[0].mxu0
        %2305 = vmatprep.mubr.bf16.mxu0 0
        %2306 = vmatmul.mubr.bf16.gmra.mrb[0].mxu0 %v2179
        %v2307 = vpop.f32.mrb[0].mxu0
        %v2308 = vadd.f32 0.0, %v2307
        %v2309 = vpop.f32.mrb[0].mxu0
        %v2310 = vpop.f32.mrb[0].mxu0
        %v2311 = vadd.f32 0.0, %v2310
        %v2312 = vpop.f32.mrb[0].mxu0
        %2313 = vmatprep.mubr.bf16.mxu0 0
        %2314 = vmatmul.mubr.bf16.gmra.mrb[0].mxu0 %v2180
        %v2315 = vpop.f32.mrb[0].mxu0
        %v2316 = vadd.f32 0.0, %v2315
        %v2317 = vpop.f32.mrb[0].mxu0
        %v2318 = vpop.f32.mrb[0].mxu0
        %v2319 = vadd.f32 0.0, %v2318
        %v2320 = vpop.f32.mrb[0].mxu0
        %2321 = vmatprep.mubr.bf16.mxu0 0
        %2322 = vmatmul.mubr.bf16.gmra.mrb[0].mxu0 %v2181
        %v2323 = vpop.f32.mrb[0].mxu0
        %v2324 = vadd.f32 0.0, %v2323
        %v2325 = vpop.f32.mrb[0].mxu0
        %v2326 = vpop.f32.mrb[0].mxu0
        %v2327 = vadd.f32 0.0, %v2326
        %v2328 = vpop.f32.mrb[0].mxu0
        %2329 = vmatprep.mubr.bf16.mxu0 0
        %2330 = vmatmul.mubr.bf16.gmra.mrb[0].mxu0 %v2182
        %v2331 = vpop.f32.mrb[0].mxu0
        %v2332 = vadd.f32 0.0, %v2331
        %v2333 = vpop.f32.mrb[0].mxu0
        %v2334 = vpop.f32.mrb[0].mxu0
        %v2335 = vadd.f32 0.0, %v2334
        %v2336 = vpop.f32.mrb[0].mxu0
        %2337 = vmatprep.mubr.bf16.mxu0 0
        %2338 = vmatmul.mubr.bf16.gmra.mrb[0].mxu0 %v2183
        %v2339 = vpop.f32.mrb[0].mxu0
        %v2340 = vadd.f32 0.0, %v2339
        %v2341 = vpop.f32.mrb[0].mxu0
        %v2342 = vpop.f32.mrb[0].mxu0
        %v2343 = vadd.f32 0.0, %v2342
        %v2344 = vpop.f32.mrb[0].mxu0
        %2345 = vmatprep.mubr.bf16.mxu0 0
        %2346 = vmatmul.mubr.bf16.gmra.mrb[0].mxu0 %v2184
        %v2347 = vpop.f32.mrb[0].mxu0
        %v2348 = vadd.f32 0.0, %v2347
        %v2349 = vpop.f32.mrb[0].mxu0
        %v2350 = vpop.f32.mrb[0].mxu0
        %v2351 = vadd.f32 0.0, %v2350
        %v2352 = vpop.f32.mrb[0].mxu0
        %2353 = vmatprep.mubr.bf16.mxu0 0
        %2354 = vmatmul.mubr.bf16.gmra.mrb[0].mxu0 %v2185
        %v2355 = vpop.f32.mrb[0].mxu0
        %v2356 = vadd.f32 0.0, %v2355
        %v2357 = vpop.f32.mrb[0].mxu0
        %v2358 = vpop.f32.mrb[0].mxu0
        %v2359 = vadd.f32 0.0, %v2358
        %v2360 = vpop.f32.mrb[0].mxu0
        %2361 = vmatprep.mubr.bf16.mxu0 0
        %2362 = vmatmul.mubr.bf16.gmra.mrb[0].mxu0 %v2186
        %v2363 = vpop.f32.mrb[0].mxu0
        %v2364 = vadd.f32 0.0, %v2363
        %v2365 = vpop.f32.mrb[0].mxu0
        %v2366 = vpop.f32.mrb[0].mxu0
        %v2367 = vadd.f32 0.0, %v2366
        %v2368 = vpop.f32.mrb[0].mxu0
        %2369 = vmatprep.mubr.bf16.mxu0 0
        %2370 = vmatmul.mubr.bf16.gmra.mrb[0].mxu0 %v2187
        %v2371 = vpop.f32.mrb[0].mxu0
        %v2372 = vadd.f32 0.0, %v2371
        %v2373 = vpop.f32.mrb[0].mxu0
        %v2374 = vpop.f32.mrb[0].mxu0
        %v2375 = vadd.f32 0.0, %v2374
        %v2376 = vpop.f32.mrb[0].mxu0
        %2377 = vmatprep.mubr.bf16.mxu0 0
        %2378 = vmatmul.mubr.bf16.gmra.mrb[0].mxu0 %v2188
        %v2379 = vpop.f32.mrb[0].mxu0
        %v2380 = vadd.f32 0.0, %v2379
        %v2381 = vpop.f32.mrb[0].mxu0
        %v2382 = vpop.f32.mrb[0].mxu0
        %v2383 = vadd.f32 0.0, %v2382
        %v2384 = vpop.f32.mrb[0].mxu0
        %2385 = vmatprep.mubr.bf16.mxu0 0
        %2386 = vmatmul.mubr.bf16.gmra.mrb[0].mxu0 %v2189
        %v2387 = vpop.f32.mrb[0].mxu0
        %v2388 = vadd.f32 0.0, %v2387
        %v2389 = vpop.f32.mrb[0].mxu0
        %v2390 = vpop.f32.mrb[0].mxu0
        %v2391 = vadd.f32 0.0, %v2390
        %v2392 = vpop.f32.mrb[0].mxu0
        %2393 = vmatprep.mubr.bf16.mxu0 0
        %2394 = vmatmul.mubr.bf16.gmra.mrb[0].mxu0 %v2190
        %v2395 = vpop.f32.mrb[0].mxu0
        %v2396 = vadd.f32 0.0, %v2395
        %v2397 = vpop.f32.mrb[0].mxu0
        %v2398 = vpop.f32.mrb[0].mxu0
        %v2399 = vadd.f32 0.0, %v2398
        %v2400 = vpop.f32.mrb[0].mxu0
        %2401 = vmatprep.mubr.bf16.mxu0 0
        %2402 = vmatmul.mubr.bf16.gmra.mrb[0].mxu0 %v2191
        %v2403 = vpop.f32.mrb[0].mxu0
        %v2404 = vadd.f32 0.0, %v2403
        %v2405 = vpop.f32.mrb[0].mxu0
        %v2406 = vpop.f32.mrb[0].mxu0
        %v2407 = vadd.f32 0.0, %v2406
        %v2408 = vpop.f32.mrb[0].mxu0
        %2409 = vmatprep.mubr.bf16.mxu0 0
        %2410 = vmatmul.mubr.bf16.gmra.mrb[0].mxu0 %v2192
        %v2411 = vpop.f32.mrb[0].mxu0
        %v2412 = vadd.f32 0.0, %v2411
        %v2413 = vpop.f32.mrb[0].mxu0
        %v2414 = vpop.f32.mrb[0].mxu0
        %v2415 = vadd.f32 0.0, %v2414
        %v2416 = vpop.f32.mrb[0].mxu0
        %2417 = vdwg.mxu0
        %v2418 = vadd.f32 %v1839, %v2292
        %v2419 = vadd.f32 %v1842, %v2295
        %v2420 = vadd.f32 %v1847, %v2300
        %v2421 = vadd.f32 %v1850, %v2303
        %v2422 = vadd.f32 %v1855, %v2308
        %v2423 = vadd.f32 %v1858, %v2311
        %v2424 = vadd.f32 %v1863, %v2316
        %v2425 = vadd.f32 %v1866, %v2319
        %v2426 = vadd.f32 %v1871, %v2324
        %v2427 = vadd.f32 %v1874, %v2327
        %v2428 = vadd.f32 %v1879, %v2332
        %v2429 = vadd.f32 %v1882, %v2335
        %v2430 = vadd.f32 %v1887, %v2340
        %v2431 = vadd.f32 %v1890, %v2343
        %v2432 = vadd.f32 %v1895, %v2348
        %v2433 = vadd.f32 %v1898, %v2351
        %v2434 = vadd.f32 %v1903, %v2356
        %v2435 = vadd.f32 %v1906, %v2359
        %v2436 = vadd.f32 %v1911, %v2364
        %v2437 = vadd.f32 %v1914, %v2367
        %v2438 = vadd.f32 %v1919, %v2372
        %v2439 = vadd.f32 %v1922, %v2375
        %v2440 = vadd.f32 %v1927, %v2380
        %v2441 = vadd.f32 %v1930, %v2383
        %v2442 = vadd.f32 %v1935, %v2388
        %v2443 = vadd.f32 %v1938, %v2391
        %v2444 = vadd.f32 %v1943, %v2396
        %v2445 = vadd.f32 %v1946, %v2399
        %v2446 = vadd.f32 %v1951, %v2404
        %v2447 = vadd.f32 %v1954, %v2407
        %v2448 = vadd.f32 %v1959, %v2412
        %v2449 = vadd.f32 %v1962, %v2415
        %s2450 = scalar_lea.vmem [#allocation2], 12
        %v2451 = vld [vmem:[%s2450] sm:$0xf]
        %v2452 = vld [vmem:[%s2450 + $0x4] sm:$0xf]
        %v2453 = vld [vmem:[%s2450 + $0xc] sm:$0xf]
        %v2454 = vld [vmem:[%s2450 + $0x10] sm:$0xf]
        %v2455 = vld [vmem:[%s2450 + $0x18] sm:$0xf]
        %v2456 = vld [vmem:[%s2450 + $0x1c] sm:$0xf]
        %v2457 = vld [vmem:[%s2450 + $0x24] sm:$0xf]
        %v2458 = vld [vmem:[%s2450 + $0x28] sm:$0xf]
        %v2459 = vld [vmem:[%s2450 + $0x30] sm:$0xf]
        %v2460 = vld [vmem:[%s2450 + $0x34] sm:$0xf]
        %v2461 = vld [vmem:[%s2450 + $0x3c] sm:$0xf]
        %v2462 = vld [vmem:[%s2450 + $0x40] sm:$0xf]
        %v2463 = vld [vmem:[%s2450 + $0x48] sm:$0xf]
        %v2464 = vld [vmem:[%s2450 + $0x4c] sm:$0xf]
        %v2465 = vld [vmem:[%s2450 + $0x54] sm:$0xf]
        %v2466 = vld [vmem:[%s2450 + $0x58] sm:$0xf]
        %v2467 = vld [vmem:[%s2450 + $0x60] sm:$0xf]
        %v2468 = vld [vmem:[%s2450 + $0x64] sm:$0xf]
        %v2469 = vld [vmem:[%s2450 + $0x6c] sm:$0xf]
        %v2470 = vld [vmem:[%s2450 + $0x70] sm:$0xf]
        %v2471 = vld [vmem:[%s2450 + $0x78] sm:$0xf]
        %v2472 = vld [vmem:[%s2450 + $0x7c] sm:$0xf]
        %v2473 = vld [vmem:[%s2450 + $0x84] sm:$0xf]
        %v2474 = vld [vmem:[%s2450 + $0x88] sm:$0xf]
        %v2475 = vld [vmem:[%s2450 + $0x90] sm:$0xf]
        %v2476 = vld [vmem:[%s2450 + $0x94] sm:$0xf]
        %v2477 = vld [vmem:[%s2450 + $0x9c] sm:$0xf]
        %v2478 = vld [vmem:[%s2450 + $0xa0] sm:$0xf]
        %v2479 = vld [vmem:[%s2450 + $0xa8] sm:$0xf]
        %v2480 = vld [vmem:[%s2450 + $0xac] sm:$0xf]
        %v2481 = vld [vmem:[%s2450 + $0xb4] sm:$0xf]
        %v2482 = vld [vmem:[%s2450 + $0xb8] sm:$0xf]
        %s2483 = scalar_lea.vmem %s1, 192
        %v2484 = vld [vmem:[%s2483] sm:$0xf]
        %v2485 = vld [vmem:[%s2483 + $0x4] sm:$0xf]
        %v2486 = vld [vmem:[%s2483 + $0x8] sm:$0xf]
        %v2487 = vld [vmem:[%s2483 + $0xc] sm:$0xf]
        %v2488 = vld [vmem:[%s2483 + $0x10] sm:$0xf]
        %v2489 = vld [vmem:[%s2483 + $0x14] sm:$0xf]
        %v2490 = vld [vmem:[%s2483 + $0x18] sm:$0xf]
        %v2491 = vld [vmem:[%s2483 + $0x1c] sm:$0xf]
        %v2492 = vld [vmem:[%s2483 + $0x20] sm:$0xf]
        %v2493 = vld [vmem:[%s2483 + $0x24] sm:$0xf]
        %v2494 = vld [vmem:[%s2483 + $0x28] sm:$0xf]
        %v2495 = vld [vmem:[%s2483 + $0x2c] sm:$0xf]
        %v2496 = vld [vmem:[%s2483 + $0x30] sm:$0xf]
        %v2497 = vld [vmem:[%s2483 + $0x34] sm:$0xf]
        %v2498 = vld [vmem:[%s2483 + $0x38] sm:$0xf]
        %v2499 = vld [vmem:[%s2483 + $0x3c] sm:$0xf]
        %v2532 = vunpack.c.l.b16 %v2451
        %v2533 = vunpack.c.l.b16 %v2452
        %v2534 = vunpack.c.l.b16 %v2453
        %v2535 = vunpack.c.l.b16 %v2454
        %v2536 = vunpack.c.l.b16 %v2455
        %v2537 = vunpack.c.l.b16 %v2456
        %v2538 = vunpack.c.l.b16 %v2457
        %v2539 = vunpack.c.l.b16 %v2458
        %v2540 = vunpack.c.l.b16 %v2459
        %v2541 = vunpack.c.l.b16 %v2460
        %v2542 = vunpack.c.l.b16 %v2461
        %v2543 = vunpack.c.l.b16 %v2462
        %v2544 = vunpack.c.l.b16 %v2463
        %v2545 = vunpack.c.l.b16 %v2464
        %v2546 = vunpack.c.l.b16 %v2465
        %v2547 = vunpack.c.l.b16 %v2466
        %v2548 = vunpack.c.l.b16 %v2467
        %v2549 = vunpack.c.l.b16 %v2468
        %v2550 = vunpack.c.l.b16 %v2469
        %v2551 = vunpack.c.l.b16 %v2470
        %v2552 = vunpack.c.l.b16 %v2471
        %v2553 = vunpack.c.l.b16 %v2472
        %v2554 = vunpack.c.l.b16 %v2473
        %v2555 = vunpack.c.l.b16 %v2474
        %v2556 = vunpack.c.l.b16 %v2475
        %v2557 = vunpack.c.l.b16 %v2476
        %v2558 = vunpack.c.l.b16 %v2477
        %v2559 = vunpack.c.l.b16 %v2478
        %v2560 = vunpack.c.l.b16 %v2479
        %v2561 = vunpack.c.l.b16 %v2480
        %v2562 = vunpack.c.l.b16 %v2481
        %v2563 = vunpack.c.l.b16 %v2482
        %v2564 = vpack.c.b16 %v2533, %v2532
        %v2565 = vpack.c.b16 %v2535, %v2534
        %v2566 = vpack.c.b16 %v2537, %v2536
        %v2567 = vpack.c.b16 %v2539, %v2538
        %v2568 = vpack.c.b16 %v2541, %v2540
        %v2569 = vpack.c.b16 %v2543, %v2542
        %v2570 = vpack.c.b16 %v2545, %v2544
        %v2571 = vpack.c.b16 %v2547, %v2546
        %v2572 = vpack.c.b16 %v2549, %v2548
        %v2573 = vpack.c.b16 %v2551, %v2550
        %v2574 = vpack.c.b16 %v2553, %v2552
        %v2575 = vpack.c.b16 %v2555, %v2554
        %v2576 = vpack.c.b16 %v2557, %v2556
        %v2577 = vpack.c.b16 %v2559, %v2558
        %v2578 = vpack.c.b16 %v2561, %v2560
        %v2579 = vpack.c.b16 %v2563, %v2562
        %v2612 = vunpack.c.l.b16 %v2484
        %v2613 = vunpack.c.l.b16 %v2485
        %v2614 = vunpack.c.l.b16 %v2486
        %v2615 = vunpack.c.l.b16 %v2487
        %v2616 = vunpack.c.l.b16 %v2488
        %v2617 = vunpack.c.l.b16 %v2489
        %v2618 = vunpack.c.l.b16 %v2490
        %v2619 = vunpack.c.l.b16 %v2491
        %v2620 = vunpack.c.l.b16 %v2492
        %v2621 = vunpack.c.l.b16 %v2493
        %v2622 = vunpack.c.l.b16 %v2494
        %v2623 = vunpack.c.l.b16 %v2495
        %v2624 = vunpack.c.l.b16 %v2496
        %v2625 = vunpack.c.l.b16 %v2497
        %v2626 = vunpack.c.l.b16 %v2498
        %v2627 = vunpack.c.l.b16 %v2499
        %v2628 = vpack.c.b16 %v2613, %v2612
        %v2629 = vpack.c.b16 %v2615, %v2614
        %v2630 = vpack.c.b16 %v2617, %v2616
        %v2631 = vpack.c.b16 %v2619, %v2618
        %v2632 = vpack.c.b16 %v2621, %v2620
        %v2633 = vpack.c.b16 %v2623, %v2622
        %v2634 = vpack.c.b16 %v2625, %v2624
        %v2635 = vpack.c.b16 %v2627, %v2626
        %2644 = vmatprep.subr.bf16.mxu0 0
        %2645 = vmatpush1.bf16.msra.mxu0 %v2628
        %2646 = vmatprep.subr.bf16.mxu0 0
        %2647 = vmatpush1.bf16.msra.mxu0 %v2629
        %2648 = vmatprep.subr.bf16.mxu0 0
        %2649 = vmatpush1.bf16.msra.mxu0 %v2630
        %2650 = vmatprep.subr.bf16.mxu0 0
        %2651 = vmatpush1.bf16.msra.mxu0 %v2631
        %2652 = vmatprep.subr.bf16.mxu0 0
        %2653 = vmatpush1.bf16.msra.mxu0 %v2632
        %2654 = vmatprep.subr.bf16.mxu0 0
        %2655 = vmatpush1.bf16.msra.mxu0 %v2633
        %2656 = vmatprep.subr.bf16.mxu0 0
        %2657 = vmatpush1.bf16.msra.mxu0 %v2634
        %2658 = vmatprep.subr.bf16.mxu0 0
        %2659 = vmatpush1.bf16.msra.mxu0 %v2635
        %2660 = vmatprep.subr.bf16.mxu0 0
        %2661 = vmatpush1.bf16.msra.mxu0 0
        %2662 = vmatprep.subr.bf16.mxu0 0
        %2663 = vmatpush1.bf16.msra.mxu0 0
        %2664 = vmatprep.subr.bf16.mxu0 0
        %2665 = vmatpush1.bf16.msra.mxu0 0
        %2666 = vmatprep.subr.bf16.mxu0 0
        %2667 = vmatpush1.bf16.msra.mxu0 0
        %2668 = vmatprep.subr.bf16.mxu0 0
        %2669 = vmatpush1.bf16.msra.mxu0 0
        %2670 = vmatprep.subr.bf16.mxu0 0
        %2671 = vmatpush1.bf16.msra.mxu0 0
        %2672 = vmatprep.subr.bf16.mxu0 0
        %2673 = vmatpush1.bf16.msra.mxu0 0
        %2674 = vmatprep.subr.bf16.mxu0 0
        %2675 = vmatpush1.bf16.msra.mxu0 0
        %2676 = vmatprep.mubr.bf16.mxu0 0
        %2677 = vmatmul.mubr.bf16.gmra.mrb[0].mxu0 %v2564
        %v2678 = vpop.f32.mrb[0].mxu0
        %v2679 = vadd.f32 0.0, %v2678
        %v2680 = vpop.f32.mrb[0].mxu0
        %v2681 = vpop.f32.mrb[0].mxu0
        %v2682 = vadd.f32 0.0, %v2681
        %v2683 = vpop.f32.mrb[0].mxu0
        %2684 = vmatprep.mubr.bf16.mxu0 0
        %2685 = vmatmul.mubr.bf16.gmra.mrb[0].mxu0 %v2565
        %v2686 = vpop.f32.mrb[0].mxu0
        %v2687 = vadd.f32 0.0, %v2686
        %v2688 = vpop.f32.mrb[0].mxu0
        %v2689 = vpop.f32.mrb[0].mxu0
        %v2690 = vadd.f32 0.0, %v2689
        %v2691 = vpop.f32.mrb[0].mxu0
        %2692 = vmatprep.mubr.bf16.mxu0 0
        %2693 = vmatmul.mubr.bf16.gmra.mrb[0].mxu0 %v2566
        %v2694 = vpop.f32.mrb[0].mxu0
        %v2695 = vadd.f32 0.0, %v2694
        %v2696 = vpop.f32.mrb[0].mxu0
        %v2697 = vpop.f32.mrb[0].mxu0
        %v2698 = vadd.f32 0.0, %v2697
        %v2699 = vpop.f32.mrb[0].mxu0
        %2700 = vmatprep.mubr.bf16.mxu0 0
        %2701 = vmatmul.mubr.bf16.gmra.mrb[0].mxu0 %v2567
        %v2702 = vpop.f32.mrb[0].mxu0
        %v2703 = vadd.f32 0.0, %v2702
        %v2704 = vpop.f32.mrb[0].mxu0
        %v2705 = vpop.f32.mrb[0].mxu0
        %v2706 = vadd.f32 0.0, %v2705
        %v2707 = vpop.f32.mrb[0].mxu0
        %2708 = vmatprep.mubr.bf16.mxu0 0
        %2709 = vmatmul.mubr.bf16.gmra.mrb[0].mxu0 %v2568
        %v2710 = vpop.f32.mrb[0].mxu0
        %v2711 = vadd.f32 0.0, %v2710
        %v2712 = vpop.f32.mrb[0].mxu0
        %v2713 = vpop.f32.mrb[0].mxu0
        %v2714 = vadd.f32 0.0, %v2713
        %v2715 = vpop.f32.mrb[0].mxu0
        %2716 = vmatprep.mubr.bf16.mxu0 0
        %2717 = vmatmul.mubr.bf16.gmra.mrb[0].mxu0 %v2569
        %v2718 = vpop.f32.mrb[0].mxu0
        %v2719 = vadd.f32 0.0, %v2718
        %v2720 = vpop.f32.mrb[0].mxu0
        %v2721 = vpop.f32.mrb[0].mxu0
        %v2722 = vadd.f32 0.0, %v2721
        %v2723 = vpop.f32.mrb[0].mxu0
        %2724 = vmatprep.mubr.bf16.mxu0 0
        %2725 = vmatmul.mubr.bf16.gmra.mrb[0].mxu0 %v2570
        %v2726 = vpop.f32.mrb[0].mxu0
        %v2727 = vadd.f32 0.0, %v2726
        %v2728 = vpop.f32.mrb[0].mxu0
        %v2729 = vpop.f32.mrb[0].mxu0
        %v2730 = vadd.f32 0.0, %v2729
        %v2731 = vpop.f32.mrb[0].mxu0
        %2732 = vmatprep.mubr.bf16.mxu0 0
        %2733 = vmatmul.mubr.bf16.gmra.mrb[0].mxu0 %v2571
        %v2734 = vpop.f32.mrb[0].mxu0
        %v2735 = vadd.f32 0.0, %v2734
        %v2736 = vpop.f32.mrb[0].mxu0
        %v2737 = vpop.f32.mrb[0].mxu0
        %v2738 = vadd.f32 0.0, %v2737
        %v2739 = vpop.f32.mrb[0].mxu0
        %2740 = vmatprep.mubr.bf16.mxu0 0
        %2741 = vmatmul.mubr.bf16.gmra.mrb[0].mxu0 %v2572
        %v2742 = vpop.f32.mrb[0].mxu0
        %v2743 = vadd.f32 0.0, %v2742
        %v2744 = vpop.f32.mrb[0].mxu0
        %v2745 = vpop.f32.mrb[0].mxu0
        %v2746 = vadd.f32 0.0, %v2745
        %v2747 = vpop.f32.mrb[0].mxu0
        %2748 = vmatprep.mubr.bf16.mxu0 0
        %2749 = vmatmul.mubr.bf16.gmra.mrb[0].mxu0 %v2573
        %v2750 = vpop.f32.mrb[0].mxu0
        %v2751 = vadd.f32 0.0, %v2750
        %v2752 = vpop.f32.mrb[0].mxu0
        %v2753 = vpop.f32.mrb[0].mxu0
        %v2754 = vadd.f32 0.0, %v2753
        %v2755 = vpop.f32.mrb[0].mxu0
        %2756 = vmatprep.mubr.bf16.mxu0 0
        %2757 = vmatmul.mubr.bf16.gmra.mrb[0].mxu0 %v2574
        %v2758 = vpop.f32.mrb[0].mxu0
        %v2759 = vadd.f32 0.0, %v2758
        %v2760 = vpop.f32.mrb[0].mxu0
        %v2761 = vpop.f32.mrb[0].mxu0
        %v2762 = vadd.f32 0.0, %v2761
        %v2763 = vpop.f32.mrb[0].mxu0
        %2764 = vmatprep.mubr.bf16.mxu0 0
        %2765 = vmatmul.mubr.bf16.gmra.mrb[0].mxu0 %v2575
        %v2766 = vpop.f32.mrb[0].mxu0
        %v2767 = vadd.f32 0.0, %v2766
        %v2768 = vpop.f32.mrb[0].mxu0
        %v2769 = vpop.f32.mrb[0].mxu0
        %v2770 = vadd.f32 0.0, %v2769
        %v2771 = vpop.f32.mrb[0].mxu0
        %2772 = vmatprep.mubr.bf16.mxu0 0
        %2773 = vmatmul.mubr.bf16.gmra.mrb[0].mxu0 %v2576
        %v2774 = vpop.f32.mrb[0].mxu0
        %v2775 = vadd.f32 0.0, %v2774
        %v2776 = vpop.f32.mrb[0].mxu0
        %v2777 = vpop.f32.mrb[0].mxu0
        %v2778 = vadd.f32 0.0, %v2777
        %v2779 = vpop.f32.mrb[0].mxu0
        %2780 = vmatprep.mubr.bf16.mxu0 0
        %2781 = vmatmul.mubr.bf16.gmra.mrb[0].mxu0 %v2577
        %v2782 = vpop.f32.mrb[0].mxu0
        %v2783 = vadd.f32 0.0, %v2782
        %v2784 = vpop.f32.mrb[0].mxu0
        %v2785 = vpop.f32.mrb[0].mxu0
        %v2786 = vadd.f32 0.0, %v2785
        %v2787 = vpop.f32.mrb[0].mxu0
        %2788 = vmatprep.mubr.bf16.mxu0 0
        %2789 = vmatmul.mubr.bf16.gmra.mrb[0].mxu0 %v2578
        %v2790 = vpop.f32.mrb[0].mxu0
        %v2791 = vadd.f32 0.0, %v2790
        %v2792 = vpop.f32.mrb[0].mxu0
        %v2793 = vpop.f32.mrb[0].mxu0
        %v2794 = vadd.f32 0.0, %v2793
        %v2795 = vpop.f32.mrb[0].mxu0
        %2796 = vmatprep.mubr.bf16.mxu0 0
        %2797 = vmatmul.mubr.bf16.gmra.mrb[0].mxu0 %v2579
        %v2798 = vpop.f32.mrb[0].mxu0
        %v2799 = vadd.f32 0.0, %v2798
        %v2800 = vpop.f32.mrb[0].mxu0
        %v2801 = vpop.f32.mrb[0].mxu0
        %v2802 = vadd.f32 0.0, %v2801
        %v2803 = vpop.f32.mrb[0].mxu0
        %2804 = vdwg.mxu0
        %v2805 = vadd.f32 %v2418, %v2679
        %v2806 = vadd.f32 %v2419, %v2682
        %v2807 = vadd.f32 %v2420, %v2687
        %v2808 = vadd.f32 %v2421, %v2690
        %v2809 = vadd.f32 %v2422, %v2695
        %v2810 = vadd.f32 %v2423, %v2698
        %v2811 = vadd.f32 %v2424, %v2703
        %v2812 = vadd.f32 %v2425, %v2706
        %v2813 = vadd.f32 %v2426, %v2711
        %v2814 = vadd.f32 %v2427, %v2714
        %v2815 = vadd.f32 %v2428, %v2719
        %v2816 = vadd.f32 %v2429, %v2722
        %v2817 = vadd.f32 %v2430, %v2727
        %v2818 = vadd.f32 %v2431, %v2730
        %v2819 = vadd.f32 %v2432, %v2735
        %v2820 = vadd.f32 %v2433, %v2738
        %v2821 = vadd.f32 %v2434, %v2743
        %v2822 = vadd.f32 %v2435, %v2746
        %v2823 = vadd.f32 %v2436, %v2751
        %v2824 = vadd.f32 %v2437, %v2754
        %v2825 = vadd.f32 %v2438, %v2759
        %v2826 = vadd.f32 %v2439, %v2762
        %v2827 = vadd.f32 %v2440, %v2767
        %v2828 = vadd.f32 %v2441, %v2770
        %v2829 = vadd.f32 %v2442, %v2775
        %v2830 = vadd.f32 %v2443, %v2778
        %v2831 = vadd.f32 %v2444, %v2783
        %v2832 = vadd.f32 %v2445, %v2786
        %v2833 = vadd.f32 %v2446, %v2791
        %v2834 = vadd.f32 %v2447, %v2794
        %v2835 = vadd.f32 %v2448, %v2799
        %v2836 = vadd.f32 %v2449, %v2802
        %v2837 = vld [vmem:[%s2450] sm:$0xf]
        %v2838 = vld [vmem:[%s2450 + $0x4] sm:$0xf]
        %v2839 = vld [vmem:[%s2450 + $0x8] sm:$0x1]
        %v2840 = vld [vmem:[%s2450 + $0xc] sm:$0xf]
        %v2841 = vld [vmem:[%s2450 + $0x10] sm:$0xf]
        %v2842 = vld [vmem:[%s2450 + $0x14] sm:$0x1]
        %v2843 = vld [vmem:[%s2450 + $0x18] sm:$0xf]
        %v2844 = vld [vmem:[%s2450 + $0x1c] sm:$0xf]
        %v2845 = vld [vmem:[%s2450 + $0x20] sm:$0x1]
        %v2846 = vld [vmem:[%s2450 + $0x24] sm:$0xf]
        %v2847 = vld [vmem:[%s2450 + $0x28] sm:$0xf]
        %v2848 = vld [vmem:[%s2450 + $0x2c] sm:$0x1]
        %v2849 = vld [vmem:[%s2450 + $0x30] sm:$0xf]
        %v2850 = vld [vmem:[%s2450 + $0x34] sm:$0xf]
        %v2851 = vld [vmem:[%s2450 + $0x38] sm:$0x1]
        %v2852 = vld [vmem:[%s2450 + $0x3c] sm:$0xf]
        %v2853 = vld [vmem:[%s2450 + $0x40] sm:$0xf]
        %v2854 = vld [vmem:[%s2450 + $0x44] sm:$0x1]
        %v2855 = vld [vmem:[%s2450 + $0x48] sm:$0xf]
        %v2856 = vld [vmem:[%s2450 + $0x4c] sm:$0xf]
        %v2857 = vld [vmem:[%s2450 + $0x50] sm:$0x1]
        %v2858 = vld [vmem:[%s2450 + $0x54] sm:$0xf]
        %v2859 = vld [vmem:[%s2450 + $0x58] sm:$0xf]
        %v2860 = vld [vmem:[%s2450 + $0x5c] sm:$0x1]
        %v2861 = vld [vmem:[%s2450 + $0x60] sm:$0xf]
        %v2862 = vld [vmem:[%s2450 + $0x64] sm:$0xf]
        %v2863 = vld [vmem:[%s2450 + $0x68] sm:$0x1]
        %v2864 = vld [vmem:[%s2450 + $0x6c] sm:$0xf]
        %v2865 = vld [vmem:[%s2450 + $0x70] sm:$0xf]
        %v2866 = vld [vmem:[%s2450 + $0x74] sm:$0x1]
        %v2867 = vld [vmem:[%s2450 + $0x78] sm:$0xf]
        %v2868 = vld [vmem:[%s2450 + $0x7c] sm:$0xf]
        %v2869 = vld [vmem:[%s2450 + $0x80] sm:$0x1]
        %v2870 = vld [vmem:[%s2450 + $0x84] sm:$0xf]
        %v2871 = vld [vmem:[%s2450 + $0x88] sm:$0xf]
        %v2872 = vld [vmem:[%s2450 + $0x8c] sm:$0x1]
        %v2873 = vld [vmem:[%s2450 + $0x90] sm:$0xf]
        %v2874 = vld [vmem:[%s2450 + $0x94] sm:$0xf]
        %v2875 = vld [vmem:[%s2450 + $0x98] sm:$0x1]
        %v2876 = vld [vmem:[%s2450 + $0x9c] sm:$0xf]
        %v2877 = vld [vmem:[%s2450 + $0xa0] sm:$0xf]
        %v2878 = vld [vmem:[%s2450 + $0xa4] sm:$0x1]
        %v2879 = vld [vmem:[%s2450 + $0xa8] sm:$0xf]
        %v2880 = vld [vmem:[%s2450 + $0xac] sm:$0xf]
        %v2881 = vld [vmem:[%s2450 + $0xb0] sm:$0x1]
        %v2882 = vld [vmem:[%s2450 + $0xb4] sm:$0xf]
        %v2883 = vld [vmem:[%s2450 + $0xb8] sm:$0xf]
        %v2884 = vld [vmem:[%s2450 + $0xbc] sm:$0x1]
        %v2886 = vshrl.u32 %v2837, 16
        %v2888 = vrot.slane %v2886, 4
        %v2889 = vshll.u32 %v2837, 16
        %v2891 = vrot.slane %v2889, 5
        %v2892 = vor.u32 %v2888, %v2891
        %v2893 = vrot.slane %v2892, 4
        %v2895 = vshll.u32 %v2838, 16
        %v2897 = vrot.slane %v2895, 5
        %v2898 = vsel %vm985, %v2893, %v2897
        %v2899 = vshrl.u32 %v2838, 16
        %v2901 = vrot.slane %v2899, 4
        %v2902 = vor.u32 %v2901, %v2897
        %v2903 = vrot.slane %v2902, 4
        %v2905 = vshll.u32 %v2839, 16
        %v2907 = vrot.slane %v2905, 5
        %v2908 = vsel %vm985, %v2903, %v2907
        %v2910 = vshrl.u32 %v2840, 16
        %v2912 = vrot.slane %v2910, 4
        %v2913 = vshll.u32 %v2840, 16
        %v2915 = vrot.slane %v2913, 5
        %v2916 = vor.u32 %v2912, %v2915
        %v2917 = vrot.slane %v2916, 4
        %v2919 = vshll.u32 %v2841, 16
        %v2921 = vrot.slane %v2919, 5
        %v2922 = vsel %vm985, %v2917, %v2921
        %v2923 = vshrl.u32 %v2841, 16
        %v2925 = vrot.slane %v2923, 4
        %v2926 = vor.u32 %v2925, %v2921
        %v2927 = vrot.slane %v2926, 4
        %v2929 = vshll.u32 %v2842, 16
        %v2931 = vrot.slane %v2929, 5
        %v2932 = vsel %vm985, %v2927, %v2931
        %v2934 = vshrl.u32 %v2843, 16
        %v2936 = vrot.slane %v2934, 4
        %v2937 = vshll.u32 %v2843, 16
        %v2939 = vrot.slane %v2937, 5
        %v2940 = vor.u32 %v2936, %v2939
        %v2941 = vrot.slane %v2940, 4
        %v2943 = vshll.u32 %v2844, 16
        %v2945 = vrot.slane %v2943, 5
        %v2946 = vsel %vm985, %v2941, %v2945
        %v2947 = vshrl.u32 %v2844, 16
        %v2949 = vrot.slane %v2947, 4
        %v2950 = vor.u32 %v2949, %v2945
        %v2951 = vrot.slane %v2950, 4
        %v2953 = vshll.u32 %v2845, 16
        %v2955 = vrot.slane %v2953, 5
        %v2956 = vsel %vm985, %v2951, %v2955
        %v2958 = vshrl.u32 %v2846, 16
        %v2960 = vrot.slane %v2958, 4
        %v2961 = vshll.u32 %v2846, 16
        %v2963 = vrot.slane %v2961, 5
        %v2964 = vor.u32 %v2960, %v2963
        %v2965 = vrot.slane %v2964, 4
        %v2967 = vshll.u32 %v2847, 16
        %v2969 = vrot.slane %v2967, 5
        %v2970 = vsel %vm985, %v2965, %v2969
        %v2971 = vshrl.u32 %v2847, 16
        %v2973 = vrot.slane %v2971, 4
        %v2974 = vor.u32 %v2973, %v2969
        %v2975 = vrot.slane %v2974, 4
        %v2977 = vshll.u32 %v2848, 16
        %v2979 = vrot.slane %v2977, 5
        %v2980 = vsel %vm985, %v2975, %v2979
        %v2982 = vshrl.u32 %v2849, 16
        %v2984 = vrot.slane %v2982, 4
        %v2985 = vshll.u32 %v2849, 16
        %v2987 = vrot.slane %v2985, 5
        %v2988 = vor.u32 %v2984, %v2987
        %v2989 = vrot.slane %v2988, 4
        %v2991 = vshll.u32 %v2850, 16
        %v2993 = vrot.slane %v2991, 5
        %v2994 = vsel %vm985, %v2989, %v2993
        %v2995 = vshrl.u32 %v2850, 16
        %v2997 = vrot.slane %v2995, 4
        %v2998 = vor.u32 %v2997, %v2993
        %v2999 = vrot.slane %v2998, 4
        %v3001 = vshll.u32 %v2851, 16
        %v3003 = vrot.slane %v3001, 5
        %v3004 = vsel %vm985, %v2999, %v3003
        %v3006 = vshrl.u32 %v2852, 16
        %v3008 = vrot.slane %v3006, 4
        %v3009 = vshll.u32 %v2852, 16
        %v3011 = vrot.slane %v3009, 5
        %v3012 = vor.u32 %v3008, %v3011
        %v3013 = vrot.slane %v3012, 4
        %v3015 = vshll.u32 %v2853, 16
        %v3017 = vrot.slane %v3015, 5
        %v3018 = vsel %vm985, %v3013, %v3017
        %v3019 = vshrl.u32 %v2853, 16
        %v3021 = vrot.slane %v3019, 4
        %v3022 = vor.u32 %v3021, %v3017
        %v3023 = vrot.slane %v3022, 4
        %v3025 = vshll.u32 %v2854, 16
        %v3027 = vrot.slane %v3025, 5
        %v3028 = vsel %vm985, %v3023, %v3027
        %v3030 = vshrl.u32 %v2855, 16
        %v3032 = vrot.slane %v3030, 4
        %v3033 = vshll.u32 %v2855, 16
        %v3035 = vrot.slane %v3033, 5
        %v3036 = vor.u32 %v3032, %v3035
        %v3037 = vrot.slane %v3036, 4
        %v3039 = vshll.u32 %v2856, 16
        %v3041 = vrot.slane %v3039, 5
        %v3042 = vsel %vm985, %v3037, %v3041
        %v3043 = vshrl.u32 %v2856, 16
        %v3045 = vrot.slane %v3043, 4
        %v3046 = vor.u32 %v3045, %v3041
        %v3047 = vrot.slane %v3046, 4
        %v3049 = vshll.u32 %v2857, 16
        %v3051 = vrot.slane %v3049, 5
        %v3052 = vsel %vm985, %v3047, %v3051
        %v3054 = vshrl.u32 %v2858, 16
        %v3056 = vrot.slane %v3054, 4
        %v3057 = vshll.u32 %v2858, 16
        %v3059 = vrot.slane %v3057, 5
        %v3060 = vor.u32 %v3056, %v3059
        %v3061 = vrot.slane %v3060, 4
        %v3063 = vshll.u32 %v2859, 16
        %v3065 = vrot.slane %v3063, 5
        %v3066 = vsel %vm985, %v3061, %v3065
        %v3067 = vshrl.u32 %v2859, 16
        %v3069 = vrot.slane %v3067, 4
        %v3070 = vor.u32 %v3069, %v3065
        %v3071 = vrot.slane %v3070, 4
        %v3073 = vshll.u32 %v2860, 16
        %v3075 = vrot.slane %v3073, 5
        %v3076 = vsel %vm985, %v3071, %v3075
        %v3078 = vshrl.u32 %v2861, 16
        %v3080 = vrot.slane %v3078, 4
        %v3081 = vshll.u32 %v2861, 16
        %v3083 = vrot.slane %v3081, 5
        %v3084 = vor.u32 %v3080, %v3083
        %v3085 = vrot.slane %v3084, 4
        %v3087 = vshll.u32 %v2862, 16
        %v3089 = vrot.slane %v3087, 5
        %v3090 = vsel %vm985, %v3085, %v3089
        %v3091 = vshrl.u32 %v2862, 16
        %v3093 = vrot.slane %v3091, 4
        %v3094 = vor.u32 %v3093, %v3089
        %v3095 = vrot.slane %v3094, 4
        %v3097 = vshll.u32 %v2863, 16
        %v3099 = vrot.slane %v3097, 5
        %v3100 = vsel %vm985, %v3095, %v3099
        %v3102 = vshrl.u32 %v2864, 16
        %v3104 = vrot.slane %v3102, 4
        %v3105 = vshll.u32 %v2864, 16
        %v3107 = vrot.slane %v3105, 5
        %v3108 = vor.u32 %v3104, %v3107
        %v3109 = vrot.slane %v3108, 4
        %v3111 = vshll.u32 %v2865, 16
        %v3113 = vrot.slane %v3111, 5
        %v3114 = vsel %vm985, %v3109, %v3113
        %v3115 = vshrl.u32 %v2865, 16
        %v3117 = vrot.slane %v3115, 4
        %v3118 = vor.u32 %v3117, %v3113
        %v3119 = vrot.slane %v3118, 4
        %v3121 = vshll.u32 %v2866, 16
        %v3123 = vrot.slane %v3121, 5
        %v3124 = vsel %vm985, %v3119, %v3123
        %v3126 = vshrl.u32 %v2867, 16
        %v3128 = vrot.slane %v3126, 4
        %v3129 = vshll.u32 %v2867, 16
        %v3131 = vrot.slane %v3129, 5
        %v3132 = vor.u32 %v3128, %v3131
        %v3133 = vrot.slane %v3132, 4
        %v3135 = vshll.u32 %v2868, 16
        %v3137 = vrot.slane %v3135, 5
        %v3138 = vsel %vm985, %v3133, %v3137
        %v3139 = vshrl.u32 %v2868, 16
        %v3141 = vrot.slane %v3139, 4
        %v3142 = vor.u32 %v3141, %v3137
        %v3143 = vrot.slane %v3142, 4
        %v3145 = vshll.u32 %v2869, 16
        %v3147 = vrot.slane %v3145, 5
        %v3148 = vsel %vm985, %v3143, %v3147
        %v3150 = vshrl.u32 %v2870, 16
        %v3152 = vrot.slane %v3150, 4
        %v3153 = vshll.u32 %v2870, 16
        %v3155 = vrot.slane %v3153, 5
        %v3156 = vor.u32 %v3152, %v3155
        %v3157 = vrot.slane %v3156, 4
        %v3159 = vshll.u32 %v2871, 16
        %v3161 = vrot.slane %v3159, 5
        %v3162 = vsel %vm985, %v3157, %v3161
        %v3163 = vshrl.u32 %v2871, 16
        %v3165 = vrot.slane %v3163, 4
        %v3166 = vor.u32 %v3165, %v3161
        %v3167 = vrot.slane %v3166, 4
        %v3169 = vshll.u32 %v2872, 16
        %v3171 = vrot.slane %v3169, 5
        %v3172 = vsel %vm985, %v3167, %v3171
        %v3174 = vshrl.u32 %v2873, 16
        %v3176 = vrot.slane %v3174, 4
        %v3177 = vshll.u32 %v2873, 16
        %v3179 = vrot.slane %v3177, 5
        %v3180 = vor.u32 %v3176, %v3179
        %v3181 = vrot.slane %v3180, 4
        %v3183 = vshll.u32 %v2874, 16
        %v3185 = vrot.slane %v3183, 5
        %v3186 = vsel %vm985, %v3181, %v3185
        %v3187 = vshrl.u32 %v2874, 16
        %v3189 = vrot.slane %v3187, 4
        %v3190 = vor.u32 %v3189, %v3185
        %v3191 = vrot.slane %v3190, 4
        %v3193 = vshll.u32 %v2875, 16
        %v3195 = vrot.slane %v3193, 5
        %v3196 = vsel %vm985, %v3191, %v3195
        %v3198 = vshrl.u32 %v2876, 16
        %v3200 = vrot.slane %v3198, 4
        %v3201 = vshll.u32 %v2876, 16
        %v3203 = vrot.slane %v3201, 5
        %v3204 = vor.u32 %v3200, %v3203
        %v3205 = vrot.slane %v3204, 4
        %v3207 = vshll.u32 %v2877, 16
        %v3209 = vrot.slane %v3207, 5
        %v3210 = vsel %vm985, %v3205, %v3209
        %v3211 = vshrl.u32 %v2877, 16
        %v3213 = vrot.slane %v3211, 4
        %v3214 = vor.u32 %v3213, %v3209
        %v3215 = vrot.slane %v3214, 4
        %v3217 = vshll.u32 %v2878, 16
        %v3219 = vrot.slane %v3217, 5
        %v3220 = vsel %vm985, %v3215, %v3219
        %v3222 = vshrl.u32 %v2879, 16
        %v3224 = vrot.slane %v3222, 4
        %v3225 = vshll.u32 %v2879, 16
        %v3227 = vrot.slane %v3225, 5
        %v3228 = vor.u32 %v3224, %v3227
        %v3229 = vrot.slane %v3228, 4
        %v3231 = vshll.u32 %v2880, 16
        %v3233 = vrot.slane %v3231, 5
        %v3234 = vsel %vm985, %v3229, %v3233
        %v3235 = vshrl.u32 %v2880, 16
        %v3237 = vrot.slane %v3235, 4
        %v3238 = vor.u32 %v3237, %v3233
        %v3239 = vrot.slane %v3238, 4
        %v3241 = vshll.u32 %v2881, 16
        %v3243 = vrot.slane %v3241, 5
        %v3244 = vsel %vm985, %v3239, %v3243
        %v3246 = vshrl.u32 %v2882, 16
        %v3248 = vrot.slane %v3246, 4
        %v3249 = vshll.u32 %v2882, 16
        %v3251 = vrot.slane %v3249, 5
        %v3252 = vor.u32 %v3248, %v3251
        %v3253 = vrot.slane %v3252, 4
        %v3255 = vshll.u32 %v2883, 16
        %v3257 = vrot.slane %v3255, 5
        %v3258 = vsel %vm985, %v3253, %v3257
        %v3259 = vshrl.u32 %v2883, 16
        %v3261 = vrot.slane %v3259, 4
        %v3262 = vor.u32 %v3261, %v3257
        %v3263 = vrot.slane %v3262, 4
        %v3265 = vshll.u32 %v2884, 16
        %v3267 = vrot.slane %v3265, 5
        %v3268 = vsel %vm985, %v3263, %v3267
        %s3269 = scalar_lea.vmem %s1, 256
        %v3270 = vld [vmem:[%s3269] sm:$0xf]
        %v3271 = vld [vmem:[%s3269 + $0x4] sm:$0xf]
        %v3272 = vld [vmem:[%s3269 + $0x8] sm:$0xf]
        %v3273 = vld [vmem:[%s3269 + $0xc] sm:$0xf]
        %v3274 = vld [vmem:[%s3269 + $0x10] sm:$0xf]
        %v3275 = vld [vmem:[%s3269 + $0x14] sm:$0xf]
        %v3276 = vld [vmem:[%s3269 + $0x18] sm:$0xf]
        %v3277 = vld [vmem:[%s3269 + $0x1c] sm:$0xf]
        %v3278 = vld [vmem:[%s3269 + $0x20] sm:$0xf]
        %v3279 = vld [vmem:[%s3269 + $0x24] sm:$0xf]
        %v3280 = vld [vmem:[%s3269 + $0x28] sm:$0xf]
        %v3281 = vld [vmem:[%s3269 + $0x2c] sm:$0xf]
        %v3282 = vld [vmem:[%s3269 + $0x30] sm:$0xf]
        %v3283 = vld [vmem:[%s3269 + $0x34] sm:$0xf]
        %v3284 = vld [vmem:[%s3269 + $0x38] sm:$0xf]
        %v3285 = vld [vmem:[%s3269 + $0x3c] sm:$0xf]
        %v3286 = vunpack.c.l.b16 %v2898
        %v3287 = vunpack.c.l.b16 %v2908
        %v3288 = vunpack.c.l.b16 %v2922
        %v3289 = vunpack.c.l.b16 %v2932
        %v3290 = vunpack.c.l.b16 %v2946
        %v3291 = vunpack.c.l.b16 %v2956
        %v3292 = vunpack.c.l.b16 %v2970
        %v3293 = vunpack.c.l.b16 %v2980
        %v3294 = vunpack.c.l.b16 %v2994
        %v3295 = vunpack.c.l.b16 %v3004
        %v3296 = vunpack.c.l.b16 %v3018
        %v3297 = vunpack.c.l.b16 %v3028
        %v3298 = vunpack.c.l.b16 %v3042
        %v3299 = vunpack.c.l.b16 %v3052
        %v3300 = vunpack.c.l.b16 %v3066
        %v3301 = vunpack.c.l.b16 %v3076
        %v3302 = vunpack.c.l.b16 %v3090
        %v3303 = vunpack.c.l.b16 %v3100
        %v3304 = vunpack.c.l.b16 %v3114
        %v3305 = vunpack.c.l.b16 %v3124
        %v3306 = vunpack.c.l.b16 %v3138
        %v3307 = vunpack.c.l.b16 %v3148
        %v3308 = vunpack.c.l.b16 %v3162
        %v3309 = vunpack.c.l.b16 %v3172
        %v3310 = vunpack.c.l.b16 %v3186
        %v3311 = vunpack.c.l.b16 %v3196
        %v3312 = vunpack.c.l.b16 %v3210
        %v3313 = vunpack.c.l.b16 %v3220
        %v3314 = vunpack.c.l.b16 %v3234
        %v3315 = vunpack.c.l.b16 %v3244
        %v3316 = vunpack.c.l.b16 %v3258
        %v3317 = vunpack.c.l.b16 %v3268
        %v3318 = vpack.c.b16 %v3287, %v3286
        %v3319 = vpack.c.b16 %v3289, %v3288
        %v3320 = vpack.c.b16 %v3291, %v3290
        %v3321 = vpack.c.b16 %v3293, %v3292
        %v3322 = vpack.c.b16 %v3295, %v3294
        %v3323 = vpack.c.b16 %v3297, %v3296
        %v3324 = vpack.c.b16 %v3299, %v3298
        %v3325 = vpack.c.b16 %v3301, %v3300
        %v3326 = vpack.c.b16 %v3303, %v3302
        %v3327 = vpack.c.b16 %v3305, %v3304
        %v3328 = vpack.c.b16 %v3307, %v3306
        %v3329 = vpack.c.b16 %v3309, %v3308
        %v3330 = vpack.c.b16 %v3311, %v3310
        %v3331 = vpack.c.b16 %v3313, %v3312
        %v3332 = vpack.c.b16 %v3315, %v3314
        %v3333 = vpack.c.b16 %v3317, %v3316
        %v3366 = vunpack.c.l.b16 %v3270
        %v3367 = vunpack.c.l.b16 %v3271
        %v3368 = vunpack.c.l.b16 %v3272
        %v3369 = vunpack.c.l.b16 %v3273
        %v3370 = vunpack.c.l.b16 %v3274
        %v3371 = vunpack.c.l.b16 %v3275
        %v3372 = vunpack.c.l.b16 %v3276
        %v3373 = vunpack.c.l.b16 %v3277
        %v3374 = vunpack.c.l.b16 %v3278
        %v3375 = vunpack.c.l.b16 %v3279
        %v3376 = vunpack.c.l.b16 %v3280
        %v3377 = vunpack.c.l.b16 %v3281
        %v3378 = vunpack.c.l.b16 %v3282
        %v3379 = vunpack.c.l.b16 %v3283
        %v3380 = vunpack.c.l.b16 %v3284
        %v3381 = vunpack.c.l.b16 %v3285
        %v3382 = vpack.c.b16 %v3367, %v3366
        %v3383 = vpack.c.b16 %v3369, %v3368
        %v3384 = vpack.c.b16 %v3371, %v3370
        %v3385 = vpack.c.b16 %v3373, %v3372
        %v3386 = vpack.c.b16 %v3375, %v3374
        %v3387 = vpack.c.b16 %v3377, %v3376
        %v3388 = vpack.c.b16 %v3379, %v3378
        %v3389 = vpack.c.b16 %v3381, %v3380
        %3398 = vmatprep.subr.bf16.mxu0 0
        %3399 = vmatpush1.bf16.msra.mxu0 %v3382
        %3400 = vmatprep.subr.bf16.mxu0 0
        %3401 = vmatpush1.bf16.msra.mxu0 %v3383
        %3402 = vmatprep.subr.bf16.mxu0 0
        %3403 = vmatpush1.bf16.msra.mxu0 %v3384
        %3404 = vmatprep.subr.bf16.mxu0 0
        %3405 = vmatpush1.bf16.msra.mxu0 %v3385
        %3406 = vmatprep.subr.bf16.mxu0 0
        %3407 = vmatpush1.bf16.msra.mxu0 %v3386
        %3408 = vmatprep.subr.bf16.mxu0 0
        %3409 = vmatpush1.bf16.msra.mxu0 %v3387
        %3410 = vmatprep.subr.bf16.mxu0 0
        %3411 = vmatpush1.bf16.msra.mxu0 %v3388
        %3412 = vmatprep.subr.bf16.mxu0 0
        %3413 = vmatpush1.bf16.msra.mxu0 %v3389
        %3414 = vmatprep.subr.bf16.mxu0 0
        %3415 = vmatpush1.bf16.msra.mxu0 0
        %3416 = vmatprep.subr.bf16.mxu0 0
        %3417 = vmatpush1.bf16.msra.mxu0 0
        %3418 = vmatprep.subr.bf16.mxu0 0
        %3419 = vmatpush1.bf16.msra.mxu0 0
        %3420 = vmatprep.subr.bf16.mxu0 0
        %3421 = vmatpush1.bf16.msra.mxu0 0
        %3422 = vmatprep.subr.bf16.mxu0 0
        %3423 = vmatpush1.bf16.msra.mxu0 0
        %3424 = vmatprep.subr.bf16.mxu0 0
        %3425 = vmatpush1.bf16.msra.mxu0 0
        %3426 = vmatprep.subr.bf16.mxu0 0
        %3427 = vmatpush1.bf16.msra.mxu0 0
        %3428 = vmatprep.subr.bf16.mxu0 0
        %3429 = vmatpush1.bf16.msra.mxu0 0
        %3430 = vmatprep.mubr.bf16.mxu0 0
        %3431 = vmatmul.mubr.bf16.gmra.mrb[0].mxu0 %v3318
        %v3432 = vpop.f32.mrb[0].mxu0
        %v3433 = vadd.f32 0.0, %v3432
        %v3434 = vpop.f32.mrb[0].mxu0
        %v3435 = vpop.f32.mrb[0].mxu0
        %v3436 = vadd.f32 0.0, %v3435
        %v3437 = vpop.f32.mrb[0].mxu0
        %3438 = vmatprep.mubr.bf16.mxu0 0
        %3439 = vmatmul.mubr.bf16.gmra.mrb[0].mxu0 %v3319
        %v3440 = vpop.f32.mrb[0].mxu0
        %v3441 = vadd.f32 0.0, %v3440
        %v3442 = vpop.f32.mrb[0].mxu0
        %v3443 = vpop.f32.mrb[0].mxu0
        %v3444 = vadd.f32 0.0, %v3443
        %v3445 = vpop.f32.mrb[0].mxu0
        %3446 = vmatprep.mubr.bf16.mxu0 0
        %3447 = vmatmul.mubr.bf16.gmra.mrb[0].mxu0 %v3320
        %v3448 = vpop.f32.mrb[0].mxu0
        %v3449 = vadd.f32 0.0, %v3448
        %v3450 = vpop.f32.mrb[0].mxu0
        %v3451 = vpop.f32.mrb[0].mxu0
        %v3452 = vadd.f32 0.0, %v3451
        %v3453 = vpop.f32.mrb[0].mxu0
        %3454 = vmatprep.mubr.bf16.mxu0 0
        %3455 = vmatmul.mubr.bf16.gmra.mrb[0].mxu0 %v3321
        %v3456 = vpop.f32.mrb[0].mxu0
        %v3457 = vadd.f32 0.0, %v3456
        %v3458 = vpop.f32.mrb[0].mxu0
        %v3459 = vpop.f32.mrb[0].mxu0
        %v3460 = vadd.f32 0.0, %v3459
        %v3461 = vpop.f32.mrb[0].mxu0
        %3462 = vmatprep.mubr.bf16.mxu0 0
        %3463 = vmatmul.mubr.bf16.gmra.mrb[0].mxu0 %v3322
        %v3464 = vpop.f32.mrb[0].mxu0
        %v3465 = vadd.f32 0.0, %v3464
        %v3466 = vpop.f32.mrb[0].mxu0
        %v3467 = vpop.f32.mrb[0].mxu0
        %v3468 = vadd.f32 0.0, %v3467
        %v3469 = vpop.f32.mrb[0].mxu0
        %3470 = vmatprep.mubr.bf16.mxu0 0
        %3471 = vmatmul.mubr.bf16.gmra.mrb[0].mxu0 %v3323
        %v3472 = vpop.f32.mrb[0].mxu0
        %v3473 = vadd.f32 0.0, %v3472
        %v3474 = vpop.f32.mrb[0].mxu0
        %v3475 = vpop.f32.mrb[0].mxu0
        %v3476 = vadd.f32 0.0, %v3475
        %v3477 = vpop.f32.mrb[0].mxu0
        %3478 = vmatprep.mubr.bf16.mxu0 0
        %3479 = vmatmul.mubr.bf16.gmra.mrb[0].mxu0 %v3324
        %v3480 = vpop.f32.mrb[0].mxu0
        %v3481 = vadd.f32 0.0, %v3480
        %v3482 = vpop.f32.mrb[0].mxu0
        %v3483 = vpop.f32.mrb[0].mxu0
        %v3484 = vadd.f32 0.0, %v3483
        %v3485 = vpop.f32.mrb[0].mxu0
        %3486 = vmatprep.mubr.bf16.mxu0 0
        %3487 = vmatmul.mubr.bf16.gmra.mrb[0].mxu0 %v3325
        %v3488 = vpop.f32.mrb[0].mxu0
        %v3489 = vadd.f32 0.0, %v3488
        %v3490 = vpop.f32.mrb[0].mxu0
        %v3491 = vpop.f32.mrb[0].mxu0
        %v3492 = vadd.f32 0.0, %v3491
        %v3493 = vpop.f32.mrb[0].mxu0
        %3494 = vmatprep.mubr.bf16.mxu0 0
        %3495 = vmatmul.mubr.bf16.gmra.mrb[0].mxu0 %v3326
        %v3496 = vpop.f32.mrb[0].mxu0
        %v3497 = vadd.f32 0.0, %v3496
        %v3498 = vpop.f32.mrb[0].mxu0
        %v3499 = vpop.f32.mrb[0].mxu0
        %v3500 = vadd.f32 0.0, %v3499
        %v3501 = vpop.f32.mrb[0].mxu0
        %3502 = vmatprep.mubr.bf16.mxu0 0
        %3503 = vmatmul.mubr.bf16.gmra.mrb[0].mxu0 %v3327
        %v3504 = vpop.f32.mrb[0].mxu0
        %v3505 = vadd.f32 0.0, %v3504
        %v3506 = vpop.f32.mrb[0].mxu0
        %v3507 = vpop.f32.mrb[0].mxu0
        %v3508 = vadd.f32 0.0, %v3507
        %v3509 = vpop.f32.mrb[0].mxu0
        %3510 = vmatprep.mubr.bf16.mxu0 0
        %3511 = vmatmul.mubr.bf16.gmra.mrb[0].mxu0 %v3328
        %v3512 = vpop.f32.mrb[0].mxu0
        %v3513 = vadd.f32 0.0, %v3512
        %v3514 = vpop.f32.mrb[0].mxu0
        %v3515 = vpop.f32.mrb[0].mxu0
        %v3516 = vadd.f32 0.0, %v3515
        %v3517 = vpop.f32.mrb[0].mxu0
        %3518 = vmatprep.mubr.bf16.mxu0 0
        %3519 = vmatmul.mubr.bf16.gmra.mrb[0].mxu0 %v3329
        %v3520 = vpop.f32.mrb[0].mxu0
        %v3521 = vadd.f32 0.0, %v3520
        %v3522 = vpop.f32.mrb[0].mxu0
        %v3523 = vpop.f32.mrb[0].mxu0
        %v3524 = vadd.f32 0.0, %v3523
        %v3525 = vpop.f32.mrb[0].mxu0
        %3526 = vmatprep.mubr.bf16.mxu0 0
        %3527 = vmatmul.mubr.bf16.gmra.mrb[0].mxu0 %v3330
        %v3528 = vpop.f32.mrb[0].mxu0
        %v3529 = vadd.f32 0.0, %v3528
        %v3530 = vpop.f32.mrb[0].mxu0
        %v3531 = vpop.f32.mrb[0].mxu0
        %v3532 = vadd.f32 0.0, %v3531
        %v3533 = vpop.f32.mrb[0].mxu0
        %3534 = vmatprep.mubr.bf16.mxu0 0
        %3535 = vmatmul.mubr.bf16.gmra.mrb[0].mxu0 %v3331
        %v3536 = vpop.f32.mrb[0].mxu0
        %v3537 = vadd.f32 0.0, %v3536
        %v3538 = vpop.f32.mrb[0].mxu0
        %v3539 = vpop.f32.mrb[0].mxu0
        %v3540 = vadd.f32 0.0, %v3539
        %v3541 = vpop.f32.mrb[0].mxu0
        %3542 = vmatprep.mubr.bf16.mxu0 0
        %3543 = vmatmul.mubr.bf16.gmra.mrb[0].mxu0 %v3332
        %v3544 = vpop.f32.mrb[0].mxu0
        %v3545 = vadd.f32 0.0, %v3544
        %v3546 = vpop.f32.mrb[0].mxu0
        %v3547 = vpop.f32.mrb[0].mxu0
        %v3548 = vadd.f32 0.0, %v3547
        %v3549 = vpop.f32.mrb[0].mxu0
        %3550 = vmatprep.mubr.bf16.mxu0 0
        %3551 = vmatmul.mubr.bf16.gmra.mrb[0].mxu0 %v3333
        %v3552 = vpop.f32.mrb[0].mxu0
        %v3553 = vadd.f32 0.0, %v3552
        %v3554 = vpop.f32.mrb[0].mxu0
        %v3555 = vpop.f32.mrb[0].mxu0
        %v3556 = vadd.f32 0.0, %v3555
        %v3557 = vpop.f32.mrb[0].mxu0
        %3558 = vdwg.mxu0
        %v3559 = vadd.f32 %v2805, %v3433
        %v3560 = vadd.f32 %v2806, %v3436
        %v3561 = vadd.f32 %v2807, %v3441
        %v3562 = vadd.f32 %v2808, %v3444
        %v3563 = vadd.f32 %v2809, %v3449
        %v3564 = vadd.f32 %v2810, %v3452
        %v3565 = vadd.f32 %v2811, %v3457
        %v3566 = vadd.f32 %v2812, %v3460
        %v3567 = vadd.f32 %v2813, %v3465
        %v3568 = vadd.f32 %v2814, %v3468
        %v3569 = vadd.f32 %v2815, %v3473
        %v3570 = vadd.f32 %v2816, %v3476
        %v3571 = vadd.f32 %v2817, %v3481
        %v3572 = vadd.f32 %v2818, %v3484
        %v3573 = vadd.f32 %v2819, %v3489
        %v3574 = vadd.f32 %v2820, %v3492
        %v3575 = vadd.f32 %v2821, %v3497
        %v3576 = vadd.f32 %v2822, %v3500
        %v3577 = vadd.f32 %v2823, %v3505
        %v3578 = vadd.f32 %v2824, %v3508
        %v3579 = vadd.f32 %v2825, %v3513
        %v3580 = vadd.f32 %v2826, %v3516
        %v3581 = vadd.f32 %v2827, %v3521
        %v3582 = vadd.f32 %v2828, %v3524
        %v3583 = vadd.f32 %v2829, %v3529
        %v3584 = vadd.f32 %v2830, %v3532
        %v3585 = vadd.f32 %v2831, %v3537
        %v3586 = vadd.f32 %v2832, %v3540
        %v3587 = vadd.f32 %v2833, %v3545
        %v3588 = vadd.f32 %v2834, %v3548
        %v3589 = vadd.f32 %v2835, %v3553
        %v3590 = vadd.f32 %v2836, %v3556
        %v3591 = vld [vmem:[%s2450] sm:$0xe]
        %v3592 = vld [vmem:[%s2450 + $0xc] sm:$0xe]
        %v3593 = vld [vmem:[%s2450 + $0x18] sm:$0xe]
        %v3594 = vld [vmem:[%s2450 + $0x24] sm:$0xe]
        %v3595 = vld [vmem:[%s2450 + $0x30] sm:$0xe]
        %v3596 = vld [vmem:[%s2450 + $0x3c] sm:$0xe]
        %v3597 = vld [vmem:[%s2450 + $0x48] sm:$0xe]
        %v3598 = vld [vmem:[%s2450 + $0x54] sm:$0xe]
        %v3599 = vld [vmem:[%s2450 + $0x60] sm:$0xe]
        %v3600 = vld [vmem:[%s2450 + $0x6c] sm:$0xe]
        %v3601 = vld [vmem:[%s2450 + $0x78] sm:$0xe]
        %v3602 = vld [vmem:[%s2450 + $0x84] sm:$0xe]
        %v3603 = vld [vmem:[%s2450 + $0x90] sm:$0xe]
        %v3604 = vld [vmem:[%s2450 + $0x9c] sm:$0xe]
        %v3605 = vld [vmem:[%s2450 + $0xa8] sm:$0xe]
        %v3606 = vld [vmem:[%s2450 + $0xb4] sm:$0xe]
        %v3655 = vrot.slane %v3591, 5
        %v3656 = vrot.slane %v3655, 4
        %v3657 = vrot.slane %v2838, 5
        %v3658 = vsel %vm2015, %v3656, %v3657
        %v3659 = vrot.slane %v3657, 4
        %v3660 = vrot.slane %v2839, 5
        %v3661 = vsel %vm2015, %v3659, %v3660
        %v3662 = vrot.slane %v3592, 5
        %v3663 = vrot.slane %v3662, 4
        %v3664 = vrot.slane %v2841, 5
        %v3665 = vsel %vm2015, %v3663, %v3664
        %v3666 = vrot.slane %v3664, 4
        %v3667 = vrot.slane %v2842, 5
        %v3668 = vsel %vm2015, %v3666, %v3667
        %v3669 = vrot.slane %v3593, 5
        %v3670 = vrot.slane %v3669, 4
        %v3671 = vrot.slane %v2844, 5
        %v3672 = vsel %vm2015, %v3670, %v3671
        %v3673 = vrot.slane %v3671, 4
        %v3674 = vrot.slane %v2845, 5
        %v3675 = vsel %vm2015, %v3673, %v3674
        %v3676 = vrot.slane %v3594, 5
        %v3677 = vrot.slane %v3676, 4
        %v3678 = vrot.slane %v2847, 5
        %v3679 = vsel %vm2015, %v3677, %v3678
        %v3680 = vrot.slane %v3678, 4
        %v3681 = vrot.slane %v2848, 5
        %v3682 = vsel %vm2015, %v3680, %v3681
        %v3683 = vrot.slane %v3595, 5
        %v3684 = vrot.slane %v3683, 4
        %v3685 = vrot.slane %v2850, 5
        %v3686 = vsel %vm2015, %v3684, %v3685
        %v3687 = vrot.slane %v3685, 4
        %v3688 = vrot.slane %v2851, 5
        %v3689 = vsel %vm2015, %v3687, %v3688
        %v3690 = vrot.slane %v3596, 5
        %v3691 = vrot.slane %v3690, 4
        %v3692 = vrot.slane %v2853, 5
        %v3693 = vsel %vm2015, %v3691, %v3692
        %v3694 = vrot.slane %v3692, 4
        %v3695 = vrot.slane %v2854, 5
        %v3696 = vsel %vm2015, %v3694, %v3695
        %v3697 = vrot.slane %v3597, 5
        %v3698 = vrot.slane %v3697, 4
        %v3699 = vrot.slane %v2856, 5
        %v3700 = vsel %vm2015, %v3698, %v3699
        %v3701 = vrot.slane %v3699, 4
        %v3702 = vrot.slane %v2857, 5
        %v3703 = vsel %vm2015, %v3701, %v3702
        %v3704 = vrot.slane %v3598, 5
        %v3705 = vrot.slane %v3704, 4
        %v3706 = vrot.slane %v2859, 5
        %v3707 = vsel %vm2015, %v3705, %v3706
        %v3708 = vrot.slane %v3706, 4
        %v3709 = vrot.slane %v2860, 5
        %v3710 = vsel %vm2015, %v3708, %v3709
        %v3711 = vrot.slane %v3599, 5
        %v3712 = vrot.slane %v3711, 4
        %v3713 = vrot.slane %v2862, 5
        %v3714 = vsel %vm2015, %v3712, %v3713
        %v3715 = vrot.slane %v3713, 4
        %v3716 = vrot.slane %v2863, 5
        %v3717 = vsel %vm2015, %v3715, %v3716
        %v3718 = vrot.slane %v3600, 5
        %v3719 = vrot.slane %v3718, 4
        %v3720 = vrot.slane %v2865, 5
        %v3721 = vsel %vm2015, %v3719, %v3720
        %v3722 = vrot.slane %v3720, 4
        %v3723 = vrot.slane %v2866, 5
        %v3724 = vsel %vm2015, %v3722, %v3723
        %v3725 = vrot.slane %v3601, 5
        %v3726 = vrot.slane %v3725, 4
        %v3727 = vrot.slane %v2868, 5
        %v3728 = vsel %vm2015, %v3726, %v3727
        %v3729 = vrot.slane %v3727, 4
        %v3730 = vrot.slane %v2869, 5
        %v3731 = vsel %vm2015, %v3729, %v3730
        %v3732 = vrot.slane %v3602, 5
        %v3733 = vrot.slane %v3732, 4
        %v3734 = vrot.slane %v2871, 5
        %v3735 = vsel %vm2015, %v3733, %v3734
        %v3736 = vrot.slane %v3734, 4
        %v3737 = vrot.slane %v2872, 5
        %v3738 = vsel %vm2015, %v3736, %v3737
        %v3739 = vrot.slane %v3603, 5
        %v3740 = vrot.slane %v3739, 4
        %v3741 = vrot.slane %v2874, 5
        %v3742 = vsel %vm2015, %v3740, %v3741
        %v3743 = vrot.slane %v3741, 4
        %v3744 = vrot.slane %v2875, 5
        %v3745 = vsel %vm2015, %v3743, %v3744
        %v3746 = vrot.slane %v3604, 5
        %v3747 = vrot.slane %v3746, 4
        %v3748 = vrot.slane %v2877, 5
        %v3749 = vsel %vm2015, %v3747, %v3748
        %v3750 = vrot.slane %v3748, 4
        %v3751 = vrot.slane %v2878, 5
        %v3752 = vsel %vm2015, %v3750, %v3751
        %v3753 = vrot.slane %v3605, 5
        %v3754 = vrot.slane %v3753, 4
        %v3755 = vrot.slane %v2880, 5
        %v3756 = vsel %vm2015, %v3754, %v3755
        %v3757 = vrot.slane %v3755, 4
        %v3758 = vrot.slane %v2881, 5
        %v3759 = vsel %vm2015, %v3757, %v3758
        %v3760 = vrot.slane %v3606, 5
        %v3761 = vrot.slane %v3760, 4
        %v3762 = vrot.slane %v2883, 5
        %v3763 = vsel %vm2015, %v3761, %v3762
        %v3764 = vrot.slane %v3762, 4
        %v3765 = vrot.slane %v2884, 5
        %v3766 = vsel %vm2015, %v3764, %v3765
        %s3767 = scalar_lea.vmem %s1, 320
        %v3768 = vld [vmem:[%s3767] sm:$0xf]
        %v3769 = vld [vmem:[%s3767 + $0x4] sm:$0xf]
        %v3770 = vld [vmem:[%s3767 + $0x8] sm:$0xf]
        %v3771 = vld [vmem:[%s3767 + $0xc] sm:$0xf]
        %v3772 = vld [vmem:[%s3767 + $0x10] sm:$0xf]
        %v3773 = vld [vmem:[%s3767 + $0x14] sm:$0xf]
        %v3774 = vld [vmem:[%s3767 + $0x18] sm:$0xf]
        %v3775 = vld [vmem:[%s3767 + $0x1c] sm:$0xf]
        %v3776 = vld [vmem:[%s3767 + $0x20] sm:$0xf]
        %v3777 = vld [vmem:[%s3767 + $0x24] sm:$0xf]
        %v3778 = vld [vmem:[%s3767 + $0x28] sm:$0xf]
        %v3779 = vld [vmem:[%s3767 + $0x2c] sm:$0xf]
        %v3780 = vld [vmem:[%s3767 + $0x30] sm:$0xf]
        %v3781 = vld [vmem:[%s3767 + $0x34] sm:$0xf]
        %v3782 = vld [vmem:[%s3767 + $0x38] sm:$0xf]
        %v3783 = vld [vmem:[%s3767 + $0x3c] sm:$0xf]
        %v3784 = vunpack.c.l.b16 %v3658
        %v3785 = vunpack.c.l.b16 %v3661
        %v3786 = vunpack.c.l.b16 %v3665
        %v3787 = vunpack.c.l.b16 %v3668
        %v3788 = vunpack.c.l.b16 %v3672
        %v3789 = vunpack.c.l.b16 %v3675
        %v3790 = vunpack.c.l.b16 %v3679
        %v3791 = vunpack.c.l.b16 %v3682
        %v3792 = vunpack.c.l.b16 %v3686
        %v3793 = vunpack.c.l.b16 %v3689
        %v3794 = vunpack.c.l.b16 %v3693
        %v3795 = vunpack.c.l.b16 %v3696
        %v3796 = vunpack.c.l.b16 %v3700
        %v3797 = vunpack.c.l.b16 %v3703
        %v3798 = vunpack.c.l.b16 %v3707
        %v3799 = vunpack.c.l.b16 %v3710
        %v3800 = vunpack.c.l.b16 %v3714
        %v3801 = vunpack.c.l.b16 %v3717
        %v3802 = vunpack.c.l.b16 %v3721
        %v3803 = vunpack.c.l.b16 %v3724
        %v3804 = vunpack.c.l.b16 %v3728
        %v3805 = vunpack.c.l.b16 %v3731
        %v3806 = vunpack.c.l.b16 %v3735
        %v3807 = vunpack.c.l.b16 %v3738
        %v3808 = vunpack.c.l.b16 %v3742
        %v3809 = vunpack.c.l.b16 %v3745
        %v3810 = vunpack.c.l.b16 %v3749
        %v3811 = vunpack.c.l.b16 %v3752
        %v3812 = vunpack.c.l.b16 %v3756
        %v3813 = vunpack.c.l.b16 %v3759
        %v3814 = vunpack.c.l.b16 %v3763
        %v3815 = vunpack.c.l.b16 %v3766
        %v3816 = vpack.c.b16 %v3785, %v3784
        %v3817 = vpack.c.b16 %v3787, %v3786
        %v3818 = vpack.c.b16 %v3789, %v3788
        %v3819 = vpack.c.b16 %v3791, %v3790
        %v3820 = vpack.c.b16 %v3793, %v3792
        %v3821 = vpack.c.b16 %v3795, %v3794
        %v3822 = vpack.c.b16 %v3797, %v3796
        %v3823 = vpack.c.b16 %v3799, %v3798
        %v3824 = vpack.c.b16 %v3801, %v3800
        %v3825 = vpack.c.b16 %v3803, %v3802
        %v3826 = vpack.c.b16 %v3805, %v3804
        %v3827 = vpack.c.b16 %v3807, %v3806
        %v3828 = vpack.c.b16 %v3809, %v3808
        %v3829 = vpack.c.b16 %v3811, %v3810
        %v3830 = vpack.c.b16 %v3813, %v3812
        %v3831 = vpack.c.b16 %v3815, %v3814
        %v3864 = vunpack.c.l.b16 %v3768
        %v3865 = vunpack.c.l.b16 %v3769
        %v3866 = vunpack.c.l.b16 %v3770
        %v3867 = vunpack.c.l.b16 %v3771
        %v3868 = vunpack.c.l.b16 %v3772
        %v3869 = vunpack.c.l.b16 %v3773
        %v3870 = vunpack.c.l.b16 %v3774
        %v3871 = vunpack.c.l.b16 %v3775
        %v3872 = vunpack.c.l.b16 %v3776
        %v3873 = vunpack.c.l.b16 %v3777
        %v3874 = vunpack.c.l.b16 %v3778
        %v3875 = vunpack.c.l.b16 %v3779
        %v3876 = vunpack.c.l.b16 %v3780
        %v3877 = vunpack.c.l.b16 %v3781
        %v3878 = vunpack.c.l.b16 %v3782
        %v3879 = vunpack.c.l.b16 %v3783
        %v3880 = vpack.c.b16 %v3865, %v3864
        %v3881 = vpack.c.b16 %v3867, %v3866
        %v3882 = vpack.c.b16 %v3869, %v3868
        %v3883 = vpack.c.b16 %v3871, %v3870
        %v3884 = vpack.c.b16 %v3873, %v3872
        %v3885 = vpack.c.b16 %v3875, %v3874
        %v3886 = vpack.c.b16 %v3877, %v3876
        %v3887 = vpack.c.b16 %v3879, %v3878
        %3896 = vmatprep.subr.bf16.mxu0 0
        %3897 = vmatpush1.bf16.msra.mxu0 %v3880
        %3898 = vmatprep.subr.bf16.mxu0 0
        %3899 = vmatpush1.bf16.msra.mxu0 %v3881
        %3900 = vmatprep.subr.bf16.mxu0 0
        %3901 = vmatpush1.bf16.msra.mxu0 %v3882
        %3902 = vmatprep.subr.bf16.mxu0 0
        %3903 = vmatpush1.bf16.msra.mxu0 %v3883
        %3904 = vmatprep.subr.bf16.mxu0 0
        %3905 = vmatpush1.bf16.msra.mxu0 %v3884
        %3906 = vmatprep.subr.bf16.mxu0 0
        %3907 = vmatpush1.bf16.msra.mxu0 %v3885
        %3908 = vmatprep.subr.bf16.mxu0 0
        %3909 = vmatpush1.bf16.msra.mxu0 %v3886
        %3910 = vmatprep.subr.bf16.mxu0 0
        %3911 = vmatpush1.bf16.msra.mxu0 %v3887
        %3912 = vmatprep.subr.bf16.mxu0 0
        %3913 = vmatpush1.bf16.msra.mxu0 0
        %3914 = vmatprep.subr.bf16.mxu0 0
        %3915 = vmatpush1.bf16.msra.mxu0 0
        %3916 = vmatprep.subr.bf16.mxu0 0
        %3917 = vmatpush1.bf16.msra.mxu0 0
        %3918 = vmatprep.subr.bf16.mxu0 0
        %3919 = vmatpush1.bf16.msra.mxu0 0
        %3920 = vmatprep.subr.bf16.mxu0 0
        %3921 = vmatpush1.bf16.msra.mxu0 0
        %3922 = vmatprep.subr.bf16.mxu0 0
        %3923 = vmatpush1.bf16.msra.mxu0 0
        %3924 = vmatprep.subr.bf16.mxu0 0
        %3925 = vmatpush1.bf16.msra.mxu0 0
        %3926 = vmatprep.subr.bf16.mxu0 0
        %3927 = vmatpush1.bf16.msra.mxu0 0
        %3928 = vmatprep.mubr.bf16.mxu0 0
        %3929 = vmatmul.mubr.bf16.gmra.mrb[0].mxu0 %v3816
        %v3930 = vpop.f32.mrb[0].mxu0
        %v3931 = vadd.f32 0.0, %v3930
        %v3932 = vpop.f32.mrb[0].mxu0
        %v3933 = vpop.f32.mrb[0].mxu0
        %v3934 = vadd.f32 0.0, %v3933
        %v3935 = vpop.f32.mrb[0].mxu0
        %3936 = vmatprep.mubr.bf16.mxu0 0
        %3937 = vmatmul.mubr.bf16.gmra.mrb[0].mxu0 %v3817
        %v3938 = vpop.f32.mrb[0].mxu0
        %v3939 = vadd.f32 0.0, %v3938
        %v3940 = vpop.f32.mrb[0].mxu0
        %v3941 = vpop.f32.mrb[0].mxu0
        %v3942 = vadd.f32 0.0, %v3941
        %v3943 = vpop.f32.mrb[0].mxu0
        %3944 = vmatprep.mubr.bf16.mxu0 0
        %3945 = vmatmul.mubr.bf16.gmra.mrb[0].mxu0 %v3818
        %v3946 = vpop.f32.mrb[0].mxu0
        %v3947 = vadd.f32 0.0, %v3946
        %v3948 = vpop.f32.mrb[0].mxu0
        %v3949 = vpop.f32.mrb[0].mxu0
        %v3950 = vadd.f32 0.0, %v3949
        %v3951 = vpop.f32.mrb[0].mxu0
        %3952 = vmatprep.mubr.bf16.mxu0 0
        %3953 = vmatmul.mubr.bf16.gmra.mrb[0].mxu0 %v3819
        %v3954 = vpop.f32.mrb[0].mxu0
        %v3955 = vadd.f32 0.0, %v3954
        %v3956 = vpop.f32.mrb[0].mxu0
        %v3957 = vpop.f32.mrb[0].mxu0
        %v3958 = vadd.f32 0.0, %v3957
        %v3959 = vpop.f32.mrb[0].mxu0
        %3960 = vmatprep.mubr.bf16.mxu0 0
        %3961 = vmatmul.mubr.bf16.gmra.mrb[0].mxu0 %v3820
        %v3962 = vpop.f32.mrb[0].mxu0
        %v3963 = vadd.f32 0.0, %v3962
        %v3964 = vpop.f32.mrb[0].mxu0
        %v3965 = vpop.f32.mrb[0].mxu0
        %v3966 = vadd.f32 0.0, %v3965
        %v3967 = vpop.f32.mrb[0].mxu0
        %3968 = vmatprep.mubr.bf16.mxu0 0
        %3969 = vmatmul.mubr.bf16.gmra.mrb[0].mxu0 %v3821
        %v3970 = vpop.f32.mrb[0].mxu0
        %v3971 = vadd.f32 0.0, %v3970
        %v3972 = vpop.f32.mrb[0].mxu0
        %v3973 = vpop.f32.mrb[0].mxu0
        %v3974 = vadd.f32 0.0, %v3973
        %v3975 = vpop.f32.mrb[0].mxu0
        %3976 = vmatprep.mubr.bf16.mxu0 0
        %3977 = vmatmul.mubr.bf16.gmra.mrb[0].mxu0 %v3822
        %v3978 = vpop.f32.mrb[0].mxu0
        %v3979 = vadd.f32 0.0, %v3978
        %v3980 = vpop.f32.mrb[0].mxu0
        %v3981 = vpop.f32.mrb[0].mxu0
        %v3982 = vadd.f32 0.0, %v3981
        %v3983 = vpop.f32.mrb[0].mxu0
        %3984 = vmatprep.mubr.bf16.mxu0 0
        %3985 = vmatmul.mubr.bf16.gmra.mrb[0].mxu0 %v3823
        %v3986 = vpop.f32.mrb[0].mxu0
        %v3987 = vadd.f32 0.0, %v3986
        %v3988 = vpop.f32.mrb[0].mxu0
        %v3989 = vpop.f32.mrb[0].mxu0
        %v3990 = vadd.f32 0.0, %v3989
        %v3991 = vpop.f32.mrb[0].mxu0
        %3992 = vmatprep.mubr.bf16.mxu0 0
        %3993 = vmatmul.mubr.bf16.gmra.mrb[0].mxu0 %v3824
        %v3994 = vpop.f32.mrb[0].mxu0
        %v3995 = vadd.f32 0.0, %v3994
        %v3996 = vpop.f32.mrb[0].mxu0
        %v3997 = vpop.f32.mrb[0].mxu0
        %v3998 = vadd.f32 0.0, %v3997
        %v3999 = vpop.f32.mrb[0].mxu0
        %4000 = vmatprep.mubr.bf16.mxu0 0
        %4001 = vmatmul.mubr.bf16.gmra.mrb[0].mxu0 %v3825
        %v4002 = vpop.f32.mrb[0].mxu0
        %v4003 = vadd.f32 0.0, %v4002
        %v4004 = vpop.f32.mrb[0].mxu0
        %v4005 = vpop.f32.mrb[0].mxu0
        %v4006 = vadd.f32 0.0, %v4005
        %v4007 = vpop.f32.mrb[0].mxu0
        %4008 = vmatprep.mubr.bf16.mxu0 0
        %4009 = vmatmul.mubr.bf16.gmra.mrb[0].mxu0 %v3826
        %v4010 = vpop.f32.mrb[0].mxu0
        %v4011 = vadd.f32 0.0, %v4010
        %v4012 = vpop.f32.mrb[0].mxu0
        %v4013 = vpop.f32.mrb[0].mxu0
        %v4014 = vadd.f32 0.0, %v4013
        %v4015 = vpop.f32.mrb[0].mxu0
        %4016 = vmatprep.mubr.bf16.mxu0 0
        %4017 = vmatmul.mubr.bf16.gmra.mrb[0].mxu0 %v3827
        %v4018 = vpop.f32.mrb[0].mxu0
        %v4019 = vadd.f32 0.0, %v4018
        %v4020 = vpop.f32.mrb[0].mxu0
        %v4021 = vpop.f32.mrb[0].mxu0
        %v4022 = vadd.f32 0.0, %v4021
        %v4023 = vpop.f32.mrb[0].mxu0
        %4024 = vmatprep.mubr.bf16.mxu0 0
        %4025 = vmatmul.mubr.bf16.gmra.mrb[0].mxu0 %v3828
        %v4026 = vpop.f32.mrb[0].mxu0
        %v4027 = vadd.f32 0.0, %v4026
        %v4028 = vpop.f32.mrb[0].mxu0
        %v4029 = vpop.f32.mrb[0].mxu0
        %v4030 = vadd.f32 0.0, %v4029
        %v4031 = vpop.f32.mrb[0].mxu0
        %4032 = vmatprep.mubr.bf16.mxu0 0
        %4033 = vmatmul.mubr.bf16.gmra.mrb[0].mxu0 %v3829
        %v4034 = vpop.f32.mrb[0].mxu0
        %v4035 = vadd.f32 0.0, %v4034
        %v4036 = vpop.f32.mrb[0].mxu0
        %v4037 = vpop.f32.mrb[0].mxu0
        %v4038 = vadd.f32 0.0, %v4037
        %v4039 = vpop.f32.mrb[0].mxu0
        %4040 = vmatprep.mubr.bf16.mxu0 0
        %4041 = vmatmul.mubr.bf16.gmra.mrb[0].mxu0 %v3830
        %v4042 = vpop.f32.mrb[0].mxu0
        %v4043 = vadd.f32 0.0, %v4042
        %v4044 = vpop.f32.mrb[0].mxu0
        %v4045 = vpop.f32.mrb[0].mxu0
        %v4046 = vadd.f32 0.0, %v4045
        %v4047 = vpop.f32.mrb[0].mxu0
        %4048 = vmatprep.mubr.bf16.mxu0 0
        %4049 = vmatmul.mubr.bf16.gmra.mrb[0].mxu0 %v3831
        %v4050 = vpop.f32.mrb[0].mxu0
        %v4051 = vadd.f32 0.0, %v4050
        %v4052 = vpop.f32.mrb[0].mxu0
        %v4053 = vpop.f32.mrb[0].mxu0
        %v4054 = vadd.f32 0.0, %v4053
        %v4055 = vpop.f32.mrb[0].mxu0
        %4056 = vdwg.mxu0
        %v4057 = vadd.f32 %v3559, %v3931
        %v4058 = vadd.f32 %v3560, %v3934
        %v4059 = vadd.f32 %v3561, %v3939
        %v4060 = vadd.f32 %v3562, %v3942
        %v4061 = vadd.f32 %v3563, %v3947
        %v4062 = vadd.f32 %v3564, %v3950
        %v4063 = vadd.f32 %v3565, %v3955
        %v4064 = vadd.f32 %v3566, %v3958
        %v4065 = vadd.f32 %v3567, %v3963
        %v4066 = vadd.f32 %v3568, %v3966
        %v4067 = vadd.f32 %v3569, %v3971
        %v4068 = vadd.f32 %v3570, %v3974
        %v4069 = vadd.f32 %v3571, %v3979
        %v4070 = vadd.f32 %v3572, %v3982
        %v4071 = vadd.f32 %v3573, %v3987
        %v4072 = vadd.f32 %v3574, %v3990
        %v4073 = vadd.f32 %v3575, %v3995
        %v4074 = vadd.f32 %v3576, %v3998
        %v4075 = vadd.f32 %v3577, %v4003
        %v4076 = vadd.f32 %v3578, %v4006
        %v4077 = vadd.f32 %v3579, %v4011
        %v4078 = vadd.f32 %v3580, %v4014
        %v4079 = vadd.f32 %v3581, %v4019
        %v4080 = vadd.f32 %v3582, %v4022
        %v4081 = vadd.f32 %v3583, %v4027
        %v4082 = vadd.f32 %v3584, %v4030
        %v4083 = vadd.f32 %v3585, %v4035
        %v4084 = vadd.f32 %v3586, %v4038
        %v4085 = vadd.f32 %v3587, %v4043
        %v4086 = vadd.f32 %v3588, %v4046
        %v4087 = vadd.f32 %v3589, %v4051
        %v4088 = vadd.f32 %v3590, %v4054
        %s4089 = scalar_lea.vmem [#allocation2], 24
        %v4090 = vld [vmem:[%s4089] sm:$0xf]
        %v4091 = vld [vmem:[%s4089 + $0x4] sm:$0xf]
        %v4092 = vld [vmem:[%s4089 + $0xc] sm:$0xf]
        %v4093 = vld [vmem:[%s4089 + $0x10] sm:$0xf]
        %v4094 = vld [vmem:[%s4089 + $0x18] sm:$0xf]
        %v4095 = vld [vmem:[%s4089 + $0x1c] sm:$0xf]
        %v4096 = vld [vmem:[%s4089 + $0x24] sm:$0xf]
        %v4097 = vld [vmem:[%s4089 + $0x28] sm:$0xf]
        %v4098 = vld [vmem:[%s4089 + $0x30] sm:$0xf]
        %v4099 = vld [vmem:[%s4089 + $0x34] sm:$0xf]
        %v4100 = vld [vmem:[%s4089 + $0x3c] sm:$0xf]
        %v4101 = vld [vmem:[%s4089 + $0x40] sm:$0xf]
        %v4102 = vld [vmem:[%s4089 + $0x48] sm:$0xf]
        %v4103 = vld [vmem:[%s4089 + $0x4c] sm:$0xf]
        %v4104 = vld [vmem:[%s4089 + $0x54] sm:$0xf]
        %v4105 = vld [vmem:[%s4089 + $0x58] sm:$0xf]
        %v4106 = vld [vmem:[%s4089 + $0x60] sm:$0xf]
        %v4107 = vld [vmem:[%s4089 + $0x64] sm:$0xf]
        %v4108 = vld [vmem:[%s4089 + $0x6c] sm:$0xf]
        %v4109 = vld [vmem:[%s4089 + $0x70] sm:$0xf]
        %v4110 = vld [vmem:[%s4089 + $0x78] sm:$0xf]
        %v4111 = vld [vmem:[%s4089 + $0x7c] sm:$0xf]
        %v4112 = vld [vmem:[%s4089 + $0x84] sm:$0xf]
        %v4113 = vld [vmem:[%s4089 + $0x88] sm:$0xf]
        %v4114 = vld [vmem:[%s4089 + $0x90] sm:$0xf]
        %v4115 = vld [vmem:[%s4089 + $0x94] sm:$0xf]
        %v4116 = vld [vmem:[%s4089 + $0x9c] sm:$0xf]
        %v4117 = vld [vmem:[%s4089 + $0xa0] sm:$0xf]
        %v4118 = vld [vmem:[%s4089 + $0xa8] sm:$0xf]
        %v4119 = vld [vmem:[%s4089 + $0xac] sm:$0xf]
        %v4120 = vld [vmem:[%s4089 + $0xb4] sm:$0xf]
        %v4121 = vld [vmem:[%s4089 + $0xb8] sm:$0xf]
        %s4122 = scalar_lea.vmem %s1, 384
        %v4123 = vld [vmem:[%s4122] sm:$0xf]
        %v4124 = vld [vmem:[%s4122 + $0x4] sm:$0xf]
        %v4125 = vld [vmem:[%s4122 + $0x8] sm:$0xf]
        %v4126 = vld [vmem:[%s4122 + $0xc] sm:$0xf]
        %v4127 = vld [vmem:[%s4122 + $0x10] sm:$0xf]
        %v4128 = vld [vmem:[%s4122 + $0x14] sm:$0xf]
        %v4129 = vld [vmem:[%s4122 + $0x18] sm:$0xf]
        %v4130 = vld [vmem:[%s4122 + $0x1c] sm:$0xf]
        %v4131 = vld [vmem:[%s4122 + $0x20] sm:$0xf]
        %v4132 = vld [vmem:[%s4122 + $0x24] sm:$0xf]
        %v4133 = vld [vmem:[%s4122 + $0x28] sm:$0xf]
        %v4134 = vld [vmem:[%s4122 + $0x2c] sm:$0xf]
        %v4135 = vld [vmem:[%s4122 + $0x30] sm:$0xf]
        %v4136 = vld [vmem:[%s4122 + $0x34] sm:$0xf]
        %v4137 = vld [vmem:[%s4122 + $0x38] sm:$0xf]
        %v4138 = vld [vmem:[%s4122 + $0x3c] sm:$0xf]
        %v4171 = vunpack.c.l.b16 %v4090
        %v4172 = vunpack.c.l.b16 %v4091
        %v4173 = vunpack.c.l.b16 %v4092
        %v4174 = vunpack.c.l.b16 %v4093
        %v4175 = vunpack.c.l.b16 %v4094
        %v4176 = vunpack.c.l.b16 %v4095
        %v4177 = vunpack.c.l.b16 %v4096
        %v4178 = vunpack.c.l.b16 %v4097
        %v4179 = vunpack.c.l.b16 %v4098
        %v4180 = vunpack.c.l.b16 %v4099
        %v4181 = vunpack.c.l.b16 %v4100
        %v4182 = vunpack.c.l.b16 %v4101
        %v4183 = vunpack.c.l.b16 %v4102
        %v4184 = vunpack.c.l.b16 %v4103
        %v4185 = vunpack.c.l.b16 %v4104
        %v4186 = vunpack.c.l.b16 %v4105
        %v4187 = vunpack.c.l.b16 %v4106
        %v4188 = vunpack.c.l.b16 %v4107
        %v4189 = vunpack.c.l.b16 %v4108
        %v4190 = vunpack.c.l.b16 %v4109
        %v4191 = vunpack.c.l.b16 %v4110
        %v4192 = vunpack.c.l.b16 %v4111
        %v4193 = vunpack.c.l.b16 %v4112
        %v4194 = vunpack.c.l.b16 %v4113
        %v4195 = vunpack.c.l.b16 %v4114
        %v4196 = vunpack.c.l.b16 %v4115
        %v4197 = vunpack.c.l.b16 %v4116
        %v4198 = vunpack.c.l.b16 %v4117
        %v4199 = vunpack.c.l.b16 %v4118
        %v4200 = vunpack.c.l.b16 %v4119
        %v4201 = vunpack.c.l.b16 %v4120
        %v4202 = vunpack.c.l.b16 %v4121
        %v4203 = vpack.c.b16 %v4172, %v4171
        %v4204 = vpack.c.b16 %v4174, %v4173
        %v4205 = vpack.c.b16 %v4176, %v4175
        %v4206 = vpack.c.b16 %v4178, %v4177
        %v4207 = vpack.c.b16 %v4180, %v4179
        %v4208 = vpack.c.b16 %v4182, %v4181
        %v4209 = vpack.c.b16 %v4184, %v4183
        %v4210 = vpack.c.b16 %v4186, %v4185
        %v4211 = vpack.c.b16 %v4188, %v4187
        %v4212 = vpack.c.b16 %v4190, %v4189
        %v4213 = vpack.c.b16 %v4192, %v4191
        %v4214 = vpack.c.b16 %v4194, %v4193
        %v4215 = vpack.c.b16 %v4196, %v4195
        %v4216 = vpack.c.b16 %v4198, %v4197
        %v4217 = vpack.c.b16 %v4200, %v4199
        %v4218 = vpack.c.b16 %v4202, %v4201
        %v4251 = vunpack.c.l.b16 %v4123
        %v4252 = vunpack.c.l.b16 %v4124
        %v4253 = vunpack.c.l.b16 %v4125
        %v4254 = vunpack.c.l.b16 %v4126
        %v4255 = vunpack.c.l.b16 %v4127
        %v4256 = vunpack.c.l.b16 %v4128
        %v4257 = vunpack.c.l.b16 %v4129
        %v4258 = vunpack.c.l.b16 %v4130
        %v4259 = vunpack.c.l.b16 %v4131
        %v4260 = vunpack.c.l.b16 %v4132
        %v4261 = vunpack.c.l.b16 %v4133
        %v4262 = vunpack.c.l.b16 %v4134
        %v4263 = vunpack.c.l.b16 %v4135
        %v4264 = vunpack.c.l.b16 %v4136
        %v4265 = vunpack.c.l.b16 %v4137
        %v4266 = vunpack.c.l.b16 %v4138
        %v4267 = vpack.c.b16 %v4252, %v4251
        %v4268 = vpack.c.b16 %v4254, %v4253
        %v4269 = vpack.c.b16 %v4256, %v4255
        %v4270 = vpack.c.b16 %v4258, %v4257
        %v4271 = vpack.c.b16 %v4260, %v4259
        %v4272 = vpack.c.b16 %v4262, %v4261
        %v4273 = vpack.c.b16 %v4264, %v4263
        %v4274 = vpack.c.b16 %v4266, %v4265
        %4283 = vmatprep.subr.bf16.mxu0 0
        %4284 = vmatpush1.bf16.msra.mxu0 %v4267
        %4285 = vmatprep.subr.bf16.mxu0 0
        %4286 = vmatpush1.bf16.msra.mxu0 %v4268
        %4287 = vmatprep.subr.bf16.mxu0 0
        %4288 = vmatpush1.bf16.msra.mxu0 %v4269
        %4289 = vmatprep.subr.bf16.mxu0 0
        %4290 = vmatpush1.bf16.msra.mxu0 %v4270
        %4291 = vmatprep.subr.bf16.mxu0 0
        %4292 = vmatpush1.bf16.msra.mxu0 %v4271
        %4293 = vmatprep.subr.bf16.mxu0 0
        %4294 = vmatpush1.bf16.msra.mxu0 %v4272
        %4295 = vmatprep.subr.bf16.mxu0 0
        %4296 = vmatpush1.bf16.msra.mxu0 %v4273
        %4297 = vmatprep.subr.bf16.mxu0 0
        %4298 = vmatpush1.bf16.msra.mxu0 %v4274
        %4299 = vmatprep.subr.bf16.mxu0 0
        %4300 = vmatpush1.bf16.msra.mxu0 0
        %4301 = vmatprep.subr.bf16.mxu0 0
        %4302 = vmatpush1.bf16.msra.mxu0 0
        %4303 = vmatprep.subr.bf16.mxu0 0
        %4304 = vmatpush1.bf16.msra.mxu0 0
        %4305 = vmatprep.subr.bf16.mxu0 0
        %4306 = vmatpush1.bf16.msra.mxu0 0
        %4307 = vmatprep.subr.bf16.mxu0 0
        %4308 = vmatpush1.bf16.msra.mxu0 0
        %4309 = vmatprep.subr.bf16.mxu0 0
        %4310 = vmatpush1.bf16.msra.mxu0 0
        %4311 = vmatprep.subr.bf16.mxu0 0
        %4312 = vmatpush1.bf16.msra.mxu0 0
        %4313 = vmatprep.subr.bf16.mxu0 0
        %4314 = vmatpush1.bf16.msra.mxu0 0
        %4315 = vmatprep.mubr.bf16.mxu0 0
        %4316 = vmatmul.mubr.bf16.gmra.mrb[0].mxu0 %v4203
        %v4317 = vpop.f32.mrb[0].mxu0
        %v4318 = vadd.f32 0.0, %v4317
        %v4319 = vpop.f32.mrb[0].mxu0
        %v4320 = vpop.f32.mrb[0].mxu0
        %v4321 = vadd.f32 0.0, %v4320
        %v4322 = vpop.f32.mrb[0].mxu0
        %4323 = vmatprep.mubr.bf16.mxu0 0
        %4324 = vmatmul.mubr.bf16.gmra.mrb[0].mxu0 %v4204
        %v4325 = vpop.f32.mrb[0].mxu0
        %v4326 = vadd.f32 0.0, %v4325
        %v4327 = vpop.f32.mrb[0].mxu0
        %v4328 = vpop.f32.mrb[0].mxu0
        %v4329 = vadd.f32 0.0, %v4328
        %v4330 = vpop.f32.mrb[0].mxu0
        %4331 = vmatprep.mubr.bf16.mxu0 0
        %4332 = vmatmul.mubr.bf16.gmra.mrb[0].mxu0 %v4205
        %v4333 = vpop.f32.mrb[0].mxu0
        %v4334 = vadd.f32 0.0, %v4333
        %v4335 = vpop.f32.mrb[0].mxu0
        %v4336 = vpop.f32.mrb[0].mxu0
        %v4337 = vadd.f32 0.0, %v4336
        %v4338 = vpop.f32.mrb[0].mxu0
        %4339 = vmatprep.mubr.bf16.mxu0 0
        %4340 = vmatmul.mubr.bf16.gmra.mrb[0].mxu0 %v4206
        %v4341 = vpop.f32.mrb[0].mxu0
        %v4342 = vadd.f32 0.0, %v4341
        %v4343 = vpop.f32.mrb[0].mxu0
        %v4344 = vpop.f32.mrb[0].mxu0
        %v4345 = vadd.f32 0.0, %v4344
        %v4346 = vpop.f32.mrb[0].mxu0
        %4347 = vmatprep.mubr.bf16.mxu0 0
        %4348 = vmatmul.mubr.bf16.gmra.mrb[0].mxu0 %v4207
        %v4349 = vpop.f32.mrb[0].mxu0
        %v4350 = vadd.f32 0.0, %v4349
        %v4351 = vpop.f32.mrb[0].mxu0
        %v4352 = vpop.f32.mrb[0].mxu0
        %v4353 = vadd.f32 0.0, %v4352
        %v4354 = vpop.f32.mrb[0].mxu0
        %4355 = vmatprep.mubr.bf16.mxu0 0
        %4356 = vmatmul.mubr.bf16.gmra.mrb[0].mxu0 %v4208
        %v4357 = vpop.f32.mrb[0].mxu0
        %v4358 = vadd.f32 0.0, %v4357
        %v4359 = vpop.f32.mrb[0].mxu0
        %v4360 = vpop.f32.mrb[0].mxu0
        %v4361 = vadd.f32 0.0, %v4360
        %v4362 = vpop.f32.mrb[0].mxu0
        %4363 = vmatprep.mubr.bf16.mxu0 0
        %4364 = vmatmul.mubr.bf16.gmra.mrb[0].mxu0 %v4209
        %v4365 = vpop.f32.mrb[0].mxu0
        %v4366 = vadd.f32 0.0, %v4365
        %v4367 = vpop.f32.mrb[0].mxu0
        %v4368 = vpop.f32.mrb[0].mxu0
        %v4369 = vadd.f32 0.0, %v4368
        %v4370 = vpop.f32.mrb[0].mxu0
        %4371 = vmatprep.mubr.bf16.mxu0 0
        %4372 = vmatmul.mubr.bf16.gmra.mrb[0].mxu0 %v4210
        %v4373 = vpop.f32.mrb[0].mxu0
        %v4374 = vadd.f32 0.0, %v4373
        %v4375 = vpop.f32.mrb[0].mxu0
        %v4376 = vpop.f32.mrb[0].mxu0
        %v4377 = vadd.f32 0.0, %v4376
        %v4378 = vpop.f32.mrb[0].mxu0
        %4379 = vmatprep.mubr.bf16.mxu0 0
        %4380 = vmatmul.mubr.bf16.gmra.mrb[0].mxu0 %v4211
        %v4381 = vpop.f32.mrb[0].mxu0
        %v4382 = vadd.f32 0.0, %v4381
        %v4383 = vpop.f32.mrb[0].mxu0
        %v4384 = vpop.f32.mrb[0].mxu0
        %v4385 = vadd.f32 0.0, %v4384
        %v4386 = vpop.f32.mrb[0].mxu0
        %4387 = vmatprep.mubr.bf16.mxu0 0
        %4388 = vmatmul.mubr.bf16.gmra.mrb[0].mxu0 %v4212
        %v4389 = vpop.f32.mrb[0].mxu0
        %v4390 = vadd.f32 0.0, %v4389
        %v4391 = vpop.f32.mrb[0].mxu0
        %v4392 = vpop.f32.mrb[0].mxu0
        %v4393 = vadd.f32 0.0, %v4392
        %v4394 = vpop.f32.mrb[0].mxu0
        %4395 = vmatprep.mubr.bf16.mxu0 0
        %4396 = vmatmul.mubr.bf16.gmra.mrb[0].mxu0 %v4213
        %v4397 = vpop.f32.mrb[0].mxu0
        %v4398 = vadd.f32 0.0, %v4397
        %v4399 = vpop.f32.mrb[0].mxu0
        %v4400 = vpop.f32.mrb[0].mxu0
        %v4401 = vadd.f32 0.0, %v4400
        %v4402 = vpop.f32.mrb[0].mxu0
        %4403 = vmatprep.mubr.bf16.mxu0 0
        %4404 = vmatmul.mubr.bf16.gmra.mrb[0].mxu0 %v4214
        %v4405 = vpop.f32.mrb[0].mxu0
        %v4406 = vadd.f32 0.0, %v4405
        %v4407 = vpop.f32.mrb[0].mxu0
        %v4408 = vpop.f32.mrb[0].mxu0
        %v4409 = vadd.f32 0.0, %v4408
        %v4410 = vpop.f32.mrb[0].mxu0
        %4411 = vmatprep.mubr.bf16.mxu0 0
        %4412 = vmatmul.mubr.bf16.gmra.mrb[0].mxu0 %v4215
        %v4413 = vpop.f32.mrb[0].mxu0
        %v4414 = vadd.f32 0.0, %v4413
        %v4415 = vpop.f32.mrb[0].mxu0
        %v4416 = vpop.f32.mrb[0].mxu0
        %v4417 = vadd.f32 0.0, %v4416
        %v4418 = vpop.f32.mrb[0].mxu0
        %4419 = vmatprep.mubr.bf16.mxu0 0
        %4420 = vmatmul.mubr.bf16.gmra.mrb[0].mxu0 %v4216
        %v4421 = vpop.f32.mrb[0].mxu0
        %v4422 = vadd.f32 0.0, %v4421
        %v4423 = vpop.f32.mrb[0].mxu0
        %v4424 = vpop.f32.mrb[0].mxu0
        %v4425 = vadd.f32 0.0, %v4424
        %v4426 = vpop.f32.mrb[0].mxu0
        %4427 = vmatprep.mubr.bf16.mxu0 0
        %4428 = vmatmul.mubr.bf16.gmra.mrb[0].mxu0 %v4217
        %v4429 = vpop.f32.mrb[0].mxu0
        %v4430 = vadd.f32 0.0, %v4429
        %v4431 = vpop.f32.mrb[0].mxu0
        %v4432 = vpop.f32.mrb[0].mxu0
        %v4433 = vadd.f32 0.0, %v4432
        %v4434 = vpop.f32.mrb[0].mxu0
        %4435 = vmatprep.mubr.bf16.mxu0 0
        %4436 = vmatmul.mubr.bf16.gmra.mrb[0].mxu0 %v4218
        %v4437 = vpop.f32.mrb[0].mxu0
        %v4438 = vadd.f32 0.0, %v4437
        %v4439 = vpop.f32.mrb[0].mxu0
        %v4440 = vpop.f32.mrb[0].mxu0
        %v4441 = vadd.f32 0.0, %v4440
        %v4442 = vpop.f32.mrb[0].mxu0
        %4443 = vdwg.mxu0
        %v4444 = vadd.f32 %v4057, %v4318
        %v4445 = vadd.f32 %v4058, %v4321
        %v4446 = vadd.f32 %v4059, %v4326
        %v4447 = vadd.f32 %v4060, %v4329
        %v4448 = vadd.f32 %v4061, %v4334
        %v4449 = vadd.f32 %v4062, %v4337
        %v4450 = vadd.f32 %v4063, %v4342
        %v4451 = vadd.f32 %v4064, %v4345
        %v4452 = vadd.f32 %v4065, %v4350
        %v4453 = vadd.f32 %v4066, %v4353
        %v4454 = vadd.f32 %v4067, %v4358
        %v4455 = vadd.f32 %v4068, %v4361
        %v4456 = vadd.f32 %v4069, %v4366
        %v4457 = vadd.f32 %v4070, %v4369
        %v4458 = vadd.f32 %v4071, %v4374
        %v4459 = vadd.f32 %v4072, %v4377
        %v4460 = vadd.f32 %v4073, %v4382
        %v4461 = vadd.f32 %v4074, %v4385
        %v4462 = vadd.f32 %v4075, %v4390
        %v4463 = vadd.f32 %v4076, %v4393
        %v4464 = vadd.f32 %v4077, %v4398
        %v4465 = vadd.f32 %v4078, %v4401
        %v4466 = vadd.f32 %v4079, %v4406
        %v4467 = vadd.f32 %v4080, %v4409
        %v4468 = vadd.f32 %v4081, %v4414
        %v4469 = vadd.f32 %v4082, %v4417
        %v4470 = vadd.f32 %v4083, %v4422
        %v4471 = vadd.f32 %v4084, %v4425
        %v4472 = vadd.f32 %v4085, %v4430
        %v4473 = vadd.f32 %v4086, %v4433
        %v4474 = vadd.f32 %v4087, %v4438
        %v4475 = vadd.f32 %v4088, %v4441
        %v4476 = vld [vmem:[%s4089] sm:$0xf]
        %v4477 = vld [vmem:[%s4089 + $0x4] sm:$0xf]
        %v4478 = vld [vmem:[%s4089 + $0x8] sm:$0x1]
        %v4479 = vld [vmem:[%s4089 + $0xc] sm:$0xf]
        %v4480 = vld [vmem:[%s4089 + $0x10] sm:$0xf]
        %v4481 = vld [vmem:[%s4089 + $0x14] sm:$0x1]
        %v4482 = vld [vmem:[%s4089 + $0x18] sm:$0xf]
        %v4483 = vld [vmem:[%s4089 + $0x1c] sm:$0xf]
        %v4484 = vld [vmem:[%s4089 + $0x20] sm:$0x1]
        %v4485 = vld [vmem:[%s4089 + $0x24] sm:$0xf]
        %v4486 = vld [vmem:[%s4089 + $0x28] sm:$0xf]
        %v4487 = vld [vmem:[%s4089 + $0x2c] sm:$0x1]
        %v4488 = vld [vmem:[%s4089 + $0x30] sm:$0xf]
        %v4489 = vld [vmem:[%s4089 + $0x34] sm:$0xf]
        %v4490 = vld [vmem:[%s4089 + $0x38] sm:$0x1]
        %v4491 = vld [vmem:[%s4089 + $0x3c] sm:$0xf]
        %v4492 = vld [vmem:[%s4089 + $0x40] sm:$0xf]
        %v4493 = vld [vmem:[%s4089 + $0x44] sm:$0x1]
        %v4494 = vld [vmem:[%s4089 + $0x48] sm:$0xf]
        %v4495 = vld [vmem:[%s4089 + $0x4c] sm:$0xf]
        %v4496 = vld [vmem:[%s4089 + $0x50] sm:$0x1]
        %v4497 = vld [vmem:[%s4089 + $0x54] sm:$0xf]
        %v4498 = vld [vmem:[%s4089 + $0x58] sm:$0xf]
        %v4499 = vld [vmem:[%s4089 + $0x5c] sm:$0x1]
        %v4500 = vld [vmem:[%s4089 + $0x60] sm:$0xf]
        %v4501 = vld [vmem:[%s4089 + $0x64] sm:$0xf]
        %v4502 = vld [vmem:[%s4089 + $0x68] sm:$0x1]
        %v4503 = vld [vmem:[%s4089 + $0x6c] sm:$0xf]
        %v4504 = vld [vmem:[%s4089 + $0x70] sm:$0xf]
        %v4505 = vld [vmem:[%s4089 + $0x74] sm:$0x1]
        %v4506 = vld [vmem:[%s4089 + $0x78] sm:$0xf]
        %v4507 = vld [vmem:[%s4089 + $0x7c] sm:$0xf]
        %v4508 = vld [vmem:[%s4089 + $0x80] sm:$0x1]
        %v4509 = vld [vmem:[%s4089 + $0x84] sm:$0xf]
        %v4510 = vld [vmem:[%s4089 + $0x88] sm:$0xf]
        %v4511 = vld [vmem:[%s4089 + $0x8c] sm:$0x1]
        %v4512 = vld [vmem:[%s4089 + $0x90] sm:$0xf]
        %v4513 = vld [vmem:[%s4089 + $0x94] sm:$0xf]
        %v4514 = vld [vmem:[%s4089 + $0x98] sm:$0x1]
        %v4515 = vld [vmem:[%s4089 + $0x9c] sm:$0xf]
        %v4516 = vld [vmem:[%s4089 + $0xa0] sm:$0xf]
        %v4517 = vld [vmem:[%s4089 + $0xa4] sm:$0x1]
        %v4518 = vld [vmem:[%s4089 + $0xa8] sm:$0xf]
        %v4519 = vld [vmem:[%s4089 + $0xac] sm:$0xf]
        %v4520 = vld [vmem:[%s4089 + $0xb0] sm:$0x1]
        %v4521 = vld [vmem:[%s4089 + $0xb4] sm:$0xf]
        %v4522 = vld [vmem:[%s4089 + $0xb8] sm:$0xf]
        %v4523 = vld [vmem:[%s4089 + $0xbc] sm:$0x1]
        %v4525 = vshrl.u32 %v4476, 16
        %v4527 = vrot.slane %v4525, 4
        %v4528 = vshll.u32 %v4476, 16
        %v4530 = vrot.slane %v4528, 5
        %v4531 = vor.u32 %v4527, %v4530
        %v4532 = vrot.slane %v4531, 4
        %v4534 = vshll.u32 %v4477, 16
        %v4536 = vrot.slane %v4534, 5
        %v4537 = vsel %vm985, %v4532, %v4536
        %v4538 = vshrl.u32 %v4477, 16
        %v4540 = vrot.slane %v4538, 4
        %v4541 = vor.u32 %v4540, %v4536
        %v4542 = vrot.slane %v4541, 4
        %v4544 = vshll.u32 %v4478, 16
        %v4546 = vrot.slane %v4544, 5
        %v4547 = vsel %vm985, %v4542, %v4546
        %v4549 = vshrl.u32 %v4479, 16
        %v4551 = vrot.slane %v4549, 4
        %v4552 = vshll.u32 %v4479, 16
        %v4554 = vrot.slane %v4552, 5
        %v4555 = vor.u32 %v4551, %v4554
        %v4556 = vrot.slane %v4555, 4
        %v4558 = vshll.u32 %v4480, 16
        %v4560 = vrot.slane %v4558, 5
        %v4561 = vsel %vm985, %v4556, %v4560
        %v4562 = vshrl.u32 %v4480, 16
        %v4564 = vrot.slane %v4562, 4
        %v4565 = vor.u32 %v4564, %v4560
        %v4566 = vrot.slane %v4565, 4
        %v4568 = vshll.u32 %v4481, 16
        %v4570 = vrot.slane %v4568, 5
        %v4571 = vsel %vm985, %v4566, %v4570
        %v4573 = vshrl.u32 %v4482, 16
        %v4575 = vrot.slane %v4573, 4
        %v4576 = vshll.u32 %v4482, 16
        %v4578 = vrot.slane %v4576, 5
        %v4579 = vor.u32 %v4575, %v4578
        %v4580 = vrot.slane %v4579, 4
        %v4582 = vshll.u32 %v4483, 16
        %v4584 = vrot.slane %v4582, 5
        %v4585 = vsel %vm985, %v4580, %v4584
        %v4586 = vshrl.u32 %v4483, 16
        %v4588 = vrot.slane %v4586, 4
        %v4589 = vor.u32 %v4588, %v4584
        %v4590 = vrot.slane %v4589, 4
        %v4592 = vshll.u32 %v4484, 16
        %v4594 = vrot.slane %v4592, 5
        %v4595 = vsel %vm985, %v4590, %v4594
        %v4597 = vshrl.u32 %v4485, 16
        %v4599 = vrot.slane %v4597, 4
        %v4600 = vshll.u32 %v4485, 16
        %v4602 = vrot.slane %v4600, 5
        %v4603 = vor.u32 %v4599, %v4602
        %v4604 = vrot.slane %v4603, 4
        %v4606 = vshll.u32 %v4486, 16
        %v4608 = vrot.slane %v4606, 5
        %v4609 = vsel %vm985, %v4604, %v4608
        %v4610 = vshrl.u32 %v4486, 16
        %v4612 = vrot.slane %v4610, 4
        %v4613 = vor.u32 %v4612, %v4608
        %v4614 = vrot.slane %v4613, 4
        %v4616 = vshll.u32 %v4487, 16
        %v4618 = vrot.slane %v4616, 5
        %v4619 = vsel %vm985, %v4614, %v4618
        %v4621 = vshrl.u32 %v4488, 16
        %v4623 = vrot.slane %v4621, 4
        %v4624 = vshll.u32 %v4488, 16
        %v4626 = vrot.slane %v4624, 5
        %v4627 = vor.u32 %v4623, %v4626
        %v4628 = vrot.slane %v4627, 4
        %v4630 = vshll.u32 %v4489, 16
        %v4632 = vrot.slane %v4630, 5
        %v4633 = vsel %vm985, %v4628, %v4632
        %v4634 = vshrl.u32 %v4489, 16
        %v4636 = vrot.slane %v4634, 4
        %v4637 = vor.u32 %v4636, %v4632
        %v4638 = vrot.slane %v4637, 4
        %v4640 = vshll.u32 %v4490, 16
        %v4642 = vrot.slane %v4640, 5
        %v4643 = vsel %vm985, %v4638, %v4642
        %v4645 = vshrl.u32 %v4491, 16
        %v4647 = vrot.slane %v4645, 4
        %v4648 = vshll.u32 %v4491, 16
        %v4650 = vrot.slane %v4648, 5
        %v4651 = vor.u32 %v4647, %v4650
        %v4652 = vrot.slane %v4651, 4
        %v4654 = vshll.u32 %v4492, 16
        %v4656 = vrot.slane %v4654, 5
        %v4657 = vsel %vm985, %v4652, %v4656
        %v4658 = vshrl.u32 %v4492, 16
        %v4660 = vrot.slane %v4658, 4
        %v4661 = vor.u32 %v4660, %v4656
        %v4662 = vrot.slane %v4661, 4
        %v4664 = vshll.u32 %v4493, 16
        %v4666 = vrot.slane %v4664, 5
        %v4667 = vsel %vm985, %v4662, %v4666
        %v4669 = vshrl.u32 %v4494, 16
        %v4671 = vrot.slane %v4669, 4
        %v4672 = vshll.u32 %v4494, 16
        %v4674 = vrot.slane %v4672, 5
        %v4675 = vor.u32 %v4671, %v4674
        %v4676 = vrot.slane %v4675, 4
        %v4678 = vshll.u32 %v4495, 16
        %v4680 = vrot.slane %v4678, 5
        %v4681 = vsel %vm985, %v4676, %v4680
        %v4682 = vshrl.u32 %v4495, 16
        %v4684 = vrot.slane %v4682, 4
        %v4685 = vor.u32 %v4684, %v4680
        %v4686 = vrot.slane %v4685, 4
        %v4688 = vshll.u32 %v4496, 16
        %v4690 = vrot.slane %v4688, 5
        %v4691 = vsel %vm985, %v4686, %v4690
        %v4693 = vshrl.u32 %v4497, 16
        %v4695 = vrot.slane %v4693, 4
        %v4696 = vshll.u32 %v4497, 16
        %v4698 = vrot.slane %v4696, 5
        %v4699 = vor.u32 %v4695, %v4698
        %v4700 = vrot.slane %v4699, 4
        %v4702 = vshll.u32 %v4498, 16
        %v4704 = vrot.slane %v4702, 5
        %v4705 = vsel %vm985, %v4700, %v4704
        %v4706 = vshrl.u32 %v4498, 16
        %v4708 = vrot.slane %v4706, 4
        %v4709 = vor.u32 %v4708, %v4704
        %v4710 = vrot.slane %v4709, 4
        %v4712 = vshll.u32 %v4499, 16
        %v4714 = vrot.slane %v4712, 5
        %v4715 = vsel %vm985, %v4710, %v4714
        %v4717 = vshrl.u32 %v4500, 16
        %v4719 = vrot.slane %v4717, 4
        %v4720 = vshll.u32 %v4500, 16
        %v4722 = vrot.slane %v4720, 5
        %v4723 = vor.u32 %v4719, %v4722
        %v4724 = vrot.slane %v4723, 4
        %v4726 = vshll.u32 %v4501, 16
        %v4728 = vrot.slane %v4726, 5
        %v4729 = vsel %vm985, %v4724, %v4728
        %v4730 = vshrl.u32 %v4501, 16
        %v4732 = vrot.slane %v4730, 4
        %v4733 = vor.u32 %v4732, %v4728
        %v4734 = vrot.slane %v4733, 4
        %v4736 = vshll.u32 %v4502, 16
        %v4738 = vrot.slane %v4736, 5
        %v4739 = vsel %vm985, %v4734, %v4738
        %v4741 = vshrl.u32 %v4503, 16
        %v4743 = vrot.slane %v4741, 4
        %v4744 = vshll.u32 %v4503, 16
        %v4746 = vrot.slane %v4744, 5
        %v4747 = vor.u32 %v4743, %v4746
        %v4748 = vrot.slane %v4747, 4
        %v4750 = vshll.u32 %v4504, 16
        %v4752 = vrot.slane %v4750, 5
        %v4753 = vsel %vm985, %v4748, %v4752
        %v4754 = vshrl.u32 %v4504, 16
        %v4756 = vrot.slane %v4754, 4
        %v4757 = vor.u32 %v4756, %v4752
        %v4758 = vrot.slane %v4757, 4
        %v4760 = vshll.u32 %v4505, 16
        %v4762 = vrot.slane %v4760, 5
        %v4763 = vsel %vm985, %v4758, %v4762
        %v4765 = vshrl.u32 %v4506, 16
        %v4767 = vrot.slane %v4765, 4
        %v4768 = vshll.u32 %v4506, 16
        %v4770 = vrot.slane %v4768, 5
        %v4771 = vor.u32 %v4767, %v4770
        %v4772 = vrot.slane %v4771, 4
        %v4774 = vshll.u32 %v4507, 16
        %v4776 = vrot.slane %v4774, 5
        %v4777 = vsel %vm985, %v4772, %v4776
        %v4778 = vshrl.u32 %v4507, 16
        %v4780 = vrot.slane %v4778, 4
        %v4781 = vor.u32 %v4780, %v4776
        %v4782 = vrot.slane %v4781, 4
        %v4784 = vshll.u32 %v4508, 16
        %v4786 = vrot.slane %v4784, 5
        %v4787 = vsel %vm985, %v4782, %v4786
        %v4789 = vshrl.u32 %v4509, 16
        %v4791 = vrot.slane %v4789, 4
        %v4792 = vshll.u32 %v4509, 16
        %v4794 = vrot.slane %v4792, 5
        %v4795 = vor.u32 %v4791, %v4794
        %v4796 = vrot.slane %v4795, 4
        %v4798 = vshll.u32 %v4510, 16
        %v4800 = vrot.slane %v4798, 5
        %v4801 = vsel %vm985, %v4796, %v4800
        %v4802 = vshrl.u32 %v4510, 16
        %v4804 = vrot.slane %v4802, 4
        %v4805 = vor.u32 %v4804, %v4800
        %v4806 = vrot.slane %v4805, 4
        %v4808 = vshll.u32 %v4511, 16
        %v4810 = vrot.slane %v4808, 5
        %v4811 = vsel %vm985, %v4806, %v4810
        %v4813 = vshrl.u32 %v4512, 16
        %v4815 = vrot.slane %v4813, 4
        %v4816 = vshll.u32 %v4512, 16
        %v4818 = vrot.slane %v4816, 5
        %v4819 = vor.u32 %v4815, %v4818
        %v4820 = vrot.slane %v4819, 4
        %v4822 = vshll.u32 %v4513, 16
        %v4824 = vrot.slane %v4822, 5
        %v4825 = vsel %vm985, %v4820, %v4824
        %v4826 = vshrl.u32 %v4513, 16
        %v4828 = vrot.slane %v4826, 4
        %v4829 = vor.u32 %v4828, %v4824
        %v4830 = vrot.slane %v4829, 4
        %v4832 = vshll.u32 %v4514, 16
        %v4834 = vrot.slane %v4832, 5
        %v4835 = vsel %vm985, %v4830, %v4834
        %v4837 = vshrl.u32 %v4515, 16
        %v4839 = vrot.slane %v4837, 4
        %v4840 = vshll.u32 %v4515, 16
        %v4842 = vrot.slane %v4840, 5
        %v4843 = vor.u32 %v4839, %v4842
        %v4844 = vrot.slane %v4843, 4
        %v4846 = vshll.u32 %v4516, 16
        %v4848 = vrot.slane %v4846, 5
        %v4849 = vsel %vm985, %v4844, %v4848
        %v4850 = vshrl.u32 %v4516, 16
        %v4852 = vrot.slane %v4850, 4
        %v4853 = vor.u32 %v4852, %v4848
        %v4854 = vrot.slane %v4853, 4
        %v4856 = vshll.u32 %v4517, 16
        %v4858 = vrot.slane %v4856, 5
        %v4859 = vsel %vm985, %v4854, %v4858
        %v4861 = vshrl.u32 %v4518, 16
        %v4863 = vrot.slane %v4861, 4
        %v4864 = vshll.u32 %v4518, 16
        %v4866 = vrot.slane %v4864, 5
        %v4867 = vor.u32 %v4863, %v4866
        %v4868 = vrot.slane %v4867, 4
        %v4870 = vshll.u32 %v4519, 16
        %v4872 = vrot.slane %v4870, 5
        %v4873 = vsel %vm985, %v4868, %v4872
        %v4874 = vshrl.u32 %v4519, 16
        %v4876 = vrot.slane %v4874, 4
        %v4877 = vor.u32 %v4876, %v4872
        %v4878 = vrot.slane %v4877, 4
        %v4880 = vshll.u32 %v4520, 16
        %v4882 = vrot.slane %v4880, 5
        %v4883 = vsel %vm985, %v4878, %v4882
        %v4885 = vshrl.u32 %v4521, 16
        %v4887 = vrot.slane %v4885, 4
        %v4888 = vshll.u32 %v4521, 16
        %v4890 = vrot.slane %v4888, 5
        %v4891 = vor.u32 %v4887, %v4890
        %v4892 = vrot.slane %v4891, 4
        %v4894 = vshll.u32 %v4522, 16
        %v4896 = vrot.slane %v4894, 5
        %v4897 = vsel %vm985, %v4892, %v4896
        %v4898 = vshrl.u32 %v4522, 16
        %v4900 = vrot.slane %v4898, 4
        %v4901 = vor.u32 %v4900, %v4896
        %v4902 = vrot.slane %v4901, 4
        %v4904 = vshll.u32 %v4523, 16
        %v4906 = vrot.slane %v4904, 5
        %v4907 = vsel %vm985, %v4902, %v4906
        %s4908 = scalar_lea.vmem %s1, 448
        %v4909 = vld [vmem:[%s4908] sm:$0xf]
        %v4910 = vld [vmem:[%s4908 + $0x4] sm:$0xf]
        %v4911 = vld [vmem:[%s4908 + $0x8] sm:$0xf]
        %v4912 = vld [vmem:[%s4908 + $0xc] sm:$0xf]
        %v4913 = vld [vmem:[%s4908 + $0x10] sm:$0xf]
        %v4914 = vld [vmem:[%s4908 + $0x14] sm:$0xf]
        %v4915 = vld [vmem:[%s4908 + $0x18] sm:$0xf]
        %v4916 = vld [vmem:[%s4908 + $0x1c] sm:$0xf]
        %v4917 = vld [vmem:[%s4908 + $0x20] sm:$0xf]
        %v4918 = vld [vmem:[%s4908 + $0x24] sm:$0xf]
        %v4919 = vld [vmem:[%s4908 + $0x28] sm:$0xf]
        %v4920 = vld [vmem:[%s4908 + $0x2c] sm:$0xf]
        %v4921 = vld [vmem:[%s4908 + $0x30] sm:$0xf]
        %v4922 = vld [vmem:[%s4908 + $0x34] sm:$0xf]
        %v4923 = vld [vmem:[%s4908 + $0x38] sm:$0xf]
        %v4924 = vld [vmem:[%s4908 + $0x3c] sm:$0xf]
        %v4925 = vunpack.c.l.b16 %v4537
        %v4926 = vunpack.c.l.b16 %v4547
        %v4927 = vunpack.c.l.b16 %v4561
        %v4928 = vunpack.c.l.b16 %v4571
        %v4929 = vunpack.c.l.b16 %v4585
        %v4930 = vunpack.c.l.b16 %v4595
        %v4931 = vunpack.c.l.b16 %v4609
        %v4932 = vunpack.c.l.b16 %v4619
        %v4933 = vunpack.c.l.b16 %v4633
        %v4934 = vunpack.c.l.b16 %v4643
        %v4935 = vunpack.c.l.b16 %v4657
        %v4936 = vunpack.c.l.b16 %v4667
        %v4937 = vunpack.c.l.b16 %v4681
        %v4938 = vunpack.c.l.b16 %v4691
        %v4939 = vunpack.c.l.b16 %v4705
        %v4940 = vunpack.c.l.b16 %v4715
        %v4941 = vunpack.c.l.b16 %v4729
        %v4942 = vunpack.c.l.b16 %v4739
        %v4943 = vunpack.c.l.b16 %v4753
        %v4944 = vunpack.c.l.b16 %v4763
        %v4945 = vunpack.c.l.b16 %v4777
        %v4946 = vunpack.c.l.b16 %v4787
        %v4947 = vunpack.c.l.b16 %v4801
        %v4948 = vunpack.c.l.b16 %v4811
        %v4949 = vunpack.c.l.b16 %v4825
        %v4950 = vunpack.c.l.b16 %v4835
        %v4951 = vunpack.c.l.b16 %v4849
        %v4952 = vunpack.c.l.b16 %v4859
        %v4953 = vunpack.c.l.b16 %v4873
        %v4954 = vunpack.c.l.b16 %v4883
        %v4955 = vunpack.c.l.b16 %v4897
        %v4956 = vunpack.c.l.b16 %v4907
        %v4957 = vpack.c.b16 %v4926, %v4925
        %v4958 = vpack.c.b16 %v4928, %v4927
        %v4959 = vpack.c.b16 %v4930, %v4929
        %v4960 = vpack.c.b16 %v4932, %v4931
        %v4961 = vpack.c.b16 %v4934, %v4933
        %v4962 = vpack.c.b16 %v4936, %v4935
        %v4963 = vpack.c.b16 %v4938, %v4937
        %v4964 = vpack.c.b16 %v4940, %v4939
        %v4965 = vpack.c.b16 %v4942, %v4941
        %v4966 = vpack.c.b16 %v4944, %v4943
        %v4967 = vpack.c.b16 %v4946, %v4945
        %v4968 = vpack.c.b16 %v4948, %v4947
        %v4969 = vpack.c.b16 %v4950, %v4949
        %v4970 = vpack.c.b16 %v4952, %v4951
        %v4971 = vpack.c.b16 %v4954, %v4953
        %v4972 = vpack.c.b16 %v4956, %v4955
        %v5005 = vunpack.c.l.b16 %v4909
        %v5006 = vunpack.c.l.b16 %v4910
        %v5007 = vunpack.c.l.b16 %v4911
        %v5008 = vunpack.c.l.b16 %v4912
        %v5009 = vunpack.c.l.b16 %v4913
        %v5010 = vunpack.c.l.b16 %v4914
        %v5011 = vunpack.c.l.b16 %v4915
        %v5012 = vunpack.c.l.b16 %v4916
        %v5013 = vunpack.c.l.b16 %v4917
        %v5014 = vunpack.c.l.b16 %v4918
        %v5015 = vunpack.c.l.b16 %v4919
        %v5016 = vunpack.c.l.b16 %v4920
        %v5017 = vunpack.c.l.b16 %v4921
        %v5018 = vunpack.c.l.b16 %v4922
        %v5019 = vunpack.c.l.b16 %v4923
        %v5020 = vunpack.c.l.b16 %v4924
        %v5021 = vpack.c.b16 %v5006, %v5005
        %v5022 = vpack.c.b16 %v5008, %v5007
        %v5023 = vpack.c.b16 %v5010, %v5009
        %v5024 = vpack.c.b16 %v5012, %v5011
        %v5025 = vpack.c.b16 %v5014, %v5013
        %v5026 = vpack.c.b16 %v5016, %v5015
        %v5027 = vpack.c.b16 %v5018, %v5017
        %v5028 = vpack.c.b16 %v5020, %v5019
        %5037 = vmatprep.subr.bf16.mxu0 0
        %5038 = vmatpush1.bf16.msra.mxu0 %v5021
        %5039 = vmatprep.subr.bf16.mxu0 0
        %5040 = vmatpush1.bf16.msra.mxu0 %v5022
        %5041 = vmatprep.subr.bf16.mxu0 0
        %5042 = vmatpush1.bf16.msra.mxu0 %v5023
        %5043 = vmatprep.subr.bf16.mxu0 0
        %5044 = vmatpush1.bf16.msra.mxu0 %v5024
        %5045 = vmatprep.subr.bf16.mxu0 0
        %5046 = vmatpush1.bf16.msra.mxu0 %v5025
        %5047 = vmatprep.subr.bf16.mxu0 0
        %5048 = vmatpush1.bf16.msra.mxu0 %v5026
        %5049 = vmatprep.subr.bf16.mxu0 0
        %5050 = vmatpush1.bf16.msra.mxu0 %v5027
        %5051 = vmatprep.subr.bf16.mxu0 0
        %5052 = vmatpush1.bf16.msra.mxu0 %v5028
        %5053 = vmatprep.subr.bf16.mxu0 0
        %5054 = vmatpush1.bf16.msra.mxu0 0
        %5055 = vmatprep.subr.bf16.mxu0 0
        %5056 = vmatpush1.bf16.msra.mxu0 0
        %5057 = vmatprep.subr.bf16.mxu0 0
        %5058 = vmatpush1.bf16.msra.mxu0 0
        %5059 = vmatprep.subr.bf16.mxu0 0
        %5060 = vmatpush1.bf16.msra.mxu0 0
        %5061 = vmatprep.subr.bf16.mxu0 0
        %5062 = vmatpush1.bf16.msra.mxu0 0
        %5063 = vmatprep.subr.bf16.mxu0 0
        %5064 = vmatpush1.bf16.msra.mxu0 0
        %5065 = vmatprep.subr.bf16.mxu0 0
        %5066 = vmatpush1.bf16.msra.mxu0 0
        %5067 = vmatprep.subr.bf16.mxu0 0
        %5068 = vmatpush1.bf16.msra.mxu0 0
        %5069 = vmatprep.mubr.bf16.mxu0 0
        %5070 = vmatmul.mubr.bf16.gmra.mrb[0].mxu0 %v4957
        %v5071 = vpop.f32.mrb[0].mxu0
        %v5072 = vadd.f32 0.0, %v5071
        %v5073 = vpop.f32.mrb[0].mxu0
        %v5074 = vpop.f32.mrb[0].mxu0
        %v5075 = vadd.f32 0.0, %v5074
        %v5076 = vpop.f32.mrb[0].mxu0
        %5077 = vmatprep.mubr.bf16.mxu0 0
        %5078 = vmatmul.mubr.bf16.gmra.mrb[0].mxu0 %v4958
        %v5079 = vpop.f32.mrb[0].mxu0
        %v5080 = vadd.f32 0.0, %v5079
        %v5081 = vpop.f32.mrb[0].mxu0
        %v5082 = vpop.f32.mrb[0].mxu0
        %v5083 = vadd.f32 0.0, %v5082
        %v5084 = vpop.f32.mrb[0].mxu0
        %5085 = vmatprep.mubr.bf16.mxu0 0
        %5086 = vmatmul.mubr.bf16.gmra.mrb[0].mxu0 %v4959
        %v5087 = vpop.f32.mrb[0].mxu0
        %v5088 = vadd.f32 0.0, %v5087
        %v5089 = vpop.f32.mrb[0].mxu0
        %v5090 = vpop.f32.mrb[0].mxu0
        %v5091 = vadd.f32 0.0, %v5090
        %v5092 = vpop.f32.mrb[0].mxu0
        %5093 = vmatprep.mubr.bf16.mxu0 0
        %5094 = vmatmul.mubr.bf16.gmra.mrb[0].mxu0 %v4960
        %v5095 = vpop.f32.mrb[0].mxu0
        %v5096 = vadd.f32 0.0, %v5095
        %v5097 = vpop.f32.mrb[0].mxu0
        %v5098 = vpop.f32.mrb[0].mxu0
        %v5099 = vadd.f32 0.0, %v5098
        %v5100 = vpop.f32.mrb[0].mxu0
        %5101 = vmatprep.mubr.bf16.mxu0 0
        %5102 = vmatmul.mubr.bf16.gmra.mrb[0].mxu0 %v4961
        %v5103 = vpop.f32.mrb[0].mxu0
        %v5104 = vadd.f32 0.0, %v5103
        %v5105 = vpop.f32.mrb[0].mxu0
        %v5106 = vpop.f32.mrb[0].mxu0
        %v5107 = vadd.f32 0.0, %v5106
        %v5108 = vpop.f32.mrb[0].mxu0
        %5109 = vmatprep.mubr.bf16.mxu0 0
        %5110 = vmatmul.mubr.bf16.gmra.mrb[0].mxu0 %v4962
        %v5111 = vpop.f32.mrb[0].mxu0
        %v5112 = vadd.f32 0.0, %v5111
        %v5113 = vpop.f32.mrb[0].mxu0
        %v5114 = vpop.f32.mrb[0].mxu0
        %v5115 = vadd.f32 0.0, %v5114
        %v5116 = vpop.f32.mrb[0].mxu0
        %5117 = vmatprep.mubr.bf16.mxu0 0
        %5118 = vmatmul.mubr.bf16.gmra.mrb[0].mxu0 %v4963
        %v5119 = vpop.f32.mrb[0].mxu0
        %v5120 = vadd.f32 0.0, %v5119
        %v5121 = vpop.f32.mrb[0].mxu0
        %v5122 = vpop.f32.mrb[0].mxu0
        %v5123 = vadd.f32 0.0, %v5122
        %v5124 = vpop.f32.mrb[0].mxu0
        %5125 = vmatprep.mubr.bf16.mxu0 0
        %5126 = vmatmul.mubr.bf16.gmra.mrb[0].mxu0 %v4964
        %v5127 = vpop.f32.mrb[0].mxu0
        %v5128 = vadd.f32 0.0, %v5127
        %v5129 = vpop.f32.mrb[0].mxu0
        %v5130 = vpop.f32.mrb[0].mxu0
        %v5131 = vadd.f32 0.0, %v5130
        %v5132 = vpop.f32.mrb[0].mxu0
        %5133 = vmatprep.mubr.bf16.mxu0 0
        %5134 = vmatmul.mubr.bf16.gmra.mrb[0].mxu0 %v4965
        %v5135 = vpop.f32.mrb[0].mxu0
        %v5136 = vadd.f32 0.0, %v5135
        %v5137 = vpop.f32.mrb[0].mxu0
        %v5138 = vpop.f32.mrb[0].mxu0
        %v5139 = vadd.f32 0.0, %v5138
        %v5140 = vpop.f32.mrb[0].mxu0
        %5141 = vmatprep.mubr.bf16.mxu0 0
        %5142 = vmatmul.mubr.bf16.gmra.mrb[0].mxu0 %v4966
        %v5143 = vpop.f32.mrb[0].mxu0
        %v5144 = vadd.f32 0.0, %v5143
        %v5145 = vpop.f32.mrb[0].mxu0
        %v5146 = vpop.f32.mrb[0].mxu0
        %v5147 = vadd.f32 0.0, %v5146
        %v5148 = vpop.f32.mrb[0].mxu0
        %5149 = vmatprep.mubr.bf16.mxu0 0
        %5150 = vmatmul.mubr.bf16.gmra.mrb[0].mxu0 %v4967
        %v5151 = vpop.f32.mrb[0].mxu0
        %v5152 = vadd.f32 0.0, %v5151
        %v5153 = vpop.f32.mrb[0].mxu0
        %v5154 = vpop.f32.mrb[0].mxu0
        %v5155 = vadd.f32 0.0, %v5154
        %v5156 = vpop.f32.mrb[0].mxu0
        %5157 = vmatprep.mubr.bf16.mxu0 0
        %5158 = vmatmul.mubr.bf16.gmra.mrb[0].mxu0 %v4968
        %v5159 = vpop.f32.mrb[0].mxu0
        %v5160 = vadd.f32 0.0, %v5159
        %v5161 = vpop.f32.mrb[0].mxu0
        %v5162 = vpop.f32.mrb[0].mxu0
        %v5163 = vadd.f32 0.0, %v5162
        %v5164 = vpop.f32.mrb[0].mxu0
        %5165 = vmatprep.mubr.bf16.mxu0 0
        %5166 = vmatmul.mubr.bf16.gmra.mrb[0].mxu0 %v4969
        %v5167 = vpop.f32.mrb[0].mxu0
        %v5168 = vadd.f32 0.0, %v5167
        %v5169 = vpop.f32.mrb[0].mxu0
        %v5170 = vpop.f32.mrb[0].mxu0
        %v5171 = vadd.f32 0.0, %v5170
        %v5172 = vpop.f32.mrb[0].mxu0
        %5173 = vmatprep.mubr.bf16.mxu0 0
        %5174 = vmatmul.mubr.bf16.gmra.mrb[0].mxu0 %v4970
        %v5175 = vpop.f32.mrb[0].mxu0
        %v5176 = vadd.f32 0.0, %v5175
        %v5177 = vpop.f32.mrb[0].mxu0
        %v5178 = vpop.f32.mrb[0].mxu0
        %v5179 = vadd.f32 0.0, %v5178
        %v5180 = vpop.f32.mrb[0].mxu0
        %5181 = vmatprep.mubr.bf16.mxu0 0
        %5182 = vmatmul.mubr.bf16.gmra.mrb[0].mxu0 %v4971
        %v5183 = vpop.f32.mrb[0].mxu0
        %v5184 = vadd.f32 0.0, %v5183
        %v5185 = vpop.f32.mrb[0].mxu0
        %v5186 = vpop.f32.mrb[0].mxu0
        %v5187 = vadd.f32 0.0, %v5186
        %v5188 = vpop.f32.mrb[0].mxu0
        %5189 = vmatprep.mubr.bf16.mxu0 0
        %5190 = vmatmul.mubr.bf16.gmra.mrb[0].mxu0 %v4972
        %v5191 = vpop.f32.mrb[0].mxu0
        %v5192 = vadd.f32 0.0, %v5191
        %v5193 = vpop.f32.mrb[0].mxu0
        %v5194 = vpop.f32.mrb[0].mxu0
        %v5195 = vadd.f32 0.0, %v5194
        %v5196 = vpop.f32.mrb[0].mxu0
        %5197 = vdwg.mxu0
        %v5198 = vadd.f32 %v4444, %v5072
        %v5199 = vadd.f32 %v4445, %v5075
        %v5200 = vadd.f32 %v4446, %v5080
        %v5201 = vadd.f32 %v4447, %v5083
        %v5202 = vadd.f32 %v4448, %v5088
        %v5203 = vadd.f32 %v4449, %v5091
        %v5204 = vadd.f32 %v4450, %v5096
        %v5205 = vadd.f32 %v4451, %v5099
        %v5206 = vadd.f32 %v4452, %v5104
        %v5207 = vadd.f32 %v4453, %v5107
        %v5208 = vadd.f32 %v4454, %v5112
        %v5209 = vadd.f32 %v4455, %v5115
        %v5210 = vadd.f32 %v4456, %v5120
        %v5211 = vadd.f32 %v4457, %v5123
        %v5212 = vadd.f32 %v4458, %v5128
        %v5213 = vadd.f32 %v4459, %v5131
        %v5214 = vadd.f32 %v4460, %v5136
        %v5215 = vadd.f32 %v4461, %v5139
        %v5216 = vadd.f32 %v4462, %v5144
        %v5217 = vadd.f32 %v4463, %v5147
        %v5218 = vadd.f32 %v4464, %v5152
        %v5219 = vadd.f32 %v4465, %v5155
        %v5220 = vadd.f32 %v4466, %v5160
        %v5221 = vadd.f32 %v4467, %v5163
        %v5222 = vadd.f32 %v4468, %v5168
        %v5223 = vadd.f32 %v4469, %v5171
        %v5224 = vadd.f32 %v4470, %v5176
        %v5225 = vadd.f32 %v4471, %v5179
        %v5226 = vadd.f32 %v4472, %v5184
        %v5227 = vadd.f32 %v4473, %v5187
        %v5228 = vadd.f32 %v4474, %v5192
        %v5229 = vadd.f32 %v4475, %v5195
        %v5230 = vld [vmem:[%s4089] sm:$0xe]
        %v5231 = vld [vmem:[%s4089 + $0xc] sm:$0xe]
        %v5232 = vld [vmem:[%s4089 + $0x18] sm:$0xe]
        %v5233 = vld [vmem:[%s4089 + $0x24] sm:$0xe]
        %v5234 = vld [vmem:[%s4089 + $0x30] sm:$0xe]
        %v5235 = vld [vmem:[%s4089 + $0x3c] sm:$0xe]
        %v5236 = vld [vmem:[%s4089 + $0x48] sm:$0xe]
        %v5237 = vld [vmem:[%s4089 + $0x54] sm:$0xe]
        %v5238 = vld [vmem:[%s4089 + $0x60] sm:$0xe]
        %v5239 = vld [vmem:[%s4089 + $0x6c] sm:$0xe]
        %v5240 = vld [vmem:[%s4089 + $0x78] sm:$0xe]
        %v5241 = vld [vmem:[%s4089 + $0x84] sm:$0xe]
        %v5242 = vld [vmem:[%s4089 + $0x90] sm:$0xe]
        %v5243 = vld [vmem:[%s4089 + $0x9c] sm:$0xe]
        %v5244 = vld [vmem:[%s4089 + $0xa8] sm:$0xe]
        %v5245 = vld [vmem:[%s4089 + $0xb4] sm:$0xe]
        %v5294 = vrot.slane %v5230, 5
        %v5295 = vrot.slane %v5294, 4
        %v5296 = vrot.slane %v4477, 5
        %v5297 = vsel %vm2015, %v5295, %v5296
        %v5298 = vrot.slane %v5296, 4
        %v5299 = vrot.slane %v4478, 5
        %v5300 = vsel %vm2015, %v5298, %v5299
        %v5301 = vrot.slane %v5231, 5
        %v5302 = vrot.slane %v5301, 4
        %v5303 = vrot.slane %v4480, 5
        %v5304 = vsel %vm2015, %v5302, %v5303
        %v5305 = vrot.slane %v5303, 4
        %v5306 = vrot.slane %v4481, 5
        %v5307 = vsel %vm2015, %v5305, %v5306
        %v5308 = vrot.slane %v5232, 5
        %v5309 = vrot.slane %v5308, 4
        %v5310 = vrot.slane %v4483, 5
        %v5311 = vsel %vm2015, %v5309, %v5310
        %v5312 = vrot.slane %v5310, 4
        %v5313 = vrot.slane %v4484, 5
        %v5314 = vsel %vm2015, %v5312, %v5313
        %v5315 = vrot.slane %v5233, 5
        %v5316 = vrot.slane %v5315, 4
        %v5317 = vrot.slane %v4486, 5
        %v5318 = vsel %vm2015, %v5316, %v5317
        %v5319 = vrot.slane %v5317, 4
        %v5320 = vrot.slane %v4487, 5
        %v5321 = vsel %vm2015, %v5319, %v5320
        %v5322 = vrot.slane %v5234, 5
        %v5323 = vrot.slane %v5322, 4
        %v5324 = vrot.slane %v4489, 5
        %v5325 = vsel %vm2015, %v5323, %v5324
        %v5326 = vrot.slane %v5324, 4
        %v5327 = vrot.slane %v4490, 5
        %v5328 = vsel %vm2015, %v5326, %v5327
        %v5329 = vrot.slane %v5235, 5
        %v5330 = vrot.slane %v5329, 4
        %v5331 = vrot.slane %v4492, 5
        %v5332 = vsel %vm2015, %v5330, %v5331
        %v5333 = vrot.slane %v5331, 4
        %v5334 = vrot.slane %v4493, 5
        %v5335 = vsel %vm2015, %v5333, %v5334
        %v5336 = vrot.slane %v5236, 5
        %v5337 = vrot.slane %v5336, 4
        %v5338 = vrot.slane %v4495, 5
        %v5339 = vsel %vm2015, %v5337, %v5338
        %v5340 = vrot.slane %v5338, 4
        %v5341 = vrot.slane %v4496, 5
        %v5342 = vsel %vm2015, %v5340, %v5341
        %v5343 = vrot.slane %v5237, 5
        %v5344 = vrot.slane %v5343, 4
        %v5345 = vrot.slane %v4498, 5
        %v5346 = vsel %vm2015, %v5344, %v5345
        %v5347 = vrot.slane %v5345, 4
        %v5348 = vrot.slane %v4499, 5
        %v5349 = vsel %vm2015, %v5347, %v5348
        %v5350 = vrot.slane %v5238, 5
        %v5351 = vrot.slane %v5350, 4
        %v5352 = vrot.slane %v4501, 5
        %v5353 = vsel %vm2015, %v5351, %v5352
        %v5354 = vrot.slane %v5352, 4
        %v5355 = vrot.slane %v4502, 5
        %v5356 = vsel %vm2015, %v5354, %v5355
        %v5357 = vrot.slane %v5239, 5
        %v5358 = vrot.slane %v5357, 4
        %v5359 = vrot.slane %v4504, 5
        %v5360 = vsel %vm2015, %v5358, %v5359
        %v5361 = vrot.slane %v5359, 4
        %v5362 = vrot.slane %v4505, 5
        %v5363 = vsel %vm2015, %v5361, %v5362
        %v5364 = vrot.slane %v5240, 5
        %v5365 = vrot.slane %v5364, 4
        %v5366 = vrot.slane %v4507, 5
        %v5367 = vsel %vm2015, %v5365, %v5366
        %v5368 = vrot.slane %v5366, 4
        %v5369 = vrot.slane %v4508, 5
        %v5370 = vsel %vm2015, %v5368, %v5369
        %v5371 = vrot.slane %v5241, 5
        %v5372 = vrot.slane %v5371, 4
        %v5373 = vrot.slane %v4510, 5
        %v5374 = vsel %vm2015, %v5372, %v5373
        %v5375 = vrot.slane %v5373, 4
        %v5376 = vrot.slane %v4511, 5
        %v5377 = vsel %vm2015, %v5375, %v5376
        %v5378 = vrot.slane %v5242, 5
        %v5379 = vrot.slane %v5378, 4
        %v5380 = vrot.slane %v4513, 5
        %v5381 = vsel %vm2015, %v5379, %v5380
        %v5382 = vrot.slane %v5380, 4
        %v5383 = vrot.slane %v4514, 5
        %v5384 = vsel %vm2015, %v5382, %v5383
        %v5385 = vrot.slane %v5243, 5
        %v5386 = vrot.slane %v5385, 4
        %v5387 = vrot.slane %v4516, 5
        %v5388 = vsel %vm2015, %v5386, %v5387
        %v5389 = vrot.slane %v5387, 4
        %v5390 = vrot.slane %v4517, 5
        %v5391 = vsel %vm2015, %v5389, %v5390
        %v5392 = vrot.slane %v5244, 5
        %v5393 = vrot.slane %v5392, 4
        %v5394 = vrot.slane %v4519, 5
        %v5395 = vsel %vm2015, %v5393, %v5394
        %v5396 = vrot.slane %v5394, 4
        %v5397 = vrot.slane %v4520, 5
        %v5398 = vsel %vm2015, %v5396, %v5397
        %v5399 = vrot.slane %v5245, 5
        %v5400 = vrot.slane %v5399, 4
        %v5401 = vrot.slane %v4522, 5
        %v5402 = vsel %vm2015, %v5400, %v5401
        %v5403 = vrot.slane %v5401, 4
        %v5404 = vrot.slane %v4523, 5
        %v5405 = vsel %vm2015, %v5403, %v5404
        %s5406 = scalar_lea.vmem %s1, 512
        %v5407 = vld [vmem:[%s5406] sm:$0xf]
        %v5408 = vld [vmem:[%s5406 + $0x4] sm:$0xf]
        %v5409 = vld [vmem:[%s5406 + $0x8] sm:$0xf]
        %v5410 = vld [vmem:[%s5406 + $0xc] sm:$0xf]
        %v5411 = vld [vmem:[%s5406 + $0x10] sm:$0xf]
        %v5412 = vld [vmem:[%s5406 + $0x14] sm:$0xf]
        %v5413 = vld [vmem:[%s5406 + $0x18] sm:$0xf]
        %v5414 = vld [vmem:[%s5406 + $0x1c] sm:$0xf]
        %v5415 = vld [vmem:[%s5406 + $0x20] sm:$0xf]
        %v5416 = vld [vmem:[%s5406 + $0x24] sm:$0xf]
        %v5417 = vld [vmem:[%s5406 + $0x28] sm:$0xf]
        %v5418 = vld [vmem:[%s5406 + $0x2c] sm:$0xf]
        %v5419 = vld [vmem:[%s5406 + $0x30] sm:$0xf]
        %v5420 = vld [vmem:[%s5406 + $0x34] sm:$0xf]
        %v5421 = vld [vmem:[%s5406 + $0x38] sm:$0xf]
        %v5422 = vld [vmem:[%s5406 + $0x3c] sm:$0xf]
        %v5423 = vunpack.c.l.b16 %v5297
        %v5424 = vunpack.c.l.b16 %v5300
        %v5425 = vunpack.c.l.b16 %v5304
        %v5426 = vunpack.c.l.b16 %v5307
        %v5427 = vunpack.c.l.b16 %v5311
        %v5428 = vunpack.c.l.b16 %v5314
        %v5429 = vunpack.c.l.b16 %v5318
        %v5430 = vunpack.c.l.b16 %v5321
        %v5431 = vunpack.c.l.b16 %v5325
        %v5432 = vunpack.c.l.b16 %v5328
        %v5433 = vunpack.c.l.b16 %v5332
        %v5434 = vunpack.c.l.b16 %v5335
        %v5435 = vunpack.c.l.b16 %v5339
        %v5436 = vunpack.c.l.b16 %v5342
        %v5437 = vunpack.c.l.b16 %v5346
        %v5438 = vunpack.c.l.b16 %v5349
        %v5439 = vunpack.c.l.b16 %v5353
        %v5440 = vunpack.c.l.b16 %v5356
        %v5441 = vunpack.c.l.b16 %v5360
        %v5442 = vunpack.c.l.b16 %v5363
        %v5443 = vunpack.c.l.b16 %v5367
        %v5444 = vunpack.c.l.b16 %v5370
        %v5445 = vunpack.c.l.b16 %v5374
        %v5446 = vunpack.c.l.b16 %v5377
        %v5447 = vunpack.c.l.b16 %v5381
        %v5448 = vunpack.c.l.b16 %v5384
        %v5449 = vunpack.c.l.b16 %v5388
        %v5450 = vunpack.c.l.b16 %v5391
        %v5451 = vunpack.c.l.b16 %v5395
        %v5452 = vunpack.c.l.b16 %v5398
        %v5453 = vunpack.c.l.b16 %v5402
        %v5454 = vunpack.c.l.b16 %v5405
        %v5455 = vpack.c.b16 %v5424, %v5423
        %v5456 = vpack.c.b16 %v5426, %v5425
        %v5457 = vpack.c.b16 %v5428, %v5427
        %v5458 = vpack.c.b16 %v5430, %v5429
        %v5459 = vpack.c.b16 %v5432, %v5431
        %v5460 = vpack.c.b16 %v5434, %v5433
        %v5461 = vpack.c.b16 %v5436, %v5435
        %v5462 = vpack.c.b16 %v5438, %v5437
        %v5463 = vpack.c.b16 %v5440, %v5439
        %v5464 = vpack.c.b16 %v5442, %v5441
        %v5465 = vpack.c.b16 %v5444, %v5443
        %v5466 = vpack.c.b16 %v5446, %v5445
        %v5467 = vpack.c.b16 %v5448, %v5447
        %v5468 = vpack.c.b16 %v5450, %v5449
        %v5469 = vpack.c.b16 %v5452, %v5451
        %v5470 = vpack.c.b16 %v5454, %v5453
        %v5503 = vunpack.c.l.b16 %v5407
        %v5504 = vunpack.c.l.b16 %v5408
        %v5505 = vunpack.c.l.b16 %v5409
        %v5506 = vunpack.c.l.b16 %v5410
        %v5507 = vunpack.c.l.b16 %v5411
        %v5508 = vunpack.c.l.b16 %v5412
        %v5509 = vunpack.c.l.b16 %v5413
        %v5510 = vunpack.c.l.b16 %v5414
        %v5511 = vunpack.c.l.b16 %v5415
        %v5512 = vunpack.c.l.b16 %v5416
        %v5513 = vunpack.c.l.b16 %v5417
        %v5514 = vunpack.c.l.b16 %v5418
        %v5515 = vunpack.c.l.b16 %v5419
        %v5516 = vunpack.c.l.b16 %v5420
        %v5517 = vunpack.c.l.b16 %v5421
        %v5518 = vunpack.c.l.b16 %v5422
        %v5519 = vpack.c.b16 %v5504, %v5503
        %v5520 = vpack.c.b16 %v5506, %v5505
        %v5521 = vpack.c.b16 %v5508, %v5507
        %v5522 = vpack.c.b16 %v5510, %v5509
        %v5523 = vpack.c.b16 %v5512, %v5511
        %v5524 = vpack.c.b16 %v5514, %v5513
        %v5525 = vpack.c.b16 %v5516, %v5515
        %v5526 = vpack.c.b16 %v5518, %v5517
        %5535 = vmatprep.subr.bf16.mxu0 0
        %5536 = vmatpush1.bf16.msra.mxu0 %v5519
        %5537 = vmatprep.subr.bf16.mxu0 0
        %5538 = vmatpush1.bf16.msra.mxu0 %v5520
        %5539 = vmatprep.subr.bf16.mxu0 0
        %5540 = vmatpush1.bf16.msra.mxu0 %v5521
        %5541 = vmatprep.subr.bf16.mxu0 0
        %5542 = vmatpush1.bf16.msra.mxu0 %v5522
        %5543 = vmatprep.subr.bf16.mxu0 0
        %5544 = vmatpush1.bf16.msra.mxu0 %v5523
        %5545 = vmatprep.subr.bf16.mxu0 0
        %5546 = vmatpush1.bf16.msra.mxu0 %v5524
        %5547 = vmatprep.subr.bf16.mxu0 0
        %5548 = vmatpush1.bf16.msra.mxu0 %v5525
        %5549 = vmatprep.subr.bf16.mxu0 0
        %5550 = vmatpush1.bf16.msra.mxu0 %v5526
        %5551 = vmatprep.subr.bf16.mxu0 0
        %5552 = vmatpush1.bf16.msra.mxu0 0
        %5553 = vmatprep.subr.bf16.mxu0 0
        %5554 = vmatpush1.bf16.msra.mxu0 0
        %5555 = vmatprep.subr.bf16.mxu0 0
        %5556 = vmatpush1.bf16.msra.mxu0 0
        %5557 = vmatprep.subr.bf16.mxu0 0
        %5558 = vmatpush1.bf16.msra.mxu0 0
        %5559 = vmatprep.subr.bf16.mxu0 0
        %5560 = vmatpush1.bf16.msra.mxu0 0
        %5561 = vmatprep.subr.bf16.mxu0 0
        %5562 = vmatpush1.bf16.msra.mxu0 0
        %5563 = vmatprep.subr.bf16.mxu0 0
        %5564 = vmatpush1.bf16.msra.mxu0 0
        %5565 = vmatprep.subr.bf16.mxu0 0
        %5566 = vmatpush1.bf16.msra.mxu0 0
        %5567 = vmatprep.mubr.bf16.mxu0 0
        %5568 = vmatmul.mubr.bf16.gmra.mrb[0].mxu0 %v5455
        %v5569 = vpop.f32.mrb[0].mxu0
        %v5570 = vadd.f32 0.0, %v5569
        %v5571 = vpop.f32.mrb[0].mxu0
        %v5572 = vpop.f32.mrb[0].mxu0
        %v5573 = vadd.f32 0.0, %v5572
        %v5574 = vpop.f32.mrb[0].mxu0
        %5575 = vmatprep.mubr.bf16.mxu0 0
        %5576 = vmatmul.mubr.bf16.gmra.mrb[0].mxu0 %v5456
        %v5577 = vpop.f32.mrb[0].mxu0
        %v5578 = vadd.f32 0.0, %v5577
        %v5579 = vpop.f32.mrb[0].mxu0
        %v5580 = vpop.f32.mrb[0].mxu0
        %v5581 = vadd.f32 0.0, %v5580
        %v5582 = vpop.f32.mrb[0].mxu0
        %5583 = vmatprep.mubr.bf16.mxu0 0
        %5584 = vmatmul.mubr.bf16.gmra.mrb[0].mxu0 %v5457
        %v5585 = vpop.f32.mrb[0].mxu0
        %v5586 = vadd.f32 0.0, %v5585
        %v5587 = vpop.f32.mrb[0].mxu0
        %v5588 = vpop.f32.mrb[0].mxu0
        %v5589 = vadd.f32 0.0, %v5588
        %v5590 = vpop.f32.mrb[0].mxu0
        %5591 = vmatprep.mubr.bf16.mxu0 0
        %5592 = vmatmul.mubr.bf16.gmra.mrb[0].mxu0 %v5458
        %v5593 = vpop.f32.mrb[0].mxu0
        %v5594 = vadd.f32 0.0, %v5593
        %v5595 = vpop.f32.mrb[0].mxu0
        %v5596 = vpop.f32.mrb[0].mxu0
        %v5597 = vadd.f32 0.0, %v5596
        %v5598 = vpop.f32.mrb[0].mxu0
        %5599 = vmatprep.mubr.bf16.mxu0 0
        %5600 = vmatmul.mubr.bf16.gmra.mrb[0].mxu0 %v5459
        %v5601 = vpop.f32.mrb[0].mxu0
        %v5602 = vadd.f32 0.0, %v5601
        %v5603 = vpop.f32.mrb[0].mxu0
        %v5604 = vpop.f32.mrb[0].mxu0
        %v5605 = vadd.f32 0.0, %v5604
        %v5606 = vpop.f32.mrb[0].mxu0
        %5607 = vmatprep.mubr.bf16.mxu0 0
        %5608 = vmatmul.mubr.bf16.gmra.mrb[0].mxu0 %v5460
        %v5609 = vpop.f32.mrb[0].mxu0
        %v5610 = vadd.f32 0.0, %v5609
        %v5611 = vpop.f32.mrb[0].mxu0
        %v5612 = vpop.f32.mrb[0].mxu0
        %v5613 = vadd.f32 0.0, %v5612
        %v5614 = vpop.f32.mrb[0].mxu0
        %5615 = vmatprep.mubr.bf16.mxu0 0
        %5616 = vmatmul.mubr.bf16.gmra.mrb[0].mxu0 %v5461
        %v5617 = vpop.f32.mrb[0].mxu0
        %v5618 = vadd.f32 0.0, %v5617
        %v5619 = vpop.f32.mrb[0].mxu0
        %v5620 = vpop.f32.mrb[0].mxu0
        %v5621 = vadd.f32 0.0, %v5620
        %v5622 = vpop.f32.mrb[0].mxu0
        %5623 = vmatprep.mubr.bf16.mxu0 0
        %5624 = vmatmul.mubr.bf16.gmra.mrb[0].mxu0 %v5462
        %v5625 = vpop.f32.mrb[0].mxu0
        %v5626 = vadd.f32 0.0, %v5625
        %v5627 = vpop.f32.mrb[0].mxu0
        %v5628 = vpop.f32.mrb[0].mxu0
        %v5629 = vadd.f32 0.0, %v5628
        %v5630 = vpop.f32.mrb[0].mxu0
        %5631 = vmatprep.mubr.bf16.mxu0 0
        %5632 = vmatmul.mubr.bf16.gmra.mrb[0].mxu0 %v5463
        %v5633 = vpop.f32.mrb[0].mxu0
        %v5634 = vadd.f32 0.0, %v5633
        %v5635 = vpop.f32.mrb[0].mxu0
        %v5636 = vpop.f32.mrb[0].mxu0
        %v5637 = vadd.f32 0.0, %v5636
        %v5638 = vpop.f32.mrb[0].mxu0
        %5639 = vmatprep.mubr.bf16.mxu0 0
        %5640 = vmatmul.mubr.bf16.gmra.mrb[0].mxu0 %v5464
        %v5641 = vpop.f32.mrb[0].mxu0
        %v5642 = vadd.f32 0.0, %v5641
        %v5643 = vpop.f32.mrb[0].mxu0
        %v5644 = vpop.f32.mrb[0].mxu0
        %v5645 = vadd.f32 0.0, %v5644
        %v5646 = vpop.f32.mrb[0].mxu0
        %5647 = vmatprep.mubr.bf16.mxu0 0
        %5648 = vmatmul.mubr.bf16.gmra.mrb[0].mxu0 %v5465
        %v5649 = vpop.f32.mrb[0].mxu0
        %v5650 = vadd.f32 0.0, %v5649
        %v5651 = vpop.f32.mrb[0].mxu0
        %v5652 = vpop.f32.mrb[0].mxu0
        %v5653 = vadd.f32 0.0, %v5652
        %v5654 = vpop.f32.mrb[0].mxu0
        %5655 = vmatprep.mubr.bf16.mxu0 0
        %5656 = vmatmul.mubr.bf16.gmra.mrb[0].mxu0 %v5466
        %v5657 = vpop.f32.mrb[0].mxu0
        %v5658 = vadd.f32 0.0, %v5657
        %v5659 = vpop.f32.mrb[0].mxu0
        %v5660 = vpop.f32.mrb[0].mxu0
        %v5661 = vadd.f32 0.0, %v5660
        %v5662 = vpop.f32.mrb[0].mxu0
        %5663 = vmatprep.mubr.bf16.mxu0 0
        %5664 = vmatmul.mubr.bf16.gmra.mrb[0].mxu0 %v5467
        %v5665 = vpop.f32.mrb[0].mxu0
        %v5666 = vadd.f32 0.0, %v5665
        %v5667 = vpop.f32.mrb[0].mxu0
        %v5668 = vpop.f32.mrb[0].mxu0
        %v5669 = vadd.f32 0.0, %v5668
        %v5670 = vpop.f32.mrb[0].mxu0
        %5671 = vmatprep.mubr.bf16.mxu0 0
        %5672 = vmatmul.mubr.bf16.gmra.mrb[0].mxu0 %v5468
        %v5673 = vpop.f32.mrb[0].mxu0
        %v5674 = vadd.f32 0.0, %v5673
        %v5675 = vpop.f32.mrb[0].mxu0
        %v5676 = vpop.f32.mrb[0].mxu0
        %v5677 = vadd.f32 0.0, %v5676
        %v5678 = vpop.f32.mrb[0].mxu0
        %5679 = vmatprep.mubr.bf16.mxu0 0
        %5680 = vmatmul.mubr.bf16.gmra.mrb[0].mxu0 %v5469
        %v5681 = vpop.f32.mrb[0].mxu0
        %v5682 = vadd.f32 0.0, %v5681
        %v5683 = vpop.f32.mrb[0].mxu0
        %v5684 = vpop.f32.mrb[0].mxu0
        %v5685 = vadd.f32 0.0, %v5684
        %v5686 = vpop.f32.mrb[0].mxu0
        %5687 = vmatprep.mubr.bf16.mxu0 0
        %5688 = vmatmul.mubr.bf16.gmra.mrb[0].mxu0 %v5470
        %v5689 = vpop.f32.mrb[0].mxu0
        %v5690 = vadd.f32 0.0, %v5689
        %v5691 = vpop.f32.mrb[0].mxu0
        %v5692 = vpop.f32.mrb[0].mxu0
        %v5693 = vadd.f32 0.0, %v5692
        %v5694 = vpop.f32.mrb[0].mxu0
        %5695 = vdwg.mxu0
        %v5696 = vadd.f32 %v5198, %v5570
        %v5697 = vadd.f32 %v5199, %v5573
        %v5698 = vadd.f32 %v5200, %v5578
        %v5699 = vadd.f32 %v5201, %v5581
        %v5700 = vadd.f32 %v5202, %v5586
        %v5701 = vadd.f32 %v5203, %v5589
        %v5702 = vadd.f32 %v5204, %v5594
        %v5703 = vadd.f32 %v5205, %v5597
        %v5704 = vadd.f32 %v5206, %v5602
        %v5705 = vadd.f32 %v5207, %v5605
        %v5706 = vadd.f32 %v5208, %v5610
        %v5707 = vadd.f32 %v5209, %v5613
        %v5708 = vadd.f32 %v5210, %v5618
        %v5709 = vadd.f32 %v5211, %v5621
        %v5710 = vadd.f32 %v5212, %v5626
        %v5711 = vadd.f32 %v5213, %v5629
        %v5712 = vadd.f32 %v5214, %v5634
        %v5713 = vadd.f32 %v5215, %v5637
        %v5714 = vadd.f32 %v5216, %v5642
        %v5715 = vadd.f32 %v5217, %v5645
        %v5716 = vadd.f32 %v5218, %v5650
        %v5717 = vadd.f32 %v5219, %v5653
        %v5718 = vadd.f32 %v5220, %v5658
        %v5719 = vadd.f32 %v5221, %v5661
        %v5720 = vadd.f32 %v5222, %v5666
        %v5721 = vadd.f32 %v5223, %v5669
        %v5722 = vadd.f32 %v5224, %v5674
        %v5723 = vadd.f32 %v5225, %v5677
        %v5724 = vadd.f32 %v5226, %v5682
        %v5725 = vadd.f32 %v5227, %v5685
        %v5726 = vadd.f32 %v5228, %v5690
        %v5727 = vadd.f32 %v5229, %v5693
        %v5728 = vld [vmem:[%s2] sm:$0x1]
        %v5730 = vlaneseq
        %v5731 = vshrl.u32 %v5730, 7
        %v5732 = vsub.s32 0, %v5731
        %v5733 = vrot.slane %v5728, %v5732
        %v5735 = vadd.f32 %v5696, %v5733
        %v5736 = vadd.f32 %v5697, %v5733
        %v5737 = vadd.f32 %v5698, %v5733
        %v5738 = vadd.f32 %v5699, %v5733
        %v5739 = vadd.f32 %v5700, %v5733
        %v5740 = vadd.f32 %v5701, %v5733
        %v5741 = vadd.f32 %v5702, %v5733
        %v5742 = vadd.f32 %v5703, %v5733
        %v5743 = vadd.f32 %v5704, %v5733
        %v5744 = vadd.f32 %v5705, %v5733
        %v5745 = vadd.f32 %v5706, %v5733
        %v5746 = vadd.f32 %v5707, %v5733
        %v5747 = vadd.f32 %v5708, %v5733
        %v5748 = vadd.f32 %v5709, %v5733
        %v5749 = vadd.f32 %v5710, %v5733
        %v5750 = vadd.f32 %v5711, %v5733
        %v5751 = vadd.f32 %v5712, %v5733
        %v5752 = vadd.f32 %v5713, %v5733
        %v5753 = vadd.f32 %v5714, %v5733
        %v5754 = vadd.f32 %v5715, %v5733
        %v5755 = vadd.f32 %v5716, %v5733
        %v5756 = vadd.f32 %v5717, %v5733
        %v5757 = vadd.f32 %v5718, %v5733
        %v5758 = vadd.f32 %v5719, %v5733
        %v5759 = vadd.f32 %v5720, %v5733
        %v5760 = vadd.f32 %v5721, %v5733
        %v5761 = vadd.f32 %v5722, %v5733
        %v5762 = vadd.f32 %v5723, %v5733
        %v5763 = vadd.f32 %v5724, %v5733
        %v5764 = vadd.f32 %v5725, %v5733
        %v5765 = vadd.f32 %v5726, %v5733
        %v5766 = vadd.f32 %v5727, %v5733
        %v5767 = vld [vmem:[%s269] sm:$0xff]
        %v5768 = vld [vmem:[%s269 + $0x8] sm:$0xff]
        %v5769 = vld [vmem:[%s269 + $0x10] sm:$0xff]
        %v5770 = vld [vmem:[%s269 + $0x18] sm:$0xff]
        %v5771 = vld [vmem:[%s269 + $0x20] sm:$0xff]
        %v5772 = vld [vmem:[%s269 + $0x28] sm:$0xff]
        %v5773 = vld [vmem:[%s269 + $0x30] sm:$0xff]
        %v5774 = vld [vmem:[%s269 + $0x38] sm:$0xff]
        %v5775 = vld [vmem:[%s269 + $0x40] sm:$0xff]
        %v5776 = vld [vmem:[%s269 + $0x48] sm:$0xff]
        %v5777 = vld [vmem:[%s269 + $0x50] sm:$0xff]
        %v5778 = vld [vmem:[%s269 + $0x58] sm:$0xff]
        %v5779 = vld [vmem:[%s269 + $0x60] sm:$0xff]
        %v5780 = vld [vmem:[%s269 + $0x68] sm:$0xff]
        %v5781 = vld [vmem:[%s269 + $0x70] sm:$0xff]
        %v5782 = vld [vmem:[%s269 + $0x78] sm:$0xff]
        %v5783 = vld [vmem:[%s269 + $0x80] sm:$0xff]
        %v5784 = vld [vmem:[%s269 + $0x88] sm:$0xff]
        %v5785 = vld [vmem:[%s269 + $0x90] sm:$0xff]
        %v5786 = vld [vmem:[%s269 + $0x98] sm:$0xff]
        %v5787 = vld [vmem:[%s269 + $0xa0] sm:$0xff]
        %v5788 = vld [vmem:[%s269 + $0xa8] sm:$0xff]
        %v5789 = vld [vmem:[%s269 + $0xb0] sm:$0xff]
        %v5790 = vld [vmem:[%s269 + $0xb8] sm:$0xff]
        %v5791 = vld [vmem:[%s269 + $0xc0] sm:$0xff]
        %v5792 = vld [vmem:[%s269 + $0xc8] sm:$0xff]
        %v5793 = vld [vmem:[%s269 + $0xd0] sm:$0xff]
        %v5794 = vld [vmem:[%s269 + $0xd8] sm:$0xff]
        %v5795 = vld [vmem:[%s269 + $0xe0] sm:$0xff]
        %v5796 = vld [vmem:[%s269 + $0xe8] sm:$0xff]
        %v5797 = vld [vmem:[%s269 + $0xf0] sm:$0xff]
        %v5798 = vld [vmem:[%s269 + $0xf8] sm:$0xff]
        %v5799 = vadd.f32 %v5735, %v5767
        %v5800 = vadd.f32 %v5736, %v5768
        %v5801 = vadd.f32 %v5737, %v5769
        %v5802 = vadd.f32 %v5738, %v5770
        %v5803 = vadd.f32 %v5739, %v5771
        %v5804 = vadd.f32 %v5740, %v5772
        %v5805 = vadd.f32 %v5741, %v5773
        %v5806 = vadd.f32 %v5742, %v5774
        %v5807 = vadd.f32 %v5743, %v5775
        %v5808 = vadd.f32 %v5744, %v5776
        %v5809 = vadd.f32 %v5745, %v5777
        %v5810 = vadd.f32 %v5746, %v5778
        %v5811 = vadd.f32 %v5747, %v5779
        %v5812 = vadd.f32 %v5748, %v5780
        %v5813 = vadd.f32 %v5749, %v5781
        %v5814 = vadd.f32 %v5750, %v5782
        %v5815 = vadd.f32 %v5751, %v5783
        %v5816 = vadd.f32 %v5752, %v5784
        %v5817 = vadd.f32 %v5753, %v5785
        %v5818 = vadd.f32 %v5754, %v5786
        %v5819 = vadd.f32 %v5755, %v5787
        %v5820 = vadd.f32 %v5756, %v5788
        %v5821 = vadd.f32 %v5757, %v5789
        %v5822 = vadd.f32 %v5758, %v5790
        %v5823 = vadd.f32 %v5759, %v5791
        %v5824 = vadd.f32 %v5760, %v5792
        %v5825 = vadd.f32 %v5761, %v5793
        %v5826 = vadd.f32 %v5762, %v5794
        %v5827 = vadd.f32 %v5763, %v5795
        %v5828 = vadd.f32 %v5764, %v5796
        %v5829 = vadd.f32 %v5765, %v5797
        %v5830 = vadd.f32 %v5766, %v5798
        %vm5831 = vcmask 261120
        %5832 = vst.msk [vmem:[%s259] sm:$0xff] %vm5831, %v5799
        %5833 = vst.msk [vmem:[%s259 + $0x8] sm:$0xff] %vm5831, %v5800
        %5834 = vst.msk [vmem:[%s259 + $0x10] sm:$0xff] %vm5831, %v5801
        %5835 = vst.msk [vmem:[%s259 + $0x18] sm:$0xff] %vm5831, %v5802
        %5836 = vst.msk [vmem:[%s259 + $0x20] sm:$0xff] %vm5831, %v5803
        %5837 = vst.msk [vmem:[%s259 + $0x28] sm:$0xff] %vm5831, %v5804
        %5838 = vst.msk [vmem:[%s259 + $0x30] sm:$0xff] %vm5831, %v5805
        %5839 = vst.msk [vmem:[%s259 + $0x38] sm:$0xff] %vm5831, %v5806
        %5840 = vst.msk [vmem:[%s259 + $0x40] sm:$0xff] %vm5831, %v5807
        %5841 = vst.msk [vmem:[%s259 + $0x48] sm:$0xff] %vm5831, %v5808
        %5842 = vst.msk [vmem:[%s259 + $0x50] sm:$0xff] %vm5831, %v5809
        %5843 = vst.msk [vmem:[%s259 + $0x58] sm:$0xff] %vm5831, %v5810
        %5844 = vst.msk [vmem:[%s259 + $0x60] sm:$0xff] %vm5831, %v5811
        %5845 = vst.msk [vmem:[%s259 + $0x68] sm:$0xff] %vm5831, %v5812
        %5846 = vst.msk [vmem:[%s259 + $0x70] sm:$0xff] %vm5831, %v5813
        %5847 = vst.msk [vmem:[%s259 + $0x78] sm:$0xff] %vm5831, %v5814
        %5848 = vst.msk [vmem:[%s259 + $0x80] sm:$0xff] %vm5831, %v5815
        %5849 = vst.msk [vmem:[%s259 + $0x88] sm:$0xff] %vm5831, %v5816
        %5850 = vst.msk [vmem:[%s259 + $0x90] sm:$0xff] %vm5831, %v5817
        %5851 = vst.msk [vmem:[%s259 + $0x98] sm:$0xff] %vm5831, %v5818
        %5852 = vst.msk [vmem:[%s259 + $0xa0] sm:$0xff] %vm5831, %v5819
        %5853 = vst.msk [vmem:[%s259 + $0xa8] sm:$0xff] %vm5831, %v5820
        %5854 = vst.msk [vmem:[%s259 + $0xb0] sm:$0xff] %vm5831, %v5821
        %5855 = vst.msk [vmem:[%s259 + $0xb8] sm:$0xff] %vm5831, %v5822
        %5856 = vst.msk [vmem:[%s259 + $0xc0] sm:$0xff] %vm5831, %v5823
        %5857 = vst.msk [vmem:[%s259 + $0xc8] sm:$0xff] %vm5831, %v5824
        %5858 = vst.msk [vmem:[%s259 + $0xd0] sm:$0xff] %vm5831, %v5825
        %5859 = vst.msk [vmem:[%s259 + $0xd8] sm:$0xff] %vm5831, %v5826
        %5860 = vst.msk [vmem:[%s259 + $0xe0] sm:$0xff] %vm5831, %v5827
        %5861 = vst.msk [vmem:[%s259 + $0xe8] sm:$0xff] %vm5831, %v5828
        %5862 = vst.msk [vmem:[%s259 + $0xf0] sm:$0xff] %vm5831, %v5829
        %5863 = vst.msk [vmem:[%s259 + $0xf8] sm:$0xff] %vm5831, %v5830
        %s5864 = sand.u32 %s164, 1
        %s5865 = scalar_lea.sflag [#allocation4], %s5864
        %s5866 = sand.u32 %s164, 1
        %s5867 = smul.addr %s5866, 256
        %s5868 = scalar_lea.vmem [#allocation3], %s5867
        // Predicated region
        $region45: #{res_block_2d.5} parent=43 // pred_check
          %p5869 = pneg %p174
        $region46: #{res_block_2d.5} parent=43 // pred_check_branch
          %5871 = sbr.rel (%p5869) target = $region48
        $region47: #{res_block_2d.5} parent=43 // pred_region
          %s5873 = ssub.s32 4096, 4096
          %5874 = vsyncadd %s5865, %s5873
          %s5875 = smul.addr %s20, 32
          %s5876 = smul.addr %s5875, 128
          %s5877 = scalar_lea.hbm %s6, %s5876
          %s5878 = sshll.u32 %s5868, 4
          %s5879 = int_to_ptr.vmem [resolvable:$true] %s5878
          %5884 = dma.vmem_to_hbm [thread:$0]  %s5879, 4096, %s5877, %s5865, 128, 128, 8
        $region48: #{res_block_2d.5} parent=43 // pred_fallthru
          _
      $region44: #{res_block_2d.5} parent=5 // pred_fallthru
        _
      %p5885 = scmp.le.s32.totalorder 2, %s15
      // Predicated region
      $region49: #{res_block_2d.5} parent=5 // pred_check
        %p5886 = pneg %p5885
      $region50: #{res_block_2d.5} parent=5 // pred_check_branch
        %5888 = sbr.rel (%p5886) target = $region52
      $region51: #{res_block_2d.5} parent=5 // pred_region
        %s5889 = ssub.s32 %s15, 2
        // Predicated region
        $region53: #{res_block_2d.5} parent=51 // pred_check
          %p5890 = pneg %p180
        $region54: #{res_block_2d.5} parent=51 // pred_check_branch
          %5892 = sbr.rel (%p5890) target = $region56
        $region55: #{res_block_2d.5} parent=51 // pred_region
          %s5893 = sand.u32 %s165, 1
          %s5894 = scalar_lea.sflag [#allocation4], %s5893
          %s5895 = sand.u32 %s165, 1
          %s5896 = smul.addr %s5895, 256
          %s5897 = scalar_lea.vmem [#allocation3], %s5896
          %5898 = dma.done %s5894, 4096
        $region56: #{res_block_2d.5} parent=51 // pred_fallthru
          _
      $region52: #{res_block_2d.5} parent=5 // pred_fallthru
        _
    $region6: #{res_block_2d.5} parent=1 // loop_footer
      %s19 = sadd.s32 1, %s15
    $region7: #{res_block_2d.5} parent=1 // loop_footer_branch
      %14 = sbr.rel target = $region3
    $region8: #{res_block_2d.5} parent=1 // loop_exit
      _
    %5899 = vsyncpa [#allocation4], 1
    %s5900 = scalar_lea.sflag [#allocation4], 1
    %5901 = vsyncpa %s5900, 1

</llo_original>
